<compile_context>
chip_gen: v6e
topology: v6e:2x2x1
jax: 0.10.0
libtpu: 0.0.40
codegen_flags: <defaults>
</compile_context>

<pallas_src>
import functools
from typing import NamedTuple

import jax
import jax.numpy as jnp
from jax.experimental import pallas as pl
from jax.experimental.pallas import tpu as pltpu


def _round_up(x, m):
    return (x + m - 1) // m * m


class Geom(NamedTuple):
    H: int
    W: int
    Hp: int
    Wp: int
    S: int      # flattened padded spatial size Hp*Wp
    OFF: int    # lane offset of the padded image inside the (C, L) slab
    L: int      # total lane extent (guard + S + guard, rounded to 128)
    shifts: tuple  # 9 flat-index shifts of the 3x3 taps (dy-major, dx-minor)


def make_geom(H, W):
    Hp, Wp = H + 2, W + 2
    S = Hp * Wp
    OFF = _round_up(Wp + 1, 128)                 # lane-aligned interior start
    L = _round_up(OFF + S + Wp + 1, 128)
    shifts = tuple((dy - 1) * Wp + (dx - 1) for dy in range(3) for dx in range(3))
    return Geom(H, W, Hp, Wp, S, OFF, L, shifts)


def _leaky(x):
    # LeakyReLU(0.1); leaky(0) == 0, so the zero padding border stays zero.
    return jnp.where(x >= 0, x, 0.1 * x)


def _store_padded(o_ref, interior, g):
    """Store (Cout, S) interior once; zero only the small lane guards."""
    cout = o_ref.shape[0]
    o_ref[:, : g.OFF] = jnp.zeros((cout, g.OFF), o_ref.dtype)
    o_ref[:, g.OFF: g.OFF + g.S] = interior.astype(o_ref.dtype)
    o_ref[:, g.OFF + g.S:] = jnp.zeros((cout, g.L - g.OFF - g.S), o_ref.dtype)


# ---------------------------------------------------------------------------
# Kernels
# ---------------------------------------------------------------------------

def _conv_from(src_ref, w_ref, b_ref, mask, *, act, g):
    """3x3 same-conv of a bf16 (Cin, L) source -> masked (Cout, S) f32.

    Used only for the three small wrapper convs (fea / hr / final): nine
    per-tap MXU dots accumulated in f32 (Cin is tiny there; the hot path,
    the RDB, uses the single-dot im2col form below).
    """
    cout = w_ref.shape[1]
    acc = jnp.zeros((cout, g.S), jnp.float32)
    for t, s in enumerate(g.shifts):
        patch = src_ref[:, g.OFF + s: g.OFF + s + g.S]            # (Cin, S) bf16
        acc = acc + jnp.dot(w_ref[t], patch,
                            preferred_element_type=jnp.float32)
    acc = acc + b_ref[...]
    if act:
        acc = _leaky(acc)
    return acc * mask                                             # zero border


def _conv_kernel(mask_ref, x_ref, w_ref, b_ref, o_ref, xb_ref, *, act, g):
    xb_ref[...] = x_ref[...].astype(jnp.bfloat16)                 # cast once
    out = _conv_from(xb_ref, w_ref, b_ref, mask_ref[...], act=act, g=g)
    _store_padded(o_ref, out, g)


def _add_conv_kernel(mask_ref, x_ref, a_ref, w_ref, b_ref, o_ref, xb_ref, *, act, g):
    # conv(x + a): fuses the trunk skip (fea + rb_blocks(fea)) into hr_conv.
    xb_ref[...] = (x_ref[...] + a_ref[...]).astype(jnp.bfloat16)
    out = _conv_from(xb_ref, w_ref, b_ref, mask_ref[...], act=act, g=g)
    _store_padded(o_ref, out, g)


def _rdb_kernel(mask_ref, x_ref, w1_ref, w2_ref, w3_ref, w4_ref, w5_ref, b_ref,
                o_ref, src_buf, act_col, raw_col, *, C, g):
    """One fused ResidualDenseBlock.

    x_ref : (C, L) f32 block input in padded-flat layout (zero border/guards).
    w{k}  : (C, 9*k*C) bf16 host-packed weight (source-major, tap, channel).
    b_ref : (5, C, 1) f32 biases.
    o_ref : (C, L) f32 output = conv5(cat(x, x1..x4)) * 0.2 + x.
    src_buf: (C, L) bf16 scratch, reused for x, x1..x4.
    act_col: (36*C, S) bf16 im2col of lrelu(x), lrelu(x1..x3)  (conv1..conv4).
    raw_col: (45*C, S) bf16 im2col of raw x, x1..x4            (conv5).
    """
    OFF, S = g.OFF, g.S
    mask = mask_ref[...]                                          # (1, S) f32

    def fill_slab(col_ref, base, src):
        # Rows [base + t*C, base + (t+1)*C) = source shifted by tap t.
        for t, s in enumerate(g.shifts):
            col_ref[base + t * C: base + (t + 1) * C, :] = \
                src[:, OFF + s: OFF + s + S]

    # --- source 0: the block input x -------------------------------------
    src_buf[...] = x_ref[...].astype(jnp.bfloat16)                # cast once
    fill_slab(raw_col, 0, src_buf)
    act_col[0: 9 * C, :] = _leaky(raw_col[0: 9 * C, :])

    # --- conv1..conv4: single fat dot each over the growing concat --------
    w_refs = (w1_ref, w2_ref, w3_ref, w4_ref)
    for k in range(1, 5):
        acc = jnp.dot(w_refs[k - 1][...], act_col[0: 9 * k * C, :],
                      preferred_element_type=jnp.float32)         # (C, S) f32
        xk = (acc + b_ref[k - 1]) * mask                          # keep border 0
        src_buf[:, OFF: OFF + S] = xk.astype(jnp.bfloat16)        # guards stay 0
        base = 9 * k * C
        fill_slab(raw_col, base, src_buf)
        if k <= 3:                                                # x4 only feeds conv5
            act_col[base: base + 9 * C, :] = _leaky(raw_col[base: base + 9 * C, :])

    # --- conv5 (no activation) + 0.2-scaled residual ----------------------
    acc5 = jnp.dot(w5_ref[...], raw_col[...],
                   preferred_element_type=jnp.float32)
    x5 = (acc5 + b_ref[4]) * mask
    out = x_ref[:, OFF: OFF + S] + 0.2 * x5
    _store_padded(o_ref, out, g)


# ---------------------------------------------------------------------------
# pallas_call wrappers
# ---------------------------------------------------------------------------

def conv3x3(x, w9, b, mask, g, *, act=False, add=None):
    """3x3 same conv on (B, Cin, L) padded-flat activations; grid over batch."""
    B, cin, L = x.shape
    cout = w9.shape[1]
    m_spec = pl.BlockSpec((1, g.S), lambda i: (0, 0))
    x_spec = pl.BlockSpec((pl.Squeezed(), cin, L), lambda i: (i, 0, 0))
    w_spec = pl.BlockSpec((9, cout, cin), lambda i: (0, 0, 0))
    b_spec = pl.BlockSpec((cout, 1), lambda i: (0, 0))
    o_spec = pl.BlockSpec((pl.Squeezed(), cout, L), lambda i: (i, 0, 0))

    if add is None:
        kernel = functools.partial(_conv_kernel, act=act, g=g)
        in_specs = [m_spec, x_spec, w_spec, b_spec]
        args = (mask, x, w9, b)
    else:
        kernel = functools.partial(_add_conv_kernel, act=act, g=g)
        a_spec = pl.BlockSpec((pl.Squeezed(), cin, L), lambda i: (i, 0, 0))
        in_specs = [m_spec, x_spec, a_spec, w_spec, b_spec]
        args = (mask, x, add, w9, b)

    return pl.pallas_call(
        kernel,
        out_shape=jax.ShapeDtypeStruct((B, cout, L), jnp.float32),
        grid=(B,),
        in_specs=in_specs,
        out_specs=o_spec,
        scratch_shapes=[pltpu.VMEM((cin, L), jnp.bfloat16)],
        compiler_params=pltpu.CompilerParams(
            dimension_semantics=("parallel",)),
    )(*args)


def residual_dense_block(x, blk, mask, g):
    """Fused ResidualDenseBlock: one pallas_call for 5 convs + 0.2 residual."""
    B, C, L = x.shape
    ws, b = blk["w"], blk["b"]
    m_spec = pl.BlockSpec((1, g.S), lambda i: (0, 0))
    x_spec = pl.BlockSpec((pl.Squeezed(), C, L), lambda i: (i, 0, 0))
    w_specs = [pl.BlockSpec(w.shape, lambda i: (0, 0)) for w in ws]
    b_spec = pl.BlockSpec(b.shape, lambda i: (0, 0, 0))
    o_spec = pl.BlockSpec((pl.Squeezed(), C, L), lambda i: (i, 0, 0))

    return pl.pallas_call(
        functools.partial(_rdb_kernel, C=C, g=g),
        out_shape=jax.ShapeDtypeStruct((B, C, L), jnp.float32),
        grid=(B,),
        in_specs=[m_spec, x_spec, *w_specs, b_spec],
        out_specs=o_spec,
        scratch_shapes=[
            pltpu.VMEM((C, L), jnp.bfloat16),            # current source
            pltpu.VMEM((9 * 4 * C, g.S), jnp.bfloat16),  # activated im2col
            pltpu.VMEM((9 * 5 * C, g.S), jnp.bfloat16),  # raw im2col
        ],
        compiler_params=pltpu.CompilerParams(
            dimension_semantics=("parallel",)),
    )(mask, x, *ws, b)


# ---------------------------------------------------------------------------
# Parameter construction (deterministic, synthetic) + host-side packing.
# ---------------------------------------------------------------------------

def _conv_params(key, cin, cout, scale=0.05):
    kw, kb = jax.random.split(key)
    w = jax.random.normal(kw, (cout, cin, 3, 3), jnp.float32) * scale   # OIHW
    b = jax.random.normal(kb, (cout,), jnp.float32) * 0.01
    return w, b


def _pack_conv_taps(w_oihw):
    # (Cout, Cin, 3, 3) -> (9, Cout, Cin), tap index t = dy*3 + dx.
    cout, cin = w_oihw.shape[:2]
    return jnp.transpose(w_oihw, (2, 3, 0, 1)).reshape(9, cout, cin)


def _pack_rdb_conv(w_oihw, C):
    # (G, k*C, 3, 3) -> (G, 9*k*C); column = (source j, tap t, channel c),
    # matching the kernel's im2col row layout (slab base 9*C*j, then t*C + c).
    G, cin = w_oihw.shape[:2]
    k = cin // C
    w = w_oihw.reshape(G, k, C, 3, 3)
    w = jnp.transpose(w, (0, 1, 3, 4, 2))          # (G, j, dy, dx, c)
    return w.reshape(G, k * 9 * C).astype(jnp.bfloat16)


def init_rrdbnet_params(key, in_ch, out_ch, mid_ch, growth_ch, num_blocks):
    # The module's `x5 * 0.2 + x` requires growth_channel == in_channel of the
    # block (true for the defaults mid=growth=32).
    assert mid_ch == growth_ch
    # bf16 im2col slabs are tiled (16, 128) on sublanes; keep slab bases aligned.
    assert mid_ch % 16 == 0, "mid/growth channels must be a multiple of 16"

    keys = jax.random.split(key, 3 + 5 * num_blocks)
    it = iter(keys)

    def prep_tap_conv(cin, cout):
        w, b = _conv_params(next(it), cin, cout)
        return (_pack_conv_taps(w).astype(jnp.bfloat16),
                b.reshape(cout, 1).astype(jnp.float32))

    params = {"fea": prep_tap_conv(in_ch, mid_ch)}
    blocks = []
    for _ in range(num_blocks):
        ws, bs = [], []
        for k in range(1, 6):
            w, b = _conv_params(next(it), mid_ch + (k - 1) * growth_ch, growth_ch)
            ws.append(_pack_rdb_conv(w, mid_ch))
            bs.append(b.reshape(growth_ch, 1))
        blocks.append({"w": tuple(ws), "b": jnp.stack(bs).astype(jnp.float32)})
    params["blocks"] = blocks
    params["hr"] = prep_tap_conv(mid_ch, mid_ch)
    params["final"] = prep_tap_conv(mid_ch, out_ch)
    # `lr_conv` is created in the PyTorch __init__ but never used in forward().
    return params


# ---------------------------------------------------------------------------
# Forward pass (mirrors RRDBNet.forward / ResidualDenseBlock.forward).
# ---------------------------------------------------------------------------

def rrdbnet_forward(x_nchw, params):
    B, Cin, H, W = x_nchw.shape
    g = make_geom(H, W)

    # NCHW -> padded-flat (B, C, L) layout: one pad for the whole network.
    xp = jnp.pad(x_nchw, ((0, 0), (0, 0), (1, 1), (1, 1)))          # (B,Cin,Hp,Wp)
    xf = xp.reshape(B, Cin, g.S)
    xf = jnp.pad(xf, ((0, 0), (0, 0), (g.OFF, g.L - g.OFF - g.S)))
    # Interior mask (1 inside the image, 0 on the padding ring), flat layout.
    mask = jnp.pad(jnp.ones((H, W), jnp.float32),
                   ((1, 1), (1, 1))).reshape(1, g.S)

    fea = conv3x3(xf, *params["fea"], mask, g)                      # fea_conv
    h = fea
    for blk in params["blocks"]:                                    # rb_blocks
        h = residual_dense_block(h, blk, mask, g)
    # hr_conv(fea + rb_blocks(fea)) with the trunk skip fused, then LeakyReLU.
    h = conv3x3(h, *params["hr"], mask, g, act=True, add=fea)
    h = conv3x3(h, *params["final"], mask, g)                       # final_conv

    # Un-pad back to NCHW (the (C, spatial) layout is already channel-major).
    out = h[:, :, g.OFF: g.OFF + g.S].reshape(B, -1, g.Hp, g.Wp)
    return out[:, :, 1:H + 1, 1:W + 1]


if __name__ == "__main__":
    # mid_channel == growth_channel as required by the in-block residual
    # (both default to 32 in the original module); 16 keeps the demo small.
    IN_CH, OUT_CH = 4, 4
    MID_CH, GROWTH_CH = 16, 16
    NUM_BLOCKS = 2
    B, H, W = 2, 16, 16

    root = jax.random.PRNGKey(0)
    k_x, k_p = jax.random.split(root)
    x = jax.random.normal(k_x, (B, IN_CH, H, W), jnp.float32)
    params = init_rrdbnet_params(k_p, IN_CH, OUT_CH, MID_CH, GROWTH_CH,
                                 NUM_BLOCKS)

    fwd = jax.jit(rrdbnet_forward)
    out = jax.block_until_ready(fwd(x, params))
    assert out.shape == (B, OUT_CH, H, W), out.shape
    assert bool(jnp.all(jnp.isfinite(out)))
    print("KERNEL_OK")
</pallas_src>

<mosaic_0001>
module attributes {stable_mosaic.version = 11 : i64} {
  func.func @_conv_kernel(%arg0: i32, %arg1: memref<1x324xf32, #tpu.memory_space<vmem>>, %arg2: memref<1x4x512xf32, #tpu.memory_space<vmem>>, %arg3: memref<9x16x4xbf16, #tpu.memory_space<vmem>>, %arg4: memref<16x1xf32, #tpu.memory_space<vmem>>, %arg5: memref<1x16x512xf32, #tpu.memory_space<vmem>>, %arg6: memref<4x512xbf16, #tpu.memory_space<vmem>>) attributes {dimension_semantics = [#tpu.dimension_semantics<parallel>], iteration_bounds = array<i64: 2>, scalar_prefetch = 0 : i64, scratch_operands = 1 : i64, tpu.core_type = #tpu.core_type<tc>, window_params = [{pipeline_mode = #tpu.pipeline_mode<synchronous>, transform_indices = @transform_0, window_bounds = array<i64: 1, 324>}, {transform_indices = @transform_1, window_bounds = array<i64: 1, 4, 512>}, {pipeline_mode = #tpu.pipeline_mode<synchronous>, transform_indices = @transform_2, window_bounds = array<i64: 9, 16, 4>}, {pipeline_mode = #tpu.pipeline_mode<synchronous>, transform_indices = @transform_3, window_bounds = array<i64: 16, 1>}, {transform_indices = @transform_4, window_bounds = array<i64: 1, 16, 512>}]} {
    %c0 = arith.constant 0 : index
    %c0_0 = arith.constant 0 : index
    %c0_1 = arith.constant 0 : index
    %0 = vector.load %arg2[%c0, %c0_0, %c0_1] : memref<1x4x512xf32, #tpu.memory_space<vmem>>, vector<1x4x512xf32>
    %1 = vector.shape_cast %0 : vector<1x4x512xf32> to vector<4x512xf32>
    %2 = arith.truncf %1 : vector<4x512xf32> to vector<4x512xbf16>
    %c0_2 = arith.constant 0 : index
    %c0_3 = arith.constant 0 : index
    %3 = vector.load %arg6[%c0_2, %c0_3] : memref<4x512xbf16, #tpu.memory_space<vmem>>, vector<4x512xbf16>
    tpu.vector_store %arg6[%c0_2, %c0_3], %2 {strides = array<i32>} : memref<4x512xbf16, #tpu.memory_space<vmem>>, vector<4x512xbf16>,
    %c0_4 = arith.constant 0 : index
    %c0_5 = arith.constant 0 : index
    %4 = vector.load %arg1[%c0_4, %c0_5] : memref<1x324xf32, #tpu.memory_space<vmem>>, vector<1x324xf32>
    %cst = arith.constant 0.000000e+00 : f32
    %5 = vector.broadcast %cst : f32 to vector<16x324xf32>
    %c0_6 = arith.constant 0 : index
    %c109 = arith.constant 109 : index
    %6 = vector.load %arg6[%c0_6, %c109] : memref<4x512xbf16, #tpu.memory_space<vmem>>, vector<4x324xbf16>
    %c0_7 = arith.constant 0 : index
    %c0_8 = arith.constant 0 : index
    %c0_9 = arith.constant 0 : index
    %7 = vector.load %arg3[%c0_7, %c0_8, %c0_9] : memref<9x16x4xbf16, #tpu.memory_space<vmem>>, vector<1x16x4xbf16>
    %8 = vector.shape_cast %7 : vector<1x16x4xbf16> to vector<16x4xbf16>
    %cst_10 = arith.constant dense<0.000000e+00> : vector<16x324xf32>
    %9 = tpu.matmul %8, %6, %cst_10 {dimension_numbers = #tpu.dot_dimension_numbers<[1], [0], [0], [1], [0, 0, 1, 1], [], []>} : vector<16x4xbf16>, vector<4x324xbf16>, vector<16x324xf32> -> vector<16x324xf32>
    %10 = arith.addf %5, %9 : vector<16x324xf32>
    %c0_11 = arith.constant 0 : index
    %c110 = arith.constant 110 : index
    %11 = vector.load %arg6[%c0_11, %c110] : memref<4x512xbf16, #tpu.memory_space<vmem>>, vector<4x324xbf16>
    %c1 = arith.constant 1 : index
    %c0_12 = arith.constant 0 : index
    %c0_13 = arith.constant 0 : index
    %12 = vector.load %arg3[%c1, %c0_12, %c0_13] : memref<9x16x4xbf16, #tpu.memory_space<vmem>>, vector<1x16x4xbf16>
    %13 = vector.shape_cast %12 : vector<1x16x4xbf16> to vector<16x4xbf16>
    %cst_14 = arith.constant dense<0.000000e+00> : vector<16x324xf32>
    %14 = tpu.matmul %13, %11, %cst_14 {dimension_numbers = #tpu.dot_dimension_numbers<[1], [0], [0], [1], [0, 0, 1, 1], [], []>} : vector<16x4xbf16>, vector<4x324xbf16>, vector<16x324xf32> -> vector<16x324xf32>
    %15 = arith.addf %10, %14 : vector<16x324xf32>
    %c0_15 = arith.constant 0 : index
    %c111 = arith.constant 111 : index
    %16 = vector.load %arg6[%c0_15, %c111] : memref<4x512xbf16, #tpu.memory_space<vmem>>, vector<4x324xbf16>
    %c2 = arith.constant 2 : index
    %c0_16 = arith.constant 0 : index
    %c0_17 = arith.constant 0 : index
    %17 = vector.load %arg3[%c2, %c0_16, %c0_17] : memref<9x16x4xbf16, #tpu.memory_space<vmem>>, vector<1x16x4xbf16>
    %18 = vector.shape_cast %17 : vector<1x16x4xbf16> to vector<16x4xbf16>
    %cst_18 = arith.constant dense<0.000000e+00> : vector<16x324xf32>
    %19 = tpu.matmul %18, %16, %cst_18 {dimension_numbers = #tpu.dot_dimension_numbers<[1], [0], [0], [1], [0, 0, 1, 1], [], []>} : vector<16x4xbf16>, vector<4x324xbf16>, vector<16x324xf32> -> vector<16x324xf32>
    %20 = arith.addf %15, %19 : vector<16x324xf32>
    %c0_19 = arith.constant 0 : index
    %c127 = arith.constant 127 : index
    %21 = vector.load %arg6[%c0_19, %c127] : memref<4x512xbf16, #tpu.memory_space<vmem>>, vector<4x324xbf16>
    %c3 = arith.constant 3 : index
    %c0_20 = arith.constant 0 : index
    %c0_21 = arith.constant 0 : index
    %22 = vector.load %arg3[%c3, %c0_20, %c0_21] : memref<9x16x4xbf16, #tpu.memory_space<vmem>>, vector<1x16x4xbf16>
    %23 = vector.shape_cast %22 : vector<1x16x4xbf16> to vector<16x4xbf16>
    %cst_22 = arith.constant dense<0.000000e+00> : vector<16x324xf32>
    %24 = tpu.matmul %23, %21, %cst_22 {dimension_numbers = #tpu.dot_dimension_numbers<[1], [0], [0], [1], [0, 0, 1, 1], [], []>} : vector<16x4xbf16>, vector<4x324xbf16>, vector<16x324xf32> -> vector<16x324xf32>
    %25 = arith.addf %20, %24 : vector<16x324xf32>
    %c0_23 = arith.constant 0 : index
    %c128 = arith.constant 128 : index
    %26 = vector.load %arg6[%c0_23, %c128] : memref<4x512xbf16, #tpu.memory_space<vmem>>, vector<4x324xbf16>
    %c4 = arith.constant 4 : index
    %c0_24 = arith.constant 0 : index
    %c0_25 = arith.constant 0 : index
    %27 = vector.load %arg3[%c4, %c0_24, %c0_25] : memref<9x16x4xbf16, #tpu.memory_space<vmem>>, vector<1x16x4xbf16>
    %28 = vector.shape_cast %27 : vector<1x16x4xbf16> to vector<16x4xbf16>
    %cst_26 = arith.constant dense<0.000000e+00> : vector<16x324xf32>
    %29 = tpu.matmul %28, %26, %cst_26 {dimension_numbers = #tpu.dot_dimension_numbers<[1], [0], [0], [1], [0, 0, 1, 1], [], []>} : vector<16x4xbf16>, vector<4x324xbf16>, vector<16x324xf32> -> vector<16x324xf32>
    %30 = arith.addf %25, %29 : vector<16x324xf32>
    %c0_27 = arith.constant 0 : index
    %c129 = arith.constant 129 : index
    %31 = vector.load %arg6[%c0_27, %c129] : memref<4x512xbf16, #tpu.memory_space<vmem>>, vector<4x324xbf16>
    %c5 = arith.constant 5 : index
    %c0_28 = arith.constant 0 : index
    %c0_29 = arith.constant 0 : index
    %32 = vector.load %arg3[%c5, %c0_28, %c0_29] : memref<9x16x4xbf16, #tpu.memory_space<vmem>>, vector<1x16x4xbf16>
    %33 = vector.shape_cast %32 : vector<1x16x4xbf16> to vector<16x4xbf16>
    %cst_30 = arith.constant dense<0.000000e+00> : vector<16x324xf32>
    %34 = tpu.matmul %33, %31, %cst_30 {dimension_numbers = #tpu.dot_dimension_numbers<[1], [0], [0], [1], [0, 0, 1, 1], [], []>} : vector<16x4xbf16>, vector<4x324xbf16>, vector<16x324xf32> -> vector<16x324xf32>
    %35 = arith.addf %30, %34 : vector<16x324xf32>
    %c0_31 = arith.constant 0 : index
    %c145 = arith.constant 145 : index
    %36 = vector.load %arg6[%c0_31, %c145] : memref<4x512xbf16, #tpu.memory_space<vmem>>, vector<4x324xbf16>
    %c6 = arith.constant 6 : index
    %c0_32 = arith.constant 0 : index
    %c0_33 = arith.constant 0 : index
    %37 = vector.load %arg3[%c6, %c0_32, %c0_33] : memref<9x16x4xbf16, #tpu.memory_space<vmem>>, vector<1x16x4xbf16>
    %38 = vector.shape_cast %37 : vector<1x16x4xbf16> to vector<16x4xbf16>
    %cst_34 = arith.constant dense<0.000000e+00> : vector<16x324xf32>
    %39 = tpu.matmul %38, %36, %cst_34 {dimension_numbers = #tpu.dot_dimension_numbers<[1], [0], [0], [1], [0, 0, 1, 1], [], []>} : vector<16x4xbf16>, vector<4x324xbf16>, vector<16x324xf32> -> vector<16x324xf32>
    %40 = arith.addf %35, %39 : vector<16x324xf32>
    %c0_35 = arith.constant 0 : index
    %c146 = arith.constant 146 : index
    %41 = vector.load %arg6[%c0_35, %c146] : memref<4x512xbf16, #tpu.memory_space<vmem>>, vector<4x324xbf16>
    %c7 = arith.constant 7 : index
    %c0_36 = arith.constant 0 : index
    %c0_37 = arith.constant 0 : index
    %42 = vector.load %arg3[%c7, %c0_36, %c0_37] : memref<9x16x4xbf16, #tpu.memory_space<vmem>>, vector<1x16x4xbf16>
    %43 = vector.shape_cast %42 : vector<1x16x4xbf16> to vector<16x4xbf16>
    %cst_38 = arith.constant dense<0.000000e+00> : vector<16x324xf32>
    %44 = tpu.matmul %43, %41, %cst_38 {dimension_numbers = #tpu.dot_dimension_numbers<[1], [0], [0], [1], [0, 0, 1, 1], [], []>} : vector<16x4xbf16>, vector<4x324xbf16>, vector<16x324xf32> -> vector<16x324xf32>
    %45 = arith.addf %40, %44 : vector<16x324xf32>
    %c0_39 = arith.constant 0 : index
    %c147 = arith.constant 147 : index
    %46 = vector.load %arg6[%c0_39, %c147] : memref<4x512xbf16, #tpu.memory_space<vmem>>, vector<4x324xbf16>
    %c8 = arith.constant 8 : index
    %c0_40 = arith.constant 0 : index
    %c0_41 = arith.constant 0 : index
    %47 = vector.load %arg3[%c8, %c0_40, %c0_41] : memref<9x16x4xbf16, #tpu.memory_space<vmem>>, vector<1x16x4xbf16>
    %48 = vector.shape_cast %47 : vector<1x16x4xbf16> to vector<16x4xbf16>
    %cst_42 = arith.constant dense<0.000000e+00> : vector<16x324xf32>
    %49 = tpu.matmul %48, %46, %cst_42 {dimension_numbers = #tpu.dot_dimension_numbers<[1], [0], [0], [1], [0, 0, 1, 1], [], []>} : vector<16x4xbf16>, vector<4x324xbf16>, vector<16x324xf32> -> vector<16x324xf32>
    %50 = arith.addf %45, %49 : vector<16x324xf32>
    %c0_43 = arith.constant 0 : index
    %c0_44 = arith.constant 0 : index
    %51 = vector.load %arg4[%c0_43, %c0_44] : memref<16x1xf32, #tpu.memory_space<vmem>>, vector<16x1xf32>
    %52 = vector.broadcast %51 : vector<16x1xf32> to vector<16x324xf32>
    %53 = arith.addf %50, %52 : vector<16x324xf32>
    %54 = vector.broadcast %4 : vector<1x324xf32> to vector<16x324xf32>
    %55 = arith.mulf %53, %54 : vector<16x324xf32>
    %cst_45 = arith.constant 0.000000e+00 : f32
    %56 = vector.broadcast %cst_45 : f32 to vector<16x128xf32>
    %c0_46 = arith.constant 0 : index
    %c0_47 = arith.constant 0 : index
    %c0_48 = arith.constant 0 : index
    %57 = vector.load %arg5[%c0_46, %c0_47, %c0_48] : memref<1x16x512xf32, #tpu.memory_space<vmem>>, vector<1x16x128xf32>
    %58 = vector.shape_cast %57 : vector<1x16x128xf32> to vector<16x128xf32>
    %59 = vector.shape_cast %56 : vector<16x128xf32> to vector<1x16x128xf32>
    tpu.vector_store %arg5[%c0_46, %c0_47, %c0_48], %59 {strides = array<i32>} : memref<1x16x512xf32, #tpu.memory_space<vmem>>, vector<1x16x128xf32>,
    %c0_49 = arith.constant 0 : index
    %c0_50 = arith.constant 0 : index
    %c128_51 = arith.constant 128 : index
    %60 = vector.load %arg5[%c0_49, %c0_50, %c128_51] : memref<1x16x512xf32, #tpu.memory_space<vmem>>, vector<1x16x324xf32>
    %61 = vector.shape_cast %60 : vector<1x16x324xf32> to vector<16x324xf32>
    %62 = vector.shape_cast %55 : vector<16x324xf32> to vector<1x16x324xf32>
    tpu.vector_store %arg5[%c0_49, %c0_50, %c128_51], %62 {strides = array<i32>} : memref<1x16x512xf32, #tpu.memory_space<vmem>>, vector<1x16x324xf32>,
    %cst_52 = arith.constant 0.000000e+00 : f32
    %63 = vector.broadcast %cst_52 : f32 to vector<16x60xf32>
    %c0_53 = arith.constant 0 : index
    %c0_54 = arith.constant 0 : index
    %c452 = arith.constant 452 : index
    %64 = vector.load %arg5[%c0_53, %c0_54, %c452] : memref<1x16x512xf32, #tpu.memory_space<vmem>>, vector<1x16x60xf32>
    %65 = vector.shape_cast %64 : vector<1x16x60xf32> to vector<16x60xf32>
    %66 = vector.shape_cast %63 : vector<16x60xf32> to vector<1x16x60xf32>
    tpu.vector_store %arg5[%c0_53, %c0_54, %c452], %66 {strides = array<i32>} : memref<1x16x512xf32, #tpu.memory_space<vmem>>, vector<1x16x60xf32>,
    return
  }
  func.func @transform_0(%arg0: i32) -> (i32, i32) {
    %c0_i32 = arith.constant 0 : i32
    %c0_i32_0 = arith.constant 0 : i32
    %c0_i32_1 = arith.constant 0 : i32
    return %c0_i32, %c0_i32_0 : i32, i32
  }
  func.func @transform_1(%arg0: i32) -> (i32, i32, i32) {
    %c0_i32 = arith.constant 0 : i32
    %c0_i32_0 = arith.constant 0 : i32
    %c0_i32_1 = arith.constant 0 : i32
    return %arg0, %c0_i32, %c0_i32_0 : i32, i32, i32
  }
  func.func @transform_2(%arg0: i32) -> (i32, i32, i32) {
    %c0_i32 = arith.constant 0 : i32
    %c0_i32_0 = arith.constant 0 : i32
    %c0_i32_1 = arith.constant 0 : i32
    %c0_i32_2 = arith.constant 0 : i32
    return %c0_i32, %c0_i32_0, %c0_i32_1 : i32, i32, i32
  }
  func.func @transform_3(%arg0: i32) -> (i32, i32) {
    %c0_i32 = arith.constant 0 : i32
    %c0_i32_0 = arith.constant 0 : i32
    %c0_i32_1 = arith.constant 0 : i32
    return %c0_i32, %c0_i32_0 : i32, i32
  }
  func.func @transform_4(%arg0: i32) -> (i32, i32, i32) {
    %c0_i32 = arith.constant 0 : i32
    %c0_i32_0 = arith.constant 0 : i32
    %c0_i32_1 = arith.constant 0 : i32
    return %arg0, %c0_i32, %c0_i32_0 : i32, i32, i32
  }
}

module attributes {stable_mosaic.version = 11 : i64} {
  func.func @_add_conv_kernel(%arg0: i32, %arg1: memref<1x324xf32, #tpu.memory_space<vmem>>, %arg2: memref<1x16x512xf32, #tpu.memory_space<vmem>>, %arg3: memref<1x16x512xf32, #tpu.memory_space<vmem>>, %arg4: memref<9x16x16xbf16, #tpu.memory_space<vmem>>, %arg5: memref<16x1xf32, #tpu.memory_space<vmem>>, %arg6: memref<1x16x512xf32, #tpu.memory_space<vmem>>, %arg7: memref<16x512xbf16, #tpu.memory_space<vmem>>) attributes {dimension_semantics = [#tpu.dimension_semantics<parallel>], iteration_bounds = array<i64: 2>, scalar_prefetch = 0 : i64, scratch_operands = 1 : i64, tpu.core_type = #tpu.core_type<tc>, window_params = [{pipeline_mode = #tpu.pipeline_mode<synchronous>, transform_indices = @transform_0, window_bounds = array<i64: 1, 324>}, {transform_indices = @transform_1, window_bounds = array<i64: 1, 16, 512>}, {transform_indices = @transform_2, window_bounds = array<i64: 1, 16, 512>}, {pipeline_mode = #tpu.pipeline_mode<synchronous>, transform_indices = @transform_3, window_bounds = array<i64: 9, 16, 16>}, {pipeline_mode = #tpu.pipeline_mode<synchronous>, transform_indices = @transform_4, window_bounds = array<i64: 16, 1>}, {transform_indices = @transform_5, window_bounds = array<i64: 1, 16, 512>}]} {
    %c0 = arith.constant 0 : index
    %c0_0 = arith.constant 0 : index
    %c0_1 = arith.constant 0 : index
    %0 = vector.load %arg2[%c0, %c0_0, %c0_1] : memref<1x16x512xf32, #tpu.memory_space<vmem>>, vector<1x16x512xf32>
    %1 = vector.shape_cast %0 : vector<1x16x512xf32> to vector<16x512xf32>
    %c0_2 = arith.constant 0 : index
    %c0_3 = arith.constant 0 : index
    %c0_4 = arith.constant 0 : index
    %2 = vector.load %arg3[%c0_2, %c0_3, %c0_4] : memref<1x16x512xf32, #tpu.memory_space<vmem>>, vector<1x16x512xf32>
    %3 = vector.shape_cast %2 : vector<1x16x512xf32> to vector<16x512xf32>
    %4 = arith.addf %1, %3 : vector<16x512xf32>
    %5 = arith.truncf %4 : vector<16x512xf32> to vector<16x512xbf16>
    %c0_5 = arith.constant 0 : index
    %c0_6 = arith.constant 0 : index
    %6 = vector.load %arg7[%c0_5, %c0_6] : memref<16x512xbf16, #tpu.memory_space<vmem>>, vector<16x512xbf16>
    tpu.vector_store %arg7[%c0_5, %c0_6], %5 {strides = array<i32>} : memref<16x512xbf16, #tpu.memory_space<vmem>>, vector<16x512xbf16>,
    %c0_7 = arith.constant 0 : index
    %c0_8 = arith.constant 0 : index
    %7 = vector.load %arg1[%c0_7, %c0_8] : memref<1x324xf32, #tpu.memory_space<vmem>>, vector<1x324xf32>
    %cst = arith.constant 0.000000e+00 : f32
    %8 = vector.broadcast %cst : f32 to vector<16x324xf32>
    %c0_9 = arith.constant 0 : index
    %c109 = arith.constant 109 : index
    %9 = vector.load %arg7[%c0_9, %c109] : memref<16x512xbf16, #tpu.memory_space<vmem>>, vector<16x324xbf16>
    %c0_10 = arith.constant 0 : index
    %c0_11 = arith.constant 0 : index
    %c0_12 = arith.constant 0 : index
    %10 = vector.load %arg4[%c0_10, %c0_11, %c0_12] : memref<9x16x16xbf16, #tpu.memory_space<vmem>>, vector<1x16x16xbf16>
    %11 = vector.shape_cast %10 : vector<1x16x16xbf16> to vector<16x16xbf16>
    %cst_13 = arith.constant dense<0.000000e+00> : vector<16x324xf32>
    %12 = tpu.matmul %11, %9, %cst_13 {dimension_numbers = #tpu.dot_dimension_numbers<[1], [0], [0], [1], [0, 0, 1, 1], [], []>} : vector<16x16xbf16>, vector<16x324xbf16>, vector<16x324xf32> -> vector<16x324xf32>
    %13 = arith.addf %8, %12 : vector<16x324xf32>
    %c0_14 = arith.constant 0 : index
    %c110 = arith.constant 110 : index
    %14 = vector.load %arg7[%c0_14, %c110] : memref<16x512xbf16, #tpu.memory_space<vmem>>, vector<16x324xbf16>
    %c1 = arith.constant 1 : index
    %c0_15 = arith.constant 0 : index
    %c0_16 = arith.constant 0 : index
    %15 = vector.load %arg4[%c1, %c0_15, %c0_16] : memref<9x16x16xbf16, #tpu.memory_space<vmem>>, vector<1x16x16xbf16>
    %16 = vector.shape_cast %15 : vector<1x16x16xbf16> to vector<16x16xbf16>
    %cst_17 = arith.constant dense<0.000000e+00> : vector<16x324xf32>
    %17 = tpu.matmul %16, %14, %cst_17 {dimension_numbers = #tpu.dot_dimension_numbers<[1], [0], [0], [1], [0, 0, 1, 1], [], []>} : vector<16x16xbf16>, vector<16x324xbf16>, vector<16x324xf32> -> vector<16x324xf32>
    %18 = arith.addf %13, %17 : vector<16x324xf32>
    %c0_18 = arith.constant 0 : index
    %c111 = arith.constant 111 : index
    %19 = vector.load %arg7[%c0_18, %c111] : memref<16x512xbf16, #tpu.memory_space<vmem>>, vector<16x324xbf16>
    %c2 = arith.constant 2 : index
    %c0_19 = arith.constant 0 : index
    %c0_20 = arith.constant 0 : index
    %20 = vector.load %arg4[%c2, %c0_19, %c0_20] : memref<9x16x16xbf16, #tpu.memory_space<vmem>>, vector<1x16x16xbf16>
    %21 = vector.shape_cast %20 : vector<1x16x16xbf16> to vector<16x16xbf16>
    %cst_21 = arith.constant dense<0.000000e+00> : vector<16x324xf32>
    %22 = tpu.matmul %21, %19, %cst_21 {dimension_numbers = #tpu.dot_dimension_numbers<[1], [0], [0], [1], [0, 0, 1, 1], [], []>} : vector<16x16xbf16>, vector<16x324xbf16>, vector<16x324xf32> -> vector<16x324xf32>
    %23 = arith.addf %18, %22 : vector<16x324xf32>
    %c0_22 = arith.constant 0 : index
    %c127 = arith.constant 127 : index
    %24 = vector.load %arg7[%c0_22, %c127] : memref<16x512xbf16, #tpu.memory_space<vmem>>, vector<16x324xbf16>
    %c3 = arith.constant 3 : index
    %c0_23 = arith.constant 0 : index
    %c0_24 = arith.constant 0 : index
    %25 = vector.load %arg4[%c3, %c0_23, %c0_24] : memref<9x16x16xbf16, #tpu.memory_space<vmem>>, vector<1x16x16xbf16>
    %26 = vector.shape_cast %25 : vector<1x16x16xbf16> to vector<16x16xbf16>
    %cst_25 = arith.constant dense<0.000000e+00> : vector<16x324xf32>
    %27 = tpu.matmul %26, %24, %cst_25 {dimension_numbers = #tpu.dot_dimension_numbers<[1], [0], [0], [1], [0, 0, 1, 1], [], []>} : vector<16x16xbf16>, vector<16x324xbf16>, vector<16x324xf32> -> vector<16x324xf32>
    %28 = arith.addf %23, %27 : vector<16x324xf32>
    %c0_26 = arith.constant 0 : index
    %c128 = arith.constant 128 : index
    %29 = vector.load %arg7[%c0_26, %c128] : memref<16x512xbf16, #tpu.memory_space<vmem>>, vector<16x324xbf16>
    %c4 = arith.constant 4 : index
    %c0_27 = arith.constant 0 : index
    %c0_28 = arith.constant 0 : index
    %30 = vector.load %arg4[%c4, %c0_27, %c0_28] : memref<9x16x16xbf16, #tpu.memory_space<vmem>>, vector<1x16x16xbf16>
    %31 = vector.shape_cast %30 : vector<1x16x16xbf16> to vector<16x16xbf16>
    %cst_29 = arith.constant dense<0.000000e+00> : vector<16x324xf32>
    %32 = tpu.matmul %31, %29, %cst_29 {dimension_numbers = #tpu.dot_dimension_numbers<[1], [0], [0], [1], [0, 0, 1, 1], [], []>} : vector<16x16xbf16>, vector<16x324xbf16>, vector<16x324xf32> -> vector<16x324xf32>
    %33 = arith.addf %28, %32 : vector<16x324xf32>
    %c0_30 = arith.constant 0 : index
    %c129 = arith.constant 129 : index
    %34 = vector.load %arg7[%c0_30, %c129] : memref<16x512xbf16, #tpu.memory_space<vmem>>, vector<16x324xbf16>
    %c5 = arith.constant 5 : index
    %c0_31 = arith.constant 0 : index
    %c0_32 = arith.constant 0 : index
    %35 = vector.load %arg4[%c5, %c0_31, %c0_32] : memref<9x16x16xbf16, #tpu.memory_space<vmem>>, vector<1x16x16xbf16>
    %36 = vector.shape_cast %35 : vector<1x16x16xbf16> to vector<16x16xbf16>
    %cst_33 = arith.constant dense<0.000000e+00> : vector<16x324xf32>
    %37 = tpu.matmul %36, %34, %cst_33 {dimension_numbers = #tpu.dot_dimension_numbers<[1], [0], [0], [1], [0, 0, 1, 1], [], []>} : vector<16x16xbf16>, vector<16x324xbf16>, vector<16x324xf32> -> vector<16x324xf32>
    %38 = arith.addf %33, %37 : vector<16x324xf32>
    %c0_34 = arith.constant 0 : index
    %c145 = arith.constant 145 : index
    %39 = vector.load %arg7[%c0_34, %c145] : memref<16x512xbf16, #tpu.memory_space<vmem>>, vector<16x324xbf16>
    %c6 = arith.constant 6 : index
    %c0_35 = arith.constant 0 : index
    %c0_36 = arith.constant 0 : index
    %40 = vector.load %arg4[%c6, %c0_35, %c0_36] : memref<9x16x16xbf16, #tpu.memory_space<vmem>>, vector<1x16x16xbf16>
    %41 = vector.shape_cast %40 : vector<1x16x16xbf16> to vector<16x16xbf16>
    %cst_37 = arith.constant dense<0.000000e+00> : vector<16x324xf32>
    %42 = tpu.matmul %41, %39, %cst_37 {dimension_numbers = #tpu.dot_dimension_numbers<[1], [0], [0], [1], [0, 0, 1, 1], [], []>} : vector<16x16xbf16>, vector<16x324xbf16>, vector<16x324xf32> -> vector<16x324xf32>
    %43 = arith.addf %38, %42 : vector<16x324xf32>
    %c0_38 = arith.constant 0 : index
    %c146 = arith.constant 146 : index
    %44 = vector.load %arg7[%c0_38, %c146] : memref<16x512xbf16, #tpu.memory_space<vmem>>, vector<16x324xbf16>
    %c7 = arith.constant 7 : index
    %c0_39 = arith.constant 0 : index
    %c0_40 = arith.constant 0 : index
    %45 = vector.load %arg4[%c7, %c0_39, %c0_40] : memref<9x16x16xbf16, #tpu.memory_space<vmem>>, vector<1x16x16xbf16>
    %46 = vector.shape_cast %45 : vector<1x16x16xbf16> to vector<16x16xbf16>
    %cst_41 = arith.constant dense<0.000000e+00> : vector<16x324xf32>
    %47 = tpu.matmul %46, %44, %cst_41 {dimension_numbers = #tpu.dot_dimension_numbers<[1], [0], [0], [1], [0, 0, 1, 1], [], []>} : vector<16x16xbf16>, vector<16x324xbf16>, vector<16x324xf32> -> vector<16x324xf32>
    %48 = arith.addf %43, %47 : vector<16x324xf32>
    %c0_42 = arith.constant 0 : index
    %c147 = arith.constant 147 : index
    %49 = vector.load %arg7[%c0_42, %c147] : memref<16x512xbf16, #tpu.memory_space<vmem>>, vector<16x324xbf16>
    %c8 = arith.constant 8 : index
    %c0_43 = arith.constant 0 : index
    %c0_44 = arith.constant 0 : index
    %50 = vector.load %arg4[%c8, %c0_43, %c0_44] : memref<9x16x16xbf16, #tpu.memory_space<vmem>>, vector<1x16x16xbf16>
    %51 = vector.shape_cast %50 : vector<1x16x16xbf16> to vector<16x16xbf16>
    %cst_45 = arith.constant dense<0.000000e+00> : vector<16x324xf32>
    %52 = tpu.matmul %51, %49, %cst_45 {dimension_numbers = #tpu.dot_dimension_numbers<[1], [0], [0], [1], [0, 0, 1, 1], [], []>} : vector<16x16xbf16>, vector<16x324xbf16>, vector<16x324xf32> -> vector<16x324xf32>
    %53 = arith.addf %48, %52 : vector<16x324xf32>
    %c0_46 = arith.constant 0 : index
    %c0_47 = arith.constant 0 : index
    %54 = vector.load %arg5[%c0_46, %c0_47] : memref<16x1xf32, #tpu.memory_space<vmem>>, vector<16x1xf32>
    %55 = vector.broadcast %54 : vector<16x1xf32> to vector<16x324xf32>
    %56 = arith.addf %53, %55 : vector<16x324xf32>
    %cst_48 = arith.constant 0.000000e+00 : f32
    %57 = vector.broadcast %cst_48 : f32 to vector<16x324xf32>
    %58 = arith.cmpf oge, %56, %57 : vector<16x324xf32>
    %cst_49 = arith.constant 1.000000e-01 : f32
    %59 = vector.broadcast %cst_49 : f32 to vector<16x324xf32>
    %60 = arith.mulf %59, %56 : vector<16x324xf32>
    %61 = arith.select %58, %56, %60 : vector<16x324xi1>, vector<16x324xf32>
    %62 = vector.broadcast %7 : vector<1x324xf32> to vector<16x324xf32>
    %63 = arith.mulf %61, %62 : vector<16x324xf32>
    %cst_50 = arith.constant 0.000000e+00 : f32
    %64 = vector.broadcast %cst_50 : f32 to vector<16x128xf32>
    %c0_51 = arith.constant 0 : index
    %c0_52 = arith.constant 0 : index
    %c0_53 = arith.constant 0 : index
    %65 = vector.load %arg6[%c0_51, %c0_52, %c0_53] : memref<1x16x512xf32, #tpu.memory_space<vmem>>, vector<1x16x128xf32>
    %66 = vector.shape_cast %65 : vector<1x16x128xf32> to vector<16x128xf32>
    %67 = vector.shape_cast %64 : vector<16x128xf32> to vector<1x16x128xf32>
    tpu.vector_store %arg6[%c0_51, %c0_52, %c0_53], %67 {strides = array<i32>} : memref<1x16x512xf32, #tpu.memory_space<vmem>>, vector<1x16x128xf32>,
    %c0_54 = arith.constant 0 : index
    %c0_55 = arith.constant 0 : index
    %c128_56 = arith.constant 128 : index
    %68 = vector.load %arg6[%c0_54, %c0_55, %c128_56] : memref<1x16x512xf32, #tpu.memory_space<vmem>>, vector<1x16x324xf32>
    %69 = vector.shape_cast %68 : vector<1x16x324xf32> to vector<16x324xf32>
    %70 = vector.shape_cast %63 : vector<16x324xf32> to vector<1x16x324xf32>
    tpu.vector_store %arg6[%c0_54, %c0_55, %c128_56], %70 {strides = array<i32>} : memref<1x16x512xf32, #tpu.memory_space<vmem>>, vector<1x16x324xf32>,
    %cst_57 = arith.constant 0.000000e+00 : f32
    %71 = vector.broadcast %cst_57 : f32 to vector<16x60xf32>
    %c0_58 = arith.constant 0 : index
    %c0_59 = arith.constant 0 : index
    %c452 = arith.constant 452 : index
    %72 = vector.load %arg6[%c0_58, %c0_59, %c452] : memref<1x16x512xf32, #tpu.memory_space<vmem>>, vector<1x16x60xf32>
    %73 = vector.shape_cast %72 : vector<1x16x60xf32> to vector<16x60xf32>
    %74 = vector.shape_cast %71 : vector<16x60xf32> to vector<1x16x60xf32>
    tpu.vector_store %arg6[%c0_58, %c0_59, %c452], %74 {strides = array<i32>} : memref<1x16x512xf32, #tpu.memory_space<vmem>>, vector<1x16x60xf32>,
    return
  }
  func.func @transform_0(%arg0: i32) -> (i32, i32) {
    %c0_i32 = arith.constant 0 : i32
    %c0_i32_0 = arith.constant 0 : i32
    %c0_i32_1 = arith.constant 0 : i32
    return %c0_i32, %c0_i32_0 : i32, i32
  }
  func.func @transform_1(%arg0: i32) -> (i32, i32, i32) {
    %c0_i32 = arith.constant 0 : i32
    %c0_i32_0 = arith.constant 0 : i32
    %c0_i32_1 = arith.constant 0 : i32
    return %arg0, %c0_i32, %c0_i32_0 : i32, i32, i32
  }
  func.func @transform_2(%arg0: i32) -> (i32, i32, i32) {
    %c0_i32 = arith.constant 0 : i32
    %c0_i32_0 = arith.constant 0 : i32
    %c0_i32_1 = arith.constant 0 : i32
    return %arg0, %c0_i32, %c0_i32_0 : i32, i32, i32
  }
  func.func @transform_3(%arg0: i32) -> (i32, i32, i32) {
    %c0_i32 = arith.constant 0 : i32
    %c0_i32_0 = arith.constant 0 : i32
    %c0_i32_1 = arith.constant 0 : i32
    %c0_i32_2 = arith.constant 0 : i32
    return %c0_i32, %c0_i32_0, %c0_i32_1 : i32, i32, i32
  }
  func.func @transform_4(%arg0: i32) -> (i32, i32) {
    %c0_i32 = arith.constant 0 : i32
    %c0_i32_0 = arith.constant 0 : i32
    %c0_i32_1 = arith.constant 0 : i32
    return %c0_i32, %c0_i32_0 : i32, i32
  }
  func.func @transform_5(%arg0: i32) -> (i32, i32, i32) {
    %c0_i32 = arith.constant 0 : i32
    %c0_i32_0 = arith.constant 0 : i32
    %c0_i32_1 = arith.constant 0 : i32
    return %arg0, %c0_i32, %c0_i32_0 : i32, i32, i32
  }
}

module attributes {stable_mosaic.version = 11 : i64} {
  func.func @_conv_kernel(%arg0: i32, %arg1: memref<1x324xf32, #tpu.memory_space<vmem>>, %arg2: memref<1x16x512xf32, #tpu.memory_space<vmem>>, %arg3: memref<9x4x16xbf16, #tpu.memory_space<vmem>>, %arg4: memref<4x1xf32, #tpu.memory_space<vmem>>, %arg5: memref<1x4x512xf32, #tpu.memory_space<vmem>>, %arg6: memref<16x512xbf16, #tpu.memory_space<vmem>>) attributes {dimension_semantics = [#tpu.dimension_semantics<parallel>], iteration_bounds = array<i64: 2>, scalar_prefetch = 0 : i64, scratch_operands = 1 : i64, tpu.core_type = #tpu.core_type<tc>, window_params = [{pipeline_mode = #tpu.pipeline_mode<synchronous>, transform_indices = @transform_0, window_bounds = array<i64: 1, 324>}, {transform_indices = @transform_1, window_bounds = array<i64: 1, 16, 512>}, {pipeline_mode = #tpu.pipeline_mode<synchronous>, transform_indices = @transform_2, window_bounds = array<i64: 9, 4, 16>}, {pipeline_mode = #tpu.pipeline_mode<synchronous>, transform_indices = @transform_3, window_bounds = array<i64: 4, 1>}, {transform_indices = @transform_4, window_bounds = array<i64: 1, 4, 512>}]} {
    %c0 = arith.constant 0 : index
    %c0_0 = arith.constant 0 : index
    %c0_1 = arith.constant 0 : index
    %0 = vector.load %arg2[%c0, %c0_0, %c0_1] : memref<1x16x512xf32, #tpu.memory_space<vmem>>, vector<1x16x512xf32>
    %1 = vector.shape_cast %0 : vector<1x16x512xf32> to vector<16x512xf32>
    %2 = arith.truncf %1 : vector<16x512xf32> to vector<16x512xbf16>
    %c0_2 = arith.constant 0 : index
    %c0_3 = arith.constant 0 : index
    %3 = vector.load %arg6[%c0_2, %c0_3] : memref<16x512xbf16, #tpu.memory_space<vmem>>, vector<16x512xbf16>
    tpu.vector_store %arg6[%c0_2, %c0_3], %2 {strides = array<i32>} : memref<16x512xbf16, #tpu.memory_space<vmem>>, vector<16x512xbf16>,
    %c0_4 = arith.constant 0 : index
    %c0_5 = arith.constant 0 : index
    %4 = vector.load %arg1[%c0_4, %c0_5] : memref<1x324xf32, #tpu.memory_space<vmem>>, vector<1x324xf32>
    %cst = arith.constant 0.000000e+00 : f32
    %5 = vector.broadcast %cst : f32 to vector<4x324xf32>
    %c0_6 = arith.constant 0 : index
    %c109 = arith.constant 109 : index
    %6 = vector.load %arg6[%c0_6, %c109] : memref<16x512xbf16, #tpu.memory_space<vmem>>, vector<16x324xbf16>
    %c0_7 = arith.constant 0 : index
    %c0_8 = arith.constant 0 : index
    %c0_9 = arith.constant 0 : index
    %7 = vector.load %arg3[%c0_7, %c0_8, %c0_9] : memref<9x4x16xbf16, #tpu.memory_space<vmem>>, vector<1x4x16xbf16>
    %8 = vector.shape_cast %7 : vector<1x4x16xbf16> to vector<4x16xbf16>
    %cst_10 = arith.constant dense<0.000000e+00> : vector<4x324xf32>
    %9 = tpu.matmul %8, %6, %cst_10 {dimension_numbers = #tpu.dot_dimension_numbers<[1], [0], [0], [1], [0, 0, 1, 1], [], []>} : vector<4x16xbf16>, vector<16x324xbf16>, vector<4x324xf32> -> vector<4x324xf32>
    %10 = arith.addf %5, %9 : vector<4x324xf32>
    %c0_11 = arith.constant 0 : index
    %c110 = arith.constant 110 : index
    %11 = vector.load %arg6[%c0_11, %c110] : memref<16x512xbf16, #tpu.memory_space<vmem>>, vector<16x324xbf16>
    %c1 = arith.constant 1 : index
    %c0_12 = arith.constant 0 : index
    %c0_13 = arith.constant 0 : index
    %12 = vector.load %arg3[%c1, %c0_12, %c0_13] : memref<9x4x16xbf16, #tpu.memory_space<vmem>>, vector<1x4x16xbf16>
    %13 = vector.shape_cast %12 : vector<1x4x16xbf16> to vector<4x16xbf16>
    %cst_14 = arith.constant dense<0.000000e+00> : vector<4x324xf32>
    %14 = tpu.matmul %13, %11, %cst_14 {dimension_numbers = #tpu.dot_dimension_numbers<[1], [0], [0], [1], [0, 0, 1, 1], [], []>} : vector<4x16xbf16>, vector<16x324xbf16>, vector<4x324xf32> -> vector<4x324xf32>
    %15 = arith.addf %10, %14 : vector<4x324xf32>
    %c0_15 = arith.constant 0 : index
    %c111 = arith.constant 111 : index
    %16 = vector.load %arg6[%c0_15, %c111] : memref<16x512xbf16, #tpu.memory_space<vmem>>, vector<16x324xbf16>
    %c2 = arith.constant 2 : index
    %c0_16 = arith.constant 0 : index
    %c0_17 = arith.constant 0 : index
    %17 = vector.load %arg3[%c2, %c0_16, %c0_17] : memref<9x4x16xbf16, #tpu.memory_space<vmem>>, vector<1x4x16xbf16>
    %18 = vector.shape_cast %17 : vector<1x4x16xbf16> to vector<4x16xbf16>
    %cst_18 = arith.constant dense<0.000000e+00> : vector<4x324xf32>
    %19 = tpu.matmul %18, %16, %cst_18 {dimension_numbers = #tpu.dot_dimension_numbers<[1], [0], [0], [1], [0, 0, 1, 1], [], []>} : vector<4x16xbf16>, vector<16x324xbf16>, vector<4x324xf32> -> vector<4x324xf32>
    %20 = arith.addf %15, %19 : vector<4x324xf32>
    %c0_19 = arith.constant 0 : index
    %c127 = arith.constant 127 : index
    %21 = vector.load %arg6[%c0_19, %c127] : memref<16x512xbf16, #tpu.memory_space<vmem>>, vector<16x324xbf16>
    %c3 = arith.constant 3 : index
    %c0_20 = arith.constant 0 : index
    %c0_21 = arith.constant 0 : index
    %22 = vector.load %arg3[%c3, %c0_20, %c0_21] : memref<9x4x16xbf16, #tpu.memory_space<vmem>>, vector<1x4x16xbf16>
    %23 = vector.shape_cast %22 : vector<1x4x16xbf16> to vector<4x16xbf16>
    %cst_22 = arith.constant dense<0.000000e+00> : vector<4x324xf32>
    %24 = tpu.matmul %23, %21, %cst_22 {dimension_numbers = #tpu.dot_dimension_numbers<[1], [0], [0], [1], [0, 0, 1, 1], [], []>} : vector<4x16xbf16>, vector<16x324xbf16>, vector<4x324xf32> -> vector<4x324xf32>
    %25 = arith.addf %20, %24 : vector<4x324xf32>
    %c0_23 = arith.constant 0 : index
    %c128 = arith.constant 128 : index
    %26 = vector.load %arg6[%c0_23, %c128] : memref<16x512xbf16, #tpu.memory_space<vmem>>, vector<16x324xbf16>
    %c4 = arith.constant 4 : index
    %c0_24 = arith.constant 0 : index
    %c0_25 = arith.constant 0 : index
    %27 = vector.load %arg3[%c4, %c0_24, %c0_25] : memref<9x4x16xbf16, #tpu.memory_space<vmem>>, vector<1x4x16xbf16>
    %28 = vector.shape_cast %27 : vector<1x4x16xbf16> to vector<4x16xbf16>
    %cst_26 = arith.constant dense<0.000000e+00> : vector<4x324xf32>
    %29 = tpu.matmul %28, %26, %cst_26 {dimension_numbers = #tpu.dot_dimension_numbers<[1], [0], [0], [1], [0, 0, 1, 1], [], []>} : vector<4x16xbf16>, vector<16x324xbf16>, vector<4x324xf32> -> vector<4x324xf32>
    %30 = arith.addf %25, %29 : vector<4x324xf32>
    %c0_27 = arith.constant 0 : index
    %c129 = arith.constant 129 : index
    %31 = vector.load %arg6[%c0_27, %c129] : memref<16x512xbf16, #tpu.memory_space<vmem>>, vector<16x324xbf16>
    %c5 = arith.constant 5 : index
    %c0_28 = arith.constant 0 : index
    %c0_29 = arith.constant 0 : index
    %32 = vector.load %arg3[%c5, %c0_28, %c0_29] : memref<9x4x16xbf16, #tpu.memory_space<vmem>>, vector<1x4x16xbf16>
    %33 = vector.shape_cast %32 : vector<1x4x16xbf16> to vector<4x16xbf16>
    %cst_30 = arith.constant dense<0.000000e+00> : vector<4x324xf32>
    %34 = tpu.matmul %33, %31, %cst_30 {dimension_numbers = #tpu.dot_dimension_numbers<[1], [0], [0], [1], [0, 0, 1, 1], [], []>} : vector<4x16xbf16>, vector<16x324xbf16>, vector<4x324xf32> -> vector<4x324xf32>
    %35 = arith.addf %30, %34 : vector<4x324xf32>
    %c0_31 = arith.constant 0 : index
    %c145 = arith.constant 145 : index
    %36 = vector.load %arg6[%c0_31, %c145] : memref<16x512xbf16, #tpu.memory_space<vmem>>, vector<16x324xbf16>
    %c6 = arith.constant 6 : index
    %c0_32 = arith.constant 0 : index
    %c0_33 = arith.constant 0 : index
    %37 = vector.load %arg3[%c6, %c0_32, %c0_33] : memref<9x4x16xbf16, #tpu.memory_space<vmem>>, vector<1x4x16xbf16>
    %38 = vector.shape_cast %37 : vector<1x4x16xbf16> to vector<4x16xbf16>
    %cst_34 = arith.constant dense<0.000000e+00> : vector<4x324xf32>
    %39 = tpu.matmul %38, %36, %cst_34 {dimension_numbers = #tpu.dot_dimension_numbers<[1], [0], [0], [1], [0, 0, 1, 1], [], []>} : vector<4x16xbf16>, vector<16x324xbf16>, vector<4x324xf32> -> vector<4x324xf32>
    %40 = arith.addf %35, %39 : vector<4x324xf32>
    %c0_35 = arith.constant 0 : index
    %c146 = arith.constant 146 : index
    %41 = vector.load %arg6[%c0_35, %c146] : memref<16x512xbf16, #tpu.memory_space<vmem>>, vector<16x324xbf16>
    %c7 = arith.constant 7 : index
    %c0_36 = arith.constant 0 : index
    %c0_37 = arith.constant 0 : index
    %42 = vector.load %arg3[%c7, %c0_36, %c0_37] : memref<9x4x16xbf16, #tpu.memory_space<vmem>>, vector<1x4x16xbf16>
    %43 = vector.shape_cast %42 : vector<1x4x16xbf16> to vector<4x16xbf16>
    %cst_38 = arith.constant dense<0.000000e+00> : vector<4x324xf32>
    %44 = tpu.matmul %43, %41, %cst_38 {dimension_numbers = #tpu.dot_dimension_numbers<[1], [0], [0], [1], [0, 0, 1, 1], [], []>} : vector<4x16xbf16>, vector<16x324xbf16>, vector<4x324xf32> -> vector<4x324xf32>
    %45 = arith.addf %40, %44 : vector<4x324xf32>
    %c0_39 = arith.constant 0 : index
    %c147 = arith.constant 147 : index
    %46 = vector.load %arg6[%c0_39, %c147] : memref<16x512xbf16, #tpu.memory_space<vmem>>, vector<16x324xbf16>
    %c8 = arith.constant 8 : index
    %c0_40 = arith.constant 0 : index
    %c0_41 = arith.constant 0 : index
    %47 = vector.load %arg3[%c8, %c0_40, %c0_41] : memref<9x4x16xbf16, #tpu.memory_space<vmem>>, vector<1x4x16xbf16>
    %48 = vector.shape_cast %47 : vector<1x4x16xbf16> to vector<4x16xbf16>
    %cst_42 = arith.constant dense<0.000000e+00> : vector<4x324xf32>
    %49 = tpu.matmul %48, %46, %cst_42 {dimension_numbers = #tpu.dot_dimension_numbers<[1], [0], [0], [1], [0, 0, 1, 1], [], []>} : vector<4x16xbf16>, vector<16x324xbf16>, vector<4x324xf32> -> vector<4x324xf32>
    %50 = arith.addf %45, %49 : vector<4x324xf32>
    %c0_43 = arith.constant 0 : index
    %c0_44 = arith.constant 0 : index
    %51 = vector.load %arg4[%c0_43, %c0_44] : memref<4x1xf32, #tpu.memory_space<vmem>>, vector<4x1xf32>
    %52 = vector.broadcast %51 : vector<4x1xf32> to vector<4x324xf32>
    %53 = arith.addf %50, %52 : vector<4x324xf32>
    %54 = vector.broadcast %4 : vector<1x324xf32> to vector<4x324xf32>
    %55 = arith.mulf %53, %54 : vector<4x324xf32>
    %cst_45 = arith.constant 0.000000e+00 : f32
    %56 = vector.broadcast %cst_45 : f32 to vector<4x128xf32>
    %c0_46 = arith.constant 0 : index
    %c0_47 = arith.constant 0 : index
    %c0_48 = arith.constant 0 : index
    %57 = vector.load %arg5[%c0_46, %c0_47, %c0_48] : memref<1x4x512xf32, #tpu.memory_space<vmem>>, vector<1x4x128xf32>
    %58 = vector.shape_cast %57 : vector<1x4x128xf32> to vector<4x128xf32>
    %59 = vector.shape_cast %56 : vector<4x128xf32> to vector<1x4x128xf32>
    tpu.vector_store %arg5[%c0_46, %c0_47, %c0_48], %59 {strides = array<i32>} : memref<1x4x512xf32, #tpu.memory_space<vmem>>, vector<1x4x128xf32>,
    %c0_49 = arith.constant 0 : index
    %c0_50 = arith.constant 0 : index
    %c128_51 = arith.constant 128 : index
    %60 = vector.load %arg5[%c0_49, %c0_50, %c128_51] : memref<1x4x512xf32, #tpu.memory_space<vmem>>, vector<1x4x324xf32>
    %61 = vector.shape_cast %60 : vector<1x4x324xf32> to vector<4x324xf32>
    %62 = vector.shape_cast %55 : vector<4x324xf32> to vector<1x4x324xf32>
    tpu.vector_store %arg5[%c0_49, %c0_50, %c128_51], %62 {strides = array<i32>} : memref<1x4x512xf32, #tpu.memory_space<vmem>>, vector<1x4x324xf32>,
    %cst_52 = arith.constant 0.000000e+00 : f32
    %63 = vector.broadcast %cst_52 : f32 to vector<4x60xf32>
    %c0_53 = arith.constant 0 : index
    %c0_54 = arith.constant 0 : index
    %c452 = arith.constant 452 : index
    %64 = vector.load %arg5[%c0_53, %c0_54, %c452] : memref<1x4x512xf32, #tpu.memory_space<vmem>>, vector<1x4x60xf32>
    %65 = vector.shape_cast %64 : vector<1x4x60xf32> to vector<4x60xf32>
    %66 = vector.shape_cast %63 : vector<4x60xf32> to vector<1x4x60xf32>
    tpu.vector_store %arg5[%c0_53, %c0_54, %c452], %66 {strides = array<i32>} : memref<1x4x512xf32, #tpu.memory_space<vmem>>, vector<1x4x60xf32>,
    return
  }
  func.func @transform_0(%arg0: i32) -> (i32, i32) {
    %c0_i32 = arith.constant 0 : i32
    %c0_i32_0 = arith.constant 0 : i32
    %c0_i32_1 = arith.constant 0 : i32
    return %c0_i32, %c0_i32_0 : i32, i32
  }
  func.func @transform_1(%arg0: i32) -> (i32, i32, i32) {
    %c0_i32 = arith.constant 0 : i32
    %c0_i32_0 = arith.constant 0 : i32
    %c0_i32_1 = arith.constant 0 : i32
    return %arg0, %c0_i32, %c0_i32_0 : i32, i32, i32
  }
  func.func @transform_2(%arg0: i32) -> (i32, i32, i32) {
    %c0_i32 = arith.constant 0 : i32
    %c0_i32_0 = arith.constant 0 : i32
    %c0_i32_1 = arith.constant 0 : i32
    %c0_i32_2 = arith.constant 0 : i32
    return %c0_i32, %c0_i32_0, %c0_i32_1 : i32, i32, i32
  }
  func.func @transform_3(%arg0: i32) -> (i32, i32) {
    %c0_i32 = arith.constant 0 : i32
    %c0_i32_0 = arith.constant 0 : i32
    %c0_i32_1 = arith.constant 0 : i32
    return %c0_i32, %c0_i32_0 : i32, i32
  }
  func.func @transform_4(%arg0: i32) -> (i32, i32, i32) {
    %c0_i32 = arith.constant 0 : i32
    %c0_i32_0 = arith.constant 0 : i32
    %c0_i32_1 = arith.constant 0 : i32
    return %arg0, %c0_i32, %c0_i32_0 : i32, i32, i32
  }
}

module attributes {stable_mosaic.version = 11 : i64} {
  func.func @_rdb_kernel(%arg0: i32, %arg1: memref<1x324xf32, #tpu.memory_space<vmem>>, %arg2: memref<1x16x512xf32, #tpu.memory_space<vmem>>, %arg3: memref<16x144xbf16, #tpu.memory_space<vmem>>, %arg4: memref<16x288xbf16, #tpu.memory_space<vmem>>, %arg5: memref<16x432xbf16, #tpu.memory_space<vmem>>, %arg6: memref<16x576xbf16, #tpu.memory_space<vmem>>, %arg7: memref<16x720xbf16, #tpu.memory_space<vmem>>, %arg8: memref<5x16x1xf32, #tpu.memory_space<vmem>>, %arg9: memref<1x16x512xf32, #tpu.memory_space<vmem>>, %arg10: memref<16x512xbf16, #tpu.memory_space<vmem>>, %arg11: memref<576x324xbf16, #tpu.memory_space<vmem>>, %arg12: memref<720x324xbf16, #tpu.memory_space<vmem>>) attributes {dimension_semantics = [#tpu.dimension_semantics<parallel>], iteration_bounds = array<i64: 2>, scalar_prefetch = 0 : i64, scratch_operands = 3 : i64, tpu.core_type = #tpu.core_type<tc>, window_params = [{pipeline_mode = #tpu.pipeline_mode<synchronous>, transform_indices = @transform_0, window_bounds = array<i64: 1, 324>}, {transform_indices = @transform_1, window_bounds = array<i64: 1, 16, 512>}, {pipeline_mode = #tpu.pipeline_mode<synchronous>, transform_indices = @transform_2, window_bounds = array<i64: 16, 144>}, {pipeline_mode = #tpu.pipeline_mode<synchronous>, transform_indices = @transform_3, window_bounds = array<i64: 16, 288>}, {pipeline_mode = #tpu.pipeline_mode<synchronous>, transform_indices = @transform_4, window_bounds = array<i64: 16, 432>}, {pipeline_mode = #tpu.pipeline_mode<synchronous>, transform_indices = @transform_5, window_bounds = array<i64: 16, 576>}, {pipeline_mode = #tpu.pipeline_mode<synchronous>, transform_indices = @transform_6, window_bounds = array<i64: 16, 720>}, {pipeline_mode = #tpu.pipeline_mode<synchronous>, transform_indices = @transform_7, window_bounds = array<i64: 5, 16, 1>}, {transform_indices = @transform_8, window_bounds = array<i64: 1, 16, 512>}]} {
    %c0 = arith.constant 0 : index
    %c0_0 = arith.constant 0 : index
    %0 = vector.load %arg1[%c0, %c0_0] : memref<1x324xf32, #tpu.memory_space<vmem>>, vector<1x324xf32>
    %c0_1 = arith.constant 0 : index
    %c0_2 = arith.constant 0 : index
    %c0_3 = arith.constant 0 : index
    %1 = vector.load %arg2[%c0_1, %c0_2, %c0_3] : memref<1x16x512xf32, #tpu.memory_space<vmem>>, vector<1x16x512xf32>
    %2 = vector.shape_cast %1 : vector<1x16x512xf32> to vector<16x512xf32>
    %3 = arith.truncf %2 : vector<16x512xf32> to vector<16x512xbf16>
    %c0_4 = arith.constant 0 : index
    %c0_5 = arith.constant 0 : index
    %4 = vector.load %arg10[%c0_4, %c0_5] : memref<16x512xbf16, #tpu.memory_space<vmem>>, vector<16x512xbf16>
    tpu.vector_store %arg10[%c0_4, %c0_5], %3 {strides = array<i32>} : memref<16x512xbf16, #tpu.memory_space<vmem>>, vector<16x512xbf16>,
    %c0_6 = arith.constant 0 : index
    %c109 = arith.constant 109 : index
    %5 = vector.load %arg10[%c0_6, %c109] : memref<16x512xbf16, #tpu.memory_space<vmem>>, vector<16x324xbf16>
    %c0_7 = arith.constant 0 : index
    %c0_8 = arith.constant 0 : index
    %6 = vector.load %arg12[%c0_7, %c0_8] : memref<720x324xbf16, #tpu.memory_space<vmem>>, vector<16x324xbf16>
    tpu.vector_store %arg12[%c0_7, %c0_8], %5 {strides = array<i32>} : memref<720x324xbf16, #tpu.memory_space<vmem>>, vector<16x324xbf16>,
    %c0_9 = arith.constant 0 : index
    %c110 = arith.constant 110 : index
    %7 = vector.load %arg10[%c0_9, %c110] : memref<16x512xbf16, #tpu.memory_space<vmem>>, vector<16x324xbf16>
    %c16 = arith.constant 16 : index
    %c0_10 = arith.constant 0 : index
    %8 = vector.load %arg12[%c16, %c0_10] : memref<720x324xbf16, #tpu.memory_space<vmem>>, vector<16x324xbf16>
    tpu.vector_store %arg12[%c16, %c0_10], %7 {strides = array<i32>} : memref<720x324xbf16, #tpu.memory_space<vmem>>, vector<16x324xbf16>,
    %c0_11 = arith.constant 0 : index
    %c111 = arith.constant 111 : index
    %9 = vector.load %arg10[%c0_11, %c111] : memref<16x512xbf16, #tpu.memory_space<vmem>>, vector<16x324xbf16>
    %c32 = arith.constant 32 : index
    %c0_12 = arith.constant 0 : index
    %10 = vector.load %arg12[%c32, %c0_12] : memref<720x324xbf16, #tpu.memory_space<vmem>>, vector<16x324xbf16>
    tpu.vector_store %arg12[%c32, %c0_12], %9 {strides = array<i32>} : memref<720x324xbf16, #tpu.memory_space<vmem>>, vector<16x324xbf16>,
    %c0_13 = arith.constant 0 : index
    %c127 = arith.constant 127 : index
    %11 = vector.load %arg10[%c0_13, %c127] : memref<16x512xbf16, #tpu.memory_space<vmem>>, vector<16x324xbf16>
    %c48 = arith.constant 48 : index
    %c0_14 = arith.constant 0 : index
    %12 = vector.load %arg12[%c48, %c0_14] : memref<720x324xbf16, #tpu.memory_space<vmem>>, vector<16x324xbf16>
    tpu.vector_store %arg12[%c48, %c0_14], %11 {strides = array<i32>} : memref<720x324xbf16, #tpu.memory_space<vmem>>, vector<16x324xbf16>,
    %c0_15 = arith.constant 0 : index
    %c128 = arith.constant 128 : index
    %13 = vector.load %arg10[%c0_15, %c128] : memref<16x512xbf16, #tpu.memory_space<vmem>>, vector<16x324xbf16>
    %c64 = arith.constant 64 : index
    %c0_16 = arith.constant 0 : index
    %14 = vector.load %arg12[%c64, %c0_16] : memref<720x324xbf16, #tpu.memory_space<vmem>>, vector<16x324xbf16>
    tpu.vector_store %arg12[%c64, %c0_16], %13 {strides = array<i32>} : memref<720x324xbf16, #tpu.memory_space<vmem>>, vector<16x324xbf16>,
    %c0_17 = arith.constant 0 : index
    %c129 = arith.constant 129 : index
    %15 = vector.load %arg10[%c0_17, %c129] : memref<16x512xbf16, #tpu.memory_space<vmem>>, vector<16x324xbf16>
    %c80 = arith.constant 80 : index
    %c0_18 = arith.constant 0 : index
    %16 = vector.load %arg12[%c80, %c0_18] : memref<720x324xbf16, #tpu.memory_space<vmem>>, vector<16x324xbf16>
    tpu.vector_store %arg12[%c80, %c0_18], %15 {strides = array<i32>} : memref<720x324xbf16, #tpu.memory_space<vmem>>, vector<16x324xbf16>,
    %c0_19 = arith.constant 0 : index
    %c145 = arith.constant 145 : index
    %17 = vector.load %arg10[%c0_19, %c145] : memref<16x512xbf16, #tpu.memory_space<vmem>>, vector<16x324xbf16>
    %c96 = arith.constant 96 : index
    %c0_20 = arith.constant 0 : index
    %18 = vector.load %arg12[%c96, %c0_20] : memref<720x324xbf16, #tpu.memory_space<vmem>>, vector<16x324xbf16>
    tpu.vector_store %arg12[%c96, %c0_20], %17 {strides = array<i32>} : memref<720x324xbf16, #tpu.memory_space<vmem>>, vector<16x324xbf16>,
    %c0_21 = arith.constant 0 : index
    %c146 = arith.constant 146 : index
    %19 = vector.load %arg10[%c0_21, %c146] : memref<16x512xbf16, #tpu.memory_space<vmem>>, vector<16x324xbf16>
    %c112 = arith.constant 112 : index
    %c0_22 = arith.constant 0 : index
    %20 = vector.load %arg12[%c112, %c0_22] : memref<720x324xbf16, #tpu.memory_space<vmem>>, vector<16x324xbf16>
    tpu.vector_store %arg12[%c112, %c0_22], %19 {strides = array<i32>} : memref<720x324xbf16, #tpu.memory_space<vmem>>, vector<16x324xbf16>,
    %c0_23 = arith.constant 0 : index
    %c147 = arith.constant 147 : index
    %21 = vector.load %arg10[%c0_23, %c147] : memref<16x512xbf16, #tpu.memory_space<vmem>>, vector<16x324xbf16>
    %c128_24 = arith.constant 128 : index
    %c0_25 = arith.constant 0 : index
    %22 = vector.load %arg12[%c128_24, %c0_25] : memref<720x324xbf16, #tpu.memory_space<vmem>>, vector<16x324xbf16>
    tpu.vector_store %arg12[%c128_24, %c0_25], %21 {strides = array<i32>} : memref<720x324xbf16, #tpu.memory_space<vmem>>, vector<16x324xbf16>,
    %c0_26 = arith.constant 0 : index
    %c0_27 = arith.constant 0 : index
    %23 = vector.load %arg12[%c0_26, %c0_27] : memref<720x324xbf16, #tpu.memory_space<vmem>>, vector<144x324xbf16>
    %cst = arith.constant 0.000000e+00 : bf16
    %24 = vector.broadcast %cst : bf16 to vector<144x324xbf16>
    %25 = arith.cmpf oge, %23, %24 : vector<144x324xbf16>
    %cst_28 = arith.constant 1.000980e-01 : bf16
    %26 = vector.broadcast %cst_28 : bf16 to vector<144x324xbf16>
    %27 = arith.mulf %26, %23 : vector<144x324xbf16>
    %28 = arith.select %25, %23, %27 : vector<144x324xi1>, vector<144x324xbf16>
    %c0_29 = arith.constant 0 : index
    %c0_30 = arith.constant 0 : index
    %29 = vector.load %arg11[%c0_29, %c0_30] : memref<576x324xbf16, #tpu.memory_space<vmem>>, vector<144x324xbf16>
    tpu.vector_store %arg11[%c0_29, %c0_30], %28 {strides = array<i32>} : memref<576x324xbf16, #tpu.memory_space<vmem>>, vector<144x324xbf16>,
    %c0_31 = arith.constant 0 : index
    %c0_32 = arith.constant 0 : index
    %30 = vector.load %arg3[%c0_31, %c0_32] : memref<16x144xbf16, #tpu.memory_space<vmem>>, vector<16x144xbf16>
    %c0_33 = arith.constant 0 : index
    %c0_34 = arith.constant 0 : index
    %31 = vector.load %arg11[%c0_33, %c0_34] : memref<576x324xbf16, #tpu.memory_space<vmem>>, vector<144x324xbf16>
    %cst_35 = arith.constant dense<0.000000e+00> : vector<16x324xf32>
    %32 = tpu.matmul %30, %31, %cst_35 {dimension_numbers = #tpu.dot_dimension_numbers<[1], [0], [0], [1], [0, 0, 1, 1], [], []>} : vector<16x144xbf16>, vector<144x324xbf16>, vector<16x324xf32> -> vector<16x324xf32>
    %c0_36 = arith.constant 0 : index
    %c0_37 = arith.constant 0 : index
    %c0_38 = arith.constant 0 : index
    %33 = vector.load %arg8[%c0_36, %c0_37, %c0_38] : memref<5x16x1xf32, #tpu.memory_space<vmem>>, vector<1x16x1xf32>
    %34 = vector.shape_cast %33 : vector<1x16x1xf32> to vector<16x1xf32>
    %35 = vector.broadcast %34 : vector<16x1xf32> to vector<16x324xf32>
    %36 = arith.addf %32, %35 : vector<16x324xf32>
    %37 = vector.broadcast %0 : vector<1x324xf32> to vector<16x324xf32>
    %38 = arith.mulf %36, %37 : vector<16x324xf32>
    %39 = arith.truncf %38 : vector<16x324xf32> to vector<16x324xbf16>
    %c0_39 = arith.constant 0 : index
    %c128_40 = arith.constant 128 : index
    %40 = vector.load %arg10[%c0_39, %c128_40] : memref<16x512xbf16, #tpu.memory_space<vmem>>, vector<16x324xbf16>
    tpu.vector_store %arg10[%c0_39, %c128_40], %39 {strides = array<i32>} : memref<16x512xbf16, #tpu.memory_space<vmem>>, vector<16x324xbf16>,
    %c0_41 = arith.constant 0 : index
    %c109_42 = arith.constant 109 : index
    %41 = vector.load %arg10[%c0_41, %c109_42] : memref<16x512xbf16, #tpu.memory_space<vmem>>, vector<16x324xbf16>
    %c144 = arith.constant 144 : index
    %c0_43 = arith.constant 0 : index
    %42 = vector.load %arg12[%c144, %c0_43] : memref<720x324xbf16, #tpu.memory_space<vmem>>, vector<16x324xbf16>
    tpu.vector_store %arg12[%c144, %c0_43], %41 {strides = array<i32>} : memref<720x324xbf16, #tpu.memory_space<vmem>>, vector<16x324xbf16>,
    %c0_44 = arith.constant 0 : index
    %c110_45 = arith.constant 110 : index
    %43 = vector.load %arg10[%c0_44, %c110_45] : memref<16x512xbf16, #tpu.memory_space<vmem>>, vector<16x324xbf16>
    %c160 = arith.constant 160 : index
    %c0_46 = arith.constant 0 : index
    %44 = vector.load %arg12[%c160, %c0_46] : memref<720x324xbf16, #tpu.memory_space<vmem>>, vector<16x324xbf16>
    tpu.vector_store %arg12[%c160, %c0_46], %43 {strides = array<i32>} : memref<720x324xbf16, #tpu.memory_space<vmem>>, vector<16x324xbf16>,
    %c0_47 = arith.constant 0 : index
    %c111_48 = arith.constant 111 : index
    %45 = vector.load %arg10[%c0_47, %c111_48] : memref<16x512xbf16, #tpu.memory_space<vmem>>, vector<16x324xbf16>
    %c176 = arith.constant 176 : index
    %c0_49 = arith.constant 0 : index
    %46 = vector.load %arg12[%c176, %c0_49] : memref<720x324xbf16, #tpu.memory_space<vmem>>, vector<16x324xbf16>
    tpu.vector_store %arg12[%c176, %c0_49], %45 {strides = array<i32>} : memref<720x324xbf16, #tpu.memory_space<vmem>>, vector<16x324xbf16>,
    %c0_50 = arith.constant 0 : index
    %c127_51 = arith.constant 127 : index
    %47 = vector.load %arg10[%c0_50, %c127_51] : memref<16x512xbf16, #tpu.memory_space<vmem>>, vector<16x324xbf16>
    %c192 = arith.constant 192 : index
    %c0_52 = arith.constant 0 : index
    %48 = vector.load %arg12[%c192, %c0_52] : memref<720x324xbf16, #tpu.memory_space<vmem>>, vector<16x324xbf16>
    tpu.vector_store %arg12[%c192, %c0_52], %47 {strides = array<i32>} : memref<720x324xbf16, #tpu.memory_space<vmem>>, vector<16x324xbf16>,
    %c0_53 = arith.constant 0 : index
    %c128_54 = arith.constant 128 : index
    %49 = vector.load %arg10[%c0_53, %c128_54] : memref<16x512xbf16, #tpu.memory_space<vmem>>, vector<16x324xbf16>
    %c208 = arith.constant 208 : index
    %c0_55 = arith.constant 0 : index
    %50 = vector.load %arg12[%c208, %c0_55] : memref<720x324xbf16, #tpu.memory_space<vmem>>, vector<16x324xbf16>
    tpu.vector_store %arg12[%c208, %c0_55], %49 {strides = array<i32>} : memref<720x324xbf16, #tpu.memory_space<vmem>>, vector<16x324xbf16>,
    %c0_56 = arith.constant 0 : index
    %c129_57 = arith.constant 129 : index
    %51 = vector.load %arg10[%c0_56, %c129_57] : memref<16x512xbf16, #tpu.memory_space<vmem>>, vector<16x324xbf16>
    %c224 = arith.constant 224 : index
    %c0_58 = arith.constant 0 : index
    %52 = vector.load %arg12[%c224, %c0_58] : memref<720x324xbf16, #tpu.memory_space<vmem>>, vector<16x324xbf16>
    tpu.vector_store %arg12[%c224, %c0_58], %51 {strides = array<i32>} : memref<720x324xbf16, #tpu.memory_space<vmem>>, vector<16x324xbf16>,
    %c0_59 = arith.constant 0 : index
    %c145_60 = arith.constant 145 : index
    %53 = vector.load %arg10[%c0_59, %c145_60] : memref<16x512xbf16, #tpu.memory_space<vmem>>, vector<16x324xbf16>
    %c240 = arith.constant 240 : index
    %c0_61 = arith.constant 0 : index
    %54 = vector.load %arg12[%c240, %c0_61] : memref<720x324xbf16, #tpu.memory_space<vmem>>, vector<16x324xbf16>
    tpu.vector_store %arg12[%c240, %c0_61], %53 {strides = array<i32>} : memref<720x324xbf16, #tpu.memory_space<vmem>>, vector<16x324xbf16>,
    %c0_62 = arith.constant 0 : index
    %c146_63 = arith.constant 146 : index
    %55 = vector.load %arg10[%c0_62, %c146_63] : memref<16x512xbf16, #tpu.memory_space<vmem>>, vector<16x324xbf16>
    %c256 = arith.constant 256 : index
    %c0_64 = arith.constant 0 : index
    %56 = vector.load %arg12[%c256, %c0_64] : memref<720x324xbf16, #tpu.memory_space<vmem>>, vector<16x324xbf16>
    tpu.vector_store %arg12[%c256, %c0_64], %55 {strides = array<i32>} : memref<720x324xbf16, #tpu.memory_space<vmem>>, vector<16x324xbf16>,
    %c0_65 = arith.constant 0 : index
    %c147_66 = arith.constant 147 : index
    %57 = vector.load %arg10[%c0_65, %c147_66] : memref<16x512xbf16, #tpu.memory_space<vmem>>, vector<16x324xbf16>
    %c272 = arith.constant 272 : index
    %c0_67 = arith.constant 0 : index
    %58 = vector.load %arg12[%c272, %c0_67] : memref<720x324xbf16, #tpu.memory_space<vmem>>, vector<16x324xbf16>
    tpu.vector_store %arg12[%c272, %c0_67], %57 {strides = array<i32>} : memref<720x324xbf16, #tpu.memory_space<vmem>>, vector<16x324xbf16>,
    %c144_68 = arith.constant 144 : index
    %c0_69 = arith.constant 0 : index
    %59 = vector.load %arg12[%c144_68, %c0_69] : memref<720x324xbf16, #tpu.memory_space<vmem>>, vector<144x324xbf16>
    %cst_70 = arith.constant 0.000000e+00 : bf16
    %60 = vector.broadcast %cst_70 : bf16 to vector<144x324xbf16>
    %61 = arith.cmpf oge, %59, %60 : vector<144x324xbf16>
    %cst_71 = arith.constant 1.000980e-01 : bf16
    %62 = vector.broadcast %cst_71 : bf16 to vector<144x324xbf16>
    %63 = arith.mulf %62, %59 : vector<144x324xbf16>
    %64 = arith.select %61, %59, %63 : vector<144x324xi1>, vector<144x324xbf16>
    %c144_72 = arith.constant 144 : index
    %c0_73 = arith.constant 0 : index
    %65 = vector.load %arg11[%c144_72, %c0_73] : memref<576x324xbf16, #tpu.memory_space<vmem>>, vector<144x324xbf16>
    tpu.vector_store %arg11[%c144_72, %c0_73], %64 {strides = array<i32>} : memref<576x324xbf16, #tpu.memory_space<vmem>>, vector<144x324xbf16>,
    %c0_74 = arith.constant 0 : index
    %c0_75 = arith.constant 0 : index
    %66 = vector.load %arg4[%c0_74, %c0_75] : memref<16x288xbf16, #tpu.memory_space<vmem>>, vector<16x288xbf16>
    %c0_76 = arith.constant 0 : index
    %c0_77 = arith.constant 0 : index
    %67 = vector.load %arg11[%c0_76, %c0_77] : memref<576x324xbf16, #tpu.memory_space<vmem>>, vector<288x324xbf16>
    %cst_78 = arith.constant dense<0.000000e+00> : vector<16x324xf32>
    %68 = tpu.matmul %66, %67, %cst_78 {dimension_numbers = #tpu.dot_dimension_numbers<[1], [0], [0], [1], [0, 0, 1, 1], [], []>} : vector<16x288xbf16>, vector<288x324xbf16>, vector<16x324xf32> -> vector<16x324xf32>
    %c1 = arith.constant 1 : index
    %c0_79 = arith.constant 0 : index
    %c0_80 = arith.constant 0 : index
    %69 = vector.load %arg8[%c1, %c0_79, %c0_80] : memref<5x16x1xf32, #tpu.memory_space<vmem>>, vector<1x16x1xf32>
    %70 = vector.shape_cast %69 : vector<1x16x1xf32> to vector<16x1xf32>
    %71 = vector.broadcast %70 : vector<16x1xf32> to vector<16x324xf32>
    %72 = arith.addf %68, %71 : vector<16x324xf32>
    %73 = vector.broadcast %0 : vector<1x324xf32> to vector<16x324xf32>
    %74 = arith.mulf %72, %73 : vector<16x324xf32>
    %75 = arith.truncf %74 : vector<16x324xf32> to vector<16x324xbf16>
    %c0_81 = arith.constant 0 : index
    %c128_82 = arith.constant 128 : index
    %76 = vector.load %arg10[%c0_81, %c128_82] : memref<16x512xbf16, #tpu.memory_space<vmem>>, vector<16x324xbf16>
    tpu.vector_store %arg10[%c0_81, %c128_82], %75 {strides = array<i32>} : memref<16x512xbf16, #tpu.memory_space<vmem>>, vector<16x324xbf16>,
    %c0_83 = arith.constant 0 : index
    %c109_84 = arith.constant 109 : index
    %77 = vector.load %arg10[%c0_83, %c109_84] : memref<16x512xbf16, #tpu.memory_space<vmem>>, vector<16x324xbf16>
    %c288 = arith.constant 288 : index
    %c0_85 = arith.constant 0 : index
    %78 = vector.load %arg12[%c288, %c0_85] : memref<720x324xbf16, #tpu.memory_space<vmem>>, vector<16x324xbf16>
    tpu.vector_store %arg12[%c288, %c0_85], %77 {strides = array<i32>} : memref<720x324xbf16, #tpu.memory_space<vmem>>, vector<16x324xbf16>,
    %c0_86 = arith.constant 0 : index
    %c110_87 = arith.constant 110 : index
    %79 = vector.load %arg10[%c0_86, %c110_87] : memref<16x512xbf16, #tpu.memory_space<vmem>>, vector<16x324xbf16>
    %c304 = arith.constant 304 : index
    %c0_88 = arith.constant 0 : index
    %80 = vector.load %arg12[%c304, %c0_88] : memref<720x324xbf16, #tpu.memory_space<vmem>>, vector<16x324xbf16>
    tpu.vector_store %arg12[%c304, %c0_88], %79 {strides = array<i32>} : memref<720x324xbf16, #tpu.memory_space<vmem>>, vector<16x324xbf16>,
    %c0_89 = arith.constant 0 : index
    %c111_90 = arith.constant 111 : index
    %81 = vector.load %arg10[%c0_89, %c111_90] : memref<16x512xbf16, #tpu.memory_space<vmem>>, vector<16x324xbf16>
    %c320 = arith.constant 320 : index
    %c0_91 = arith.constant 0 : index
    %82 = vector.load %arg12[%c320, %c0_91] : memref<720x324xbf16, #tpu.memory_space<vmem>>, vector<16x324xbf16>
    tpu.vector_store %arg12[%c320, %c0_91], %81 {strides = array<i32>} : memref<720x324xbf16, #tpu.memory_space<vmem>>, vector<16x324xbf16>,
    %c0_92 = arith.constant 0 : index
    %c127_93 = arith.constant 127 : index
    %83 = vector.load %arg10[%c0_92, %c127_93] : memref<16x512xbf16, #tpu.memory_space<vmem>>, vector<16x324xbf16>
    %c336 = arith.constant 336 : index
    %c0_94 = arith.constant 0 : index
    %84 = vector.load %arg12[%c336, %c0_94] : memref<720x324xbf16, #tpu.memory_space<vmem>>, vector<16x324xbf16>
    tpu.vector_store %arg12[%c336, %c0_94], %83 {strides = array<i32>} : memref<720x324xbf16, #tpu.memory_space<vmem>>, vector<16x324xbf16>,
    %c0_95 = arith.constant 0 : index
    %c128_96 = arith.constant 128 : index
    %85 = vector.load %arg10[%c0_95, %c128_96] : memref<16x512xbf16, #tpu.memory_space<vmem>>, vector<16x324xbf16>
    %c352 = arith.constant 352 : index
    %c0_97 = arith.constant 0 : index
    %86 = vector.load %arg12[%c352, %c0_97] : memref<720x324xbf16, #tpu.memory_space<vmem>>, vector<16x324xbf16>
    tpu.vector_store %arg12[%c352, %c0_97], %85 {strides = array<i32>} : memref<720x324xbf16, #tpu.memory_space<vmem>>, vector<16x324xbf16>,
    %c0_98 = arith.constant 0 : index
    %c129_99 = arith.constant 129 : index
    %87 = vector.load %arg10[%c0_98, %c129_99] : memref<16x512xbf16, #tpu.memory_space<vmem>>, vector<16x324xbf16>
    %c368 = arith.constant 368 : index
    %c0_100 = arith.constant 0 : index
    %88 = vector.load %arg12[%c368, %c0_100] : memref<720x324xbf16, #tpu.memory_space<vmem>>, vector<16x324xbf16>
    tpu.vector_store %arg12[%c368, %c0_100], %87 {strides = array<i32>} : memref<720x324xbf16, #tpu.memory_space<vmem>>, vector<16x324xbf16>,
    %c0_101 = arith.constant 0 : index
    %c145_102 = arith.constant 145 : index
    %89 = vector.load %arg10[%c0_101, %c145_102] : memref<16x512xbf16, #tpu.memory_space<vmem>>, vector<16x324xbf16>
    %c384 = arith.constant 384 : index
    %c0_103 = arith.constant 0 : index
    %90 = vector.load %arg12[%c384, %c0_103] : memref<720x324xbf16, #tpu.memory_space<vmem>>, vector<16x324xbf16>
    tpu.vector_store %arg12[%c384, %c0_103], %89 {strides = array<i32>} : memref<720x324xbf16, #tpu.memory_space<vmem>>, vector<16x324xbf16>,
    %c0_104 = arith.constant 0 : index
    %c146_105 = arith.constant 146 : index
    %91 = vector.load %arg10[%c0_104, %c146_105] : memref<16x512xbf16, #tpu.memory_space<vmem>>, vector<16x324xbf16>
    %c400 = arith.constant 400 : index
    %c0_106 = arith.constant 0 : index
    %92 = vector.load %arg12[%c400, %c0_106] : memref<720x324xbf16, #tpu.memory_space<vmem>>, vector<16x324xbf16>
    tpu.vector_store %arg12[%c400, %c0_106], %91 {strides = array<i32>} : memref<720x324xbf16, #tpu.memory_space<vmem>>, vector<16x324xbf16>,
    %c0_107 = arith.constant 0 : index
    %c147_108 = arith.constant 147 : index
    %93 = vector.load %arg10[%c0_107, %c147_108] : memref<16x512xbf16, #tpu.memory_space<vmem>>, vector<16x324xbf16>
    %c416 = arith.constant 416 : index
    %c0_109 = arith.constant 0 : index
    %94 = vector.load %arg12[%c416, %c0_109] : memref<720x324xbf16, #tpu.memory_space<vmem>>, vector<16x324xbf16>
    tpu.vector_store %arg12[%c416, %c0_109], %93 {strides = array<i32>} : memref<720x324xbf16, #tpu.memory_space<vmem>>, vector<16x324xbf16>,
    %c288_110 = arith.constant 288 : index
    %c0_111 = arith.constant 0 : index
    %95 = vector.load %arg12[%c288_110, %c0_111] : memref<720x324xbf16, #tpu.memory_space<vmem>>, vector<144x324xbf16>
    %cst_112 = arith.constant 0.000000e+00 : bf16
    %96 = vector.broadcast %cst_112 : bf16 to vector<144x324xbf16>
    %97 = arith.cmpf oge, %95, %96 : vector<144x324xbf16>
    %cst_113 = arith.constant 1.000980e-01 : bf16
    %98 = vector.broadcast %cst_113 : bf16 to vector<144x324xbf16>
    %99 = arith.mulf %98, %95 : vector<144x324xbf16>
    %100 = arith.select %97, %95, %99 : vector<144x324xi1>, vector<144x324xbf16>
    %c288_114 = arith.constant 288 : index
    %c0_115 = arith.constant 0 : index
    %101 = vector.load %arg11[%c288_114, %c0_115] : memref<576x324xbf16, #tpu.memory_space<vmem>>, vector<144x324xbf16>
    tpu.vector_store %arg11[%c288_114, %c0_115], %100 {strides = array<i32>} : memref<576x324xbf16, #tpu.memory_space<vmem>>, vector<144x324xbf16>,
    %c0_116 = arith.constant 0 : index
    %c0_117 = arith.constant 0 : index
    %102 = vector.load %arg5[%c0_116, %c0_117] : memref<16x432xbf16, #tpu.memory_space<vmem>>, vector<16x432xbf16>
    %c0_118 = arith.constant 0 : index
    %c0_119 = arith.constant 0 : index
    %103 = vector.load %arg11[%c0_118, %c0_119] : memref<576x324xbf16, #tpu.memory_space<vmem>>, vector<432x324xbf16>
    %cst_120 = arith.constant dense<0.000000e+00> : vector<16x324xf32>
    %104 = tpu.matmul %102, %103, %cst_120 {dimension_numbers = #tpu.dot_dimension_numbers<[1], [0], [0], [1], [0, 0, 1, 1], [], []>} : vector<16x432xbf16>, vector<432x324xbf16>, vector<16x324xf32> -> vector<16x324xf32>
    %c2 = arith.constant 2 : index
    %c0_121 = arith.constant 0 : index
    %c0_122 = arith.constant 0 : index
    %105 = vector.load %arg8[%c2, %c0_121, %c0_122] : memref<5x16x1xf32, #tpu.memory_space<vmem>>, vector<1x16x1xf32>
    %106 = vector.shape_cast %105 : vector<1x16x1xf32> to vector<16x1xf32>
    %107 = vector.broadcast %106 : vector<16x1xf32> to vector<16x324xf32>
    %108 = arith.addf %104, %107 : vector<16x324xf32>
    %109 = vector.broadcast %0 : vector<1x324xf32> to vector<16x324xf32>
    %110 = arith.mulf %108, %109 : vector<16x324xf32>
    %111 = arith.truncf %110 : vector<16x324xf32> to vector<16x324xbf16>
    %c0_123 = arith.constant 0 : index
    %c128_124 = arith.constant 128 : index
    %112 = vector.load %arg10[%c0_123, %c128_124] : memref<16x512xbf16, #tpu.memory_space<vmem>>, vector<16x324xbf16>
    tpu.vector_store %arg10[%c0_123, %c128_124], %111 {strides = array<i32>} : memref<16x512xbf16, #tpu.memory_space<vmem>>, vector<16x324xbf16>,
    %c0_125 = arith.constant 0 : index
    %c109_126 = arith.constant 109 : index
    %113 = vector.load %arg10[%c0_125, %c109_126] : memref<16x512xbf16, #tpu.memory_space<vmem>>, vector<16x324xbf16>
    %c432 = arith.constant 432 : index
    %c0_127 = arith.constant 0 : index
    %114 = vector.load %arg12[%c432, %c0_127] : memref<720x324xbf16, #tpu.memory_space<vmem>>, vector<16x324xbf16>
    tpu.vector_store %arg12[%c432, %c0_127], %113 {strides = array<i32>} : memref<720x324xbf16, #tpu.memory_space<vmem>>, vector<16x324xbf16>,
    %c0_128 = arith.constant 0 : index
    %c110_129 = arith.constant 110 : index
    %115 = vector.load %arg10[%c0_128, %c110_129] : memref<16x512xbf16, #tpu.memory_space<vmem>>, vector<16x324xbf16>
    %c448 = arith.constant 448 : index
    %c0_130 = arith.constant 0 : index
    %116 = vector.load %arg12[%c448, %c0_130] : memref<720x324xbf16, #tpu.memory_space<vmem>>, vector<16x324xbf16>
    tpu.vector_store %arg12[%c448, %c0_130], %115 {strides = array<i32>} : memref<720x324xbf16, #tpu.memory_space<vmem>>, vector<16x324xbf16>,
    %c0_131 = arith.constant 0 : index
    %c111_132 = arith.constant 111 : index
    %117 = vector.load %arg10[%c0_131, %c111_132] : memref<16x512xbf16, #tpu.memory_space<vmem>>, vector<16x324xbf16>
    %c464 = arith.constant 464 : index
    %c0_133 = arith.constant 0 : index
    %118 = vector.load %arg12[%c464, %c0_133] : memref<720x324xbf16, #tpu.memory_space<vmem>>, vector<16x324xbf16>
    tpu.vector_store %arg12[%c464, %c0_133], %117 {strides = array<i32>} : memref<720x324xbf16, #tpu.memory_space<vmem>>, vector<16x324xbf16>,
    %c0_134 = arith.constant 0 : index
    %c127_135 = arith.constant 127 : index
    %119 = vector.load %arg10[%c0_134, %c127_135] : memref<16x512xbf16, #tpu.memory_space<vmem>>, vector<16x324xbf16>
    %c480 = arith.constant 480 : index
    %c0_136 = arith.constant 0 : index
    %120 = vector.load %arg12[%c480, %c0_136] : memref<720x324xbf16, #tpu.memory_space<vmem>>, vector<16x324xbf16>
    tpu.vector_store %arg12[%c480, %c0_136], %119 {strides = array<i32>} : memref<720x324xbf16, #tpu.memory_space<vmem>>, vector<16x324xbf16>,
    %c0_137 = arith.constant 0 : index
    %c128_138 = arith.constant 128 : index
    %121 = vector.load %arg10[%c0_137, %c128_138] : memref<16x512xbf16, #tpu.memory_space<vmem>>, vector<16x324xbf16>
    %c496 = arith.constant 496 : index
    %c0_139 = arith.constant 0 : index
    %122 = vector.load %arg12[%c496, %c0_139] : memref<720x324xbf16, #tpu.memory_space<vmem>>, vector<16x324xbf16>
    tpu.vector_store %arg12[%c496, %c0_139], %121 {strides = array<i32>} : memref<720x324xbf16, #tpu.memory_space<vmem>>, vector<16x324xbf16>,
    %c0_140 = arith.constant 0 : index
    %c129_141 = arith.constant 129 : index
    %123 = vector.load %arg10[%c0_140, %c129_141] : memref<16x512xbf16, #tpu.memory_space<vmem>>, vector<16x324xbf16>
    %c512 = arith.constant 512 : index
    %c0_142 = arith.constant 0 : index
    %124 = vector.load %arg12[%c512, %c0_142] : memref<720x324xbf16, #tpu.memory_space<vmem>>, vector<16x324xbf16>
    tpu.vector_store %arg12[%c512, %c0_142], %123 {strides = array<i32>} : memref<720x324xbf16, #tpu.memory_space<vmem>>, vector<16x324xbf16>,
    %c0_143 = arith.constant 0 : index
    %c145_144 = arith.constant 145 : index
    %125 = vector.load %arg10[%c0_143, %c145_144] : memref<16x512xbf16, #tpu.memory_space<vmem>>, vector<16x324xbf16>
    %c528 = arith.constant 528 : index
    %c0_145 = arith.constant 0 : index
    %126 = vector.load %arg12[%c528, %c0_145] : memref<720x324xbf16, #tpu.memory_space<vmem>>, vector<16x324xbf16>
    tpu.vector_store %arg12[%c528, %c0_145], %125 {strides = array<i32>} : memref<720x324xbf16, #tpu.memory_space<vmem>>, vector<16x324xbf16>,
    %c0_146 = arith.constant 0 : index
    %c146_147 = arith.constant 146 : index
    %127 = vector.load %arg10[%c0_146, %c146_147] : memref<16x512xbf16, #tpu.memory_space<vmem>>, vector<16x324xbf16>
    %c544 = arith.constant 544 : index
    %c0_148 = arith.constant 0 : index
    %128 = vector.load %arg12[%c544, %c0_148] : memref<720x324xbf16, #tpu.memory_space<vmem>>, vector<16x324xbf16>
    tpu.vector_store %arg12[%c544, %c0_148], %127 {strides = array<i32>} : memref<720x324xbf16, #tpu.memory_space<vmem>>, vector<16x324xbf16>,
    %c0_149 = arith.constant 0 : index
    %c147_150 = arith.constant 147 : index
    %129 = vector.load %arg10[%c0_149, %c147_150] : memref<16x512xbf16, #tpu.memory_space<vmem>>, vector<16x324xbf16>
    %c560 = arith.constant 560 : index
    %c0_151 = arith.constant 0 : index
    %130 = vector.load %arg12[%c560, %c0_151] : memref<720x324xbf16, #tpu.memory_space<vmem>>, vector<16x324xbf16>
    tpu.vector_store %arg12[%c560, %c0_151], %129 {strides = array<i32>} : memref<720x324xbf16, #tpu.memory_space<vmem>>, vector<16x324xbf16>,
    %c432_152 = arith.constant 432 : index
    %c0_153 = arith.constant 0 : index
    %131 = vector.load %arg12[%c432_152, %c0_153] : memref<720x324xbf16, #tpu.memory_space<vmem>>, vector<144x324xbf16>
    %cst_154 = arith.constant 0.000000e+00 : bf16
    %132 = vector.broadcast %cst_154 : bf16 to vector<144x324xbf16>
    %133 = arith.cmpf oge, %131, %132 : vector<144x324xbf16>
    %cst_155 = arith.constant 1.000980e-01 : bf16
    %134 = vector.broadcast %cst_155 : bf16 to vector<144x324xbf16>
    %135 = arith.mulf %134, %131 : vector<144x324xbf16>
    %136 = arith.select %133, %131, %135 : vector<144x324xi1>, vector<144x324xbf16>
    %c432_156 = arith.constant 432 : index
    %c0_157 = arith.constant 0 : index
    %137 = vector.load %arg11[%c432_156, %c0_157] : memref<576x324xbf16, #tpu.memory_space<vmem>>, vector<144x324xbf16>
    tpu.vector_store %arg11[%c432_156, %c0_157], %136 {strides = array<i32>} : memref<576x324xbf16, #tpu.memory_space<vmem>>, vector<144x324xbf16>,
    %c0_158 = arith.constant 0 : index
    %c0_159 = arith.constant 0 : index
    %138 = vector.load %arg6[%c0_158, %c0_159] : memref<16x576xbf16, #tpu.memory_space<vmem>>, vector<16x576xbf16>
    %c0_160 = arith.constant 0 : index
    %c0_161 = arith.constant 0 : index
    %139 = vector.load %arg11[%c0_160, %c0_161] : memref<576x324xbf16, #tpu.memory_space<vmem>>, vector<576x324xbf16>
    %cst_162 = arith.constant dense<0.000000e+00> : vector<16x324xf32>
    %140 = tpu.matmul %138, %139, %cst_162 {dimension_numbers = #tpu.dot_dimension_numbers<[1], [0], [0], [1], [0, 0, 1, 1], [], []>} : vector<16x576xbf16>, vector<576x324xbf16>, vector<16x324xf32> -> vector<16x324xf32>
    %c3 = arith.constant 3 : index
    %c0_163 = arith.constant 0 : index
    %c0_164 = arith.constant 0 : index
    %141 = vector.load %arg8[%c3, %c0_163, %c0_164] : memref<5x16x1xf32, #tpu.memory_space<vmem>>, vector<1x16x1xf32>
    %142 = vector.shape_cast %141 : vector<1x16x1xf32> to vector<16x1xf32>
    %143 = vector.broadcast %142 : vector<16x1xf32> to vector<16x324xf32>
    %144 = arith.addf %140, %143 : vector<16x324xf32>
    %145 = vector.broadcast %0 : vector<1x324xf32> to vector<16x324xf32>
    %146 = arith.mulf %144, %145 : vector<16x324xf32>
    %147 = arith.truncf %146 : vector<16x324xf32> to vector<16x324xbf16>
    %c0_165 = arith.constant 0 : index
    %c128_166 = arith.constant 128 : index
    %148 = vector.load %arg10[%c0_165, %c128_166] : memref<16x512xbf16, #tpu.memory_space<vmem>>, vector<16x324xbf16>
    tpu.vector_store %arg10[%c0_165, %c128_166], %147 {strides = array<i32>} : memref<16x512xbf16, #tpu.memory_space<vmem>>, vector<16x324xbf16>,
    %c0_167 = arith.constant 0 : index
    %c109_168 = arith.constant 109 : index
    %149 = vector.load %arg10[%c0_167, %c109_168] : memref<16x512xbf16, #tpu.memory_space<vmem>>, vector<16x324xbf16>
    %c576 = arith.constant 576 : index
    %c0_169 = arith.constant 0 : index
    %150 = vector.load %arg12[%c576, %c0_169] : memref<720x324xbf16, #tpu.memory_space<vmem>>, vector<16x324xbf16>
    tpu.vector_store %arg12[%c576, %c0_169], %149 {strides = array<i32>} : memref<720x324xbf16, #tpu.memory_space<vmem>>, vector<16x324xbf16>,
    %c0_170 = arith.constant 0 : index
    %c110_171 = arith.constant 110 : index
    %151 = vector.load %arg10[%c0_170, %c110_171] : memref<16x512xbf16, #tpu.memory_space<vmem>>, vector<16x324xbf16>
    %c592 = arith.constant 592 : index
    %c0_172 = arith.constant 0 : index
    %152 = vector.load %arg12[%c592, %c0_172] : memref<720x324xbf16, #tpu.memory_space<vmem>>, vector<16x324xbf16>
    tpu.vector_store %arg12[%c592, %c0_172], %151 {strides = array<i32>} : memref<720x324xbf16, #tpu.memory_space<vmem>>, vector<16x324xbf16>,
    %c0_173 = arith.constant 0 : index
    %c111_174 = arith.constant 111 : index
    %153 = vector.load %arg10[%c0_173, %c111_174] : memref<16x512xbf16, #tpu.memory_space<vmem>>, vector<16x324xbf16>
    %c608 = arith.constant 608 : index
    %c0_175 = arith.constant 0 : index
    %154 = vector.load %arg12[%c608, %c0_175] : memref<720x324xbf16, #tpu.memory_space<vmem>>, vector<16x324xbf16>
    tpu.vector_store %arg12[%c608, %c0_175], %153 {strides = array<i32>} : memref<720x324xbf16, #tpu.memory_space<vmem>>, vector<16x324xbf16>,
    %c0_176 = arith.constant 0 : index
    %c127_177 = arith.constant 127 : index
    %155 = vector.load %arg10[%c0_176, %c127_177] : memref<16x512xbf16, #tpu.memory_space<vmem>>, vector<16x324xbf16>
    %c624 = arith.constant 624 : index
    %c0_178 = arith.constant 0 : index
    %156 = vector.load %arg12[%c624, %c0_178] : memref<720x324xbf16, #tpu.memory_space<vmem>>, vector<16x324xbf16>
    tpu.vector_store %arg12[%c624, %c0_178], %155 {strides = array<i32>} : memref<720x324xbf16, #tpu.memory_space<vmem>>, vector<16x324xbf16>,
    %c0_179 = arith.constant 0 : index
    %c128_180 = arith.constant 128 : index
    %157 = vector.load %arg10[%c0_179, %c128_180] : memref<16x512xbf16, #tpu.memory_space<vmem>>, vector<16x324xbf16>
    %c640 = arith.constant 640 : index
    %c0_181 = arith.constant 0 : index
    %158 = vector.load %arg12[%c640, %c0_181] : memref<720x324xbf16, #tpu.memory_space<vmem>>, vector<16x324xbf16>
    tpu.vector_store %arg12[%c640, %c0_181], %157 {strides = array<i32>} : memref<720x324xbf16, #tpu.memory_space<vmem>>, vector<16x324xbf16>,
    %c0_182 = arith.constant 0 : index
    %c129_183 = arith.constant 129 : index
    %159 = vector.load %arg10[%c0_182, %c129_183] : memref<16x512xbf16, #tpu.memory_space<vmem>>, vector<16x324xbf16>
    %c656 = arith.constant 656 : index
    %c0_184 = arith.constant 0 : index
    %160 = vector.load %arg12[%c656, %c0_184] : memref<720x324xbf16, #tpu.memory_space<vmem>>, vector<16x324xbf16>
    tpu.vector_store %arg12[%c656, %c0_184], %159 {strides = array<i32>} : memref<720x324xbf16, #tpu.memory_space<vmem>>, vector<16x324xbf16>,
    %c0_185 = arith.constant 0 : index
    %c145_186 = arith.constant 145 : index
    %161 = vector.load %arg10[%c0_185, %c145_186] : memref<16x512xbf16, #tpu.memory_space<vmem>>, vector<16x324xbf16>
    %c672 = arith.constant 672 : index
    %c0_187 = arith.constant 0 : index
    %162 = vector.load %arg12[%c672, %c0_187] : memref<720x324xbf16, #tpu.memory_space<vmem>>, vector<16x324xbf16>
    tpu.vector_store %arg12[%c672, %c0_187], %161 {strides = array<i32>} : memref<720x324xbf16, #tpu.memory_space<vmem>>, vector<16x324xbf16>,
    %c0_188 = arith.constant 0 : index
    %c146_189 = arith.constant 146 : index
    %163 = vector.load %arg10[%c0_188, %c146_189] : memref<16x512xbf16, #tpu.memory_space<vmem>>, vector<16x324xbf16>
    %c688 = arith.constant 688 : index
    %c0_190 = arith.constant 0 : index
    %164 = vector.load %arg12[%c688, %c0_190] : memref<720x324xbf16, #tpu.memory_space<vmem>>, vector<16x324xbf16>
    tpu.vector_store %arg12[%c688, %c0_190], %163 {strides = array<i32>} : memref<720x324xbf16, #tpu.memory_space<vmem>>, vector<16x324xbf16>,
    %c0_191 = arith.constant 0 : index
    %c147_192 = arith.constant 147 : index
    %165 = vector.load %arg10[%c0_191, %c147_192] : memref<16x512xbf16, #tpu.memory_space<vmem>>, vector<16x324xbf16>
    %c704 = arith.constant 704 : index
    %c0_193 = arith.constant 0 : index
    %166 = vector.load %arg12[%c704, %c0_193] : memref<720x324xbf16, #tpu.memory_space<vmem>>, vector<16x324xbf16>
    tpu.vector_store %arg12[%c704, %c0_193], %165 {strides = array<i32>} : memref<720x324xbf16, #tpu.memory_space<vmem>>, vector<16x324xbf16>,
    %c0_194 = arith.constant 0 : index
    %c0_195 = arith.constant 0 : index
    %167 = vector.load %arg7[%c0_194, %c0_195] : memref<16x720xbf16, #tpu.memory_space<vmem>>, vector<16x720xbf16>
    %c0_196 = arith.constant 0 : index
    %c0_197 = arith.constant 0 : index
    %168 = vector.load %arg12[%c0_196, %c0_197] : memref<720x324xbf16, #tpu.memory_space<vmem>>, vector<720x324xbf16>
    %cst_198 = arith.constant dense<0.000000e+00> : vector<16x324xf32>
    %169 = tpu.matmul %167, %168, %cst_198 {dimension_numbers = #tpu.dot_dimension_numbers<[1], [0], [0], [1], [0, 0, 1, 1], [], []>} : vector<16x720xbf16>, vector<720x324xbf16>, vector<16x324xf32> -> vector<16x324xf32>
    %c4 = arith.constant 4 : index
    %c0_199 = arith.constant 0 : index
    %c0_200 = arith.constant 0 : index
    %170 = vector.load %arg8[%c4, %c0_199, %c0_200] : memref<5x16x1xf32, #tpu.memory_space<vmem>>, vector<1x16x1xf32>
    %171 = vector.shape_cast %170 : vector<1x16x1xf32> to vector<16x1xf32>
    %172 = vector.broadcast %171 : vector<16x1xf32> to vector<16x324xf32>
    %173 = arith.addf %169, %172 : vector<16x324xf32>
    %174 = vector.broadcast %0 : vector<1x324xf32> to vector<16x324xf32>
    %175 = arith.mulf %173, %174 : vector<16x324xf32>
    %c0_201 = arith.constant 0 : index
    %c0_202 = arith.constant 0 : index
    %c128_203 = arith.constant 128 : index
    %176 = vector.load %arg2[%c0_201, %c0_202, %c128_203] : memref<1x16x512xf32, #tpu.memory_space<vmem>>, vector<1x16x324xf32>
    %177 = vector.shape_cast %176 : vector<1x16x324xf32> to vector<16x324xf32>
    %cst_204 = arith.constant 2.000000e-01 : f32
    %178 = vector.broadcast %cst_204 : f32 to vector<16x324xf32>
    %179 = arith.mulf %178, %175 : vector<16x324xf32>
    %180 = arith.addf %177, %179 : vector<16x324xf32>
    %cst_205 = arith.constant 0.000000e+00 : f32
    %181 = vector.broadcast %cst_205 : f32 to vector<16x128xf32>
    %c0_206 = arith.constant 0 : index
    %c0_207 = arith.constant 0 : index
    %c0_208 = arith.constant 0 : index
    %182 = vector.load %arg9[%c0_206, %c0_207, %c0_208] : memref<1x16x512xf32, #tpu.memory_space<vmem>>, vector<1x16x128xf32>
    %183 = vector.shape_cast %182 : vector<1x16x128xf32> to vector<16x128xf32>
    %184 = vector.shape_cast %181 : vector<16x128xf32> to vector<1x16x128xf32>
    tpu.vector_store %arg9[%c0_206, %c0_207, %c0_208], %184 {strides = array<i32>} : memref<1x16x512xf32, #tpu.memory_space<vmem>>, vector<1x16x128xf32>,
    %c0_209 = arith.constant 0 : index
    %c0_210 = arith.constant 0 : index
    %c128_211 = arith.constant 128 : index
    %185 = vector.load %arg9[%c0_209, %c0_210, %c128_211] : memref<1x16x512xf32, #tpu.memory_space<vmem>>, vector<1x16x324xf32>
    %186 = vector.shape_cast %185 : vector<1x16x324xf32> to vector<16x324xf32>
    %187 = vector.shape_cast %180 : vector<16x324xf32> to vector<1x16x324xf32>
    tpu.vector_store %arg9[%c0_209, %c0_210, %c128_211], %187 {strides = array<i32>} : memref<1x16x512xf32, #tpu.memory_space<vmem>>, vector<1x16x324xf32>,
    %cst_212 = arith.constant 0.000000e+00 : f32
    %188 = vector.broadcast %cst_212 : f32 to vector<16x60xf32>
    %c0_213 = arith.constant 0 : index
    %c0_214 = arith.constant 0 : index
    %c452 = arith.constant 452 : index
    %189 = vector.load %arg9[%c0_213, %c0_214, %c452] : memref<1x16x512xf32, #tpu.memory_space<vmem>>, vector<1x16x60xf32>
    %190 = vector.shape_cast %189 : vector<1x16x60xf32> to vector<16x60xf32>
    %191 = vector.shape_cast %188 : vector<16x60xf32> to vector<1x16x60xf32>
    tpu.vector_store %arg9[%c0_213, %c0_214, %c452], %191 {strides = array<i32>} : memref<1x16x512xf32, #tpu.memory_space<vmem>>, vector<1x16x60xf32>,
    return
  }
  func.func @transform_0(%arg0: i32) -> (i32, i32) {
    %c0_i32 = arith.constant 0 : i32
    %c0_i32_0 = arith.constant 0 : i32
    %c0_i32_1 = arith.constant 0 : i32
    return %c0_i32, %c0_i32_0 : i32, i32
  }
  func.func @transform_1(%arg0: i32) -> (i32, i32, i32) {
    %c0_i32 = arith.constant 0 : i32
    %c0_i32_0 = arith.constant 0 : i32
    %c0_i32_1 = arith.constant 0 : i32
    return %arg0, %c0_i32, %c0_i32_0 : i32, i32, i32
  }
  func.func @transform_2(%arg0: i32) -> (i32, i32) {
    %c0_i32 = arith.constant 0 : i32
    %c0_i32_0 = arith.constant 0 : i32
    %c0_i32_1 = arith.constant 0 : i32
    return %c0_i32, %c0_i32_0 : i32, i32
  }
  func.func @transform_3(%arg0: i32) -> (i32, i32) {
    %c0_i32 = arith.constant 0 : i32
    %c0_i32_0 = arith.constant 0 : i32
    %c0_i32_1 = arith.constant 0 : i32
    return %c0_i32, %c0_i32_0 : i32, i32
  }
  func.func @transform_4(%arg0: i32) -> (i32, i32) {
    %c0_i32 = arith.constant 0 : i32
    %c0_i32_0 = arith.constant 0 : i32
    %c0_i32_1 = arith.constant 0 : i32
    return %c0_i32, %c0_i32_0 : i32, i32
  }
  func.func @transform_5(%arg0: i32) -> (i32, i32) {
    %c0_i32 = arith.constant 0 : i32
    %c0_i32_0 = arith.constant 0 : i32
    %c0_i32_1 = arith.constant 0 : i32
    return %c0_i32, %c0_i32_0 : i32, i32
  }
  func.func @transform_6(%arg0: i32) -> (i32, i32) {
    %c0_i32 = arith.constant 0 : i32
    %c0_i32_0 = arith.constant 0 : i32
    %c0_i32_1 = arith.constant 0 : i32
    return %c0_i32, %c0_i32_0 : i32, i32
  }
  func.func @transform_7(%arg0: i32) -> (i32, i32, i32) {
    %c0_i32 = arith.constant 0 : i32
    %c0_i32_0 = arith.constant 0 : i32
    %c0_i32_1 = arith.constant 0 : i32
    %c0_i32_2 = arith.constant 0 : i32
    return %c0_i32, %c0_i32_0, %c0_i32_1 : i32, i32, i32
  }
  func.func @transform_8(%arg0: i32) -> (i32, i32, i32) {
    %c0_i32 = arith.constant 0 : i32
    %c0_i32_0 = arith.constant 0 : i32
    %c0_i32_1 = arith.constant 0 : i32
    return %arg0, %c0_i32, %c0_i32_0 : i32, i32, i32
  }
}

</mosaic_0001>

<llo_original>
// kernel: rrdbnet_forward.5
$region0: #{rrdbnet_forward.5}
  #allocation0 [shape = 'u32[]', space=smem, size = 0x4, offset = 0x4, fixed_abs, tag = 'smem constant byte address 0x4 - core index']
  #allocation1 [shape = 'u32[144,128]{1,0:T(1,128)}', space=vmem, size = 0x12000, scoped, tag = 'internal scratch']
  #allocation2 [shape = 'bf16[4,512]{1,0:T(4,128)(2,1)}', space=vmem, size = 0x1000, scoped, tag = 'scratch operand']
  %s0 = inlined_call_operand.vmem [shape: f32[1,324], index: 0, kind: input, shape index: {}]
  %s1 = inlined_call_operand.vmem [shape: f32[2,4,512], index: 1, kind: input, shape index: {}]
  %s2 = inlined_call_operand.vmem [shape: bf16[9,16,4], index: 2, kind: input, shape index: {}]
  %s3 = inlined_call_operand.vmem [shape: f32[16,1], index: 3, kind: input, shape index: {}]
  %s4 = inlined_call_operand.vmem [shape: f32[2,16,512], index: 4, kind: output, shape index: {}]
  %s5 = sld [smem:[#allocation0]]
  $region49: #{rrdbnet_forward.5} parent=0
    _
  %s7 = ssub.s32 1, %s5
  %s8 = scalar_select 0, %s7, %s5
  loop: start=0, step=1, limit=4
  $region2: #{rrdbnet_forward.5} parent=0 // loop_pre_header
    _
  $region3: #{rrdbnet_forward.5} parent=0 // loop_header
    %s10 = sphi 0, %s14
    %p11 = scmp.ge.s32.totalorder %s10, 4
    %s18 = sphi 0, %s18
    %s20 = sphi 0, %s18
    %s21 = sphi 0, %s20
    %s35 = sphi 0, %s21
    %s41 = sphi 0, %s43
    %s44 = sphi 0, %s41
    %s45 = sphi 0, %s44
    %s61 = sphi 0, %s45
    %s65 = sphi 0, %s65
    %s67 = sphi 0, %s65
    %s68 = sphi 0, %s67
    %s82 = sphi 0, %s68
    %s86 = sphi 0, %s86
    %s88 = sphi 0, %s86
    %s89 = sphi 0, %s88
    %s103 = sphi 0, %s89
    %s109 = sphi 0, %s111
    %s112 = sphi 0, %s109
    %s113 = sphi 0, %s112
    %s129 = sphi 0, %s113
  $region4: #{rrdbnet_forward.5} parent=0 // loop_header_branch
    %13 = sbr.rel (%p11) target = $region8
  $region5: #{rrdbnet_forward.5} parent=0 // loop_body
    %s15 = ssub.s32 %s10, 1
    %s16 = ssub.s32 %s10, 2
    %s17 = sadd.s32 %s10, 1
    %s19 = sadd.s32 %s18, 1
    %p22 = scmp.eq.s32.totalorder %s10, 1
    %p23 = scmp.ne.s32.totalorder %s18, %s20
    %p24 = scmp.eq.s32.totalorder %s10, 0
    %p25 = por %p23, %p24
    %p26 = scmp.ne.s32.totalorder %s18, %s20
    %p27 = scmp.eq.s32.totalorder %s15, 1
    %p28 = por %p26, %p27
    %p29 = scmp.ne.s32.totalorder %s20, %s21
    %p30 = scmp.eq.s32.totalorder %s15, 0
    %p31 = por %p29, %p30
    %p32 = scmp.ne.s32.totalorder %s20, %s21
    %p33 = scmp.eq.s32.totalorder %s16, 1
    %p34 = por %p32, %p33
    %p36 = scmp.ne.s32.totalorder %s21, %s35
    %p37 = scmp.eq.s32.totalorder %s16, 0
    %p38 = por %p36, %p37
    %s39 = ssub.s32 %s10, %s17
    %p40 = scmp.eq.s32.totalorder %s39, 0
    %s42 = sadd.s32 %s41, 1
    %s43 = scalar_select %p40, %s41, %s42
    %p46 = pneg %p40
    %p47 = scmp.eq.s32.totalorder %s10, 1
    %p48 = por %p46, %p47
    %p49 = scmp.ne.s32.totalorder %s41, %s44
    %p50 = scmp.eq.s32.totalorder %s10, 0
    %p51 = por %p49, %p50
    %p52 = scmp.ne.s32.totalorder %s41, %s44
    %p53 = scmp.eq.s32.totalorder %s15, 1
    %p54 = por %p52, %p53
    %p55 = scmp.ne.s32.totalorder %s44, %s45
    %p56 = scmp.eq.s32.totalorder %s15, 0
    %p57 = por %p55, %p56
    %p58 = scmp.ne.s32.totalorder %s44, %s45
    %p59 = scmp.eq.s32.totalorder %s16, 1
    %p60 = por %p58, %p59
    %p62 = scmp.ne.s32.totalorder %s45, %s61
    %p63 = scmp.eq.s32.totalorder %s16, 0
    %p64 = por %p62, %p63
    %s66 = sadd.s32 %s65, 1
    %p69 = scmp.eq.s32.totalorder %s10, 1
    %p70 = scmp.ne.s32.totalorder %s65, %s67
    %p71 = scmp.eq.s32.totalorder %s10, 0
    %p72 = por %p70, %p71
    %p73 = scmp.ne.s32.totalorder %s65, %s67
    %p74 = scmp.eq.s32.totalorder %s15, 1
    %p75 = por %p73, %p74
    %p76 = scmp.ne.s32.totalorder %s67, %s68
    %p77 = scmp.eq.s32.totalorder %s15, 0
    %p78 = por %p76, %p77
    %p79 = scmp.ne.s32.totalorder %s67, %s68
    %p80 = scmp.eq.s32.totalorder %s16, 1
    %p81 = por %p79, %p80
    %p83 = scmp.ne.s32.totalorder %s68, %s82
    %p84 = scmp.eq.s32.totalorder %s16, 0
    %p85 = por %p83, %p84
    %s87 = sadd.s32 %s86, 1
    %p90 = scmp.eq.s32.totalorder %s10, 1
    %p91 = scmp.ne.s32.totalorder %s86, %s88
    %p92 = scmp.eq.s32.totalorder %s10, 0
    %p93 = por %p91, %p92
    %p94 = scmp.ne.s32.totalorder %s86, %s88
    %p95 = scmp.eq.s32.totalorder %s15, 1
    %p96 = por %p94, %p95
    %p97 = scmp.ne.s32.totalorder %s88, %s89
    %p98 = scmp.eq.s32.totalorder %s15, 0
    %p99 = por %p97, %p98
    %p100 = scmp.ne.s32.totalorder %s88, %s89
    %p101 = scmp.eq.s32.totalorder %s16, 1
    %p102 = por %p100, %p101
    %p104 = scmp.ne.s32.totalorder %s89, %s103
    %p105 = scmp.eq.s32.totalorder %s16, 0
    %p106 = por %p104, %p105
    %s107 = ssub.s32 %s10, %s17
    %p108 = scmp.eq.s32.totalorder %s107, 0
    %s110 = sadd.s32 %s109, 1
    %s111 = scalar_select %p108, %s109, %s110
    %p114 = pneg %p108
    %p115 = scmp.eq.s32.totalorder %s10, 1
    %p116 = por %p114, %p115
    %p117 = scmp.ne.s32.totalorder %s109, %s112
    %p118 = scmp.eq.s32.totalorder %s10, 0
    %p119 = por %p117, %p118
    %p120 = scmp.ne.s32.totalorder %s109, %s112
    %p121 = scmp.eq.s32.totalorder %s15, 1
    %p122 = por %p120, %p121
    %p123 = scmp.ne.s32.totalorder %s112, %s113
    %p124 = scmp.eq.s32.totalorder %s15, 0
    %p125 = por %p123, %p124
    %p126 = scmp.ne.s32.totalorder %s112, %s113
    %p127 = scmp.eq.s32.totalorder %s16, 1
    %p128 = por %p126, %p127
    %p130 = scmp.ne.s32.totalorder %s113, %s129
    %p131 = scmp.eq.s32.totalorder %s16, 0
    %p132 = por %p130, %p131
    %p133 = scmp.le.s32.totalorder 1, %s10
    %p134 = scmp.lt.s32.totalorder %s10, 3
    %p135 = pnand %p133, %p134
    %p136 = pneg %p135
    // Predicated region
    $region9: #{rrdbnet_forward.5} parent=5 // pred_check
      _
    $region10: #{rrdbnet_forward.5} parent=5 // pred_check_branch
      %138 = sbr.rel (%p135) target = $region12
    $region11: #{rrdbnet_forward.5} parent=5 // pred_region
      %s139 = ssub.s32 %s10, 1
      // Predicated region
      $region13: #{rrdbnet_forward.5} parent=11 // pred_check
        %p140 = pneg %p31
      $region14: #{rrdbnet_forward.5} parent=11 // pred_check_branch
        %142 = sbr.rel (%p140) target = $region16
      $region15: #{rrdbnet_forward.5} parent=11 // pred_region
        _
      $region16: #{rrdbnet_forward.5} parent=11 // pred_fallthru
        _
      // Predicated region
      $region17: #{rrdbnet_forward.5} parent=11 // pred_check
        %p143 = pneg %p78
      $region18: #{rrdbnet_forward.5} parent=11 // pred_check_branch
        %145 = sbr.rel (%p143) target = $region20
      $region19: #{rrdbnet_forward.5} parent=11 // pred_region
        _
      $region20: #{rrdbnet_forward.5} parent=11 // pred_fallthru
        _
      // Predicated region
      $region21: #{rrdbnet_forward.5} parent=11 // pred_check
        %p146 = pneg %p99
      $region22: #{rrdbnet_forward.5} parent=11 // pred_check_branch
        %148 = sbr.rel (%p146) target = $region24
      $region23: #{rrdbnet_forward.5} parent=11 // pred_region
        _
      $region24: #{rrdbnet_forward.5} parent=11 // pred_fallthru
        _
    $region12: #{rrdbnet_forward.5} parent=5 // pred_fallthru
      _
    %p149 = scmp.lt.s32.totalorder %s10, 2
    // Predicated region
    $region25: #{rrdbnet_forward.5} parent=5 // pred_check
      %p150 = pneg %p149
    $region26: #{rrdbnet_forward.5} parent=5 // pred_check_branch
      %152 = sbr.rel (%p150) target = $region28
    $region27: #{rrdbnet_forward.5} parent=5 // pred_region
      // Predicated region
      $region29: #{rrdbnet_forward.5} parent=27 // pred_check
        %p153 = pneg %p51
      $region30: #{rrdbnet_forward.5} parent=27 // pred_check_branch
        %155 = sbr.rel (%p153) target = $region32
      $region31: #{rrdbnet_forward.5} parent=27 // pred_region
        %p156 = scmp.lt.s32.totalorder %s10, 1
        %s157 = scalar_select %p156, %s10, 1
        %s158 = smul.addr %s157, 4
        %s159 = smul.addr %s158, 4
        %s160 = scalar_lea.vmem %s1, %s159
      $region32: #{rrdbnet_forward.5} parent=27 // pred_fallthru
        _
    $region28: #{rrdbnet_forward.5} parent=5 // pred_fallthru
      _
    %p161 = scmp.le.s32.totalorder 1, %s10
    %p162 = scmp.lt.s32.totalorder %s10, 3
    %p163 = pnand %p161, %p162
    %p164 = pneg %p163
    // Predicated region
    $region33: #{rrdbnet_forward.5} parent=5 // pred_check
      _
    $region34: #{rrdbnet_forward.5} parent=5 // pred_check_branch
      %166 = sbr.rel (%p163) target = $region36
    $region35: #{rrdbnet_forward.5} parent=5 // pred_region
      %s167 = ssub.s32 %s10, 1
      %p168 = pneg %p31
      %p169 = pneg %p28
      %p170 = scmp.lt.s32.totalorder %s15, 1
      %s171 = scalar_select %p170, %s15, 1
      %s172 = smul.addr %s171, 4
      %s173 = smul.addr %s172, 4
      %s174 = scalar_lea.vmem %s1, %s173
      %p175 = pneg %p57
      %p176 = pneg %p54
      %p177 = pneg %p78
      %p178 = pneg %p75
      %p179 = pneg %p99
      %p180 = pneg %p96
      %p181 = pneg %p125
      %p182 = pneg %p122
      %p183 = scmp.lt.s32.totalorder %s15, 1
      %s184 = scalar_select %p183, %s15, 1
      %s185 = smul.addr %s184, 8
      %s186 = smul.addr %s185, 8
      %s187 = scalar_lea.vmem %s4, %s186
      %p188 = scmp.lt.s32.totalorder %s15, 1
      %s189 = scalar_select %p188, %s15, 1
      %s190 = smul.addr %s189, 4
      %s191 = smul.addr %s190, 4
      %s192 = scalar_lea.vmem %s1, %s191
      %p193 = scmp.lt.s32.totalorder %s15, 1
      %s194 = scalar_select %p193, %s15, 1
      %s195 = smul.addr %s194, 8
      %s196 = smul.addr %s195, 8
      %s197 = scalar_lea.vmem %s4, %s196
      %v199 = vld [vmem:[%s192] sm:$0xff]
      %v200 = vld [vmem:[%s192 + $0x8] sm:$0xff]
      %v203 = vcombine.high %v199, %v199
      %v204 = vcombine.high %v200, %v200
      %v207 = vpack.c.bf16 %v199, %v199
      %v208 = vpack.c.bf16 %v203, %v203
      %v209 = vpack.c.bf16 %v200, %v200
      %v210 = vpack.c.bf16 %v204, %v204
      %v215 = vcombine.low %v207, %v208
      %v216 = vcombine.low %v209, %v210
      %v218 = vunpack.c.l.s4 1983009808
      %v219 = vunpack.c.0.s8 %v218
      %v220 = vlaneseq
      %v221 = vshrl.u32 %v220, 7
      %v222 = vsub.s32 %v219, %v221
      %v223 = vrot.slane %v215, %v222
      %v225 = vunpack.c.l.s4 1983009808
      %v226 = vunpack.c.0.s8 %v225
      %v227 = vlaneseq
      %v228 = vshrl.u32 %v227, 7
      %v229 = vsub.s32 %v226, %v228
      %v230 = vrot.slane %v216, %v229
      %v231 = vcombine.low %v223, %v230
      %233 = vst [vmem:[#allocation2] sm:$0xff] %v231
      %v234 = vld [vmem:[%s0] sm:$0x7]
      %v235 = vld [vmem:[#allocation2] sm:$0xff]
      %v236 = vld [vmem:[%s2] sm:$0xf]
      %v237 = vld [vmem:[%s2 + $0x4] sm:$0xf]
      %s238 = scalar_lea.vmem %s2, 8
      %v239 = vld [vmem:[%s238] sm:$0xf]
      %v240 = vld [vmem:[%s238 + $0x4] sm:$0xf]
      %v243 = vunpack.c.l.b16 %v239
      %v244 = vunpack.c.l.b16 %v240
      %v245 = vpack.c.b16 %v244, %v243
      %v247 = vcombine.high %v235, %v235
      %v249 = vunpack.c.l.s4 1983009808
      %v250 = vunpack.c.0.s8 %v249
      %v251 = vlaneseq
      %v252 = vshrl.u32 %v251, 7
      %v253 = vsub.s32 %v250, %v252
      %v254 = vrot.slane %v235, %v253
      %v256 = vunpack.c.l.s4 1983009808
      %v257 = vunpack.c.0.s8 %v256
      %v258 = vlaneseq
      %v259 = vshrl.u32 %v258, 7
      %v260 = vsub.s32 %v257, %v259
      %v261 = vrot.slane %v247, %v260
      %v262 = vcombine.high %v254, %v254
      %v263 = vcombine.high %v261, %v261
      %264 = vrot.lane.b32.xlu0 %v254, 18
      %v265 = vpop.permute.xlu0 %264
      %266 = vrot.lane.b32.xlu0 %v262, 18
      %v267 = vpop.permute.xlu0 %266
      %268 = vrot.lane.b32.xlu0 %v261, 18
      %v269 = vpop.permute.xlu0 %268
      %270 = vrot.lane.b32.xlu0 %v263, 18
      %v271 = vpop.permute.xlu0 %270
      %vm272 = vcmask 146432
      %v273 = vsel %vm272, %v265, %v267
      %v274 = vsel %vm272, %v267, %v269
      %v275 = vsel %vm272, %v269, %v271
      %vm276 = vcmask 31744
      %v278 = vsel %vm276, %v245, 0
      %vm280 = vcmask 1041408
      %v282 = vsel %vm280, %v273, 0
      %v285 = vsel %vm280, %v274, 0
      %v288 = vsel %vm280, %v275, 0
      %290 = vmatprep.subr.bf16.mxu0 0
      %291 = vmatpush1.bf16.msra.mxu0 0
      %292 = vmatprep.subr.bf16.mxu0 0
      %293 = vmatpush1.bf16.msra.mxu0 0
      %294 = vmatprep.subr.bf16.mxu0 0
      %295 = vmatpush1.bf16.msra.mxu0 0
      %296 = vmatprep.subr.bf16.mxu0 0
      %297 = vmatpush1.bf16.msra.mxu0 0
      %298 = vmatprep.subr.bf16.mxu0 0
      %299 = vmatpush1.bf16.msra.mxu0 0
      %300 = vmatprep.subr.bf16.mxu0 0
      %301 = vmatpush1.bf16.msra.mxu0 0
      %302 = vmatprep.subr.bf16.mxu0 0
      %303 = vmatpush1.bf16.msra.mxu0 0
      %304 = vmatprep.subr.bf16.mxu0 %v285
      %305 = vmatpush1.bf16.msra.mxu0 %v282
      %306 = vmatprep.subr.bf16.mxu0 0
      %307 = vmatpush2.bf16.msra.mxu0 0
      %308 = vmatprep.subr.bf16.mxu0 0
      %309 = vmatpush2.bf16.msra.mxu0 0
      %310 = vmatprep.subr.bf16.mxu0 0
      %311 = vmatpush2.bf16.msra.mxu0 0
      %312 = vmatprep.subr.bf16.mxu0 0
      %313 = vmatpush2.bf16.msra.mxu0 0
      %314 = vmatprep.subr.bf16.mxu0 0
      %315 = vmatpush2.bf16.msra.mxu0 0
      %316 = vmatprep.subr.bf16.mxu0 0
      %317 = vmatpush2.bf16.msra.mxu0 0
      %318 = vmatprep.subr.bf16.mxu0 0
      %319 = vmatpush2.bf16.msra.mxu0 0
      %320 = vmatprep.subr.bf16.mxu0 0
      %321 = vmatpush2.bf16.msra.mxu0 0
      %322 = vmatprep.mubr.bf16.mxu0 0
      %323 = vmatmul.mubr.bf16.gmra.mxu0 %v278
      %v324 = vpop.f32.mrf.mxu0
      %v325 = vadd.f32 0.0, %v324
      %v326 = vpop.f32.mrf.mxu0
      %v327 = vadd.f32 0.0, %v326
      %v328 = vpop.f32.mrf.mxu0
      %v329 = vadd.f32 0.0, %v328
      %v330 = vpop.f32.mrf.mxu0
      %v331 = vadd.f32 0.0, %v330
      %332 = vdwg.mxu0
      %333 = vmatprep.subr.bf16.mxu0 0
      %334 = vmatpush1.bf16.msra.mxu0 0
      %335 = vmatprep.subr.bf16.mxu0 0
      %336 = vmatpush1.bf16.msra.mxu0 0
      %337 = vmatprep.subr.bf16.mxu0 0
      %338 = vmatpush1.bf16.msra.mxu0 0
      %339 = vmatprep.subr.bf16.mxu0 0
      %340 = vmatpush1.bf16.msra.mxu0 0
      %341 = vmatprep.subr.bf16.mxu0 0
      %342 = vmatpush1.bf16.msra.mxu0 0
      %343 = vmatprep.subr.bf16.mxu0 0
      %344 = vmatpush1.bf16.msra.mxu0 0
      %345 = vmatprep.subr.bf16.mxu0 0
      %346 = vmatpush1.bf16.msra.mxu0 0
      %347 = vmatprep.subr.bf16.mxu0 0
      %348 = vmatpush1.bf16.msra.mxu0 %v288
      %349 = vmatprep.subr.bf16.mxu0 0
      %350 = vmatpush2.bf16.msra.mxu0 0
      %351 = vmatprep.subr.bf16.mxu0 0
      %352 = vmatpush2.bf16.msra.mxu0 0
      %353 = vmatprep.subr.bf16.mxu0 0
      %354 = vmatpush2.bf16.msra.mxu0 0
      %355 = vmatprep.subr.bf16.mxu0 0
      %356 = vmatpush2.bf16.msra.mxu0 0
      %357 = vmatprep.subr.bf16.mxu0 0
      %358 = vmatpush2.bf16.msra.mxu0 0
      %359 = vmatprep.subr.bf16.mxu0 0
      %360 = vmatpush2.bf16.msra.mxu0 0
      %361 = vmatprep.subr.bf16.mxu0 0
      %362 = vmatpush2.bf16.msra.mxu0 0
      %363 = vmatprep.subr.bf16.mxu0 0
      %364 = vmatpush2.bf16.msra.mxu0 0
      %365 = vmatprep.mubr.bf16.mxu0 0
      %366 = vmatmul.mubr.bf16.gmra.mxu0 %v278
      %v367 = vpop.f32.mrf.mxu0
      %v368 = vadd.f32 0.0, %v367
      %v369 = vpop.f32.mrf.mxu0
      %v370 = vpop.f32.mrf.mxu0
      %v371 = vadd.f32 0.0, %v370
      %v372 = vpop.f32.mrf.mxu0
      %373 = vdwg.mxu0
      %v376 = vunpack.c.l.b16 %v236
      %v377 = vunpack.c.l.b16 %v237
      %v378 = vpack.c.b16 %v377, %v376
      %379 = vrot.lane.b32.xlu0 %v254, 19
      %v380 = vpop.permute.xlu0 %379
      %381 = vrot.lane.b32.xlu0 %v262, 19
      %v382 = vpop.permute.xlu0 %381
      %383 = vrot.lane.b32.xlu0 %v261, 19
      %v384 = vpop.permute.xlu0 %383
      %385 = vrot.lane.b32.xlu0 %v263, 19
      %v386 = vpop.permute.xlu0 %385
      %vm387 = vcmask 154624
      %v388 = vsel %vm387, %v380, %v382
      %v389 = vsel %vm387, %v382, %v384
      %v390 = vsel %vm387, %v384, %v386
      %v392 = vsel %vm276, %v378, 0
      %v395 = vsel %vm280, %v388, 0
      %v398 = vsel %vm280, %v389, 0
      %v401 = vsel %vm280, %v390, 0
      %403 = vmatprep.subr.bf16.mxu0 0
      %404 = vmatpush1.bf16.msra.mxu0 0
      %405 = vmatprep.subr.bf16.mxu0 0
      %406 = vmatpush1.bf16.msra.mxu0 0
      %407 = vmatprep.subr.bf16.mxu0 0
      %408 = vmatpush1.bf16.msra.mxu0 0
      %409 = vmatprep.subr.bf16.mxu0 0
      %410 = vmatpush1.bf16.msra.mxu0 0
      %411 = vmatprep.subr.bf16.mxu0 0
      %412 = vmatpush1.bf16.msra.mxu0 0
      %413 = vmatprep.subr.bf16.mxu0 0
      %414 = vmatpush1.bf16.msra.mxu0 0
      %415 = vmatprep.subr.bf16.mxu0 0
      %416 = vmatpush1.bf16.msra.mxu0 0
      %417 = vmatprep.subr.bf16.mxu0 %v398
      %418 = vmatpush1.bf16.msra.mxu0 %v395
      %419 = vmatprep.subr.bf16.mxu0 0
      %420 = vmatpush2.bf16.msra.mxu0 0
      %421 = vmatprep.subr.bf16.mxu0 0
      %422 = vmatpush2.bf16.msra.mxu0 0
      %423 = vmatprep.subr.bf16.mxu0 0
      %424 = vmatpush2.bf16.msra.mxu0 0
      %425 = vmatprep.subr.bf16.mxu0 0
      %426 = vmatpush2.bf16.msra.mxu0 0
      %427 = vmatprep.subr.bf16.mxu0 0
      %428 = vmatpush2.bf16.msra.mxu0 0
      %429 = vmatprep.subr.bf16.mxu0 0
      %430 = vmatpush2.bf16.msra.mxu0 0
      %431 = vmatprep.subr.bf16.mxu0 0
      %432 = vmatpush2.bf16.msra.mxu0 0
      %433 = vmatprep.subr.bf16.mxu0 0
      %434 = vmatpush2.bf16.msra.mxu0 0
      %435 = vmatprep.mubr.bf16.mxu0 0
      %436 = vmatmul.mubr.bf16.gmra.mxu0 %v392
      %v437 = vpop.f32.mrf.mxu0
      %v438 = vadd.f32 %v325, %v437
      %v439 = vpop.f32.mrf.mxu0
      %v440 = vadd.f32 %v327, %v439
      %v441 = vpop.f32.mrf.mxu0
      %v442 = vadd.f32 %v329, %v441
      %v443 = vpop.f32.mrf.mxu0
      %v444 = vadd.f32 %v331, %v443
      %445 = vdwg.mxu0
      %446 = vmatprep.subr.bf16.mxu0 0
      %447 = vmatpush1.bf16.msra.mxu0 0
      %448 = vmatprep.subr.bf16.mxu0 0
      %449 = vmatpush1.bf16.msra.mxu0 0
      %450 = vmatprep.subr.bf16.mxu0 0
      %451 = vmatpush1.bf16.msra.mxu0 0
      %452 = vmatprep.subr.bf16.mxu0 0
      %453 = vmatpush1.bf16.msra.mxu0 0
      %454 = vmatprep.subr.bf16.mxu0 0
      %455 = vmatpush1.bf16.msra.mxu0 0
      %456 = vmatprep.subr.bf16.mxu0 0
      %457 = vmatpush1.bf16.msra.mxu0 0
      %458 = vmatprep.subr.bf16.mxu0 0
      %459 = vmatpush1.bf16.msra.mxu0 0
      %460 = vmatprep.subr.bf16.mxu0 0
      %461 = vmatpush1.bf16.msra.mxu0 %v401
      %462 = vmatprep.subr.bf16.mxu0 0
      %463 = vmatpush2.bf16.msra.mxu0 0
      %464 = vmatprep.subr.bf16.mxu0 0
      %465 = vmatpush2.bf16.msra.mxu0 0
      %466 = vmatprep.subr.bf16.mxu0 0
      %467 = vmatpush2.bf16.msra.mxu0 0
      %468 = vmatprep.subr.bf16.mxu0 0
      %469 = vmatpush2.bf16.msra.mxu0 0
      %470 = vmatprep.subr.bf16.mxu0 0
      %471 = vmatpush2.bf16.msra.mxu0 0
      %472 = vmatprep.subr.bf16.mxu0 0
      %473 = vmatpush2.bf16.msra.mxu0 0
      %474 = vmatprep.subr.bf16.mxu0 0
      %475 = vmatpush2.bf16.msra.mxu0 0
      %476 = vmatprep.subr.bf16.mxu0 0
      %477 = vmatpush2.bf16.msra.mxu0 0
      %478 = vmatprep.mubr.bf16.mxu0 0
      %479 = vmatmul.mubr.bf16.gmra.mxu0 %v392
      %v480 = vpop.f32.mrf.mxu0
      %v481 = vadd.f32 %v368, %v480
      %v482 = vpop.f32.mrf.mxu0
      %v483 = vpop.f32.mrf.mxu0
      %v484 = vadd.f32 %v371, %v483
      %v485 = vpop.f32.mrf.mxu0
      %486 = vdwg.mxu0
      %v487 = vld [vmem:[#allocation2] sm:$0xff]
      %s488 = scalar_lea.vmem %s2, 16
      %v489 = vld [vmem:[%s488] sm:$0xf]
      %v490 = vld [vmem:[%s488 + $0x4] sm:$0xf]
      %v493 = vunpack.c.l.b16 %v489
      %v494 = vunpack.c.l.b16 %v490
      %v495 = vpack.c.b16 %v494, %v493
      %v497 = vcombine.high %v487, %v487
      %v499 = vunpack.c.l.s4 1983009808
      %v500 = vunpack.c.0.s8 %v499
      %v501 = vlaneseq
      %v502 = vshrl.u32 %v501, 7
      %v503 = vsub.s32 %v500, %v502
      %v504 = vrot.slane %v487, %v503
      %v506 = vunpack.c.l.s4 1983009808
      %v507 = vunpack.c.0.s8 %v506
      %v508 = vlaneseq
      %v509 = vshrl.u32 %v508, 7
      %v510 = vsub.s32 %v507, %v509
      %v511 = vrot.slane %v497, %v510
      %v512 = vcombine.high %v504, %v504
      %v513 = vcombine.high %v511, %v511
      %514 = vrot.lane.b32.xlu0 %v504, 17
      %v515 = vpop.permute.xlu0 %514
      %516 = vrot.lane.b32.xlu0 %v512, 17
      %v517 = vpop.permute.xlu0 %516
      %518 = vrot.lane.b32.xlu0 %v511, 17
      %v519 = vpop.permute.xlu0 %518
      %520 = vrot.lane.b32.xlu0 %v513, 17
      %v521 = vpop.permute.xlu0 %520
      %vm522 = vcmask 138240
      %v523 = vsel %vm522, %v515, %v517
      %v524 = vsel %vm522, %v517, %v519
      %v525 = vsel %vm522, %v519, %v521
      %v527 = vsel %vm276, %v495, 0
      %v530 = vsel %vm280, %v523, 0
      %v533 = vsel %vm280, %v524, 0
      %v536 = vsel %vm280, %v525, 0
      %538 = vmatprep.subr.bf16.mxu0 0
      %539 = vmatpush1.bf16.msra.mxu0 0
      %540 = vmatprep.subr.bf16.mxu0 0
      %541 = vmatpush1.bf16.msra.mxu0 0
      %542 = vmatprep.subr.bf16.mxu0 0
      %543 = vmatpush1.bf16.msra.mxu0 0
      %544 = vmatprep.subr.bf16.mxu0 0
      %545 = vmatpush1.bf16.msra.mxu0 0
      %546 = vmatprep.subr.bf16.mxu0 0
      %547 = vmatpush1.bf16.msra.mxu0 0
      %548 = vmatprep.subr.bf16.mxu0 0
      %549 = vmatpush1.bf16.msra.mxu0 0
      %550 = vmatprep.subr.bf16.mxu0 0
      %551 = vmatpush1.bf16.msra.mxu0 0
      %552 = vmatprep.subr.bf16.mxu0 %v533
      %553 = vmatpush1.bf16.msra.mxu0 %v530
      %554 = vmatprep.subr.bf16.mxu0 0
      %555 = vmatpush2.bf16.msra.mxu0 0
      %556 = vmatprep.subr.bf16.mxu0 0
      %557 = vmatpush2.bf16.msra.mxu0 0
      %558 = vmatprep.subr.bf16.mxu0 0
      %559 = vmatpush2.bf16.msra.mxu0 0
      %560 = vmatprep.subr.bf16.mxu0 0
      %561 = vmatpush2.bf16.msra.mxu0 0
      %562 = vmatprep.subr.bf16.mxu0 0
      %563 = vmatpush2.bf16.msra.mxu0 0
      %564 = vmatprep.subr.bf16.mxu0 0
      %565 = vmatpush2.bf16.msra.mxu0 0
      %566 = vmatprep.subr.bf16.mxu0 0
      %567 = vmatpush2.bf16.msra.mxu0 0
      %568 = vmatprep.subr.bf16.mxu0 0
      %569 = vmatpush2.bf16.msra.mxu0 0
      %570 = vmatprep.mubr.bf16.mxu0 0
      %571 = vmatmul.mubr.bf16.gmra.mxu0 %v527
      %v572 = vpop.f32.mrf.mxu0
      %v573 = vadd.f32 0.0, %v572
      %v574 = vpop.f32.mrf.mxu0
      %v575 = vadd.f32 0.0, %v574
      %v576 = vpop.f32.mrf.mxu0
      %v577 = vadd.f32 0.0, %v576
      %v578 = vpop.f32.mrf.mxu0
      %v579 = vadd.f32 0.0, %v578
      %580 = vdwg.mxu0
      %581 = vmatprep.subr.bf16.mxu0 0
      %582 = vmatpush1.bf16.msra.mxu0 0
      %583 = vmatprep.subr.bf16.mxu0 0
      %584 = vmatpush1.bf16.msra.mxu0 0
      %585 = vmatprep.subr.bf16.mxu0 0
      %586 = vmatpush1.bf16.msra.mxu0 0
      %587 = vmatprep.subr.bf16.mxu0 0
      %588 = vmatpush1.bf16.msra.mxu0 0
      %589 = vmatprep.subr.bf16.mxu0 0
      %590 = vmatpush1.bf16.msra.mxu0 0
      %591 = vmatprep.subr.bf16.mxu0 0
      %592 = vmatpush1.bf16.msra.mxu0 0
      %593 = vmatprep.subr.bf16.mxu0 0
      %594 = vmatpush1.bf16.msra.mxu0 0
      %595 = vmatprep.subr.bf16.mxu0 0
      %596 = vmatpush1.bf16.msra.mxu0 %v536
      %597 = vmatprep.subr.bf16.mxu0 0
      %598 = vmatpush2.bf16.msra.mxu0 0
      %599 = vmatprep.subr.bf16.mxu0 0
      %600 = vmatpush2.bf16.msra.mxu0 0
      %601 = vmatprep.subr.bf16.mxu0 0
      %602 = vmatpush2.bf16.msra.mxu0 0
      %603 = vmatprep.subr.bf16.mxu0 0
      %604 = vmatpush2.bf16.msra.mxu0 0
      %605 = vmatprep.subr.bf16.mxu0 0
      %606 = vmatpush2.bf16.msra.mxu0 0
      %607 = vmatprep.subr.bf16.mxu0 0
      %608 = vmatpush2.bf16.msra.mxu0 0
      %609 = vmatprep.subr.bf16.mxu0 0
      %610 = vmatpush2.bf16.msra.mxu0 0
      %611 = vmatprep.subr.bf16.mxu0 0
      %612 = vmatpush2.bf16.msra.mxu0 0
      %613 = vmatprep.mubr.bf16.mxu0 0
      %614 = vmatmul.mubr.bf16.gmra.mxu0 %v527
      %v615 = vpop.f32.mrf.mxu0
      %v616 = vadd.f32 0.0, %v615
      %v617 = vpop.f32.mrf.mxu0
      %v618 = vpop.f32.mrf.mxu0
      %v619 = vadd.f32 0.0, %v618
      %v620 = vpop.f32.mrf.mxu0
      %621 = vdwg.mxu0
      %v622 = vadd.f32 %v438, %v573
      %v623 = vadd.f32 %v440, %v575
      %v624 = vadd.f32 %v481, %v616
      %v625 = vadd.f32 %v442, %v577
      %v626 = vadd.f32 %v444, %v579
      %v627 = vadd.f32 %v484, %v619
      %v628 = vld [vmem:[#allocation2] sm:$0xff]
      %s629 = scalar_lea.vmem %s2, 24
      %v630 = vld [vmem:[%s629] sm:$0xf]
      %v631 = vld [vmem:[%s629 + $0x4] sm:$0xf]
      %v634 = vunpack.c.l.b16 %v630
      %v635 = vunpack.c.l.b16 %v631
      %v636 = vpack.c.b16 %v635, %v634
      %v638 = vcombine.high %v628, %v628
      %v640 = vunpack.c.l.s4 1983009808
      %v641 = vunpack.c.0.s8 %v640
      %v642 = vlaneseq
      %v643 = vshrl.u32 %v642, 7
      %v644 = vsub.s32 %v641, %v643
      %v645 = vrot.slane %v628, %v644
      %v647 = vunpack.c.l.s4 1983009808
      %v648 = vunpack.c.0.s8 %v647
      %v649 = vlaneseq
      %v650 = vshrl.u32 %v649, 7
      %v651 = vsub.s32 %v648, %v650
      %v652 = vrot.slane %v638, %v651
      %v653 = vcombine.high %v645, %v645
      %v654 = vcombine.high %v652, %v652
      %655 = vrot.lane.b32.xlu0 %v645, 1
      %v656 = vpop.permute.xlu0 %655
      %657 = vrot.lane.b32.xlu0 %v653, 1
      %v658 = vpop.permute.xlu0 %657
      %659 = vrot.lane.b32.xlu0 %v652, 1
      %v660 = vpop.permute.xlu0 %659
      %661 = vrot.lane.b32.xlu0 %v654, 1
      %v662 = vpop.permute.xlu0 %661
      %vm663 = vcmask 7168
      %v664 = vsel %vm663, %v656, %v658
      %v665 = vsel %vm663, %v658, %v660
      %v666 = vsel %vm663, %v660, %v662
      %v668 = vsel %vm276, %v636, 0
      %v671 = vsel %vm280, %v664, 0
      %v674 = vsel %vm280, %v665, 0
      %v677 = vsel %vm280, %v666, 0
      %679 = vmatprep.subr.bf16.mxu0 0
      %680 = vmatpush1.bf16.msra.mxu0 0
      %681 = vmatprep.subr.bf16.mxu0 0
      %682 = vmatpush1.bf16.msra.mxu0 0
      %683 = vmatprep.subr.bf16.mxu0 0
      %684 = vmatpush1.bf16.msra.mxu0 0
      %685 = vmatprep.subr.bf16.mxu0 0
      %686 = vmatpush1.bf16.msra.mxu0 0
      %687 = vmatprep.subr.bf16.mxu0 0
      %688 = vmatpush1.bf16.msra.mxu0 0
      %689 = vmatprep.subr.bf16.mxu0 0
      %690 = vmatpush1.bf16.msra.mxu0 0
      %691 = vmatprep.subr.bf16.mxu0 0
      %692 = vmatpush1.bf16.msra.mxu0 0
      %693 = vmatprep.subr.bf16.mxu0 %v674
      %694 = vmatpush1.bf16.msra.mxu0 %v671
      %695 = vmatprep.subr.bf16.mxu0 0
      %696 = vmatpush2.bf16.msra.mxu0 0
      %697 = vmatprep.subr.bf16.mxu0 0
      %698 = vmatpush2.bf16.msra.mxu0 0
      %699 = vmatprep.subr.bf16.mxu0 0
      %700 = vmatpush2.bf16.msra.mxu0 0
      %701 = vmatprep.subr.bf16.mxu0 0
      %702 = vmatpush2.bf16.msra.mxu0 0
      %703 = vmatprep.subr.bf16.mxu0 0
      %704 = vmatpush2.bf16.msra.mxu0 0
      %705 = vmatprep.subr.bf16.mxu0 0
      %706 = vmatpush2.bf16.msra.mxu0 0
      %707 = vmatprep.subr.bf16.mxu0 0
      %708 = vmatpush2.bf16.msra.mxu0 0
      %709 = vmatprep.subr.bf16.mxu0 0
      %710 = vmatpush2.bf16.msra.mxu0 0
      %711 = vmatprep.mubr.bf16.mxu0 0
      %712 = vmatmul.mubr.bf16.gmra.mxu0 %v668
      %v713 = vpop.f32.mrf.mxu0
      %v714 = vadd.f32 0.0, %v713
      %v715 = vpop.f32.mrf.mxu0
      %v716 = vadd.f32 0.0, %v715
      %v717 = vpop.f32.mrf.mxu0
      %v718 = vadd.f32 0.0, %v717
      %v719 = vpop.f32.mrf.mxu0
      %v720 = vadd.f32 0.0, %v719
      %721 = vdwg.mxu0
      %722 = vmatprep.subr.bf16.mxu0 0
      %723 = vmatpush1.bf16.msra.mxu0 0
      %724 = vmatprep.subr.bf16.mxu0 0
      %725 = vmatpush1.bf16.msra.mxu0 0
      %726 = vmatprep.subr.bf16.mxu0 0
      %727 = vmatpush1.bf16.msra.mxu0 0
      %728 = vmatprep.subr.bf16.mxu0 0
      %729 = vmatpush1.bf16.msra.mxu0 0
      %730 = vmatprep.subr.bf16.mxu0 0
      %731 = vmatpush1.bf16.msra.mxu0 0
      %732 = vmatprep.subr.bf16.mxu0 0
      %733 = vmatpush1.bf16.msra.mxu0 0
      %734 = vmatprep.subr.bf16.mxu0 0
      %735 = vmatpush1.bf16.msra.mxu0 0
      %736 = vmatprep.subr.bf16.mxu0 0
      %737 = vmatpush1.bf16.msra.mxu0 %v677
      %738 = vmatprep.subr.bf16.mxu0 0
      %739 = vmatpush2.bf16.msra.mxu0 0
      %740 = vmatprep.subr.bf16.mxu0 0
      %741 = vmatpush2.bf16.msra.mxu0 0
      %742 = vmatprep.subr.bf16.mxu0 0
      %743 = vmatpush2.bf16.msra.mxu0 0
      %744 = vmatprep.subr.bf16.mxu0 0
      %745 = vmatpush2.bf16.msra.mxu0 0
      %746 = vmatprep.subr.bf16.mxu0 0
      %747 = vmatpush2.bf16.msra.mxu0 0
      %748 = vmatprep.subr.bf16.mxu0 0
      %749 = vmatpush2.bf16.msra.mxu0 0
      %750 = vmatprep.subr.bf16.mxu0 0
      %751 = vmatpush2.bf16.msra.mxu0 0
      %752 = vmatprep.subr.bf16.mxu0 0
      %753 = vmatpush2.bf16.msra.mxu0 0
      %754 = vmatprep.mubr.bf16.mxu0 0
      %755 = vmatmul.mubr.bf16.gmra.mxu0 %v668
      %v756 = vpop.f32.mrf.mxu0
      %v757 = vadd.f32 0.0, %v756
      %v758 = vpop.f32.mrf.mxu0
      %v759 = vpop.f32.mrf.mxu0
      %v760 = vadd.f32 0.0, %v759
      %v761 = vpop.f32.mrf.mxu0
      %762 = vdwg.mxu0
      %v763 = vadd.f32 %v622, %v714
      %v764 = vadd.f32 %v623, %v716
      %v765 = vadd.f32 %v624, %v757
      %v766 = vadd.f32 %v625, %v718
      %v767 = vadd.f32 %v626, %v720
      %v768 = vadd.f32 %v627, %v760
      %v769 = vld [vmem:[#allocation2 + $0x2] sm:$0x3f]
      %s770 = scalar_lea.vmem %s2, 32
      %v771 = vld [vmem:[%s770] sm:$0xf]
      %v772 = vld [vmem:[%s770 + $0x4] sm:$0xf]
      %v775 = vunpack.c.l.b16 %v771
      %v776 = vunpack.c.l.b16 %v772
      %v777 = vpack.c.b16 %v776, %v775
      %v779 = vcombine.high %v769, %v769
      %v781 = vunpack.c.l.s4 1983009808
      %v782 = vunpack.c.0.s8 %v781
      %v783 = vlaneseq
      %v784 = vshrl.u32 %v783, 7
      %v785 = vsub.s32 %v782, %v784
      %v786 = vrot.slane %v769, %v785
      %v788 = vunpack.c.l.s4 1983009808
      %v789 = vunpack.c.0.s8 %v788
      %v790 = vlaneseq
      %v791 = vshrl.u32 %v790, 7
      %v792 = vsub.s32 %v789, %v791
      %v793 = vrot.slane %v779, %v792
      %v794 = vcombine.high %v786, %v786
      %v796 = vsel %vm276, %v777, 0
      %v799 = vsel %vm280, %v786, 0
      %v802 = vsel %vm280, %v794, 0
      %v805 = vsel %vm280, %v793, 0
      %807 = vmatprep.subr.bf16.mxu0 0
      %808 = vmatpush1.bf16.msra.mxu0 0
      %809 = vmatprep.subr.bf16.mxu0 0
      %810 = vmatpush1.bf16.msra.mxu0 0
      %811 = vmatprep.subr.bf16.mxu0 0
      %812 = vmatpush1.bf16.msra.mxu0 0
      %813 = vmatprep.subr.bf16.mxu0 0
      %814 = vmatpush1.bf16.msra.mxu0 0
      %815 = vmatprep.subr.bf16.mxu0 0
      %816 = vmatpush1.bf16.msra.mxu0 0
      %817 = vmatprep.subr.bf16.mxu0 0
      %818 = vmatpush1.bf16.msra.mxu0 0
      %819 = vmatprep.subr.bf16.mxu0 0
      %820 = vmatpush1.bf16.msra.mxu0 0
      %821 = vmatprep.subr.bf16.mxu0 %v802
      %822 = vmatpush1.bf16.msra.mxu0 %v799
      %823 = vmatprep.subr.bf16.mxu0 0
      %824 = vmatpush2.bf16.msra.mxu0 0
      %825 = vmatprep.subr.bf16.mxu0 0
      %826 = vmatpush2.bf16.msra.mxu0 0
      %827 = vmatprep.subr.bf16.mxu0 0
      %828 = vmatpush2.bf16.msra.mxu0 0
      %829 = vmatprep.subr.bf16.mxu0 0
      %830 = vmatpush2.bf16.msra.mxu0 0
      %831 = vmatprep.subr.bf16.mxu0 0
      %832 = vmatpush2.bf16.msra.mxu0 0
      %833 = vmatprep.subr.bf16.mxu0 0
      %834 = vmatpush2.bf16.msra.mxu0 0
      %835 = vmatprep.subr.bf16.mxu0 0
      %836 = vmatpush2.bf16.msra.mxu0 0
      %837 = vmatprep.subr.bf16.mxu0 0
      %838 = vmatpush2.bf16.msra.mxu0 0
      %839 = vmatprep.mubr.bf16.mxu0 0
      %840 = vmatmul.mubr.bf16.gmra.mxu0 %v796
      %v841 = vpop.f32.mrf.mxu0
      %v842 = vadd.f32 0.0, %v841
      %v843 = vpop.f32.mrf.mxu0
      %v844 = vadd.f32 0.0, %v843
      %v845 = vpop.f32.mrf.mxu0
      %v846 = vadd.f32 0.0, %v845
      %v847 = vpop.f32.mrf.mxu0
      %v848 = vadd.f32 0.0, %v847
      %849 = vdwg.mxu0
      %850 = vmatprep.subr.bf16.mxu0 0
      %851 = vmatpush1.bf16.msra.mxu0 0
      %852 = vmatprep.subr.bf16.mxu0 0
      %853 = vmatpush1.bf16.msra.mxu0 0
      %854 = vmatprep.subr.bf16.mxu0 0
      %855 = vmatpush1.bf16.msra.mxu0 0
      %856 = vmatprep.subr.bf16.mxu0 0
      %857 = vmatpush1.bf16.msra.mxu0 0
      %858 = vmatprep.subr.bf16.mxu0 0
      %859 = vmatpush1.bf16.msra.mxu0 0
      %860 = vmatprep.subr.bf16.mxu0 0
      %861 = vmatpush1.bf16.msra.mxu0 0
      %862 = vmatprep.subr.bf16.mxu0 0
      %863 = vmatpush1.bf16.msra.mxu0 0
      %864 = vmatprep.subr.bf16.mxu0 0
      %865 = vmatpush1.bf16.msra.mxu0 %v805
      %866 = vmatprep.subr.bf16.mxu0 0
      %867 = vmatpush2.bf16.msra.mxu0 0
      %868 = vmatprep.subr.bf16.mxu0 0
      %869 = vmatpush2.bf16.msra.mxu0 0
      %870 = vmatprep.subr.bf16.mxu0 0
      %871 = vmatpush2.bf16.msra.mxu0 0
      %872 = vmatprep.subr.bf16.mxu0 0
      %873 = vmatpush2.bf16.msra.mxu0 0
      %874 = vmatprep.subr.bf16.mxu0 0
      %875 = vmatpush2.bf16.msra.mxu0 0
      %876 = vmatprep.subr.bf16.mxu0 0
      %877 = vmatpush2.bf16.msra.mxu0 0
      %878 = vmatprep.subr.bf16.mxu0 0
      %879 = vmatpush2.bf16.msra.mxu0 0
      %880 = vmatprep.subr.bf16.mxu0 0
      %881 = vmatpush2.bf16.msra.mxu0 0
      %882 = vmatprep.mubr.bf16.mxu0 0
      %883 = vmatmul.mubr.bf16.gmra.mxu0 %v796
      %v884 = vpop.f32.mrf.mxu0
      %v885 = vadd.f32 0.0, %v884
      %v886 = vpop.f32.mrf.mxu0
      %v887 = vpop.f32.mrf.mxu0
      %v888 = vadd.f32 0.0, %v887
      %v889 = vpop.f32.mrf.mxu0
      %890 = vdwg.mxu0
      %v891 = vadd.f32 %v763, %v842
      %v892 = vadd.f32 %v764, %v844
      %v893 = vadd.f32 %v765, %v885
      %v894 = vadd.f32 %v766, %v846
      %v895 = vadd.f32 %v767, %v848
      %v896 = vadd.f32 %v768, %v888
      %v897 = vld [vmem:[#allocation2 + $0x2] sm:$0x3f]
      %s898 = scalar_lea.vmem %s2, 40
      %v899 = vld [vmem:[%s898] sm:$0xf]
      %v900 = vld [vmem:[%s898 + $0x4] sm:$0xf]
      %v903 = vunpack.c.l.b16 %v899
      %v904 = vunpack.c.l.b16 %v900
      %v905 = vpack.c.b16 %v904, %v903
      %v907 = vcombine.high %v897, %v897
      %v909 = vunpack.c.l.s4 1983009808
      %v910 = vunpack.c.0.s8 %v909
      %v911 = vlaneseq
      %v912 = vshrl.u32 %v911, 7
      %v913 = vsub.s32 %v910, %v912
      %v914 = vrot.slane %v897, %v913
      %v916 = vunpack.c.l.s4 1983009808
      %v917 = vunpack.c.0.s8 %v916
      %v918 = vlaneseq
      %v919 = vshrl.u32 %v918, 7
      %v920 = vsub.s32 %v917, %v919
      %v921 = vrot.slane %v907, %v920
      %v922 = vcombine.high %v914, %v914
      %923 = vrot.lane.b32.xlu0 %v914, 127
      %v924 = vpop.permute.xlu0 %923
      %925 = vrot.lane.b32.xlu0 %v922, 127
      %v926 = vpop.permute.xlu0 %925
      %927 = vrot.lane.b32.xlu0 %v921, 127
      %v928 = vpop.permute.xlu0 %927
      %vm929 = vcmask 1039360
      %v930 = vsel %vm929, %v924, %v926
      %v931 = vsel %vm929, %v926, %v928
      %v933 = vsel %vm276, %v905, 0
      %v936 = vsel %vm280, %v930, 0
      %v939 = vsel %vm280, %v931, 0
      %v942 = vsel %vm280, %v928, 0
      %944 = vmatprep.subr.bf16.mxu0 0
      %945 = vmatpush1.bf16.msra.mxu0 0
      %946 = vmatprep.subr.bf16.mxu0 0
      %947 = vmatpush1.bf16.msra.mxu0 0
      %948 = vmatprep.subr.bf16.mxu0 0
      %949 = vmatpush1.bf16.msra.mxu0 0
      %950 = vmatprep.subr.bf16.mxu0 0
      %951 = vmatpush1.bf16.msra.mxu0 0
      %952 = vmatprep.subr.bf16.mxu0 0
      %953 = vmatpush1.bf16.msra.mxu0 0
      %954 = vmatprep.subr.bf16.mxu0 0
      %955 = vmatpush1.bf16.msra.mxu0 0
      %956 = vmatprep.subr.bf16.mxu0 0
      %957 = vmatpush1.bf16.msra.mxu0 0
      %958 = vmatprep.subr.bf16.mxu0 %v939
      %959 = vmatpush1.bf16.msra.mxu0 %v936
      %960 = vmatprep.subr.bf16.mxu0 0
      %961 = vmatpush2.bf16.msra.mxu0 0
      %962 = vmatprep.subr.bf16.mxu0 0
      %963 = vmatpush2.bf16.msra.mxu0 0
      %964 = vmatprep.subr.bf16.mxu0 0
      %965 = vmatpush2.bf16.msra.mxu0 0
      %966 = vmatprep.subr.bf16.mxu0 0
      %967 = vmatpush2.bf16.msra.mxu0 0
      %968 = vmatprep.subr.bf16.mxu0 0
      %969 = vmatpush2.bf16.msra.mxu0 0
      %970 = vmatprep.subr.bf16.mxu0 0
      %971 = vmatpush2.bf16.msra.mxu0 0
      %972 = vmatprep.subr.bf16.mxu0 0
      %973 = vmatpush2.bf16.msra.mxu0 0
      %974 = vmatprep.subr.bf16.mxu0 0
      %975 = vmatpush2.bf16.msra.mxu0 0
      %976 = vmatprep.mubr.bf16.mxu0 0
      %977 = vmatmul.mubr.bf16.gmra.mxu0 %v933
      %v978 = vpop.f32.mrf.mxu0
      %v979 = vadd.f32 0.0, %v978
      %v980 = vpop.f32.mrf.mxu0
      %v981 = vadd.f32 0.0, %v980
      %v982 = vpop.f32.mrf.mxu0
      %v983 = vadd.f32 0.0, %v982
      %v984 = vpop.f32.mrf.mxu0
      %v985 = vadd.f32 0.0, %v984
      %986 = vdwg.mxu0
      %987 = vmatprep.subr.bf16.mxu0 0
      %988 = vmatpush1.bf16.msra.mxu0 0
      %989 = vmatprep.subr.bf16.mxu0 0
      %990 = vmatpush1.bf16.msra.mxu0 0
      %991 = vmatprep.subr.bf16.mxu0 0
      %992 = vmatpush1.bf16.msra.mxu0 0
      %993 = vmatprep.subr.bf16.mxu0 0
      %994 = vmatpush1.bf16.msra.mxu0 0
      %995 = vmatprep.subr.bf16.mxu0 0
      %996 = vmatpush1.bf16.msra.mxu0 0
      %997 = vmatprep.subr.bf16.mxu0 0
      %998 = vmatpush1.bf16.msra.mxu0 0
      %999 = vmatprep.subr.bf16.mxu0 0
      %1000 = vmatpush1.bf16.msra.mxu0 0
      %1001 = vmatprep.subr.bf16.mxu0 0
      %1002 = vmatpush1.bf16.msra.mxu0 %v942
      %1003 = vmatprep.subr.bf16.mxu0 0
      %1004 = vmatpush2.bf16.msra.mxu0 0
      %1005 = vmatprep.subr.bf16.mxu0 0
      %1006 = vmatpush2.bf16.msra.mxu0 0
      %1007 = vmatprep.subr.bf16.mxu0 0
      %1008 = vmatpush2.bf16.msra.mxu0 0
      %1009 = vmatprep.subr.bf16.mxu0 0
      %1010 = vmatpush2.bf16.msra.mxu0 0
      %1011 = vmatprep.subr.bf16.mxu0 0
      %1012 = vmatpush2.bf16.msra.mxu0 0
      %1013 = vmatprep.subr.bf16.mxu0 0
      %1014 = vmatpush2.bf16.msra.mxu0 0
      %1015 = vmatprep.subr.bf16.mxu0 0
      %1016 = vmatpush2.bf16.msra.mxu0 0
      %1017 = vmatprep.subr.bf16.mxu0 0
      %1018 = vmatpush2.bf16.msra.mxu0 0
      %1019 = vmatprep.mubr.bf16.mxu0 0
      %1020 = vmatmul.mubr.bf16.gmra.mxu0 %v933
      %v1021 = vpop.f32.mrf.mxu0
      %v1022 = vadd.f32 0.0, %v1021
      %v1023 = vpop.f32.mrf.mxu0
      %v1024 = vpop.f32.mrf.mxu0
      %v1025 = vadd.f32 0.0, %v1024
      %v1026 = vpop.f32.mrf.mxu0
      %1027 = vdwg.mxu0
      %v1028 = vadd.f32 %v891, %v979
      %v1029 = vadd.f32 %v892, %v981
      %v1030 = vadd.f32 %v893, %v1022
      %v1031 = vadd.f32 %v894, %v983
      %v1032 = vadd.f32 %v895, %v985
      %v1033 = vadd.f32 %v896, %v1025
      %v1034 = vld [vmem:[#allocation2 + $0x2] sm:$0x3f]
      %s1035 = scalar_lea.vmem %s2, 48
      %v1036 = vld [vmem:[%s1035] sm:$0xf]
      %v1037 = vld [vmem:[%s1035 + $0x4] sm:$0xf]
      %v1040 = vunpack.c.l.b16 %v1036
      %v1041 = vunpack.c.l.b16 %v1037
      %v1042 = vpack.c.b16 %v1041, %v1040
      %v1044 = vcombine.high %v1034, %v1034
      %v1046 = vunpack.c.l.s4 1983009808
      %v1047 = vunpack.c.0.s8 %v1046
      %v1048 = vlaneseq
      %v1049 = vshrl.u32 %v1048, 7
      %v1050 = vsub.s32 %v1047, %v1049
      %v1051 = vrot.slane %v1034, %v1050
      %v1053 = vunpack.c.l.s4 1983009808
      %v1054 = vunpack.c.0.s8 %v1053
      %v1055 = vlaneseq
      %v1056 = vshrl.u32 %v1055, 7
      %v1057 = vsub.s32 %v1054, %v1056
      %v1058 = vrot.slane %v1044, %v1057
      %v1059 = vcombine.high %v1051, %v1051
      %1060 = vrot.lane.b32.xlu0 %v1051, 111
      %v1061 = vpop.permute.xlu0 %1060
      %1062 = vrot.lane.b32.xlu0 %v1059, 111
      %v1063 = vpop.permute.xlu0 %1062
      %1064 = vrot.lane.b32.xlu0 %v1058, 111
      %v1065 = vpop.permute.xlu0 %1064
      %vm1066 = vcmask 908288
      %v1067 = vsel %vm1066, %v1061, %v1063
      %v1068 = vsel %vm1066, %v1063, %v1065
      %v1070 = vsel %vm276, %v1042, 0
      %v1073 = vsel %vm280, %v1067, 0
      %v1076 = vsel %vm280, %v1068, 0
      %v1079 = vsel %vm280, %v1065, 0
      %1081 = vmatprep.subr.bf16.mxu0 0
      %1082 = vmatpush1.bf16.msra.mxu0 0
      %1083 = vmatprep.subr.bf16.mxu0 0
      %1084 = vmatpush1.bf16.msra.mxu0 0
      %1085 = vmatprep.subr.bf16.mxu0 0
      %1086 = vmatpush1.bf16.msra.mxu0 0
      %1087 = vmatprep.subr.bf16.mxu0 0
      %1088 = vmatpush1.bf16.msra.mxu0 0
      %1089 = vmatprep.subr.bf16.mxu0 0
      %1090 = vmatpush1.bf16.msra.mxu0 0
      %1091 = vmatprep.subr.bf16.mxu0 0
      %1092 = vmatpush1.bf16.msra.mxu0 0
      %1093 = vmatprep.subr.bf16.mxu0 0
      %1094 = vmatpush1.bf16.msra.mxu0 0
      %1095 = vmatprep.subr.bf16.mxu0 %v1076
      %1096 = vmatpush1.bf16.msra.mxu0 %v1073
      %1097 = vmatprep.subr.bf16.mxu0 0
      %1098 = vmatpush2.bf16.msra.mxu0 0
      %1099 = vmatprep.subr.bf16.mxu0 0
      %1100 = vmatpush2.bf16.msra.mxu0 0
      %1101 = vmatprep.subr.bf16.mxu0 0
      %1102 = vmatpush2.bf16.msra.mxu0 0
      %1103 = vmatprep.subr.bf16.mxu0 0
      %1104 = vmatpush2.bf16.msra.mxu0 0
      %1105 = vmatprep.subr.bf16.mxu0 0
      %1106 = vmatpush2.bf16.msra.mxu0 0
      %1107 = vmatprep.subr.bf16.mxu0 0
      %1108 = vmatpush2.bf16.msra.mxu0 0
      %1109 = vmatprep.subr.bf16.mxu0 0
      %1110 = vmatpush2.bf16.msra.mxu0 0
      %1111 = vmatprep.subr.bf16.mxu0 0
      %1112 = vmatpush2.bf16.msra.mxu0 0
      %1113 = vmatprep.mubr.bf16.mxu0 0
      %1114 = vmatmul.mubr.bf16.gmra.mxu0 %v1070
      %v1115 = vpop.f32.mrf.mxu0
      %v1116 = vadd.f32 0.0, %v1115
      %v1117 = vpop.f32.mrf.mxu0
      %v1118 = vadd.f32 0.0, %v1117
      %v1119 = vpop.f32.mrf.mxu0
      %v1120 = vadd.f32 0.0, %v1119
      %v1121 = vpop.f32.mrf.mxu0
      %v1122 = vadd.f32 0.0, %v1121
      %1123 = vdwg.mxu0
      %1124 = vmatprep.subr.bf16.mxu0 0
      %1125 = vmatpush1.bf16.msra.mxu0 0
      %1126 = vmatprep.subr.bf16.mxu0 0
      %1127 = vmatpush1.bf16.msra.mxu0 0
      %1128 = vmatprep.subr.bf16.mxu0 0
      %1129 = vmatpush1.bf16.msra.mxu0 0
      %1130 = vmatprep.subr.bf16.mxu0 0
      %1131 = vmatpush1.bf16.msra.mxu0 0
      %1132 = vmatprep.subr.bf16.mxu0 0
      %1133 = vmatpush1.bf16.msra.mxu0 0
      %1134 = vmatprep.subr.bf16.mxu0 0
      %1135 = vmatpush1.bf16.msra.mxu0 0
      %1136 = vmatprep.subr.bf16.mxu0 0
      %1137 = vmatpush1.bf16.msra.mxu0 0
      %1138 = vmatprep.subr.bf16.mxu0 0
      %1139 = vmatpush1.bf16.msra.mxu0 %v1079
      %1140 = vmatprep.subr.bf16.mxu0 0
      %1141 = vmatpush2.bf16.msra.mxu0 0
      %1142 = vmatprep.subr.bf16.mxu0 0
      %1143 = vmatpush2.bf16.msra.mxu0 0
      %1144 = vmatprep.subr.bf16.mxu0 0
      %1145 = vmatpush2.bf16.msra.mxu0 0
      %1146 = vmatprep.subr.bf16.mxu0 0
      %1147 = vmatpush2.bf16.msra.mxu0 0
      %1148 = vmatprep.subr.bf16.mxu0 0
      %1149 = vmatpush2.bf16.msra.mxu0 0
      %1150 = vmatprep.subr.bf16.mxu0 0
      %1151 = vmatpush2.bf16.msra.mxu0 0
      %1152 = vmatprep.subr.bf16.mxu0 0
      %1153 = vmatpush2.bf16.msra.mxu0 0
      %1154 = vmatprep.subr.bf16.mxu0 0
      %1155 = vmatpush2.bf16.msra.mxu0 0
      %1156 = vmatprep.mubr.bf16.mxu0 0
      %1157 = vmatmul.mubr.bf16.gmra.mxu0 %v1070
      %v1158 = vpop.f32.mrf.mxu0
      %v1159 = vadd.f32 0.0, %v1158
      %v1160 = vpop.f32.mrf.mxu0
      %v1161 = vpop.f32.mrf.mxu0
      %v1162 = vadd.f32 0.0, %v1161
      %v1163 = vpop.f32.mrf.mxu0
      %1164 = vdwg.mxu0
      %v1165 = vadd.f32 %v1028, %v1116
      %v1166 = vadd.f32 %v1029, %v1118
      %v1167 = vadd.f32 %v1030, %v1159
      %v1168 = vadd.f32 %v1031, %v1120
      %v1169 = vadd.f32 %v1032, %v1122
      %v1170 = vadd.f32 %v1033, %v1162
      %v1171 = vld [vmem:[#allocation2 + $0x2] sm:$0x3f]
      %s1172 = scalar_lea.vmem %s2, 56
      %v1173 = vld [vmem:[%s1172] sm:$0xf]
      %v1174 = vld [vmem:[%s1172 + $0x4] sm:$0xf]
      %v1177 = vunpack.c.l.b16 %v1173
      %v1178 = vunpack.c.l.b16 %v1174
      %v1179 = vpack.c.b16 %v1178, %v1177
      %v1181 = vcombine.high %v1171, %v1171
      %v1183 = vunpack.c.l.s4 1983009808
      %v1184 = vunpack.c.0.s8 %v1183
      %v1185 = vlaneseq
      %v1186 = vshrl.u32 %v1185, 7
      %v1187 = vsub.s32 %v1184, %v1186
      %v1188 = vrot.slane %v1171, %v1187
      %v1190 = vunpack.c.l.s4 1983009808
      %v1191 = vunpack.c.0.s8 %v1190
      %v1192 = vlaneseq
      %v1193 = vshrl.u32 %v1192, 7
      %v1194 = vsub.s32 %v1191, %v1193
      %v1195 = vrot.slane %v1181, %v1194
      %v1196 = vcombine.high %v1188, %v1188
      %1197 = vrot.lane.b32.xlu0 %v1188, 110
      %v1198 = vpop.permute.xlu0 %1197
      %1199 = vrot.lane.b32.xlu0 %v1196, 110
      %v1200 = vpop.permute.xlu0 %1199
      %1201 = vrot.lane.b32.xlu0 %v1195, 110
      %v1202 = vpop.permute.xlu0 %1201
      %vm1203 = vcmask 900096
      %v1204 = vsel %vm1203, %v1198, %v1200
      %v1205 = vsel %vm1203, %v1200, %v1202
      %v1207 = vsel %vm276, %v1179, 0
      %v1210 = vsel %vm280, %v1204, 0
      %v1213 = vsel %vm280, %v1205, 0
      %v1216 = vsel %vm280, %v1202, 0
      %1218 = vmatprep.subr.bf16.mxu0 0
      %1219 = vmatpush1.bf16.msra.mxu0 0
      %1220 = vmatprep.subr.bf16.mxu0 0
      %1221 = vmatpush1.bf16.msra.mxu0 0
      %1222 = vmatprep.subr.bf16.mxu0 0
      %1223 = vmatpush1.bf16.msra.mxu0 0
      %1224 = vmatprep.subr.bf16.mxu0 0
      %1225 = vmatpush1.bf16.msra.mxu0 0
      %1226 = vmatprep.subr.bf16.mxu0 0
      %1227 = vmatpush1.bf16.msra.mxu0 0
      %1228 = vmatprep.subr.bf16.mxu0 0
      %1229 = vmatpush1.bf16.msra.mxu0 0
      %1230 = vmatprep.subr.bf16.mxu0 0
      %1231 = vmatpush1.bf16.msra.mxu0 0
      %1232 = vmatprep.subr.bf16.mxu0 %v1213
      %1233 = vmatpush1.bf16.msra.mxu0 %v1210
      %1234 = vmatprep.subr.bf16.mxu0 0
      %1235 = vmatpush2.bf16.msra.mxu0 0
      %1236 = vmatprep.subr.bf16.mxu0 0
      %1237 = vmatpush2.bf16.msra.mxu0 0
      %1238 = vmatprep.subr.bf16.mxu0 0
      %1239 = vmatpush2.bf16.msra.mxu0 0
      %1240 = vmatprep.subr.bf16.mxu0 0
      %1241 = vmatpush2.bf16.msra.mxu0 0
      %1242 = vmatprep.subr.bf16.mxu0 0
      %1243 = vmatpush2.bf16.msra.mxu0 0
      %1244 = vmatprep.subr.bf16.mxu0 0
      %1245 = vmatpush2.bf16.msra.mxu0 0
      %1246 = vmatprep.subr.bf16.mxu0 0
      %1247 = vmatpush2.bf16.msra.mxu0 0
      %1248 = vmatprep.subr.bf16.mxu0 0
      %1249 = vmatpush2.bf16.msra.mxu0 0
      %1250 = vmatprep.mubr.bf16.mxu0 0
      %1251 = vmatmul.mubr.bf16.gmra.mxu0 %v1207
      %v1252 = vpop.f32.mrf.mxu0
      %v1253 = vadd.f32 0.0, %v1252
      %v1254 = vpop.f32.mrf.mxu0
      %v1255 = vadd.f32 0.0, %v1254
      %v1256 = vpop.f32.mrf.mxu0
      %v1257 = vadd.f32 0.0, %v1256
      %v1258 = vpop.f32.mrf.mxu0
      %v1259 = vadd.f32 0.0, %v1258
      %1260 = vdwg.mxu0
      %1261 = vmatprep.subr.bf16.mxu0 0
      %1262 = vmatpush1.bf16.msra.mxu0 0
      %1263 = vmatprep.subr.bf16.mxu0 0
      %1264 = vmatpush1.bf16.msra.mxu0 0
      %1265 = vmatprep.subr.bf16.mxu0 0
      %1266 = vmatpush1.bf16.msra.mxu0 0
      %1267 = vmatprep.subr.bf16.mxu0 0
      %1268 = vmatpush1.bf16.msra.mxu0 0
      %1269 = vmatprep.subr.bf16.mxu0 0
      %1270 = vmatpush1.bf16.msra.mxu0 0
      %1271 = vmatprep.subr.bf16.mxu0 0
      %1272 = vmatpush1.bf16.msra.mxu0 0
      %1273 = vmatprep.subr.bf16.mxu0 0
      %1274 = vmatpush1.bf16.msra.mxu0 0
      %1275 = vmatprep.subr.bf16.mxu0 0
      %1276 = vmatpush1.bf16.msra.mxu0 %v1216
      %1277 = vmatprep.subr.bf16.mxu0 0
      %1278 = vmatpush2.bf16.msra.mxu0 0
      %1279 = vmatprep.subr.bf16.mxu0 0
      %1280 = vmatpush2.bf16.msra.mxu0 0
      %1281 = vmatprep.subr.bf16.mxu0 0
      %1282 = vmatpush2.bf16.msra.mxu0 0
      %1283 = vmatprep.subr.bf16.mxu0 0
      %1284 = vmatpush2.bf16.msra.mxu0 0
      %1285 = vmatprep.subr.bf16.mxu0 0
      %1286 = vmatpush2.bf16.msra.mxu0 0
      %1287 = vmatprep.subr.bf16.mxu0 0
      %1288 = vmatpush2.bf16.msra.mxu0 0
      %1289 = vmatprep.subr.bf16.mxu0 0
      %1290 = vmatpush2.bf16.msra.mxu0 0
      %1291 = vmatprep.subr.bf16.mxu0 0
      %1292 = vmatpush2.bf16.msra.mxu0 0
      %1293 = vmatprep.mubr.bf16.mxu0 0
      %1294 = vmatmul.mubr.bf16.gmra.mxu0 %v1207
      %v1295 = vpop.f32.mrf.mxu0
      %v1296 = vadd.f32 0.0, %v1295
      %v1297 = vpop.f32.mrf.mxu0
      %v1298 = vpop.f32.mrf.mxu0
      %v1299 = vadd.f32 0.0, %v1298
      %v1300 = vpop.f32.mrf.mxu0
      %1301 = vdwg.mxu0
      %v1302 = vadd.f32 %v1165, %v1253
      %v1303 = vadd.f32 %v1166, %v1255
      %v1304 = vadd.f32 %v1167, %v1296
      %v1305 = vadd.f32 %v1168, %v1257
      %v1306 = vadd.f32 %v1169, %v1259
      %v1307 = vadd.f32 %v1170, %v1299
      %v1308 = vld [vmem:[#allocation2 + $0x2] sm:$0x3f]
      %s1309 = scalar_lea.vmem %s2, 64
      %v1310 = vld [vmem:[%s1309] sm:$0xf]
      %v1311 = vld [vmem:[%s1309 + $0x4] sm:$0xf]
      %v1314 = vunpack.c.l.b16 %v1310
      %v1315 = vunpack.c.l.b16 %v1311
      %v1316 = vpack.c.b16 %v1315, %v1314
      %v1318 = vcombine.high %v1308, %v1308
      %v1320 = vunpack.c.l.s4 1983009808
      %v1321 = vunpack.c.0.s8 %v1320
      %v1322 = vlaneseq
      %v1323 = vshrl.u32 %v1322, 7
      %v1324 = vsub.s32 %v1321, %v1323
      %v1325 = vrot.slane %v1308, %v1324
      %v1327 = vunpack.c.l.s4 1983009808
      %v1328 = vunpack.c.0.s8 %v1327
      %v1329 = vlaneseq
      %v1330 = vshrl.u32 %v1329, 7
      %v1331 = vsub.s32 %v1328, %v1330
      %v1332 = vrot.slane %v1318, %v1331
      %v1333 = vcombine.high %v1325, %v1325
      %1334 = vrot.lane.b32.xlu0 %v1325, 109
      %v1335 = vpop.permute.xlu0 %1334
      %1336 = vrot.lane.b32.xlu0 %v1333, 109
      %v1337 = vpop.permute.xlu0 %1336
      %1338 = vrot.lane.b32.xlu0 %v1332, 109
      %v1339 = vpop.permute.xlu0 %1338
      %vm1340 = vcmask 891904
      %v1341 = vsel %vm1340, %v1335, %v1337
      %v1342 = vsel %vm1340, %v1337, %v1339
      %v1344 = vsel %vm276, %v1316, 0
      %v1347 = vsel %vm280, %v1341, 0
      %v1350 = vsel %vm280, %v1342, 0
      %v1353 = vsel %vm280, %v1339, 0
      %1355 = vmatprep.subr.bf16.mxu0 0
      %1356 = vmatpush1.bf16.msra.mxu0 0
      %1357 = vmatprep.subr.bf16.mxu0 0
      %1358 = vmatpush1.bf16.msra.mxu0 0
      %1359 = vmatprep.subr.bf16.mxu0 0
      %1360 = vmatpush1.bf16.msra.mxu0 0
      %1361 = vmatprep.subr.bf16.mxu0 0
      %1362 = vmatpush1.bf16.msra.mxu0 0
      %1363 = vmatprep.subr.bf16.mxu0 0
      %1364 = vmatpush1.bf16.msra.mxu0 0
      %1365 = vmatprep.subr.bf16.mxu0 0
      %1366 = vmatpush1.bf16.msra.mxu0 0
      %1367 = vmatprep.subr.bf16.mxu0 0
      %1368 = vmatpush1.bf16.msra.mxu0 0
      %1369 = vmatprep.subr.bf16.mxu0 %v1350
      %1370 = vmatpush1.bf16.msra.mxu0 %v1347
      %1371 = vmatprep.subr.bf16.mxu0 0
      %1372 = vmatpush2.bf16.msra.mxu0 0
      %1373 = vmatprep.subr.bf16.mxu0 0
      %1374 = vmatpush2.bf16.msra.mxu0 0
      %1375 = vmatprep.subr.bf16.mxu0 0
      %1376 = vmatpush2.bf16.msra.mxu0 0
      %1377 = vmatprep.subr.bf16.mxu0 0
      %1378 = vmatpush2.bf16.msra.mxu0 0
      %1379 = vmatprep.subr.bf16.mxu0 0
      %1380 = vmatpush2.bf16.msra.mxu0 0
      %1381 = vmatprep.subr.bf16.mxu0 0
      %1382 = vmatpush2.bf16.msra.mxu0 0
      %1383 = vmatprep.subr.bf16.mxu0 0
      %1384 = vmatpush2.bf16.msra.mxu0 0
      %1385 = vmatprep.subr.bf16.mxu0 0
      %1386 = vmatpush2.bf16.msra.mxu0 0
      %1387 = vmatprep.mubr.bf16.mxu0 0
      %1388 = vmatmul.mubr.bf16.gmra.mxu0 %v1344
      %v1389 = vpop.f32.mrf.mxu0
      %v1390 = vadd.f32 0.0, %v1389
      %v1391 = vpop.f32.mrf.mxu0
      %v1392 = vadd.f32 0.0, %v1391
      %v1393 = vpop.f32.mrf.mxu0
      %v1394 = vadd.f32 0.0, %v1393
      %v1395 = vpop.f32.mrf.mxu0
      %v1396 = vadd.f32 0.0, %v1395
      %1397 = vdwg.mxu0
      %1398 = vmatprep.subr.bf16.mxu0 0
      %1399 = vmatpush1.bf16.msra.mxu0 0
      %1400 = vmatprep.subr.bf16.mxu0 0
      %1401 = vmatpush1.bf16.msra.mxu0 0
      %1402 = vmatprep.subr.bf16.mxu0 0
      %1403 = vmatpush1.bf16.msra.mxu0 0
      %1404 = vmatprep.subr.bf16.mxu0 0
      %1405 = vmatpush1.bf16.msra.mxu0 0
      %1406 = vmatprep.subr.bf16.mxu0 0
      %1407 = vmatpush1.bf16.msra.mxu0 0
      %1408 = vmatprep.subr.bf16.mxu0 0
      %1409 = vmatpush1.bf16.msra.mxu0 0
      %1410 = vmatprep.subr.bf16.mxu0 0
      %1411 = vmatpush1.bf16.msra.mxu0 0
      %1412 = vmatprep.subr.bf16.mxu0 0
      %1413 = vmatpush1.bf16.msra.mxu0 %v1353
      %1414 = vmatprep.subr.bf16.mxu0 0
      %1415 = vmatpush2.bf16.msra.mxu0 0
      %1416 = vmatprep.subr.bf16.mxu0 0
      %1417 = vmatpush2.bf16.msra.mxu0 0
      %1418 = vmatprep.subr.bf16.mxu0 0
      %1419 = vmatpush2.bf16.msra.mxu0 0
      %1420 = vmatprep.subr.bf16.mxu0 0
      %1421 = vmatpush2.bf16.msra.mxu0 0
      %1422 = vmatprep.subr.bf16.mxu0 0
      %1423 = vmatpush2.bf16.msra.mxu0 0
      %1424 = vmatprep.subr.bf16.mxu0 0
      %1425 = vmatpush2.bf16.msra.mxu0 0
      %1426 = vmatprep.subr.bf16.mxu0 0
      %1427 = vmatpush2.bf16.msra.mxu0 0
      %1428 = vmatprep.subr.bf16.mxu0 0
      %1429 = vmatpush2.bf16.msra.mxu0 0
      %1430 = vmatprep.mubr.bf16.mxu0 0
      %1431 = vmatmul.mubr.bf16.gmra.mxu0 %v1344
      %v1432 = vpop.f32.mrf.mxu0
      %v1433 = vadd.f32 0.0, %v1432
      %v1434 = vpop.f32.mrf.mxu0
      %v1435 = vpop.f32.mrf.mxu0
      %v1436 = vadd.f32 0.0, %v1435
      %v1437 = vpop.f32.mrf.mxu0
      %1438 = vdwg.mxu0
      %v1439 = vadd.f32 %v1302, %v1390
      %v1440 = vadd.f32 %v1303, %v1392
      %v1441 = vadd.f32 %v1304, %v1433
      %v1442 = vadd.f32 %v1305, %v1394
      %v1443 = vadd.f32 %v1306, %v1396
      %v1444 = vadd.f32 %v1307, %v1436
      %v1445 = vld [vmem:[%s3] sm:$0xff]
      %v1446 = vld [vmem:[%s3 + $0x8] sm:$0xff]
      %1448 = vset.pattern.permute.xlu0 0
      %1449 = vperm.xlu0 %1448, %v1445
      %v1450 = vpop.permute.xlu0 %1449
      %1453 = vset.pattern.permute.xlu0 0
      %1454 = vperm.xlu0 %1453, %v1446
      %v1455 = vpop.permute.xlu0 %1454
      %v1457 = vadd.f32 %v1439, %v1450
      %v1458 = vadd.f32 %v1440, %v1450
      %v1459 = vadd.f32 %v1441, %v1450
      %v1460 = vadd.f32 %v1442, %v1455
      %v1461 = vadd.f32 %v1443, %v1455
      %v1462 = vadd.f32 %v1444, %v1455
      %v1464 = vlaneseq
      %v1465 = vshrl.u32 %v1464, 7
      %v1466 = vsub.s32 0, %v1465
      %v1467 = vrot.slane %v234, %v1466
      %v1468 = vlaneseq
      %v1469 = vshrl.u32 %v1468, 7
      %v1470 = vsub.s32 1, %v1469
      %v1471 = vrot.slane %v234, %v1470
      %v1472 = vlaneseq
      %v1473 = vshrl.u32 %v1472, 7
      %v1474 = vsub.s32 2, %v1473
      %v1475 = vrot.slane %v234, %v1474
      %v1479 = vmul.f32 %v1457, %v1467
      %v1480 = vmul.f32 %v1458, %v1471
      %v1481 = vmul.f32 %v1459, %v1475
      %v1482 = vmul.f32 %v1460, %v1467
      %v1483 = vmul.f32 %v1461, %v1471
      %v1484 = vmul.f32 %v1462, %v1475
      %1485 = vst [vmem:[%s197] sm:$0xff] 0.0
      %1486 = vst [vmem:[%s197 + $0x20] sm:$0xff] 0.0
      %1487 = vst [vmem:[%s197 + $0x8] sm:$0xff] %v1479
      %1488 = vst [vmem:[%s197 + $0x10] sm:$0xff] %v1480
      %vm1489 = vcmask 556032
      %1490 = vst.msk [vmem:[%s197 + $0x18] sm:$0xff] %vm1489, %v1481
      %1491 = vst [vmem:[%s197 + $0x28] sm:$0xff] %v1482
      %1492 = vst [vmem:[%s197 + $0x30] sm:$0xff] %v1483
      %1493 = vst.msk [vmem:[%s197 + $0x38] sm:$0xff] %vm1489, %v1484
      %vm1494 = vcmask 1048096
      %1495 = vst.msk [vmem:[%s197 + $0x18] sm:$0xff] %vm1494, 0.0
      %1496 = vst.msk [vmem:[%s197 + $0x38] sm:$0xff] %vm1494, 0.0
      %p1497 = scmp.lt.s32.totalorder %s15, 1
      %s1498 = scalar_select %p1497, %s15, 1
      %s1499 = smul.addr %s1498, 8
      %s1500 = smul.addr %s1499, 8
      %s1501 = scalar_lea.vmem %s4, %s1500
      // Predicated region
      $region37: #{rrdbnet_forward.5} parent=35 // pred_check
        %p1502 = pneg %p122
      $region38: #{rrdbnet_forward.5} parent=35 // pred_check_branch
        %1504 = sbr.rel (%p1502) target = $region40
      $region39: #{rrdbnet_forward.5} parent=35 // pred_region
        _
      $region40: #{rrdbnet_forward.5} parent=35 // pred_fallthru
        _
    $region36: #{rrdbnet_forward.5} parent=5 // pred_fallthru
      _
    %p1505 = scmp.le.s32.totalorder 2, %s10
    // Predicated region
    $region41: #{rrdbnet_forward.5} parent=5 // pred_check
      %p1506 = pneg %p1505
    $region42: #{rrdbnet_forward.5} parent=5 // pred_check_branch
      %1508 = sbr.rel (%p1506) target = $region44
    $region43: #{rrdbnet_forward.5} parent=5 // pred_region
      %s1509 = ssub.s32 %s10, 2
      // Predicated region
      $region45: #{rrdbnet_forward.5} parent=43 // pred_check
        %p1510 = pneg %p128
      $region46: #{rrdbnet_forward.5} parent=43 // pred_check_branch
        %1512 = sbr.rel (%p1510) target = $region48
      $region47: #{rrdbnet_forward.5} parent=43 // pred_region
        %p1513 = scmp.lt.s32.totalorder %s16, 1
        %s1514 = scalar_select %p1513, %s16, 1
        %s1515 = smul.addr %s1514, 8
        %s1516 = smul.addr %s1515, 8
        %s1517 = scalar_lea.vmem %s4, %s1516
      $region48: #{rrdbnet_forward.5} parent=43 // pred_fallthru
        _
    $region44: #{rrdbnet_forward.5} parent=5 // pred_fallthru
      _
  $region6: #{rrdbnet_forward.5} parent=0 // loop_footer
    %s14 = sadd.s32 1, %s10
  $region7: #{rrdbnet_forward.5} parent=0 // loop_footer_branch
    %9 = sbr.rel target = $region3
  $region8: #{rrdbnet_forward.5} parent=0 // loop_exit
    _

// kernel: rrdbnet_forward.9
$region0: #{rrdbnet_forward.9}
  #allocation0 [shape = 'u32[]', space=smem, size = 0x4, offset = 0x4, fixed_abs, tag = 'smem constant byte address 0x4 - core index']
  #allocation1 [shape = 'u32[144,128]{1,0:T(1,128)}', space=vmem, size = 0x12000, scoped, tag = 'internal scratch']
  #allocation2 [shape = 'bf16[16,512]{1,0:T(8,128)(2,1)}', space=vmem, size = 0x4000, scoped, tag = 'scratch operand']
  %s0 = inlined_call_operand.vmem [shape: f32[1,324], index: 0, kind: input, shape index: {}]
  %s1 = inlined_call_operand.vmem [shape: f32[2,16,512], index: 1, kind: input, shape index: {}]
  %s2 = inlined_call_operand.vmem [shape: bf16[9,4,16], index: 2, kind: input, shape index: {}]
  %s3 = inlined_call_operand.vmem [shape: f32[4,1], index: 3, kind: input, shape index: {}]
  %s4 = inlined_call_operand.vmem [shape: f32[2,4,512], index: 4, kind: output, shape index: {}]
  %s5 = sld [smem:[#allocation0]]
  $region49: #{rrdbnet_forward.9} parent=0
    _
  %s7 = ssub.s32 1, %s5
  %s8 = scalar_select 0, %s7, %s5
  loop: start=0, step=1, limit=4
  $region2: #{rrdbnet_forward.9} parent=0 // loop_pre_header
    _
  $region3: #{rrdbnet_forward.9} parent=0 // loop_header
    %s10 = sphi 0, %s14
    %p11 = scmp.ge.s32.totalorder %s10, 4
    %s18 = sphi 0, %s18
    %s20 = sphi 0, %s18
    %s21 = sphi 0, %s20
    %s35 = sphi 0, %s21
    %s41 = sphi 0, %s43
    %s44 = sphi 0, %s41
    %s45 = sphi 0, %s44
    %s61 = sphi 0, %s45
    %s65 = sphi 0, %s65
    %s67 = sphi 0, %s65
    %s68 = sphi 0, %s67
    %s82 = sphi 0, %s68
    %s86 = sphi 0, %s86
    %s88 = sphi 0, %s86
    %s89 = sphi 0, %s88
    %s103 = sphi 0, %s89
    %s109 = sphi 0, %s111
    %s112 = sphi 0, %s109
    %s113 = sphi 0, %s112
    %s129 = sphi 0, %s113
  $region4: #{rrdbnet_forward.9} parent=0 // loop_header_branch
    %13 = sbr.rel (%p11) target = $region8
  $region5: #{rrdbnet_forward.9} parent=0 // loop_body
    %s15 = ssub.s32 %s10, 1
    %s16 = ssub.s32 %s10, 2
    %s17 = sadd.s32 %s10, 1
    %s19 = sadd.s32 %s18, 1
    %p22 = scmp.eq.s32.totalorder %s10, 1
    %p23 = scmp.ne.s32.totalorder %s18, %s20
    %p24 = scmp.eq.s32.totalorder %s10, 0
    %p25 = por %p23, %p24
    %p26 = scmp.ne.s32.totalorder %s18, %s20
    %p27 = scmp.eq.s32.totalorder %s15, 1
    %p28 = por %p26, %p27
    %p29 = scmp.ne.s32.totalorder %s20, %s21
    %p30 = scmp.eq.s32.totalorder %s15, 0
    %p31 = por %p29, %p30
    %p32 = scmp.ne.s32.totalorder %s20, %s21
    %p33 = scmp.eq.s32.totalorder %s16, 1
    %p34 = por %p32, %p33
    %p36 = scmp.ne.s32.totalorder %s21, %s35
    %p37 = scmp.eq.s32.totalorder %s16, 0
    %p38 = por %p36, %p37
    %s39 = ssub.s32 %s10, %s17
    %p40 = scmp.eq.s32.totalorder %s39, 0
    %s42 = sadd.s32 %s41, 1
    %s43 = scalar_select %p40, %s41, %s42
    %p46 = pneg %p40
    %p47 = scmp.eq.s32.totalorder %s10, 1
    %p48 = por %p46, %p47
    %p49 = scmp.ne.s32.totalorder %s41, %s44
    %p50 = scmp.eq.s32.totalorder %s10, 0
    %p51 = por %p49, %p50
    %p52 = scmp.ne.s32.totalorder %s41, %s44
    %p53 = scmp.eq.s32.totalorder %s15, 1
    %p54 = por %p52, %p53
    %p55 = scmp.ne.s32.totalorder %s44, %s45
    %p56 = scmp.eq.s32.totalorder %s15, 0
    %p57 = por %p55, %p56
    %p58 = scmp.ne.s32.totalorder %s44, %s45
    %p59 = scmp.eq.s32.totalorder %s16, 1
    %p60 = por %p58, %p59
    %p62 = scmp.ne.s32.totalorder %s45, %s61
    %p63 = scmp.eq.s32.totalorder %s16, 0
    %p64 = por %p62, %p63
    %s66 = sadd.s32 %s65, 1
    %p69 = scmp.eq.s32.totalorder %s10, 1
    %p70 = scmp.ne.s32.totalorder %s65, %s67
    %p71 = scmp.eq.s32.totalorder %s10, 0
    %p72 = por %p70, %p71
    %p73 = scmp.ne.s32.totalorder %s65, %s67
    %p74 = scmp.eq.s32.totalorder %s15, 1
    %p75 = por %p73, %p74
    %p76 = scmp.ne.s32.totalorder %s67, %s68
    %p77 = scmp.eq.s32.totalorder %s15, 0
    %p78 = por %p76, %p77
    %p79 = scmp.ne.s32.totalorder %s67, %s68
    %p80 = scmp.eq.s32.totalorder %s16, 1
    %p81 = por %p79, %p80
    %p83 = scmp.ne.s32.totalorder %s68, %s82
    %p84 = scmp.eq.s32.totalorder %s16, 0
    %p85 = por %p83, %p84
    %s87 = sadd.s32 %s86, 1
    %p90 = scmp.eq.s32.totalorder %s10, 1
    %p91 = scmp.ne.s32.totalorder %s86, %s88
    %p92 = scmp.eq.s32.totalorder %s10, 0
    %p93 = por %p91, %p92
    %p94 = scmp.ne.s32.totalorder %s86, %s88
    %p95 = scmp.eq.s32.totalorder %s15, 1
    %p96 = por %p94, %p95
    %p97 = scmp.ne.s32.totalorder %s88, %s89
    %p98 = scmp.eq.s32.totalorder %s15, 0
    %p99 = por %p97, %p98
    %p100 = scmp.ne.s32.totalorder %s88, %s89
    %p101 = scmp.eq.s32.totalorder %s16, 1
    %p102 = por %p100, %p101
    %p104 = scmp.ne.s32.totalorder %s89, %s103
    %p105 = scmp.eq.s32.totalorder %s16, 0
    %p106 = por %p104, %p105
    %s107 = ssub.s32 %s10, %s17
    %p108 = scmp.eq.s32.totalorder %s107, 0
    %s110 = sadd.s32 %s109, 1
    %s111 = scalar_select %p108, %s109, %s110
    %p114 = pneg %p108
    %p115 = scmp.eq.s32.totalorder %s10, 1
    %p116 = por %p114, %p115
    %p117 = scmp.ne.s32.totalorder %s109, %s112
    %p118 = scmp.eq.s32.totalorder %s10, 0
    %p119 = por %p117, %p118
    %p120 = scmp.ne.s32.totalorder %s109, %s112
    %p121 = scmp.eq.s32.totalorder %s15, 1
    %p122 = por %p120, %p121
    %p123 = scmp.ne.s32.totalorder %s112, %s113
    %p124 = scmp.eq.s32.totalorder %s15, 0
    %p125 = por %p123, %p124
    %p126 = scmp.ne.s32.totalorder %s112, %s113
    %p127 = scmp.eq.s32.totalorder %s16, 1
    %p128 = por %p126, %p127
    %p130 = scmp.ne.s32.totalorder %s113, %s129
    %p131 = scmp.eq.s32.totalorder %s16, 0
    %p132 = por %p130, %p131
    %p133 = scmp.le.s32.totalorder 1, %s10
    %p134 = scmp.lt.s32.totalorder %s10, 3
    %p135 = pnand %p133, %p134
    %p136 = pneg %p135
    // Predicated region
    $region9: #{rrdbnet_forward.9} parent=5 // pred_check
      _
    $region10: #{rrdbnet_forward.9} parent=5 // pred_check_branch
      %138 = sbr.rel (%p135) target = $region12
    $region11: #{rrdbnet_forward.9} parent=5 // pred_region
      %s139 = ssub.s32 %s10, 1
      // Predicated region
      $region13: #{rrdbnet_forward.9} parent=11 // pred_check
        %p140 = pneg %p31
      $region14: #{rrdbnet_forward.9} parent=11 // pred_check_branch
        %142 = sbr.rel (%p140) target = $region16
      $region15: #{rrdbnet_forward.9} parent=11 // pred_region
        _
      $region16: #{rrdbnet_forward.9} parent=11 // pred_fallthru
        _
      // Predicated region
      $region17: #{rrdbnet_forward.9} parent=11 // pred_check
        %p143 = pneg %p78
      $region18: #{rrdbnet_forward.9} parent=11 // pred_check_branch
        %145 = sbr.rel (%p143) target = $region20
      $region19: #{rrdbnet_forward.9} parent=11 // pred_region
        _
      $region20: #{rrdbnet_forward.9} parent=11 // pred_fallthru
        _
      // Predicated region
      $region21: #{rrdbnet_forward.9} parent=11 // pred_check
        %p146 = pneg %p99
      $region22: #{rrdbnet_forward.9} parent=11 // pred_check_branch
        %148 = sbr.rel (%p146) target = $region24
      $region23: #{rrdbnet_forward.9} parent=11 // pred_region
        _
      $region24: #{rrdbnet_forward.9} parent=11 // pred_fallthru
        _
    $region12: #{rrdbnet_forward.9} parent=5 // pred_fallthru
      _
    %p149 = scmp.lt.s32.totalorder %s10, 2
    // Predicated region
    $region25: #{rrdbnet_forward.9} parent=5 // pred_check
      %p150 = pneg %p149
    $region26: #{rrdbnet_forward.9} parent=5 // pred_check_branch
      %152 = sbr.rel (%p150) target = $region28
    $region27: #{rrdbnet_forward.9} parent=5 // pred_region
      // Predicated region
      $region29: #{rrdbnet_forward.9} parent=27 // pred_check
        %p153 = pneg %p51
      $region30: #{rrdbnet_forward.9} parent=27 // pred_check_branch
        %155 = sbr.rel (%p153) target = $region32
      $region31: #{rrdbnet_forward.9} parent=27 // pred_region
        %p156 = scmp.lt.s32.totalorder %s10, 1
        %s157 = scalar_select %p156, %s10, 1
        %s158 = smul.addr %s157, 8
        %s159 = smul.addr %s158, 8
        %s160 = scalar_lea.vmem %s1, %s159
      $region32: #{rrdbnet_forward.9} parent=27 // pred_fallthru
        _
    $region28: #{rrdbnet_forward.9} parent=5 // pred_fallthru
      _
    %p161 = scmp.le.s32.totalorder 1, %s10
    %p162 = scmp.lt.s32.totalorder %s10, 3
    %p163 = pnand %p161, %p162
    %p164 = pneg %p163
    // Predicated region
    $region33: #{rrdbnet_forward.9} parent=5 // pred_check
      _
    $region34: #{rrdbnet_forward.9} parent=5 // pred_check_branch
      %166 = sbr.rel (%p163) target = $region36
    $region35: #{rrdbnet_forward.9} parent=5 // pred_region
      %s167 = ssub.s32 %s10, 1
      %p168 = pneg %p31
      %p169 = pneg %p28
      %p170 = scmp.lt.s32.totalorder %s15, 1
      %s171 = scalar_select %p170, %s15, 1
      %s172 = smul.addr %s171, 8
      %s173 = smul.addr %s172, 8
      %s174 = scalar_lea.vmem %s1, %s173
      %p175 = pneg %p57
      %p176 = pneg %p54
      %p177 = pneg %p78
      %p178 = pneg %p75
      %p179 = pneg %p99
      %p180 = pneg %p96
      %p181 = pneg %p125
      %p182 = pneg %p122
      %p183 = scmp.lt.s32.totalorder %s15, 1
      %s184 = scalar_select %p183, %s15, 1
      %s185 = smul.addr %s184, 4
      %s186 = smul.addr %s185, 4
      %s187 = scalar_lea.vmem %s4, %s186
      %p188 = scmp.lt.s32.totalorder %s15, 1
      %s189 = scalar_select %p188, %s15, 1
      %s190 = smul.addr %s189, 8
      %s191 = smul.addr %s190, 8
      %s192 = scalar_lea.vmem %s1, %s191
      %p193 = scmp.lt.s32.totalorder %s15, 1
      %s194 = scalar_select %p193, %s15, 1
      %s195 = smul.addr %s194, 4
      %s196 = smul.addr %s195, 4
      %s197 = scalar_lea.vmem %s4, %s196
      %v199 = vld [vmem:[%s192] sm:$0xff]
      %v200 = vld [vmem:[%s192 + $0x8] sm:$0xff]
      %v201 = vld [vmem:[%s192 + $0x10] sm:$0xff]
      %v202 = vld [vmem:[%s192 + $0x18] sm:$0xff]
      %v203 = vld [vmem:[%s192 + $0x20] sm:$0xff]
      %v204 = vld [vmem:[%s192 + $0x28] sm:$0xff]
      %v205 = vld [vmem:[%s192 + $0x30] sm:$0xff]
      %v206 = vld [vmem:[%s192 + $0x38] sm:$0xff]
      %v207 = vpack.c.bf16 %v203, %v199
      %v208 = vpack.c.bf16 %v204, %v200
      %v209 = vpack.c.bf16 %v205, %v201
      %v210 = vpack.c.bf16 %v206, %v202
      %v215 = vunpack.c.l.b16 %v207
      %v216 = vunpack.c.l.b16 %v208
      %v217 = vunpack.c.l.b16 %v209
      %v218 = vunpack.c.l.b16 %v210
      %v219 = vunpack.c.h.b16 %v207
      %v220 = vunpack.c.h.b16 %v208
      %v221 = vunpack.c.h.b16 %v209
      %v222 = vunpack.c.h.b16 %v210
      %v223 = vpack.c.b16 %v216, %v215
      %v224 = vpack.c.b16 %v218, %v217
      %v225 = vpack.c.b16 %v220, %v219
      %v226 = vpack.c.b16 %v222, %v221
      %231 = vst [vmem:[#allocation2] sm:$0xff] %v223
      %232 = vst [vmem:[#allocation2 + $0x8] sm:$0xff] %v224
      %233 = vst [vmem:[#allocation2 + $0x10] sm:$0xff] %v225
      %234 = vst [vmem:[#allocation2 + $0x18] sm:$0xff] %v226
      %v235 = vld [vmem:[%s0] sm:$0x7]
      %v236 = vld [vmem:[#allocation2] sm:$0xff]
      %v237 = vld [vmem:[#allocation2 + $0x8] sm:$0xff]
      %v238 = vld [vmem:[#allocation2 + $0x10] sm:$0xff]
      %v239 = vld [vmem:[#allocation2 + $0x18] sm:$0xff]
      %v240 = vld [vmem:[%s2] sm:$0x3]
      %s241 = scalar_lea.vmem %s2, 2
      %v242 = vld [vmem:[%s241] sm:$0x3]
      %v247 = vunpack.c.l.b16 %v236
      %v248 = vunpack.c.h.b16 %v236
      %v249 = vunpack.c.l.b16 %v237
      %v250 = vunpack.c.h.b16 %v237
      %v251 = vunpack.c.l.b16 %v238
      %v252 = vunpack.c.h.b16 %v238
      %v253 = vunpack.c.l.b16 %v239
      %v254 = vunpack.c.h.b16 %v239
      %v255 = vpack.c.b16 %v251, %v247
      %v256 = vpack.c.b16 %v252, %v248
      %v257 = vpack.c.b16 %v253, %v249
      %v258 = vpack.c.b16 %v254, %v250
      %259 = vrot.lane.b32.xlu0 %v255, 18
      %v260 = vpop.permute.xlu0 %259
      %261 = vrot.lane.b32.xlu0 %v256, 18
      %v262 = vpop.permute.xlu0 %261
      %263 = vrot.lane.b32.xlu0 %v257, 18
      %v264 = vpop.permute.xlu0 %263
      %265 = vrot.lane.b32.xlu0 %v258, 18
      %v266 = vpop.permute.xlu0 %265
      %vm267 = vcmask 146432
      %v268 = vsel %vm267, %v260, %v262
      %v269 = vsel %vm267, %v262, %v264
      %v270 = vsel %vm267, %v264, %v266
      %vm274 = vcmask 130048
      %v276 = vsel %vm274, %v242, 0
      %278 = vmatprep.subr.bf16.mxu0 0
      %279 = vmatpush1.bf16.msra.mxu0 0
      %280 = vmatprep.subr.bf16.mxu0 0
      %281 = vmatpush1.bf16.msra.mxu0 0
      %282 = vmatprep.subr.bf16.mxu0 0
      %283 = vmatpush1.bf16.msra.mxu0 0
      %284 = vmatprep.subr.bf16.mxu0 0
      %285 = vmatpush1.bf16.msra.mxu0 0
      %286 = vmatprep.subr.bf16.mxu0 0
      %287 = vmatpush1.bf16.msra.mxu0 0
      %288 = vmatprep.subr.bf16.mxu0 0
      %289 = vmatpush1.bf16.msra.mxu0 0
      %290 = vmatprep.subr.bf16.mxu0 0
      %291 = vmatpush1.bf16.msra.mxu0 0
      %292 = vmatprep.subr.bf16.mxu0 %v269
      %293 = vmatpush1.bf16.msra.mxu0 %v268
      %294 = vmatprep.subr.bf16.mxu0 0
      %295 = vmatpush2.bf16.msra.mxu0 0
      %296 = vmatprep.subr.bf16.mxu0 0
      %297 = vmatpush2.bf16.msra.mxu0 0
      %298 = vmatprep.subr.bf16.mxu0 0
      %299 = vmatpush2.bf16.msra.mxu0 0
      %300 = vmatprep.subr.bf16.mxu0 0
      %301 = vmatpush2.bf16.msra.mxu0 0
      %302 = vmatprep.subr.bf16.mxu0 0
      %303 = vmatpush2.bf16.msra.mxu0 0
      %304 = vmatprep.subr.bf16.mxu0 0
      %305 = vmatpush2.bf16.msra.mxu0 0
      %306 = vmatprep.subr.bf16.mxu0 0
      %307 = vmatpush2.bf16.msra.mxu0 0
      %308 = vmatprep.subr.bf16.mxu0 0
      %309 = vmatpush2.bf16.msra.mxu0 0
      %310 = vmatprep.mubr.bf16.mxu0 0
      %311 = vmatmul.mubr.bf16.gmra.mxu0 %v276
      %v312 = vpop.f32.mrf.mxu0
      %v313 = vadd.f32 0.0, %v312
      %v314 = vpop.f32.mrf.mxu0
      %v315 = vadd.f32 0.0, %v314
      %v316 = vpop.f32.mrf.mxu0
      %v317 = vpop.f32.mrf.mxu0
      %318 = vdwg.mxu0
      %319 = vmatprep.subr.bf16.mxu0 0
      %320 = vmatpush1.bf16.msra.mxu0 0
      %321 = vmatprep.subr.bf16.mxu0 0
      %322 = vmatpush1.bf16.msra.mxu0 0
      %323 = vmatprep.subr.bf16.mxu0 0
      %324 = vmatpush1.bf16.msra.mxu0 0
      %325 = vmatprep.subr.bf16.mxu0 0
      %326 = vmatpush1.bf16.msra.mxu0 0
      %327 = vmatprep.subr.bf16.mxu0 0
      %328 = vmatpush1.bf16.msra.mxu0 0
      %329 = vmatprep.subr.bf16.mxu0 0
      %330 = vmatpush1.bf16.msra.mxu0 0
      %331 = vmatprep.subr.bf16.mxu0 0
      %332 = vmatpush1.bf16.msra.mxu0 0
      %333 = vmatprep.subr.bf16.mxu0 0
      %334 = vmatpush1.bf16.msra.mxu0 %v270
      %335 = vmatprep.subr.bf16.mxu0 0
      %336 = vmatpush2.bf16.msra.mxu0 0
      %337 = vmatprep.subr.bf16.mxu0 0
      %338 = vmatpush2.bf16.msra.mxu0 0
      %339 = vmatprep.subr.bf16.mxu0 0
      %340 = vmatpush2.bf16.msra.mxu0 0
      %341 = vmatprep.subr.bf16.mxu0 0
      %342 = vmatpush2.bf16.msra.mxu0 0
      %343 = vmatprep.subr.bf16.mxu0 0
      %344 = vmatpush2.bf16.msra.mxu0 0
      %345 = vmatprep.subr.bf16.mxu0 0
      %346 = vmatpush2.bf16.msra.mxu0 0
      %347 = vmatprep.subr.bf16.mxu0 0
      %348 = vmatpush2.bf16.msra.mxu0 0
      %349 = vmatprep.subr.bf16.mxu0 0
      %350 = vmatpush2.bf16.msra.mxu0 0
      %351 = vmatprep.mubr.bf16.mxu0 0
      %352 = vmatmul.mubr.bf16.gmra.mxu0 %v276
      %v353 = vpop.f32.mrf.mxu0
      %v354 = vadd.f32 0.0, %v353
      %v355 = vpop.f32.mrf.mxu0
      %v356 = vpop.f32.mrf.mxu0
      %v357 = vpop.f32.mrf.mxu0
      %358 = vdwg.mxu0
      %359 = vrot.lane.b32.xlu0 %v255, 19
      %v360 = vpop.permute.xlu0 %359
      %361 = vrot.lane.b32.xlu0 %v256, 19
      %v362 = vpop.permute.xlu0 %361
      %363 = vrot.lane.b32.xlu0 %v257, 19
      %v364 = vpop.permute.xlu0 %363
      %365 = vrot.lane.b32.xlu0 %v258, 19
      %v366 = vpop.permute.xlu0 %365
      %vm367 = vcmask 154624
      %v368 = vsel %vm367, %v360, %v362
      %v369 = vsel %vm367, %v362, %v364
      %v370 = vsel %vm367, %v364, %v366
      %v375 = vsel %vm274, %v240, 0
      %377 = vmatprep.subr.bf16.mxu0 0
      %378 = vmatpush1.bf16.msra.mxu0 0
      %379 = vmatprep.subr.bf16.mxu0 0
      %380 = vmatpush1.bf16.msra.mxu0 0
      %381 = vmatprep.subr.bf16.mxu0 0
      %382 = vmatpush1.bf16.msra.mxu0 0
      %383 = vmatprep.subr.bf16.mxu0 0
      %384 = vmatpush1.bf16.msra.mxu0 0
      %385 = vmatprep.subr.bf16.mxu0 0
      %386 = vmatpush1.bf16.msra.mxu0 0
      %387 = vmatprep.subr.bf16.mxu0 0
      %388 = vmatpush1.bf16.msra.mxu0 0
      %389 = vmatprep.subr.bf16.mxu0 0
      %390 = vmatpush1.bf16.msra.mxu0 0
      %391 = vmatprep.subr.bf16.mxu0 %v369
      %392 = vmatpush1.bf16.msra.mxu0 %v368
      %393 = vmatprep.subr.bf16.mxu0 0
      %394 = vmatpush2.bf16.msra.mxu0 0
      %395 = vmatprep.subr.bf16.mxu0 0
      %396 = vmatpush2.bf16.msra.mxu0 0
      %397 = vmatprep.subr.bf16.mxu0 0
      %398 = vmatpush2.bf16.msra.mxu0 0
      %399 = vmatprep.subr.bf16.mxu0 0
      %400 = vmatpush2.bf16.msra.mxu0 0
      %401 = vmatprep.subr.bf16.mxu0 0
      %402 = vmatpush2.bf16.msra.mxu0 0
      %403 = vmatprep.subr.bf16.mxu0 0
      %404 = vmatpush2.bf16.msra.mxu0 0
      %405 = vmatprep.subr.bf16.mxu0 0
      %406 = vmatpush2.bf16.msra.mxu0 0
      %407 = vmatprep.subr.bf16.mxu0 0
      %408 = vmatpush2.bf16.msra.mxu0 0
      %409 = vmatprep.mubr.bf16.mxu0 0
      %410 = vmatmul.mubr.bf16.gmra.mxu0 %v375
      %v411 = vpop.f32.mrf.mxu0
      %v412 = vadd.f32 %v313, %v411
      %v413 = vpop.f32.mrf.mxu0
      %v414 = vadd.f32 %v315, %v413
      %v415 = vpop.f32.mrf.mxu0
      %v416 = vpop.f32.mrf.mxu0
      %417 = vdwg.mxu0
      %418 = vmatprep.subr.bf16.mxu0 0
      %419 = vmatpush1.bf16.msra.mxu0 0
      %420 = vmatprep.subr.bf16.mxu0 0
      %421 = vmatpush1.bf16.msra.mxu0 0
      %422 = vmatprep.subr.bf16.mxu0 0
      %423 = vmatpush1.bf16.msra.mxu0 0
      %424 = vmatprep.subr.bf16.mxu0 0
      %425 = vmatpush1.bf16.msra.mxu0 0
      %426 = vmatprep.subr.bf16.mxu0 0
      %427 = vmatpush1.bf16.msra.mxu0 0
      %428 = vmatprep.subr.bf16.mxu0 0
      %429 = vmatpush1.bf16.msra.mxu0 0
      %430 = vmatprep.subr.bf16.mxu0 0
      %431 = vmatpush1.bf16.msra.mxu0 0
      %432 = vmatprep.subr.bf16.mxu0 0
      %433 = vmatpush1.bf16.msra.mxu0 %v370
      %434 = vmatprep.subr.bf16.mxu0 0
      %435 = vmatpush2.bf16.msra.mxu0 0
      %436 = vmatprep.subr.bf16.mxu0 0
      %437 = vmatpush2.bf16.msra.mxu0 0
      %438 = vmatprep.subr.bf16.mxu0 0
      %439 = vmatpush2.bf16.msra.mxu0 0
      %440 = vmatprep.subr.bf16.mxu0 0
      %441 = vmatpush2.bf16.msra.mxu0 0
      %442 = vmatprep.subr.bf16.mxu0 0
      %443 = vmatpush2.bf16.msra.mxu0 0
      %444 = vmatprep.subr.bf16.mxu0 0
      %445 = vmatpush2.bf16.msra.mxu0 0
      %446 = vmatprep.subr.bf16.mxu0 0
      %447 = vmatpush2.bf16.msra.mxu0 0
      %448 = vmatprep.subr.bf16.mxu0 0
      %449 = vmatpush2.bf16.msra.mxu0 0
      %450 = vmatprep.mubr.bf16.mxu0 0
      %451 = vmatmul.mubr.bf16.gmra.mxu0 %v375
      %v452 = vpop.f32.mrf.mxu0
      %v453 = vadd.f32 %v354, %v452
      %v454 = vpop.f32.mrf.mxu0
      %v455 = vpop.f32.mrf.mxu0
      %v456 = vpop.f32.mrf.mxu0
      %457 = vdwg.mxu0
      %s458 = scalar_lea.vmem %s2, 4
      %v459 = vld [vmem:[%s458] sm:$0x3]
      %460 = vrot.lane.b32.xlu0 %v255, 17
      %v461 = vpop.permute.xlu0 %460
      %462 = vrot.lane.b32.xlu0 %v256, 17
      %v463 = vpop.permute.xlu0 %462
      %464 = vrot.lane.b32.xlu0 %v257, 17
      %v465 = vpop.permute.xlu0 %464
      %466 = vrot.lane.b32.xlu0 %v258, 17
      %v467 = vpop.permute.xlu0 %466
      %vm468 = vcmask 138240
      %v469 = vsel %vm468, %v461, %v463
      %v470 = vsel %vm468, %v463, %v465
      %v471 = vsel %vm468, %v465, %v467
      %v476 = vsel %vm274, %v459, 0
      %478 = vmatprep.subr.bf16.mxu0 0
      %479 = vmatpush1.bf16.msra.mxu0 0
      %480 = vmatprep.subr.bf16.mxu0 0
      %481 = vmatpush1.bf16.msra.mxu0 0
      %482 = vmatprep.subr.bf16.mxu0 0
      %483 = vmatpush1.bf16.msra.mxu0 0
      %484 = vmatprep.subr.bf16.mxu0 0
      %485 = vmatpush1.bf16.msra.mxu0 0
      %486 = vmatprep.subr.bf16.mxu0 0
      %487 = vmatpush1.bf16.msra.mxu0 0
      %488 = vmatprep.subr.bf16.mxu0 0
      %489 = vmatpush1.bf16.msra.mxu0 0
      %490 = vmatprep.subr.bf16.mxu0 0
      %491 = vmatpush1.bf16.msra.mxu0 0
      %492 = vmatprep.subr.bf16.mxu0 %v470
      %493 = vmatpush1.bf16.msra.mxu0 %v469
      %494 = vmatprep.subr.bf16.mxu0 0
      %495 = vmatpush2.bf16.msra.mxu0 0
      %496 = vmatprep.subr.bf16.mxu0 0
      %497 = vmatpush2.bf16.msra.mxu0 0
      %498 = vmatprep.subr.bf16.mxu0 0
      %499 = vmatpush2.bf16.msra.mxu0 0
      %500 = vmatprep.subr.bf16.mxu0 0
      %501 = vmatpush2.bf16.msra.mxu0 0
      %502 = vmatprep.subr.bf16.mxu0 0
      %503 = vmatpush2.bf16.msra.mxu0 0
      %504 = vmatprep.subr.bf16.mxu0 0
      %505 = vmatpush2.bf16.msra.mxu0 0
      %506 = vmatprep.subr.bf16.mxu0 0
      %507 = vmatpush2.bf16.msra.mxu0 0
      %508 = vmatprep.subr.bf16.mxu0 0
      %509 = vmatpush2.bf16.msra.mxu0 0
      %510 = vmatprep.mubr.bf16.mxu0 0
      %511 = vmatmul.mubr.bf16.gmra.mxu0 %v476
      %v512 = vpop.f32.mrf.mxu0
      %v513 = vadd.f32 0.0, %v512
      %v514 = vpop.f32.mrf.mxu0
      %v515 = vadd.f32 0.0, %v514
      %v516 = vpop.f32.mrf.mxu0
      %v517 = vpop.f32.mrf.mxu0
      %518 = vdwg.mxu0
      %519 = vmatprep.subr.bf16.mxu0 0
      %520 = vmatpush1.bf16.msra.mxu0 0
      %521 = vmatprep.subr.bf16.mxu0 0
      %522 = vmatpush1.bf16.msra.mxu0 0
      %523 = vmatprep.subr.bf16.mxu0 0
      %524 = vmatpush1.bf16.msra.mxu0 0
      %525 = vmatprep.subr.bf16.mxu0 0
      %526 = vmatpush1.bf16.msra.mxu0 0
      %527 = vmatprep.subr.bf16.mxu0 0
      %528 = vmatpush1.bf16.msra.mxu0 0
      %529 = vmatprep.subr.bf16.mxu0 0
      %530 = vmatpush1.bf16.msra.mxu0 0
      %531 = vmatprep.subr.bf16.mxu0 0
      %532 = vmatpush1.bf16.msra.mxu0 0
      %533 = vmatprep.subr.bf16.mxu0 0
      %534 = vmatpush1.bf16.msra.mxu0 %v471
      %535 = vmatprep.subr.bf16.mxu0 0
      %536 = vmatpush2.bf16.msra.mxu0 0
      %537 = vmatprep.subr.bf16.mxu0 0
      %538 = vmatpush2.bf16.msra.mxu0 0
      %539 = vmatprep.subr.bf16.mxu0 0
      %540 = vmatpush2.bf16.msra.mxu0 0
      %541 = vmatprep.subr.bf16.mxu0 0
      %542 = vmatpush2.bf16.msra.mxu0 0
      %543 = vmatprep.subr.bf16.mxu0 0
      %544 = vmatpush2.bf16.msra.mxu0 0
      %545 = vmatprep.subr.bf16.mxu0 0
      %546 = vmatpush2.bf16.msra.mxu0 0
      %547 = vmatprep.subr.bf16.mxu0 0
      %548 = vmatpush2.bf16.msra.mxu0 0
      %549 = vmatprep.subr.bf16.mxu0 0
      %550 = vmatpush2.bf16.msra.mxu0 0
      %551 = vmatprep.mubr.bf16.mxu0 0
      %552 = vmatmul.mubr.bf16.gmra.mxu0 %v476
      %v553 = vpop.f32.mrf.mxu0
      %v554 = vadd.f32 0.0, %v553
      %v555 = vpop.f32.mrf.mxu0
      %v556 = vpop.f32.mrf.mxu0
      %v557 = vpop.f32.mrf.mxu0
      %558 = vdwg.mxu0
      %v559 = vadd.f32 %v412, %v513
      %v560 = vadd.f32 %v414, %v515
      %v561 = vadd.f32 %v453, %v554
      %s562 = scalar_lea.vmem %s2, 6
      %v563 = vld [vmem:[%s562] sm:$0x3]
      %564 = vrot.lane.b32.xlu0 %v255, 1
      %v565 = vpop.permute.xlu0 %564
      %566 = vrot.lane.b32.xlu0 %v256, 1
      %v567 = vpop.permute.xlu0 %566
      %568 = vrot.lane.b32.xlu0 %v257, 1
      %v569 = vpop.permute.xlu0 %568
      %570 = vrot.lane.b32.xlu0 %v258, 1
      %v571 = vpop.permute.xlu0 %570
      %vm572 = vcmask 7168
      %v573 = vsel %vm572, %v565, %v567
      %v574 = vsel %vm572, %v567, %v569
      %v575 = vsel %vm572, %v569, %v571
      %v580 = vsel %vm274, %v563, 0
      %582 = vmatprep.subr.bf16.mxu0 0
      %583 = vmatpush1.bf16.msra.mxu0 0
      %584 = vmatprep.subr.bf16.mxu0 0
      %585 = vmatpush1.bf16.msra.mxu0 0
      %586 = vmatprep.subr.bf16.mxu0 0
      %587 = vmatpush1.bf16.msra.mxu0 0
      %588 = vmatprep.subr.bf16.mxu0 0
      %589 = vmatpush1.bf16.msra.mxu0 0
      %590 = vmatprep.subr.bf16.mxu0 0
      %591 = vmatpush1.bf16.msra.mxu0 0
      %592 = vmatprep.subr.bf16.mxu0 0
      %593 = vmatpush1.bf16.msra.mxu0 0
      %594 = vmatprep.subr.bf16.mxu0 0
      %595 = vmatpush1.bf16.msra.mxu0 0
      %596 = vmatprep.subr.bf16.mxu0 %v574
      %597 = vmatpush1.bf16.msra.mxu0 %v573
      %598 = vmatprep.subr.bf16.mxu0 0
      %599 = vmatpush2.bf16.msra.mxu0 0
      %600 = vmatprep.subr.bf16.mxu0 0
      %601 = vmatpush2.bf16.msra.mxu0 0
      %602 = vmatprep.subr.bf16.mxu0 0
      %603 = vmatpush2.bf16.msra.mxu0 0
      %604 = vmatprep.subr.bf16.mxu0 0
      %605 = vmatpush2.bf16.msra.mxu0 0
      %606 = vmatprep.subr.bf16.mxu0 0
      %607 = vmatpush2.bf16.msra.mxu0 0
      %608 = vmatprep.subr.bf16.mxu0 0
      %609 = vmatpush2.bf16.msra.mxu0 0
      %610 = vmatprep.subr.bf16.mxu0 0
      %611 = vmatpush2.bf16.msra.mxu0 0
      %612 = vmatprep.subr.bf16.mxu0 0
      %613 = vmatpush2.bf16.msra.mxu0 0
      %614 = vmatprep.mubr.bf16.mxu0 0
      %615 = vmatmul.mubr.bf16.gmra.mxu0 %v580
      %v616 = vpop.f32.mrf.mxu0
      %v617 = vadd.f32 0.0, %v616
      %v618 = vpop.f32.mrf.mxu0
      %v619 = vadd.f32 0.0, %v618
      %v620 = vpop.f32.mrf.mxu0
      %v621 = vpop.f32.mrf.mxu0
      %622 = vdwg.mxu0
      %623 = vmatprep.subr.bf16.mxu0 0
      %624 = vmatpush1.bf16.msra.mxu0 0
      %625 = vmatprep.subr.bf16.mxu0 0
      %626 = vmatpush1.bf16.msra.mxu0 0
      %627 = vmatprep.subr.bf16.mxu0 0
      %628 = vmatpush1.bf16.msra.mxu0 0
      %629 = vmatprep.subr.bf16.mxu0 0
      %630 = vmatpush1.bf16.msra.mxu0 0
      %631 = vmatprep.subr.bf16.mxu0 0
      %632 = vmatpush1.bf16.msra.mxu0 0
      %633 = vmatprep.subr.bf16.mxu0 0
      %634 = vmatpush1.bf16.msra.mxu0 0
      %635 = vmatprep.subr.bf16.mxu0 0
      %636 = vmatpush1.bf16.msra.mxu0 0
      %637 = vmatprep.subr.bf16.mxu0 0
      %638 = vmatpush1.bf16.msra.mxu0 %v575
      %639 = vmatprep.subr.bf16.mxu0 0
      %640 = vmatpush2.bf16.msra.mxu0 0
      %641 = vmatprep.subr.bf16.mxu0 0
      %642 = vmatpush2.bf16.msra.mxu0 0
      %643 = vmatprep.subr.bf16.mxu0 0
      %644 = vmatpush2.bf16.msra.mxu0 0
      %645 = vmatprep.subr.bf16.mxu0 0
      %646 = vmatpush2.bf16.msra.mxu0 0
      %647 = vmatprep.subr.bf16.mxu0 0
      %648 = vmatpush2.bf16.msra.mxu0 0
      %649 = vmatprep.subr.bf16.mxu0 0
      %650 = vmatpush2.bf16.msra.mxu0 0
      %651 = vmatprep.subr.bf16.mxu0 0
      %652 = vmatpush2.bf16.msra.mxu0 0
      %653 = vmatprep.subr.bf16.mxu0 0
      %654 = vmatpush2.bf16.msra.mxu0 0
      %655 = vmatprep.mubr.bf16.mxu0 0
      %656 = vmatmul.mubr.bf16.gmra.mxu0 %v580
      %v657 = vpop.f32.mrf.mxu0
      %v658 = vadd.f32 0.0, %v657
      %v659 = vpop.f32.mrf.mxu0
      %v660 = vpop.f32.mrf.mxu0
      %v661 = vpop.f32.mrf.mxu0
      %662 = vdwg.mxu0
      %v663 = vadd.f32 %v559, %v617
      %v664 = vadd.f32 %v560, %v619
      %v665 = vadd.f32 %v561, %v658
      %v666 = vld [vmem:[#allocation2 + $0x4] sm:$0xff]
      %v667 = vld [vmem:[#allocation2 + $0xc] sm:$0xf]
      %v668 = vld [vmem:[#allocation2 + $0x14] sm:$0xff]
      %v669 = vld [vmem:[#allocation2 + $0x1c] sm:$0xf]
      %s670 = scalar_lea.vmem %s2, 8
      %v671 = vld [vmem:[%s670] sm:$0x3]
      %v676 = vunpack.c.l.b16 %v666
      %v677 = vunpack.c.h.b16 %v666
      %v678 = vunpack.c.l.b16 %v667
      %v679 = vunpack.c.l.b16 %v668
      %v680 = vunpack.c.h.b16 %v668
      %v681 = vunpack.c.l.b16 %v669
      %v682 = vpack.c.b16 %v679, %v676
      %v683 = vpack.c.b16 %v680, %v677
      %v684 = vpack.c.b16 %v681, %v678
      %v689 = vsel %vm274, %v671, 0
      %691 = vmatprep.subr.bf16.mxu0 0
      %692 = vmatpush1.bf16.msra.mxu0 0
      %693 = vmatprep.subr.bf16.mxu0 0
      %694 = vmatpush1.bf16.msra.mxu0 0
      %695 = vmatprep.subr.bf16.mxu0 0
      %696 = vmatpush1.bf16.msra.mxu0 0
      %697 = vmatprep.subr.bf16.mxu0 0
      %698 = vmatpush1.bf16.msra.mxu0 0
      %699 = vmatprep.subr.bf16.mxu0 0
      %700 = vmatpush1.bf16.msra.mxu0 0
      %701 = vmatprep.subr.bf16.mxu0 0
      %702 = vmatpush1.bf16.msra.mxu0 0
      %703 = vmatprep.subr.bf16.mxu0 0
      %704 = vmatpush1.bf16.msra.mxu0 0
      %705 = vmatprep.subr.bf16.mxu0 %v683
      %706 = vmatpush1.bf16.msra.mxu0 %v682
      %707 = vmatprep.subr.bf16.mxu0 0
      %708 = vmatpush2.bf16.msra.mxu0 0
      %709 = vmatprep.subr.bf16.mxu0 0
      %710 = vmatpush2.bf16.msra.mxu0 0
      %711 = vmatprep.subr.bf16.mxu0 0
      %712 = vmatpush2.bf16.msra.mxu0 0
      %713 = vmatprep.subr.bf16.mxu0 0
      %714 = vmatpush2.bf16.msra.mxu0 0
      %715 = vmatprep.subr.bf16.mxu0 0
      %716 = vmatpush2.bf16.msra.mxu0 0
      %717 = vmatprep.subr.bf16.mxu0 0
      %718 = vmatpush2.bf16.msra.mxu0 0
      %719 = vmatprep.subr.bf16.mxu0 0
      %720 = vmatpush2.bf16.msra.mxu0 0
      %721 = vmatprep.subr.bf16.mxu0 0
      %722 = vmatpush2.bf16.msra.mxu0 0
      %723 = vmatprep.mubr.bf16.mxu0 0
      %724 = vmatmul.mubr.bf16.gmra.mxu0 %v689
      %v725 = vpop.f32.mrf.mxu0
      %v726 = vadd.f32 0.0, %v725
      %v727 = vpop.f32.mrf.mxu0
      %v728 = vadd.f32 0.0, %v727
      %v729 = vpop.f32.mrf.mxu0
      %v730 = vpop.f32.mrf.mxu0
      %731 = vdwg.mxu0
      %732 = vmatprep.subr.bf16.mxu0 0
      %733 = vmatpush1.bf16.msra.mxu0 0
      %734 = vmatprep.subr.bf16.mxu0 0
      %735 = vmatpush1.bf16.msra.mxu0 0
      %736 = vmatprep.subr.bf16.mxu0 0
      %737 = vmatpush1.bf16.msra.mxu0 0
      %738 = vmatprep.subr.bf16.mxu0 0
      %739 = vmatpush1.bf16.msra.mxu0 0
      %740 = vmatprep.subr.bf16.mxu0 0
      %741 = vmatpush1.bf16.msra.mxu0 0
      %742 = vmatprep.subr.bf16.mxu0 0
      %743 = vmatpush1.bf16.msra.mxu0 0
      %744 = vmatprep.subr.bf16.mxu0 0
      %745 = vmatpush1.bf16.msra.mxu0 0
      %746 = vmatprep.subr.bf16.mxu0 0
      %747 = vmatpush1.bf16.msra.mxu0 %v684
      %748 = vmatprep.subr.bf16.mxu0 0
      %749 = vmatpush2.bf16.msra.mxu0 0
      %750 = vmatprep.subr.bf16.mxu0 0
      %751 = vmatpush2.bf16.msra.mxu0 0
      %752 = vmatprep.subr.bf16.mxu0 0
      %753 = vmatpush2.bf16.msra.mxu0 0
      %754 = vmatprep.subr.bf16.mxu0 0
      %755 = vmatpush2.bf16.msra.mxu0 0
      %756 = vmatprep.subr.bf16.mxu0 0
      %757 = vmatpush2.bf16.msra.mxu0 0
      %758 = vmatprep.subr.bf16.mxu0 0
      %759 = vmatpush2.bf16.msra.mxu0 0
      %760 = vmatprep.subr.bf16.mxu0 0
      %761 = vmatpush2.bf16.msra.mxu0 0
      %762 = vmatprep.subr.bf16.mxu0 0
      %763 = vmatpush2.bf16.msra.mxu0 0
      %764 = vmatprep.mubr.bf16.mxu0 0
      %765 = vmatmul.mubr.bf16.gmra.mxu0 %v689
      %v766 = vpop.f32.mrf.mxu0
      %v767 = vadd.f32 0.0, %v766
      %v768 = vpop.f32.mrf.mxu0
      %v769 = vpop.f32.mrf.mxu0
      %v770 = vpop.f32.mrf.mxu0
      %771 = vdwg.mxu0
      %v772 = vadd.f32 %v663, %v726
      %v773 = vadd.f32 %v664, %v728
      %v774 = vadd.f32 %v665, %v767
      %s775 = scalar_lea.vmem %s2, 10
      %v776 = vld [vmem:[%s775] sm:$0x3]
      %777 = vrot.lane.b32.xlu0 %v682, 127
      %v778 = vpop.permute.xlu0 %777
      %779 = vrot.lane.b32.xlu0 %v683, 127
      %v780 = vpop.permute.xlu0 %779
      %781 = vrot.lane.b32.xlu0 %v684, 127
      %v782 = vpop.permute.xlu0 %781
      %vm783 = vcmask 1039360
      %v784 = vsel %vm783, %v778, %v780
      %v785 = vsel %vm783, %v780, %v782
      %v790 = vsel %vm274, %v776, 0
      %792 = vmatprep.subr.bf16.mxu0 0
      %793 = vmatpush1.bf16.msra.mxu0 0
      %794 = vmatprep.subr.bf16.mxu0 0
      %795 = vmatpush1.bf16.msra.mxu0 0
      %796 = vmatprep.subr.bf16.mxu0 0
      %797 = vmatpush1.bf16.msra.mxu0 0
      %798 = vmatprep.subr.bf16.mxu0 0
      %799 = vmatpush1.bf16.msra.mxu0 0
      %800 = vmatprep.subr.bf16.mxu0 0
      %801 = vmatpush1.bf16.msra.mxu0 0
      %802 = vmatprep.subr.bf16.mxu0 0
      %803 = vmatpush1.bf16.msra.mxu0 0
      %804 = vmatprep.subr.bf16.mxu0 0
      %805 = vmatpush1.bf16.msra.mxu0 0
      %806 = vmatprep.subr.bf16.mxu0 %v785
      %807 = vmatpush1.bf16.msra.mxu0 %v784
      %808 = vmatprep.subr.bf16.mxu0 0
      %809 = vmatpush2.bf16.msra.mxu0 0
      %810 = vmatprep.subr.bf16.mxu0 0
      %811 = vmatpush2.bf16.msra.mxu0 0
      %812 = vmatprep.subr.bf16.mxu0 0
      %813 = vmatpush2.bf16.msra.mxu0 0
      %814 = vmatprep.subr.bf16.mxu0 0
      %815 = vmatpush2.bf16.msra.mxu0 0
      %816 = vmatprep.subr.bf16.mxu0 0
      %817 = vmatpush2.bf16.msra.mxu0 0
      %818 = vmatprep.subr.bf16.mxu0 0
      %819 = vmatpush2.bf16.msra.mxu0 0
      %820 = vmatprep.subr.bf16.mxu0 0
      %821 = vmatpush2.bf16.msra.mxu0 0
      %822 = vmatprep.subr.bf16.mxu0 0
      %823 = vmatpush2.bf16.msra.mxu0 0
      %824 = vmatprep.mubr.bf16.mxu0 0
      %825 = vmatmul.mubr.bf16.gmra.mxu0 %v790
      %v826 = vpop.f32.mrf.mxu0
      %v827 = vadd.f32 0.0, %v826
      %v828 = vpop.f32.mrf.mxu0
      %v829 = vadd.f32 0.0, %v828
      %v830 = vpop.f32.mrf.mxu0
      %v831 = vpop.f32.mrf.mxu0
      %832 = vdwg.mxu0
      %833 = vmatprep.subr.bf16.mxu0 0
      %834 = vmatpush1.bf16.msra.mxu0 0
      %835 = vmatprep.subr.bf16.mxu0 0
      %836 = vmatpush1.bf16.msra.mxu0 0
      %837 = vmatprep.subr.bf16.mxu0 0
      %838 = vmatpush1.bf16.msra.mxu0 0
      %839 = vmatprep.subr.bf16.mxu0 0
      %840 = vmatpush1.bf16.msra.mxu0 0
      %841 = vmatprep.subr.bf16.mxu0 0
      %842 = vmatpush1.bf16.msra.mxu0 0
      %843 = vmatprep.subr.bf16.mxu0 0
      %844 = vmatpush1.bf16.msra.mxu0 0
      %845 = vmatprep.subr.bf16.mxu0 0
      %846 = vmatpush1.bf16.msra.mxu0 0
      %847 = vmatprep.subr.bf16.mxu0 0
      %848 = vmatpush1.bf16.msra.mxu0 %v782
      %849 = vmatprep.subr.bf16.mxu0 0
      %850 = vmatpush2.bf16.msra.mxu0 0
      %851 = vmatprep.subr.bf16.mxu0 0
      %852 = vmatpush2.bf16.msra.mxu0 0
      %853 = vmatprep.subr.bf16.mxu0 0
      %854 = vmatpush2.bf16.msra.mxu0 0
      %855 = vmatprep.subr.bf16.mxu0 0
      %856 = vmatpush2.bf16.msra.mxu0 0
      %857 = vmatprep.subr.bf16.mxu0 0
      %858 = vmatpush2.bf16.msra.mxu0 0
      %859 = vmatprep.subr.bf16.mxu0 0
      %860 = vmatpush2.bf16.msra.mxu0 0
      %861 = vmatprep.subr.bf16.mxu0 0
      %862 = vmatpush2.bf16.msra.mxu0 0
      %863 = vmatprep.subr.bf16.mxu0 0
      %864 = vmatpush2.bf16.msra.mxu0 0
      %865 = vmatprep.mubr.bf16.mxu0 0
      %866 = vmatmul.mubr.bf16.gmra.mxu0 %v790
      %v867 = vpop.f32.mrf.mxu0
      %v868 = vadd.f32 0.0, %v867
      %v869 = vpop.f32.mrf.mxu0
      %v870 = vpop.f32.mrf.mxu0
      %v871 = vpop.f32.mrf.mxu0
      %872 = vdwg.mxu0
      %v873 = vadd.f32 %v772, %v827
      %v874 = vadd.f32 %v773, %v829
      %v875 = vadd.f32 %v774, %v868
      %s876 = scalar_lea.vmem %s2, 12
      %v877 = vld [vmem:[%s876] sm:$0x3]
      %878 = vrot.lane.b32.xlu0 %v682, 111
      %v879 = vpop.permute.xlu0 %878
      %880 = vrot.lane.b32.xlu0 %v683, 111
      %v881 = vpop.permute.xlu0 %880
      %882 = vrot.lane.b32.xlu0 %v684, 111
      %v883 = vpop.permute.xlu0 %882
      %vm884 = vcmask 908288
      %v885 = vsel %vm884, %v879, %v881
      %v886 = vsel %vm884, %v881, %v883
      %v891 = vsel %vm274, %v877, 0
      %893 = vmatprep.subr.bf16.mxu0 0
      %894 = vmatpush1.bf16.msra.mxu0 0
      %895 = vmatprep.subr.bf16.mxu0 0
      %896 = vmatpush1.bf16.msra.mxu0 0
      %897 = vmatprep.subr.bf16.mxu0 0
      %898 = vmatpush1.bf16.msra.mxu0 0
      %899 = vmatprep.subr.bf16.mxu0 0
      %900 = vmatpush1.bf16.msra.mxu0 0
      %901 = vmatprep.subr.bf16.mxu0 0
      %902 = vmatpush1.bf16.msra.mxu0 0
      %903 = vmatprep.subr.bf16.mxu0 0
      %904 = vmatpush1.bf16.msra.mxu0 0
      %905 = vmatprep.subr.bf16.mxu0 0
      %906 = vmatpush1.bf16.msra.mxu0 0
      %907 = vmatprep.subr.bf16.mxu0 %v886
      %908 = vmatpush1.bf16.msra.mxu0 %v885
      %909 = vmatprep.subr.bf16.mxu0 0
      %910 = vmatpush2.bf16.msra.mxu0 0
      %911 = vmatprep.subr.bf16.mxu0 0
      %912 = vmatpush2.bf16.msra.mxu0 0
      %913 = vmatprep.subr.bf16.mxu0 0
      %914 = vmatpush2.bf16.msra.mxu0 0
      %915 = vmatprep.subr.bf16.mxu0 0
      %916 = vmatpush2.bf16.msra.mxu0 0
      %917 = vmatprep.subr.bf16.mxu0 0
      %918 = vmatpush2.bf16.msra.mxu0 0
      %919 = vmatprep.subr.bf16.mxu0 0
      %920 = vmatpush2.bf16.msra.mxu0 0
      %921 = vmatprep.subr.bf16.mxu0 0
      %922 = vmatpush2.bf16.msra.mxu0 0
      %923 = vmatprep.subr.bf16.mxu0 0
      %924 = vmatpush2.bf16.msra.mxu0 0
      %925 = vmatprep.mubr.bf16.mxu0 0
      %926 = vmatmul.mubr.bf16.gmra.mxu0 %v891
      %v927 = vpop.f32.mrf.mxu0
      %v928 = vadd.f32 0.0, %v927
      %v929 = vpop.f32.mrf.mxu0
      %v930 = vadd.f32 0.0, %v929
      %v931 = vpop.f32.mrf.mxu0
      %v932 = vpop.f32.mrf.mxu0
      %933 = vdwg.mxu0
      %934 = vmatprep.subr.bf16.mxu0 0
      %935 = vmatpush1.bf16.msra.mxu0 0
      %936 = vmatprep.subr.bf16.mxu0 0
      %937 = vmatpush1.bf16.msra.mxu0 0
      %938 = vmatprep.subr.bf16.mxu0 0
      %939 = vmatpush1.bf16.msra.mxu0 0
      %940 = vmatprep.subr.bf16.mxu0 0
      %941 = vmatpush1.bf16.msra.mxu0 0
      %942 = vmatprep.subr.bf16.mxu0 0
      %943 = vmatpush1.bf16.msra.mxu0 0
      %944 = vmatprep.subr.bf16.mxu0 0
      %945 = vmatpush1.bf16.msra.mxu0 0
      %946 = vmatprep.subr.bf16.mxu0 0
      %947 = vmatpush1.bf16.msra.mxu0 0
      %948 = vmatprep.subr.bf16.mxu0 0
      %949 = vmatpush1.bf16.msra.mxu0 %v883
      %950 = vmatprep.subr.bf16.mxu0 0
      %951 = vmatpush2.bf16.msra.mxu0 0
      %952 = vmatprep.subr.bf16.mxu0 0
      %953 = vmatpush2.bf16.msra.mxu0 0
      %954 = vmatprep.subr.bf16.mxu0 0
      %955 = vmatpush2.bf16.msra.mxu0 0
      %956 = vmatprep.subr.bf16.mxu0 0
      %957 = vmatpush2.bf16.msra.mxu0 0
      %958 = vmatprep.subr.bf16.mxu0 0
      %959 = vmatpush2.bf16.msra.mxu0 0
      %960 = vmatprep.subr.bf16.mxu0 0
      %961 = vmatpush2.bf16.msra.mxu0 0
      %962 = vmatprep.subr.bf16.mxu0 0
      %963 = vmatpush2.bf16.msra.mxu0 0
      %964 = vmatprep.subr.bf16.mxu0 0
      %965 = vmatpush2.bf16.msra.mxu0 0
      %966 = vmatprep.mubr.bf16.mxu0 0
      %967 = vmatmul.mubr.bf16.gmra.mxu0 %v891
      %v968 = vpop.f32.mrf.mxu0
      %v969 = vadd.f32 0.0, %v968
      %v970 = vpop.f32.mrf.mxu0
      %v971 = vpop.f32.mrf.mxu0
      %v972 = vpop.f32.mrf.mxu0
      %973 = vdwg.mxu0
      %v974 = vadd.f32 %v873, %v928
      %v975 = vadd.f32 %v874, %v930
      %v976 = vadd.f32 %v875, %v969
      %s977 = scalar_lea.vmem %s2, 14
      %v978 = vld [vmem:[%s977] sm:$0x3]
      %979 = vrot.lane.b32.xlu0 %v682, 110
      %v980 = vpop.permute.xlu0 %979
      %981 = vrot.lane.b32.xlu0 %v683, 110
      %v982 = vpop.permute.xlu0 %981
      %983 = vrot.lane.b32.xlu0 %v684, 110
      %v984 = vpop.permute.xlu0 %983
      %vm985 = vcmask 900096
      %v986 = vsel %vm985, %v980, %v982
      %v987 = vsel %vm985, %v982, %v984
      %v992 = vsel %vm274, %v978, 0
      %994 = vmatprep.subr.bf16.mxu0 0
      %995 = vmatpush1.bf16.msra.mxu0 0
      %996 = vmatprep.subr.bf16.mxu0 0
      %997 = vmatpush1.bf16.msra.mxu0 0
      %998 = vmatprep.subr.bf16.mxu0 0
      %999 = vmatpush1.bf16.msra.mxu0 0
      %1000 = vmatprep.subr.bf16.mxu0 0
      %1001 = vmatpush1.bf16.msra.mxu0 0
      %1002 = vmatprep.subr.bf16.mxu0 0
      %1003 = vmatpush1.bf16.msra.mxu0 0
      %1004 = vmatprep.subr.bf16.mxu0 0
      %1005 = vmatpush1.bf16.msra.mxu0 0
      %1006 = vmatprep.subr.bf16.mxu0 0
      %1007 = vmatpush1.bf16.msra.mxu0 0
      %1008 = vmatprep.subr.bf16.mxu0 %v987
      %1009 = vmatpush1.bf16.msra.mxu0 %v986
      %1010 = vmatprep.subr.bf16.mxu0 0
      %1011 = vmatpush2.bf16.msra.mxu0 0
      %1012 = vmatprep.subr.bf16.mxu0 0
      %1013 = vmatpush2.bf16.msra.mxu0 0
      %1014 = vmatprep.subr.bf16.mxu0 0
      %1015 = vmatpush2.bf16.msra.mxu0 0
      %1016 = vmatprep.subr.bf16.mxu0 0
      %1017 = vmatpush2.bf16.msra.mxu0 0
      %1018 = vmatprep.subr.bf16.mxu0 0
      %1019 = vmatpush2.bf16.msra.mxu0 0
      %1020 = vmatprep.subr.bf16.mxu0 0
      %1021 = vmatpush2.bf16.msra.mxu0 0
      %1022 = vmatprep.subr.bf16.mxu0 0
      %1023 = vmatpush2.bf16.msra.mxu0 0
      %1024 = vmatprep.subr.bf16.mxu0 0
      %1025 = vmatpush2.bf16.msra.mxu0 0
      %1026 = vmatprep.mubr.bf16.mxu0 0
      %1027 = vmatmul.mubr.bf16.gmra.mxu0 %v992
      %v1028 = vpop.f32.mrf.mxu0
      %v1029 = vadd.f32 0.0, %v1028
      %v1030 = vpop.f32.mrf.mxu0
      %v1031 = vadd.f32 0.0, %v1030
      %v1032 = vpop.f32.mrf.mxu0
      %v1033 = vpop.f32.mrf.mxu0
      %1034 = vdwg.mxu0
      %1035 = vmatprep.subr.bf16.mxu0 0
      %1036 = vmatpush1.bf16.msra.mxu0 0
      %1037 = vmatprep.subr.bf16.mxu0 0
      %1038 = vmatpush1.bf16.msra.mxu0 0
      %1039 = vmatprep.subr.bf16.mxu0 0
      %1040 = vmatpush1.bf16.msra.mxu0 0
      %1041 = vmatprep.subr.bf16.mxu0 0
      %1042 = vmatpush1.bf16.msra.mxu0 0
      %1043 = vmatprep.subr.bf16.mxu0 0
      %1044 = vmatpush1.bf16.msra.mxu0 0
      %1045 = vmatprep.subr.bf16.mxu0 0
      %1046 = vmatpush1.bf16.msra.mxu0 0
      %1047 = vmatprep.subr.bf16.mxu0 0
      %1048 = vmatpush1.bf16.msra.mxu0 0
      %1049 = vmatprep.subr.bf16.mxu0 0
      %1050 = vmatpush1.bf16.msra.mxu0 %v984
      %1051 = vmatprep.subr.bf16.mxu0 0
      %1052 = vmatpush2.bf16.msra.mxu0 0
      %1053 = vmatprep.subr.bf16.mxu0 0
      %1054 = vmatpush2.bf16.msra.mxu0 0
      %1055 = vmatprep.subr.bf16.mxu0 0
      %1056 = vmatpush2.bf16.msra.mxu0 0
      %1057 = vmatprep.subr.bf16.mxu0 0
      %1058 = vmatpush2.bf16.msra.mxu0 0
      %1059 = vmatprep.subr.bf16.mxu0 0
      %1060 = vmatpush2.bf16.msra.mxu0 0
      %1061 = vmatprep.subr.bf16.mxu0 0
      %1062 = vmatpush2.bf16.msra.mxu0 0
      %1063 = vmatprep.subr.bf16.mxu0 0
      %1064 = vmatpush2.bf16.msra.mxu0 0
      %1065 = vmatprep.subr.bf16.mxu0 0
      %1066 = vmatpush2.bf16.msra.mxu0 0
      %1067 = vmatprep.mubr.bf16.mxu0 0
      %1068 = vmatmul.mubr.bf16.gmra.mxu0 %v992
      %v1069 = vpop.f32.mrf.mxu0
      %v1070 = vadd.f32 0.0, %v1069
      %v1071 = vpop.f32.mrf.mxu0
      %v1072 = vpop.f32.mrf.mxu0
      %v1073 = vpop.f32.mrf.mxu0
      %1074 = vdwg.mxu0
      %v1075 = vadd.f32 %v974, %v1029
      %v1076 = vadd.f32 %v975, %v1031
      %v1077 = vadd.f32 %v976, %v1070
      %s1078 = scalar_lea.vmem %s2, 16
      %v1079 = vld [vmem:[%s1078] sm:$0x3]
      %1080 = vrot.lane.b32.xlu0 %v682, 109
      %v1081 = vpop.permute.xlu0 %1080
      %1082 = vrot.lane.b32.xlu0 %v683, 109
      %v1083 = vpop.permute.xlu0 %1082
      %1084 = vrot.lane.b32.xlu0 %v684, 109
      %v1085 = vpop.permute.xlu0 %1084
      %vm1086 = vcmask 891904
      %v1087 = vsel %vm1086, %v1081, %v1083
      %v1088 = vsel %vm1086, %v1083, %v1085
      %v1093 = vsel %vm274, %v1079, 0
      %1095 = vmatprep.subr.bf16.mxu0 0
      %1096 = vmatpush1.bf16.msra.mxu0 0
      %1097 = vmatprep.subr.bf16.mxu0 0
      %1098 = vmatpush1.bf16.msra.mxu0 0
      %1099 = vmatprep.subr.bf16.mxu0 0
      %1100 = vmatpush1.bf16.msra.mxu0 0
      %1101 = vmatprep.subr.bf16.mxu0 0
      %1102 = vmatpush1.bf16.msra.mxu0 0
      %1103 = vmatprep.subr.bf16.mxu0 0
      %1104 = vmatpush1.bf16.msra.mxu0 0
      %1105 = vmatprep.subr.bf16.mxu0 0
      %1106 = vmatpush1.bf16.msra.mxu0 0
      %1107 = vmatprep.subr.bf16.mxu0 0
      %1108 = vmatpush1.bf16.msra.mxu0 0
      %1109 = vmatprep.subr.bf16.mxu0 %v1088
      %1110 = vmatpush1.bf16.msra.mxu0 %v1087
      %1111 = vmatprep.subr.bf16.mxu0 0
      %1112 = vmatpush2.bf16.msra.mxu0 0
      %1113 = vmatprep.subr.bf16.mxu0 0
      %1114 = vmatpush2.bf16.msra.mxu0 0
      %1115 = vmatprep.subr.bf16.mxu0 0
      %1116 = vmatpush2.bf16.msra.mxu0 0
      %1117 = vmatprep.subr.bf16.mxu0 0
      %1118 = vmatpush2.bf16.msra.mxu0 0
      %1119 = vmatprep.subr.bf16.mxu0 0
      %1120 = vmatpush2.bf16.msra.mxu0 0
      %1121 = vmatprep.subr.bf16.mxu0 0
      %1122 = vmatpush2.bf16.msra.mxu0 0
      %1123 = vmatprep.subr.bf16.mxu0 0
      %1124 = vmatpush2.bf16.msra.mxu0 0
      %1125 = vmatprep.subr.bf16.mxu0 0
      %1126 = vmatpush2.bf16.msra.mxu0 0
      %1127 = vmatprep.mubr.bf16.mxu0 0
      %1128 = vmatmul.mubr.bf16.gmra.mxu0 %v1093
      %v1129 = vpop.f32.mrf.mxu0
      %v1130 = vadd.f32 0.0, %v1129
      %v1131 = vpop.f32.mrf.mxu0
      %v1132 = vadd.f32 0.0, %v1131
      %v1133 = vpop.f32.mrf.mxu0
      %v1134 = vpop.f32.mrf.mxu0
      %1135 = vdwg.mxu0
      %1136 = vmatprep.subr.bf16.mxu0 0
      %1137 = vmatpush1.bf16.msra.mxu0 0
      %1138 = vmatprep.subr.bf16.mxu0 0
      %1139 = vmatpush1.bf16.msra.mxu0 0
      %1140 = vmatprep.subr.bf16.mxu0 0
      %1141 = vmatpush1.bf16.msra.mxu0 0
      %1142 = vmatprep.subr.bf16.mxu0 0
      %1143 = vmatpush1.bf16.msra.mxu0 0
      %1144 = vmatprep.subr.bf16.mxu0 0
      %1145 = vmatpush1.bf16.msra.mxu0 0
      %1146 = vmatprep.subr.bf16.mxu0 0
      %1147 = vmatpush1.bf16.msra.mxu0 0
      %1148 = vmatprep.subr.bf16.mxu0 0
      %1149 = vmatpush1.bf16.msra.mxu0 0
      %1150 = vmatprep.subr.bf16.mxu0 0
      %1151 = vmatpush1.bf16.msra.mxu0 %v1085
      %1152 = vmatprep.subr.bf16.mxu0 0
      %1153 = vmatpush2.bf16.msra.mxu0 0
      %1154 = vmatprep.subr.bf16.mxu0 0
      %1155 = vmatpush2.bf16.msra.mxu0 0
      %1156 = vmatprep.subr.bf16.mxu0 0
      %1157 = vmatpush2.bf16.msra.mxu0 0
      %1158 = vmatprep.subr.bf16.mxu0 0
      %1159 = vmatpush2.bf16.msra.mxu0 0
      %1160 = vmatprep.subr.bf16.mxu0 0
      %1161 = vmatpush2.bf16.msra.mxu0 0
      %1162 = vmatprep.subr.bf16.mxu0 0
      %1163 = vmatpush2.bf16.msra.mxu0 0
      %1164 = vmatprep.subr.bf16.mxu0 0
      %1165 = vmatpush2.bf16.msra.mxu0 0
      %1166 = vmatprep.subr.bf16.mxu0 0
      %1167 = vmatpush2.bf16.msra.mxu0 0
      %1168 = vmatprep.mubr.bf16.mxu0 0
      %1169 = vmatmul.mubr.bf16.gmra.mxu0 %v1093
      %v1170 = vpop.f32.mrf.mxu0
      %v1171 = vadd.f32 0.0, %v1170
      %v1172 = vpop.f32.mrf.mxu0
      %v1173 = vpop.f32.mrf.mxu0
      %v1174 = vpop.f32.mrf.mxu0
      %1175 = vdwg.mxu0
      %v1176 = vadd.f32 %v1075, %v1130
      %v1177 = vadd.f32 %v1076, %v1132
      %v1178 = vadd.f32 %v1077, %v1171
      %v1179 = vld [vmem:[%s3] sm:$0xf]
      %1181 = vset.pattern.permute.xlu0 0
      %1182 = vperm.xlu0 %1181, %v1179
      %v1183 = vpop.permute.xlu0 %1182
      %v1185 = vadd.f32 %v1176, %v1183
      %v1186 = vadd.f32 %v1177, %v1183
      %v1187 = vadd.f32 %v1178, %v1183
      %v1189 = vlaneseq
      %v1190 = vshrl.u32 %v1189, 7
      %v1191 = vsub.s32 0, %v1190
      %v1192 = vrot.slane %v235, %v1191
      %v1193 = vlaneseq
      %v1194 = vshrl.u32 %v1193, 7
      %v1195 = vsub.s32 1, %v1194
      %v1196 = vrot.slane %v235, %v1195
      %v1197 = vlaneseq
      %v1198 = vshrl.u32 %v1197, 7
      %v1199 = vsub.s32 2, %v1198
      %v1200 = vrot.slane %v235, %v1199
      %v1204 = vmul.f32 %v1185, %v1192
      %v1205 = vmul.f32 %v1186, %v1196
      %v1206 = vmul.f32 %v1187, %v1200
      %1207 = vst [vmem:[%s197] sm:$0xf] 0.0
      %v1210 = vcombine.low %v1204, %v1205
      %1212 = vst [vmem:[%s197 + $0x4] sm:$0xff] %v1210
      %vm1213 = vcmask 551936
      %1214 = vst.msk [vmem:[%s197 + $0xc] sm:$0xf] %vm1213, %v1206
      %vm1215 = vcmask 1044000
      %1216 = vst.msk [vmem:[%s197 + $0xc] sm:$0xf] %vm1215, 0.0
      %p1217 = scmp.lt.s32.totalorder %s15, 1
      %s1218 = scalar_select %p1217, %s15, 1
      %s1219 = smul.addr %s1218, 4
      %s1220 = smul.addr %s1219, 4
      %s1221 = scalar_lea.vmem %s4, %s1220
      // Predicated region
      $region37: #{rrdbnet_forward.9} parent=35 // pred_check
        %p1222 = pneg %p122
      $region38: #{rrdbnet_forward.9} parent=35 // pred_check_branch
        %1224 = sbr.rel (%p1222) target = $region40
      $region39: #{rrdbnet_forward.9} parent=35 // pred_region
        _
      $region40: #{rrdbnet_forward.9} parent=35 // pred_fallthru
        _
    $region36: #{rrdbnet_forward.9} parent=5 // pred_fallthru
      _
    %p1225 = scmp.le.s32.totalorder 2, %s10
    // Predicated region
    $region41: #{rrdbnet_forward.9} parent=5 // pred_check
      %p1226 = pneg %p1225
    $region42: #{rrdbnet_forward.9} parent=5 // pred_check_branch
      %1228 = sbr.rel (%p1226) target = $region44
    $region43: #{rrdbnet_forward.9} parent=5 // pred_region
      %s1229 = ssub.s32 %s10, 2
      // Predicated region
      $region45: #{rrdbnet_forward.9} parent=43 // pred_check
        %p1230 = pneg %p128
      $region46: #{rrdbnet_forward.9} parent=43 // pred_check_branch
        %1232 = sbr.rel (%p1230) target = $region48
      $region47: #{rrdbnet_forward.9} parent=43 // pred_region
        %p1233 = scmp.lt.s32.totalorder %s16, 1
        %s1234 = scalar_select %p1233, %s16, 1
        %s1235 = smul.addr %s1234, 4
        %s1236 = smul.addr %s1235, 4
        %s1237 = scalar_lea.vmem %s4, %s1236
      $region48: #{rrdbnet_forward.9} parent=43 // pred_fallthru
        _
    $region44: #{rrdbnet_forward.9} parent=5 // pred_fallthru
      _
  $region6: #{rrdbnet_forward.9} parent=0 // loop_footer
    %s14 = sadd.s32 1, %s10
  $region7: #{rrdbnet_forward.9} parent=0 // loop_footer_branch
    %9 = sbr.rel target = $region3
  $region8: #{rrdbnet_forward.9} parent=0 // loop_exit
    _

// kernel: rrdbnet_forward.8
$region0: #{rrdbnet_forward.8}
  #allocation0 [shape = 'u32[]', space=smem, size = 0x4, offset = 0x4, fixed_abs, tag = 'smem constant byte address 0x4 - core index']
  #allocation1 [shape = 'u32[144,128]{1,0:T(1,128)}', space=vmem, size = 0x12000, scoped, tag = 'internal scratch']
  #allocation2 [shape = 'bf16[16,512]{1,0:T(8,128)(2,1)}', space=vmem, size = 0x4000, scoped, tag = 'scratch operand']
  %s0 = inlined_call_operand.vmem [shape: f32[1,324], index: 0, kind: input, shape index: {}]
  %s1 = inlined_call_operand.vmem [shape: f32[2,16,512], index: 1, kind: input, shape index: {}]
  %s2 = inlined_call_operand.vmem [shape: f32[2,16,512], index: 2, kind: input, shape index: {}]
  %s3 = inlined_call_operand.vmem [shape: bf16[9,16,16], index: 3, kind: input, shape index: {}]
  %s4 = inlined_call_operand.vmem [shape: f32[16,1], index: 4, kind: input, shape index: {}]
  %s5 = inlined_call_operand.vmem [shape: f32[2,16,512], index: 5, kind: output, shape index: {}]
  %s6 = sld [smem:[#allocation0]]
  $region53: #{rrdbnet_forward.8} parent=0
    _
  %s8 = ssub.s32 1, %s6
  %s9 = scalar_select 0, %s8, %s6
  loop: start=0, step=1, limit=4
  $region2: #{rrdbnet_forward.8} parent=0 // loop_pre_header
    _
  $region3: #{rrdbnet_forward.8} parent=0 // loop_header
    %s11 = sphi 0, %s15
    %p12 = scmp.ge.s32.totalorder %s11, 4
    %s19 = sphi 0, %s19
    %s21 = sphi 0, %s19
    %s22 = sphi 0, %s21
    %s36 = sphi 0, %s22
    %s42 = sphi 0, %s44
    %s45 = sphi 0, %s42
    %s46 = sphi 0, %s45
    %s62 = sphi 0, %s46
    %s68 = sphi 0, %s70
    %s71 = sphi 0, %s68
    %s72 = sphi 0, %s71
    %s88 = sphi 0, %s72
    %s92 = sphi 0, %s92
    %s94 = sphi 0, %s92
    %s95 = sphi 0, %s94
    %s109 = sphi 0, %s95
    %s113 = sphi 0, %s113
    %s115 = sphi 0, %s113
    %s116 = sphi 0, %s115
    %s130 = sphi 0, %s116
    %s136 = sphi 0, %s138
    %s139 = sphi 0, %s136
    %s140 = sphi 0, %s139
    %s156 = sphi 0, %s140
  $region4: #{rrdbnet_forward.8} parent=0 // loop_header_branch
    %14 = sbr.rel (%p12) target = $region8
  $region5: #{rrdbnet_forward.8} parent=0 // loop_body
    %s16 = ssub.s32 %s11, 1
    %s17 = ssub.s32 %s11, 2
    %s18 = sadd.s32 %s11, 1
    %s20 = sadd.s32 %s19, 1
    %p23 = scmp.eq.s32.totalorder %s11, 1
    %p24 = scmp.ne.s32.totalorder %s19, %s21
    %p25 = scmp.eq.s32.totalorder %s11, 0
    %p26 = por %p24, %p25
    %p27 = scmp.ne.s32.totalorder %s19, %s21
    %p28 = scmp.eq.s32.totalorder %s16, 1
    %p29 = por %p27, %p28
    %p30 = scmp.ne.s32.totalorder %s21, %s22
    %p31 = scmp.eq.s32.totalorder %s16, 0
    %p32 = por %p30, %p31
    %p33 = scmp.ne.s32.totalorder %s21, %s22
    %p34 = scmp.eq.s32.totalorder %s17, 1
    %p35 = por %p33, %p34
    %p37 = scmp.ne.s32.totalorder %s22, %s36
    %p38 = scmp.eq.s32.totalorder %s17, 0
    %p39 = por %p37, %p38
    %s40 = ssub.s32 %s11, %s18
    %p41 = scmp.eq.s32.totalorder %s40, 0
    %s43 = sadd.s32 %s42, 1
    %s44 = scalar_select %p41, %s42, %s43
    %p47 = pneg %p41
    %p48 = scmp.eq.s32.totalorder %s11, 1
    %p49 = por %p47, %p48
    %p50 = scmp.ne.s32.totalorder %s42, %s45
    %p51 = scmp.eq.s32.totalorder %s11, 0
    %p52 = por %p50, %p51
    %p53 = scmp.ne.s32.totalorder %s42, %s45
    %p54 = scmp.eq.s32.totalorder %s16, 1
    %p55 = por %p53, %p54
    %p56 = scmp.ne.s32.totalorder %s45, %s46
    %p57 = scmp.eq.s32.totalorder %s16, 0
    %p58 = por %p56, %p57
    %p59 = scmp.ne.s32.totalorder %s45, %s46
    %p60 = scmp.eq.s32.totalorder %s17, 1
    %p61 = por %p59, %p60
    %p63 = scmp.ne.s32.totalorder %s46, %s62
    %p64 = scmp.eq.s32.totalorder %s17, 0
    %p65 = por %p63, %p64
    %s66 = ssub.s32 %s11, %s18
    %p67 = scmp.eq.s32.totalorder %s66, 0
    %s69 = sadd.s32 %s68, 1
    %s70 = scalar_select %p67, %s68, %s69
    %p73 = pneg %p67
    %p74 = scmp.eq.s32.totalorder %s11, 1
    %p75 = por %p73, %p74
    %p76 = scmp.ne.s32.totalorder %s68, %s71
    %p77 = scmp.eq.s32.totalorder %s11, 0
    %p78 = por %p76, %p77
    %p79 = scmp.ne.s32.totalorder %s68, %s71
    %p80 = scmp.eq.s32.totalorder %s16, 1
    %p81 = por %p79, %p80
    %p82 = scmp.ne.s32.totalorder %s71, %s72
    %p83 = scmp.eq.s32.totalorder %s16, 0
    %p84 = por %p82, %p83
    %p85 = scmp.ne.s32.totalorder %s71, %s72
    %p86 = scmp.eq.s32.totalorder %s17, 1
    %p87 = por %p85, %p86
    %p89 = scmp.ne.s32.totalorder %s72, %s88
    %p90 = scmp.eq.s32.totalorder %s17, 0
    %p91 = por %p89, %p90
    %s93 = sadd.s32 %s92, 1
    %p96 = scmp.eq.s32.totalorder %s11, 1
    %p97 = scmp.ne.s32.totalorder %s92, %s94
    %p98 = scmp.eq.s32.totalorder %s11, 0
    %p99 = por %p97, %p98
    %p100 = scmp.ne.s32.totalorder %s92, %s94
    %p101 = scmp.eq.s32.totalorder %s16, 1
    %p102 = por %p100, %p101
    %p103 = scmp.ne.s32.totalorder %s94, %s95
    %p104 = scmp.eq.s32.totalorder %s16, 0
    %p105 = por %p103, %p104
    %p106 = scmp.ne.s32.totalorder %s94, %s95
    %p107 = scmp.eq.s32.totalorder %s17, 1
    %p108 = por %p106, %p107
    %p110 = scmp.ne.s32.totalorder %s95, %s109
    %p111 = scmp.eq.s32.totalorder %s17, 0
    %p112 = por %p110, %p111
    %s114 = sadd.s32 %s113, 1
    %p117 = scmp.eq.s32.totalorder %s11, 1
    %p118 = scmp.ne.s32.totalorder %s113, %s115
    %p119 = scmp.eq.s32.totalorder %s11, 0
    %p120 = por %p118, %p119
    %p121 = scmp.ne.s32.totalorder %s113, %s115
    %p122 = scmp.eq.s32.totalorder %s16, 1
    %p123 = por %p121, %p122
    %p124 = scmp.ne.s32.totalorder %s115, %s116
    %p125 = scmp.eq.s32.totalorder %s16, 0
    %p126 = por %p124, %p125
    %p127 = scmp.ne.s32.totalorder %s115, %s116
    %p128 = scmp.eq.s32.totalorder %s17, 1
    %p129 = por %p127, %p128
    %p131 = scmp.ne.s32.totalorder %s116, %s130
    %p132 = scmp.eq.s32.totalorder %s17, 0
    %p133 = por %p131, %p132
    %s134 = ssub.s32 %s11, %s18
    %p135 = scmp.eq.s32.totalorder %s134, 0
    %s137 = sadd.s32 %s136, 1
    %s138 = scalar_select %p135, %s136, %s137
    %p141 = pneg %p135
    %p142 = scmp.eq.s32.totalorder %s11, 1
    %p143 = por %p141, %p142
    %p144 = scmp.ne.s32.totalorder %s136, %s139
    %p145 = scmp.eq.s32.totalorder %s11, 0
    %p146 = por %p144, %p145
    %p147 = scmp.ne.s32.totalorder %s136, %s139
    %p148 = scmp.eq.s32.totalorder %s16, 1
    %p149 = por %p147, %p148
    %p150 = scmp.ne.s32.totalorder %s139, %s140
    %p151 = scmp.eq.s32.totalorder %s16, 0
    %p152 = por %p150, %p151
    %p153 = scmp.ne.s32.totalorder %s139, %s140
    %p154 = scmp.eq.s32.totalorder %s17, 1
    %p155 = por %p153, %p154
    %p157 = scmp.ne.s32.totalorder %s140, %s156
    %p158 = scmp.eq.s32.totalorder %s17, 0
    %p159 = por %p157, %p158
    %p160 = scmp.le.s32.totalorder 1, %s11
    %p161 = scmp.lt.s32.totalorder %s11, 3
    %p162 = pnand %p160, %p161
    %p163 = pneg %p162
    // Predicated region
    $region9: #{rrdbnet_forward.8} parent=5 // pred_check
      _
    $region10: #{rrdbnet_forward.8} parent=5 // pred_check_branch
      %165 = sbr.rel (%p162) target = $region12
    $region11: #{rrdbnet_forward.8} parent=5 // pred_region
      %s166 = ssub.s32 %s11, 1
      // Predicated region
      $region13: #{rrdbnet_forward.8} parent=11 // pred_check
        %p167 = pneg %p32
      $region14: #{rrdbnet_forward.8} parent=11 // pred_check_branch
        %169 = sbr.rel (%p167) target = $region16
      $region15: #{rrdbnet_forward.8} parent=11 // pred_region
        _
      $region16: #{rrdbnet_forward.8} parent=11 // pred_fallthru
        _
      // Predicated region
      $region17: #{rrdbnet_forward.8} parent=11 // pred_check
        %p170 = pneg %p105
      $region18: #{rrdbnet_forward.8} parent=11 // pred_check_branch
        %172 = sbr.rel (%p170) target = $region20
      $region19: #{rrdbnet_forward.8} parent=11 // pred_region
        _
      $region20: #{rrdbnet_forward.8} parent=11 // pred_fallthru
        _
      // Predicated region
      $region21: #{rrdbnet_forward.8} parent=11 // pred_check
        %p173 = pneg %p126
      $region22: #{rrdbnet_forward.8} parent=11 // pred_check_branch
        %175 = sbr.rel (%p173) target = $region24
      $region23: #{rrdbnet_forward.8} parent=11 // pred_region
        _
      $region24: #{rrdbnet_forward.8} parent=11 // pred_fallthru
        _
    $region12: #{rrdbnet_forward.8} parent=5 // pred_fallthru
      _
    %p176 = scmp.lt.s32.totalorder %s11, 2
    // Predicated region
    $region25: #{rrdbnet_forward.8} parent=5 // pred_check
      %p177 = pneg %p176
    $region26: #{rrdbnet_forward.8} parent=5 // pred_check_branch
      %179 = sbr.rel (%p177) target = $region28
    $region27: #{rrdbnet_forward.8} parent=5 // pred_region
      // Predicated region
      $region29: #{rrdbnet_forward.8} parent=27 // pred_check
        %p180 = pneg %p52
      $region30: #{rrdbnet_forward.8} parent=27 // pred_check_branch
        %182 = sbr.rel (%p180) target = $region32
      $region31: #{rrdbnet_forward.8} parent=27 // pred_region
        %p183 = scmp.lt.s32.totalorder %s11, 1
        %s184 = scalar_select %p183, %s11, 1
        %s185 = smul.addr %s184, 8
        %s186 = smul.addr %s185, 8
        %s187 = scalar_lea.vmem %s1, %s186
      $region32: #{rrdbnet_forward.8} parent=27 // pred_fallthru
        _
      // Predicated region
      $region33: #{rrdbnet_forward.8} parent=27 // pred_check
        %p188 = pneg %p78
      $region34: #{rrdbnet_forward.8} parent=27 // pred_check_branch
        %190 = sbr.rel (%p188) target = $region36
      $region35: #{rrdbnet_forward.8} parent=27 // pred_region
        %p191 = scmp.lt.s32.totalorder %s11, 1
        %s192 = scalar_select %p191, %s11, 1
        %s193 = smul.addr %s192, 8
        %s194 = smul.addr %s193, 8
        %s195 = scalar_lea.vmem %s2, %s194
      $region36: #{rrdbnet_forward.8} parent=27 // pred_fallthru
        _
    $region28: #{rrdbnet_forward.8} parent=5 // pred_fallthru
      _
    %p196 = scmp.le.s32.totalorder 1, %s11
    %p197 = scmp.lt.s32.totalorder %s11, 3
    %p198 = pnand %p196, %p197
    %p199 = pneg %p198
    // Predicated region
    $region37: #{rrdbnet_forward.8} parent=5 // pred_check
      _
    $region38: #{rrdbnet_forward.8} parent=5 // pred_check_branch
      %201 = sbr.rel (%p198) target = $region40
    $region39: #{rrdbnet_forward.8} parent=5 // pred_region
      %s202 = ssub.s32 %s11, 1
      %p203 = pneg %p32
      %p204 = pneg %p29
      %p205 = scmp.lt.s32.totalorder %s16, 1
      %s206 = scalar_select %p205, %s16, 1
      %s207 = smul.addr %s206, 8
      %s208 = smul.addr %s207, 8
      %s209 = scalar_lea.vmem %s1, %s208
      %p210 = pneg %p58
      %p211 = pneg %p55
      %p212 = scmp.lt.s32.totalorder %s16, 1
      %s213 = scalar_select %p212, %s16, 1
      %s214 = smul.addr %s213, 8
      %s215 = smul.addr %s214, 8
      %s216 = scalar_lea.vmem %s2, %s215
      %p217 = pneg %p84
      %p218 = pneg %p81
      %p219 = pneg %p105
      %p220 = pneg %p102
      %p221 = pneg %p126
      %p222 = pneg %p123
      %p223 = pneg %p152
      %p224 = pneg %p149
      %p225 = scmp.lt.s32.totalorder %s16, 1
      %s226 = scalar_select %p225, %s16, 1
      %s227 = smul.addr %s226, 8
      %s228 = smul.addr %s227, 8
      %s229 = scalar_lea.vmem %s5, %s228
      %p230 = scmp.lt.s32.totalorder %s16, 1
      %s231 = scalar_select %p230, %s16, 1
      %s232 = smul.addr %s231, 8
      %s233 = smul.addr %s232, 8
      %s234 = scalar_lea.vmem %s1, %s233
      %p235 = scmp.lt.s32.totalorder %s16, 1
      %s236 = scalar_select %p235, %s16, 1
      %s237 = smul.addr %s236, 8
      %s238 = smul.addr %s237, 8
      %s239 = scalar_lea.vmem %s2, %s238
      %p240 = scmp.lt.s32.totalorder %s16, 1
      %s241 = scalar_select %p240, %s16, 1
      %s242 = smul.addr %s241, 8
      %s243 = smul.addr %s242, 8
      %s244 = scalar_lea.vmem %s5, %s243
      %v246 = vld [vmem:[%s234] sm:$0xff]
      %v247 = vld [vmem:[%s234 + $0x8] sm:$0xff]
      %v248 = vld [vmem:[%s234 + $0x10] sm:$0xff]
      %v249 = vld [vmem:[%s234 + $0x18] sm:$0xff]
      %v250 = vld [vmem:[%s234 + $0x20] sm:$0xff]
      %v251 = vld [vmem:[%s234 + $0x28] sm:$0xff]
      %v252 = vld [vmem:[%s234 + $0x30] sm:$0xff]
      %v253 = vld [vmem:[%s234 + $0x38] sm:$0xff]
      %v254 = vld [vmem:[%s239] sm:$0xff]
      %v255 = vld [vmem:[%s239 + $0x8] sm:$0xff]
      %v256 = vld [vmem:[%s239 + $0x10] sm:$0xff]
      %v257 = vld [vmem:[%s239 + $0x18] sm:$0xff]
      %v258 = vld [vmem:[%s239 + $0x20] sm:$0xff]
      %v259 = vld [vmem:[%s239 + $0x28] sm:$0xff]
      %v260 = vld [vmem:[%s239 + $0x30] sm:$0xff]
      %v261 = vld [vmem:[%s239 + $0x38] sm:$0xff]
      %v262 = vadd.f32 %v246, %v254
      %v263 = vadd.f32 %v247, %v255
      %v264 = vadd.f32 %v248, %v256
      %v265 = vadd.f32 %v249, %v257
      %v266 = vadd.f32 %v250, %v258
      %v267 = vadd.f32 %v251, %v259
      %v268 = vadd.f32 %v252, %v260
      %v269 = vadd.f32 %v253, %v261
      %v270 = vpack.c.bf16 %v266, %v262
      %v271 = vpack.c.bf16 %v267, %v263
      %v272 = vpack.c.bf16 %v268, %v264
      %v273 = vpack.c.bf16 %v269, %v265
      %v278 = vunpack.c.l.b16 %v270
      %v279 = vunpack.c.l.b16 %v271
      %v280 = vunpack.c.l.b16 %v272
      %v281 = vunpack.c.l.b16 %v273
      %v282 = vunpack.c.h.b16 %v270
      %v283 = vunpack.c.h.b16 %v271
      %v284 = vunpack.c.h.b16 %v272
      %v285 = vunpack.c.h.b16 %v273
      %v286 = vpack.c.b16 %v279, %v278
      %v287 = vpack.c.b16 %v281, %v280
      %v288 = vpack.c.b16 %v283, %v282
      %v289 = vpack.c.b16 %v285, %v284
      %294 = vst [vmem:[#allocation2] sm:$0xff] %v286
      %295 = vst [vmem:[#allocation2 + $0x8] sm:$0xff] %v287
      %296 = vst [vmem:[#allocation2 + $0x10] sm:$0xff] %v288
      %297 = vst [vmem:[#allocation2 + $0x18] sm:$0xff] %v289
      %v298 = vld [vmem:[%s0] sm:$0x7]
      %v299 = vld [vmem:[#allocation2] sm:$0xff]
      %v300 = vld [vmem:[#allocation2 + $0x8] sm:$0xff]
      %v301 = vld [vmem:[#allocation2 + $0x10] sm:$0xff]
      %v302 = vld [vmem:[#allocation2 + $0x18] sm:$0xff]
      %v303 = vld [vmem:[%s3] sm:$0xf]
      %v304 = vld [vmem:[%s3 + $0x4] sm:$0xf]
      %s305 = scalar_lea.vmem %s3, 8
      %v306 = vld [vmem:[%s305] sm:$0xf]
      %v307 = vld [vmem:[%s305 + $0x4] sm:$0xf]
      %v310 = vunpack.c.l.b16 %v306
      %v311 = vunpack.c.l.b16 %v307
      %v312 = vpack.c.b16 %v311, %v310
      %v317 = vunpack.c.l.b16 %v299
      %v318 = vunpack.c.h.b16 %v299
      %v319 = vunpack.c.l.b16 %v300
      %v320 = vunpack.c.h.b16 %v300
      %v321 = vunpack.c.l.b16 %v301
      %v322 = vunpack.c.h.b16 %v301
      %v323 = vunpack.c.l.b16 %v302
      %v324 = vunpack.c.h.b16 %v302
      %v325 = vpack.c.b16 %v321, %v317
      %v326 = vpack.c.b16 %v322, %v318
      %v327 = vpack.c.b16 %v323, %v319
      %v328 = vpack.c.b16 %v324, %v320
      %329 = vrot.lane.b32.xlu0 %v325, 18
      %v330 = vpop.permute.xlu0 %329
      %331 = vrot.lane.b32.xlu0 %v326, 18
      %v332 = vpop.permute.xlu0 %331
      %333 = vrot.lane.b32.xlu0 %v327, 18
      %v334 = vpop.permute.xlu0 %333
      %335 = vrot.lane.b32.xlu0 %v328, 18
      %v336 = vpop.permute.xlu0 %335
      %vm337 = vcmask 146432
      %v338 = vsel %vm337, %v330, %v332
      %v339 = vsel %vm337, %v332, %v334
      %v340 = vsel %vm337, %v334, %v336
      %vm344 = vcmask 130048
      %v346 = vsel %vm344, %v312, 0
      %348 = vmatprep.subr.bf16.mxu0 0
      %349 = vmatpush1.bf16.msra.mxu0 0
      %350 = vmatprep.subr.bf16.mxu0 0
      %351 = vmatpush1.bf16.msra.mxu0 0
      %352 = vmatprep.subr.bf16.mxu0 0
      %353 = vmatpush1.bf16.msra.mxu0 0
      %354 = vmatprep.subr.bf16.mxu0 0
      %355 = vmatpush1.bf16.msra.mxu0 0
      %356 = vmatprep.subr.bf16.mxu0 0
      %357 = vmatpush1.bf16.msra.mxu0 0
      %358 = vmatprep.subr.bf16.mxu0 0
      %359 = vmatpush1.bf16.msra.mxu0 0
      %360 = vmatprep.subr.bf16.mxu0 0
      %361 = vmatpush1.bf16.msra.mxu0 0
      %362 = vmatprep.subr.bf16.mxu0 %v339
      %363 = vmatpush1.bf16.msra.mxu0 %v338
      %364 = vmatprep.subr.bf16.mxu0 0
      %365 = vmatpush2.bf16.msra.mxu0 0
      %366 = vmatprep.subr.bf16.mxu0 0
      %367 = vmatpush2.bf16.msra.mxu0 0
      %368 = vmatprep.subr.bf16.mxu0 0
      %369 = vmatpush2.bf16.msra.mxu0 0
      %370 = vmatprep.subr.bf16.mxu0 0
      %371 = vmatpush2.bf16.msra.mxu0 0
      %372 = vmatprep.subr.bf16.mxu0 0
      %373 = vmatpush2.bf16.msra.mxu0 0
      %374 = vmatprep.subr.bf16.mxu0 0
      %375 = vmatpush2.bf16.msra.mxu0 0
      %376 = vmatprep.subr.bf16.mxu0 0
      %377 = vmatpush2.bf16.msra.mxu0 0
      %378 = vmatprep.subr.bf16.mxu0 0
      %379 = vmatpush2.bf16.msra.mxu0 0
      %380 = vmatprep.mubr.bf16.mxu0 0
      %381 = vmatmul.mubr.bf16.gmra.mxu0 %v346
      %v382 = vpop.f32.mrf.mxu0
      %v383 = vadd.f32 0.0, %v382
      %v384 = vpop.f32.mrf.mxu0
      %v385 = vadd.f32 0.0, %v384
      %v386 = vpop.f32.mrf.mxu0
      %v387 = vadd.f32 0.0, %v386
      %v388 = vpop.f32.mrf.mxu0
      %v389 = vadd.f32 0.0, %v388
      %390 = vdwg.mxu0
      %391 = vmatprep.subr.bf16.mxu0 0
      %392 = vmatpush1.bf16.msra.mxu0 0
      %393 = vmatprep.subr.bf16.mxu0 0
      %394 = vmatpush1.bf16.msra.mxu0 0
      %395 = vmatprep.subr.bf16.mxu0 0
      %396 = vmatpush1.bf16.msra.mxu0 0
      %397 = vmatprep.subr.bf16.mxu0 0
      %398 = vmatpush1.bf16.msra.mxu0 0
      %399 = vmatprep.subr.bf16.mxu0 0
      %400 = vmatpush1.bf16.msra.mxu0 0
      %401 = vmatprep.subr.bf16.mxu0 0
      %402 = vmatpush1.bf16.msra.mxu0 0
      %403 = vmatprep.subr.bf16.mxu0 0
      %404 = vmatpush1.bf16.msra.mxu0 0
      %405 = vmatprep.subr.bf16.mxu0 0
      %406 = vmatpush1.bf16.msra.mxu0 %v340
      %407 = vmatprep.subr.bf16.mxu0 0
      %408 = vmatpush2.bf16.msra.mxu0 0
      %409 = vmatprep.subr.bf16.mxu0 0
      %410 = vmatpush2.bf16.msra.mxu0 0
      %411 = vmatprep.subr.bf16.mxu0 0
      %412 = vmatpush2.bf16.msra.mxu0 0
      %413 = vmatprep.subr.bf16.mxu0 0
      %414 = vmatpush2.bf16.msra.mxu0 0
      %415 = vmatprep.subr.bf16.mxu0 0
      %416 = vmatpush2.bf16.msra.mxu0 0
      %417 = vmatprep.subr.bf16.mxu0 0
      %418 = vmatpush2.bf16.msra.mxu0 0
      %419 = vmatprep.subr.bf16.mxu0 0
      %420 = vmatpush2.bf16.msra.mxu0 0
      %421 = vmatprep.subr.bf16.mxu0 0
      %422 = vmatpush2.bf16.msra.mxu0 0
      %423 = vmatprep.mubr.bf16.mxu0 0
      %424 = vmatmul.mubr.bf16.gmra.mxu0 %v346
      %v425 = vpop.f32.mrf.mxu0
      %v426 = vadd.f32 0.0, %v425
      %v427 = vpop.f32.mrf.mxu0
      %v428 = vpop.f32.mrf.mxu0
      %v429 = vadd.f32 0.0, %v428
      %v430 = vpop.f32.mrf.mxu0
      %431 = vdwg.mxu0
      %v434 = vunpack.c.l.b16 %v303
      %v435 = vunpack.c.l.b16 %v304
      %v436 = vpack.c.b16 %v435, %v434
      %437 = vrot.lane.b32.xlu0 %v325, 19
      %v438 = vpop.permute.xlu0 %437
      %439 = vrot.lane.b32.xlu0 %v326, 19
      %v440 = vpop.permute.xlu0 %439
      %441 = vrot.lane.b32.xlu0 %v327, 19
      %v442 = vpop.permute.xlu0 %441
      %443 = vrot.lane.b32.xlu0 %v328, 19
      %v444 = vpop.permute.xlu0 %443
      %vm445 = vcmask 154624
      %v446 = vsel %vm445, %v438, %v440
      %v447 = vsel %vm445, %v440, %v442
      %v448 = vsel %vm445, %v442, %v444
      %v453 = vsel %vm344, %v436, 0
      %455 = vmatprep.subr.bf16.mxu0 0
      %456 = vmatpush1.bf16.msra.mxu0 0
      %457 = vmatprep.subr.bf16.mxu0 0
      %458 = vmatpush1.bf16.msra.mxu0 0
      %459 = vmatprep.subr.bf16.mxu0 0
      %460 = vmatpush1.bf16.msra.mxu0 0
      %461 = vmatprep.subr.bf16.mxu0 0
      %462 = vmatpush1.bf16.msra.mxu0 0
      %463 = vmatprep.subr.bf16.mxu0 0
      %464 = vmatpush1.bf16.msra.mxu0 0
      %465 = vmatprep.subr.bf16.mxu0 0
      %466 = vmatpush1.bf16.msra.mxu0 0
      %467 = vmatprep.subr.bf16.mxu0 0
      %468 = vmatpush1.bf16.msra.mxu0 0
      %469 = vmatprep.subr.bf16.mxu0 %v447
      %470 = vmatpush1.bf16.msra.mxu0 %v446
      %471 = vmatprep.subr.bf16.mxu0 0
      %472 = vmatpush2.bf16.msra.mxu0 0
      %473 = vmatprep.subr.bf16.mxu0 0
      %474 = vmatpush2.bf16.msra.mxu0 0
      %475 = vmatprep.subr.bf16.mxu0 0
      %476 = vmatpush2.bf16.msra.mxu0 0
      %477 = vmatprep.subr.bf16.mxu0 0
      %478 = vmatpush2.bf16.msra.mxu0 0
      %479 = vmatprep.subr.bf16.mxu0 0
      %480 = vmatpush2.bf16.msra.mxu0 0
      %481 = vmatprep.subr.bf16.mxu0 0
      %482 = vmatpush2.bf16.msra.mxu0 0
      %483 = vmatprep.subr.bf16.mxu0 0
      %484 = vmatpush2.bf16.msra.mxu0 0
      %485 = vmatprep.subr.bf16.mxu0 0
      %486 = vmatpush2.bf16.msra.mxu0 0
      %487 = vmatprep.mubr.bf16.mxu0 0
      %488 = vmatmul.mubr.bf16.gmra.mxu0 %v453
      %v489 = vpop.f32.mrf.mxu0
      %v490 = vadd.f32 %v383, %v489
      %v491 = vpop.f32.mrf.mxu0
      %v492 = vadd.f32 %v385, %v491
      %v493 = vpop.f32.mrf.mxu0
      %v494 = vadd.f32 %v387, %v493
      %v495 = vpop.f32.mrf.mxu0
      %v496 = vadd.f32 %v389, %v495
      %497 = vdwg.mxu0
      %498 = vmatprep.subr.bf16.mxu0 0
      %499 = vmatpush1.bf16.msra.mxu0 0
      %500 = vmatprep.subr.bf16.mxu0 0
      %501 = vmatpush1.bf16.msra.mxu0 0
      %502 = vmatprep.subr.bf16.mxu0 0
      %503 = vmatpush1.bf16.msra.mxu0 0
      %504 = vmatprep.subr.bf16.mxu0 0
      %505 = vmatpush1.bf16.msra.mxu0 0
      %506 = vmatprep.subr.bf16.mxu0 0
      %507 = vmatpush1.bf16.msra.mxu0 0
      %508 = vmatprep.subr.bf16.mxu0 0
      %509 = vmatpush1.bf16.msra.mxu0 0
      %510 = vmatprep.subr.bf16.mxu0 0
      %511 = vmatpush1.bf16.msra.mxu0 0
      %512 = vmatprep.subr.bf16.mxu0 0
      %513 = vmatpush1.bf16.msra.mxu0 %v448
      %514 = vmatprep.subr.bf16.mxu0 0
      %515 = vmatpush2.bf16.msra.mxu0 0
      %516 = vmatprep.subr.bf16.mxu0 0
      %517 = vmatpush2.bf16.msra.mxu0 0
      %518 = vmatprep.subr.bf16.mxu0 0
      %519 = vmatpush2.bf16.msra.mxu0 0
      %520 = vmatprep.subr.bf16.mxu0 0
      %521 = vmatpush2.bf16.msra.mxu0 0
      %522 = vmatprep.subr.bf16.mxu0 0
      %523 = vmatpush2.bf16.msra.mxu0 0
      %524 = vmatprep.subr.bf16.mxu0 0
      %525 = vmatpush2.bf16.msra.mxu0 0
      %526 = vmatprep.subr.bf16.mxu0 0
      %527 = vmatpush2.bf16.msra.mxu0 0
      %528 = vmatprep.subr.bf16.mxu0 0
      %529 = vmatpush2.bf16.msra.mxu0 0
      %530 = vmatprep.mubr.bf16.mxu0 0
      %531 = vmatmul.mubr.bf16.gmra.mxu0 %v453
      %v532 = vpop.f32.mrf.mxu0
      %v533 = vadd.f32 %v426, %v532
      %v534 = vpop.f32.mrf.mxu0
      %v535 = vpop.f32.mrf.mxu0
      %v536 = vadd.f32 %v429, %v535
      %v537 = vpop.f32.mrf.mxu0
      %538 = vdwg.mxu0
      %s539 = scalar_lea.vmem %s3, 16
      %v540 = vld [vmem:[%s539] sm:$0xf]
      %v541 = vld [vmem:[%s539 + $0x4] sm:$0xf]
      %v544 = vunpack.c.l.b16 %v540
      %v545 = vunpack.c.l.b16 %v541
      %v546 = vpack.c.b16 %v545, %v544
      %547 = vrot.lane.b32.xlu0 %v325, 17
      %v548 = vpop.permute.xlu0 %547
      %549 = vrot.lane.b32.xlu0 %v326, 17
      %v550 = vpop.permute.xlu0 %549
      %551 = vrot.lane.b32.xlu0 %v327, 17
      %v552 = vpop.permute.xlu0 %551
      %553 = vrot.lane.b32.xlu0 %v328, 17
      %v554 = vpop.permute.xlu0 %553
      %vm555 = vcmask 138240
      %v556 = vsel %vm555, %v548, %v550
      %v557 = vsel %vm555, %v550, %v552
      %v558 = vsel %vm555, %v552, %v554
      %v563 = vsel %vm344, %v546, 0
      %565 = vmatprep.subr.bf16.mxu0 0
      %566 = vmatpush1.bf16.msra.mxu0 0
      %567 = vmatprep.subr.bf16.mxu0 0
      %568 = vmatpush1.bf16.msra.mxu0 0
      %569 = vmatprep.subr.bf16.mxu0 0
      %570 = vmatpush1.bf16.msra.mxu0 0
      %571 = vmatprep.subr.bf16.mxu0 0
      %572 = vmatpush1.bf16.msra.mxu0 0
      %573 = vmatprep.subr.bf16.mxu0 0
      %574 = vmatpush1.bf16.msra.mxu0 0
      %575 = vmatprep.subr.bf16.mxu0 0
      %576 = vmatpush1.bf16.msra.mxu0 0
      %577 = vmatprep.subr.bf16.mxu0 0
      %578 = vmatpush1.bf16.msra.mxu0 0
      %579 = vmatprep.subr.bf16.mxu0 %v557
      %580 = vmatpush1.bf16.msra.mxu0 %v556
      %581 = vmatprep.subr.bf16.mxu0 0
      %582 = vmatpush2.bf16.msra.mxu0 0
      %583 = vmatprep.subr.bf16.mxu0 0
      %584 = vmatpush2.bf16.msra.mxu0 0
      %585 = vmatprep.subr.bf16.mxu0 0
      %586 = vmatpush2.bf16.msra.mxu0 0
      %587 = vmatprep.subr.bf16.mxu0 0
      %588 = vmatpush2.bf16.msra.mxu0 0
      %589 = vmatprep.subr.bf16.mxu0 0
      %590 = vmatpush2.bf16.msra.mxu0 0
      %591 = vmatprep.subr.bf16.mxu0 0
      %592 = vmatpush2.bf16.msra.mxu0 0
      %593 = vmatprep.subr.bf16.mxu0 0
      %594 = vmatpush2.bf16.msra.mxu0 0
      %595 = vmatprep.subr.bf16.mxu0 0
      %596 = vmatpush2.bf16.msra.mxu0 0
      %597 = vmatprep.mubr.bf16.mxu0 0
      %598 = vmatmul.mubr.bf16.gmra.mxu0 %v563
      %v599 = vpop.f32.mrf.mxu0
      %v600 = vadd.f32 0.0, %v599
      %v601 = vpop.f32.mrf.mxu0
      %v602 = vadd.f32 0.0, %v601
      %v603 = vpop.f32.mrf.mxu0
      %v604 = vadd.f32 0.0, %v603
      %v605 = vpop.f32.mrf.mxu0
      %v606 = vadd.f32 0.0, %v605
      %607 = vdwg.mxu0
      %608 = vmatprep.subr.bf16.mxu0 0
      %609 = vmatpush1.bf16.msra.mxu0 0
      %610 = vmatprep.subr.bf16.mxu0 0
      %611 = vmatpush1.bf16.msra.mxu0 0
      %612 = vmatprep.subr.bf16.mxu0 0
      %613 = vmatpush1.bf16.msra.mxu0 0
      %614 = vmatprep.subr.bf16.mxu0 0
      %615 = vmatpush1.bf16.msra.mxu0 0
      %616 = vmatprep.subr.bf16.mxu0 0
      %617 = vmatpush1.bf16.msra.mxu0 0
      %618 = vmatprep.subr.bf16.mxu0 0
      %619 = vmatpush1.bf16.msra.mxu0 0
      %620 = vmatprep.subr.bf16.mxu0 0
      %621 = vmatpush1.bf16.msra.mxu0 0
      %622 = vmatprep.subr.bf16.mxu0 0
      %623 = vmatpush1.bf16.msra.mxu0 %v558
      %624 = vmatprep.subr.bf16.mxu0 0
      %625 = vmatpush2.bf16.msra.mxu0 0
      %626 = vmatprep.subr.bf16.mxu0 0
      %627 = vmatpush2.bf16.msra.mxu0 0
      %628 = vmatprep.subr.bf16.mxu0 0
      %629 = vmatpush2.bf16.msra.mxu0 0
      %630 = vmatprep.subr.bf16.mxu0 0
      %631 = vmatpush2.bf16.msra.mxu0 0
      %632 = vmatprep.subr.bf16.mxu0 0
      %633 = vmatpush2.bf16.msra.mxu0 0
      %634 = vmatprep.subr.bf16.mxu0 0
      %635 = vmatpush2.bf16.msra.mxu0 0
      %636 = vmatprep.subr.bf16.mxu0 0
      %637 = vmatpush2.bf16.msra.mxu0 0
      %638 = vmatprep.subr.bf16.mxu0 0
      %639 = vmatpush2.bf16.msra.mxu0 0
      %640 = vmatprep.mubr.bf16.mxu0 0
      %641 = vmatmul.mubr.bf16.gmra.mxu0 %v563
      %v642 = vpop.f32.mrf.mxu0
      %v643 = vadd.f32 0.0, %v642
      %v644 = vpop.f32.mrf.mxu0
      %v645 = vpop.f32.mrf.mxu0
      %v646 = vadd.f32 0.0, %v645
      %v647 = vpop.f32.mrf.mxu0
      %648 = vdwg.mxu0
      %v649 = vadd.f32 %v490, %v600
      %v650 = vadd.f32 %v492, %v602
      %v651 = vadd.f32 %v533, %v643
      %v652 = vadd.f32 %v494, %v604
      %v653 = vadd.f32 %v496, %v606
      %v654 = vadd.f32 %v536, %v646
      %s655 = scalar_lea.vmem %s3, 24
      %v656 = vld [vmem:[%s655] sm:$0xf]
      %v657 = vld [vmem:[%s655 + $0x4] sm:$0xf]
      %v660 = vunpack.c.l.b16 %v656
      %v661 = vunpack.c.l.b16 %v657
      %v662 = vpack.c.b16 %v661, %v660
      %663 = vrot.lane.b32.xlu0 %v325, 1
      %v664 = vpop.permute.xlu0 %663
      %665 = vrot.lane.b32.xlu0 %v326, 1
      %v666 = vpop.permute.xlu0 %665
      %667 = vrot.lane.b32.xlu0 %v327, 1
      %v668 = vpop.permute.xlu0 %667
      %669 = vrot.lane.b32.xlu0 %v328, 1
      %v670 = vpop.permute.xlu0 %669
      %vm671 = vcmask 7168
      %v672 = vsel %vm671, %v664, %v666
      %v673 = vsel %vm671, %v666, %v668
      %v674 = vsel %vm671, %v668, %v670
      %v679 = vsel %vm344, %v662, 0
      %681 = vmatprep.subr.bf16.mxu0 0
      %682 = vmatpush1.bf16.msra.mxu0 0
      %683 = vmatprep.subr.bf16.mxu0 0
      %684 = vmatpush1.bf16.msra.mxu0 0
      %685 = vmatprep.subr.bf16.mxu0 0
      %686 = vmatpush1.bf16.msra.mxu0 0
      %687 = vmatprep.subr.bf16.mxu0 0
      %688 = vmatpush1.bf16.msra.mxu0 0
      %689 = vmatprep.subr.bf16.mxu0 0
      %690 = vmatpush1.bf16.msra.mxu0 0
      %691 = vmatprep.subr.bf16.mxu0 0
      %692 = vmatpush1.bf16.msra.mxu0 0
      %693 = vmatprep.subr.bf16.mxu0 0
      %694 = vmatpush1.bf16.msra.mxu0 0
      %695 = vmatprep.subr.bf16.mxu0 %v673
      %696 = vmatpush1.bf16.msra.mxu0 %v672
      %697 = vmatprep.subr.bf16.mxu0 0
      %698 = vmatpush2.bf16.msra.mxu0 0
      %699 = vmatprep.subr.bf16.mxu0 0
      %700 = vmatpush2.bf16.msra.mxu0 0
      %701 = vmatprep.subr.bf16.mxu0 0
      %702 = vmatpush2.bf16.msra.mxu0 0
      %703 = vmatprep.subr.bf16.mxu0 0
      %704 = vmatpush2.bf16.msra.mxu0 0
      %705 = vmatprep.subr.bf16.mxu0 0
      %706 = vmatpush2.bf16.msra.mxu0 0
      %707 = vmatprep.subr.bf16.mxu0 0
      %708 = vmatpush2.bf16.msra.mxu0 0
      %709 = vmatprep.subr.bf16.mxu0 0
      %710 = vmatpush2.bf16.msra.mxu0 0
      %711 = vmatprep.subr.bf16.mxu0 0
      %712 = vmatpush2.bf16.msra.mxu0 0
      %713 = vmatprep.mubr.bf16.mxu0 0
      %714 = vmatmul.mubr.bf16.gmra.mxu0 %v679
      %v715 = vpop.f32.mrf.mxu0
      %v716 = vadd.f32 0.0, %v715
      %v717 = vpop.f32.mrf.mxu0
      %v718 = vadd.f32 0.0, %v717
      %v719 = vpop.f32.mrf.mxu0
      %v720 = vadd.f32 0.0, %v719
      %v721 = vpop.f32.mrf.mxu0
      %v722 = vadd.f32 0.0, %v721
      %723 = vdwg.mxu0
      %724 = vmatprep.subr.bf16.mxu0 0
      %725 = vmatpush1.bf16.msra.mxu0 0
      %726 = vmatprep.subr.bf16.mxu0 0
      %727 = vmatpush1.bf16.msra.mxu0 0
      %728 = vmatprep.subr.bf16.mxu0 0
      %729 = vmatpush1.bf16.msra.mxu0 0
      %730 = vmatprep.subr.bf16.mxu0 0
      %731 = vmatpush1.bf16.msra.mxu0 0
      %732 = vmatprep.subr.bf16.mxu0 0
      %733 = vmatpush1.bf16.msra.mxu0 0
      %734 = vmatprep.subr.bf16.mxu0 0
      %735 = vmatpush1.bf16.msra.mxu0 0
      %736 = vmatprep.subr.bf16.mxu0 0
      %737 = vmatpush1.bf16.msra.mxu0 0
      %738 = vmatprep.subr.bf16.mxu0 0
      %739 = vmatpush1.bf16.msra.mxu0 %v674
      %740 = vmatprep.subr.bf16.mxu0 0
      %741 = vmatpush2.bf16.msra.mxu0 0
      %742 = vmatprep.subr.bf16.mxu0 0
      %743 = vmatpush2.bf16.msra.mxu0 0
      %744 = vmatprep.subr.bf16.mxu0 0
      %745 = vmatpush2.bf16.msra.mxu0 0
      %746 = vmatprep.subr.bf16.mxu0 0
      %747 = vmatpush2.bf16.msra.mxu0 0
      %748 = vmatprep.subr.bf16.mxu0 0
      %749 = vmatpush2.bf16.msra.mxu0 0
      %750 = vmatprep.subr.bf16.mxu0 0
      %751 = vmatpush2.bf16.msra.mxu0 0
      %752 = vmatprep.subr.bf16.mxu0 0
      %753 = vmatpush2.bf16.msra.mxu0 0
      %754 = vmatprep.subr.bf16.mxu0 0
      %755 = vmatpush2.bf16.msra.mxu0 0
      %756 = vmatprep.mubr.bf16.mxu0 0
      %757 = vmatmul.mubr.bf16.gmra.mxu0 %v679
      %v758 = vpop.f32.mrf.mxu0
      %v759 = vadd.f32 0.0, %v758
      %v760 = vpop.f32.mrf.mxu0
      %v761 = vpop.f32.mrf.mxu0
      %v762 = vadd.f32 0.0, %v761
      %v763 = vpop.f32.mrf.mxu0
      %764 = vdwg.mxu0
      %v765 = vadd.f32 %v649, %v716
      %v766 = vadd.f32 %v650, %v718
      %v767 = vadd.f32 %v651, %v759
      %v768 = vadd.f32 %v652, %v720
      %v769 = vadd.f32 %v653, %v722
      %v770 = vadd.f32 %v654, %v762
      %v771 = vld [vmem:[#allocation2 + $0x4] sm:$0xff]
      %v772 = vld [vmem:[#allocation2 + $0xc] sm:$0xf]
      %v773 = vld [vmem:[#allocation2 + $0x14] sm:$0xff]
      %v774 = vld [vmem:[#allocation2 + $0x1c] sm:$0xf]
      %s775 = scalar_lea.vmem %s3, 32
      %v776 = vld [vmem:[%s775] sm:$0xf]
      %v777 = vld [vmem:[%s775 + $0x4] sm:$0xf]
      %v780 = vunpack.c.l.b16 %v776
      %v781 = vunpack.c.l.b16 %v777
      %v782 = vpack.c.b16 %v781, %v780
      %v787 = vunpack.c.l.b16 %v771
      %v788 = vunpack.c.h.b16 %v771
      %v789 = vunpack.c.l.b16 %v772
      %v790 = vunpack.c.l.b16 %v773
      %v791 = vunpack.c.h.b16 %v773
      %v792 = vunpack.c.l.b16 %v774
      %v793 = vpack.c.b16 %v790, %v787
      %v794 = vpack.c.b16 %v791, %v788
      %v795 = vpack.c.b16 %v792, %v789
      %v800 = vsel %vm344, %v782, 0
      %802 = vmatprep.subr.bf16.mxu0 0
      %803 = vmatpush1.bf16.msra.mxu0 0
      %804 = vmatprep.subr.bf16.mxu0 0
      %805 = vmatpush1.bf16.msra.mxu0 0
      %806 = vmatprep.subr.bf16.mxu0 0
      %807 = vmatpush1.bf16.msra.mxu0 0
      %808 = vmatprep.subr.bf16.mxu0 0
      %809 = vmatpush1.bf16.msra.mxu0 0
      %810 = vmatprep.subr.bf16.mxu0 0
      %811 = vmatpush1.bf16.msra.mxu0 0
      %812 = vmatprep.subr.bf16.mxu0 0
      %813 = vmatpush1.bf16.msra.mxu0 0
      %814 = vmatprep.subr.bf16.mxu0 0
      %815 = vmatpush1.bf16.msra.mxu0 0
      %816 = vmatprep.subr.bf16.mxu0 %v794
      %817 = vmatpush1.bf16.msra.mxu0 %v793
      %818 = vmatprep.subr.bf16.mxu0 0
      %819 = vmatpush2.bf16.msra.mxu0 0
      %820 = vmatprep.subr.bf16.mxu0 0
      %821 = vmatpush2.bf16.msra.mxu0 0
      %822 = vmatprep.subr.bf16.mxu0 0
      %823 = vmatpush2.bf16.msra.mxu0 0
      %824 = vmatprep.subr.bf16.mxu0 0
      %825 = vmatpush2.bf16.msra.mxu0 0
      %826 = vmatprep.subr.bf16.mxu0 0
      %827 = vmatpush2.bf16.msra.mxu0 0
      %828 = vmatprep.subr.bf16.mxu0 0
      %829 = vmatpush2.bf16.msra.mxu0 0
      %830 = vmatprep.subr.bf16.mxu0 0
      %831 = vmatpush2.bf16.msra.mxu0 0
      %832 = vmatprep.subr.bf16.mxu0 0
      %833 = vmatpush2.bf16.msra.mxu0 0
      %834 = vmatprep.mubr.bf16.mxu0 0
      %835 = vmatmul.mubr.bf16.gmra.mxu0 %v800
      %v836 = vpop.f32.mrf.mxu0
      %v837 = vadd.f32 0.0, %v836
      %v838 = vpop.f32.mrf.mxu0
      %v839 = vadd.f32 0.0, %v838
      %v840 = vpop.f32.mrf.mxu0
      %v841 = vadd.f32 0.0, %v840
      %v842 = vpop.f32.mrf.mxu0
      %v843 = vadd.f32 0.0, %v842
      %844 = vdwg.mxu0
      %845 = vmatprep.subr.bf16.mxu0 0
      %846 = vmatpush1.bf16.msra.mxu0 0
      %847 = vmatprep.subr.bf16.mxu0 0
      %848 = vmatpush1.bf16.msra.mxu0 0
      %849 = vmatprep.subr.bf16.mxu0 0
      %850 = vmatpush1.bf16.msra.mxu0 0
      %851 = vmatprep.subr.bf16.mxu0 0
      %852 = vmatpush1.bf16.msra.mxu0 0
      %853 = vmatprep.subr.bf16.mxu0 0
      %854 = vmatpush1.bf16.msra.mxu0 0
      %855 = vmatprep.subr.bf16.mxu0 0
      %856 = vmatpush1.bf16.msra.mxu0 0
      %857 = vmatprep.subr.bf16.mxu0 0
      %858 = vmatpush1.bf16.msra.mxu0 0
      %859 = vmatprep.subr.bf16.mxu0 0
      %860 = vmatpush1.bf16.msra.mxu0 %v795
      %861 = vmatprep.subr.bf16.mxu0 0
      %862 = vmatpush2.bf16.msra.mxu0 0
      %863 = vmatprep.subr.bf16.mxu0 0
      %864 = vmatpush2.bf16.msra.mxu0 0
      %865 = vmatprep.subr.bf16.mxu0 0
      %866 = vmatpush2.bf16.msra.mxu0 0
      %867 = vmatprep.subr.bf16.mxu0 0
      %868 = vmatpush2.bf16.msra.mxu0 0
      %869 = vmatprep.subr.bf16.mxu0 0
      %870 = vmatpush2.bf16.msra.mxu0 0
      %871 = vmatprep.subr.bf16.mxu0 0
      %872 = vmatpush2.bf16.msra.mxu0 0
      %873 = vmatprep.subr.bf16.mxu0 0
      %874 = vmatpush2.bf16.msra.mxu0 0
      %875 = vmatprep.subr.bf16.mxu0 0
      %876 = vmatpush2.bf16.msra.mxu0 0
      %877 = vmatprep.mubr.bf16.mxu0 0
      %878 = vmatmul.mubr.bf16.gmra.mxu0 %v800
      %v879 = vpop.f32.mrf.mxu0
      %v880 = vadd.f32 0.0, %v879
      %v881 = vpop.f32.mrf.mxu0
      %v882 = vpop.f32.mrf.mxu0
      %v883 = vadd.f32 0.0, %v882
      %v884 = vpop.f32.mrf.mxu0
      %885 = vdwg.mxu0
      %v886 = vadd.f32 %v765, %v837
      %v887 = vadd.f32 %v766, %v839
      %v888 = vadd.f32 %v767, %v880
      %v889 = vadd.f32 %v768, %v841
      %v890 = vadd.f32 %v769, %v843
      %v891 = vadd.f32 %v770, %v883
      %s892 = scalar_lea.vmem %s3, 40
      %v893 = vld [vmem:[%s892] sm:$0xf]
      %v894 = vld [vmem:[%s892 + $0x4] sm:$0xf]
      %v897 = vunpack.c.l.b16 %v893
      %v898 = vunpack.c.l.b16 %v894
      %v899 = vpack.c.b16 %v898, %v897
      %900 = vrot.lane.b32.xlu0 %v793, 127
      %v901 = vpop.permute.xlu0 %900
      %902 = vrot.lane.b32.xlu0 %v794, 127
      %v903 = vpop.permute.xlu0 %902
      %904 = vrot.lane.b32.xlu0 %v795, 127
      %v905 = vpop.permute.xlu0 %904
      %vm906 = vcmask 1039360
      %v907 = vsel %vm906, %v901, %v903
      %v908 = vsel %vm906, %v903, %v905
      %v913 = vsel %vm344, %v899, 0
      %915 = vmatprep.subr.bf16.mxu0 0
      %916 = vmatpush1.bf16.msra.mxu0 0
      %917 = vmatprep.subr.bf16.mxu0 0
      %918 = vmatpush1.bf16.msra.mxu0 0
      %919 = vmatprep.subr.bf16.mxu0 0
      %920 = vmatpush1.bf16.msra.mxu0 0
      %921 = vmatprep.subr.bf16.mxu0 0
      %922 = vmatpush1.bf16.msra.mxu0 0
      %923 = vmatprep.subr.bf16.mxu0 0
      %924 = vmatpush1.bf16.msra.mxu0 0
      %925 = vmatprep.subr.bf16.mxu0 0
      %926 = vmatpush1.bf16.msra.mxu0 0
      %927 = vmatprep.subr.bf16.mxu0 0
      %928 = vmatpush1.bf16.msra.mxu0 0
      %929 = vmatprep.subr.bf16.mxu0 %v908
      %930 = vmatpush1.bf16.msra.mxu0 %v907
      %931 = vmatprep.subr.bf16.mxu0 0
      %932 = vmatpush2.bf16.msra.mxu0 0
      %933 = vmatprep.subr.bf16.mxu0 0
      %934 = vmatpush2.bf16.msra.mxu0 0
      %935 = vmatprep.subr.bf16.mxu0 0
      %936 = vmatpush2.bf16.msra.mxu0 0
      %937 = vmatprep.subr.bf16.mxu0 0
      %938 = vmatpush2.bf16.msra.mxu0 0
      %939 = vmatprep.subr.bf16.mxu0 0
      %940 = vmatpush2.bf16.msra.mxu0 0
      %941 = vmatprep.subr.bf16.mxu0 0
      %942 = vmatpush2.bf16.msra.mxu0 0
      %943 = vmatprep.subr.bf16.mxu0 0
      %944 = vmatpush2.bf16.msra.mxu0 0
      %945 = vmatprep.subr.bf16.mxu0 0
      %946 = vmatpush2.bf16.msra.mxu0 0
      %947 = vmatprep.mubr.bf16.mxu0 0
      %948 = vmatmul.mubr.bf16.gmra.mxu0 %v913
      %v949 = vpop.f32.mrf.mxu0
      %v950 = vadd.f32 0.0, %v949
      %v951 = vpop.f32.mrf.mxu0
      %v952 = vadd.f32 0.0, %v951
      %v953 = vpop.f32.mrf.mxu0
      %v954 = vadd.f32 0.0, %v953
      %v955 = vpop.f32.mrf.mxu0
      %v956 = vadd.f32 0.0, %v955
      %957 = vdwg.mxu0
      %958 = vmatprep.subr.bf16.mxu0 0
      %959 = vmatpush1.bf16.msra.mxu0 0
      %960 = vmatprep.subr.bf16.mxu0 0
      %961 = vmatpush1.bf16.msra.mxu0 0
      %962 = vmatprep.subr.bf16.mxu0 0
      %963 = vmatpush1.bf16.msra.mxu0 0
      %964 = vmatprep.subr.bf16.mxu0 0
      %965 = vmatpush1.bf16.msra.mxu0 0
      %966 = vmatprep.subr.bf16.mxu0 0
      %967 = vmatpush1.bf16.msra.mxu0 0
      %968 = vmatprep.subr.bf16.mxu0 0
      %969 = vmatpush1.bf16.msra.mxu0 0
      %970 = vmatprep.subr.bf16.mxu0 0
      %971 = vmatpush1.bf16.msra.mxu0 0
      %972 = vmatprep.subr.bf16.mxu0 0
      %973 = vmatpush1.bf16.msra.mxu0 %v905
      %974 = vmatprep.subr.bf16.mxu0 0
      %975 = vmatpush2.bf16.msra.mxu0 0
      %976 = vmatprep.subr.bf16.mxu0 0
      %977 = vmatpush2.bf16.msra.mxu0 0
      %978 = vmatprep.subr.bf16.mxu0 0
      %979 = vmatpush2.bf16.msra.mxu0 0
      %980 = vmatprep.subr.bf16.mxu0 0
      %981 = vmatpush2.bf16.msra.mxu0 0
      %982 = vmatprep.subr.bf16.mxu0 0
      %983 = vmatpush2.bf16.msra.mxu0 0
      %984 = vmatprep.subr.bf16.mxu0 0
      %985 = vmatpush2.bf16.msra.mxu0 0
      %986 = vmatprep.subr.bf16.mxu0 0
      %987 = vmatpush2.bf16.msra.mxu0 0
      %988 = vmatprep.subr.bf16.mxu0 0
      %989 = vmatpush2.bf16.msra.mxu0 0
      %990 = vmatprep.mubr.bf16.mxu0 0
      %991 = vmatmul.mubr.bf16.gmra.mxu0 %v913
      %v992 = vpop.f32.mrf.mxu0
      %v993 = vadd.f32 0.0, %v992
      %v994 = vpop.f32.mrf.mxu0
      %v995 = vpop.f32.mrf.mxu0
      %v996 = vadd.f32 0.0, %v995
      %v997 = vpop.f32.mrf.mxu0
      %998 = vdwg.mxu0
      %v999 = vadd.f32 %v886, %v950
      %v1000 = vadd.f32 %v887, %v952
      %v1001 = vadd.f32 %v888, %v993
      %v1002 = vadd.f32 %v889, %v954
      %v1003 = vadd.f32 %v890, %v956
      %v1004 = vadd.f32 %v891, %v996
      %s1005 = scalar_lea.vmem %s3, 48
      %v1006 = vld [vmem:[%s1005] sm:$0xf]
      %v1007 = vld [vmem:[%s1005 + $0x4] sm:$0xf]
      %v1010 = vunpack.c.l.b16 %v1006
      %v1011 = vunpack.c.l.b16 %v1007
      %v1012 = vpack.c.b16 %v1011, %v1010
      %1013 = vrot.lane.b32.xlu0 %v793, 111
      %v1014 = vpop.permute.xlu0 %1013
      %1015 = vrot.lane.b32.xlu0 %v794, 111
      %v1016 = vpop.permute.xlu0 %1015
      %1017 = vrot.lane.b32.xlu0 %v795, 111
      %v1018 = vpop.permute.xlu0 %1017
      %vm1019 = vcmask 908288
      %v1020 = vsel %vm1019, %v1014, %v1016
      %v1021 = vsel %vm1019, %v1016, %v1018
      %v1026 = vsel %vm344, %v1012, 0
      %1028 = vmatprep.subr.bf16.mxu0 0
      %1029 = vmatpush1.bf16.msra.mxu0 0
      %1030 = vmatprep.subr.bf16.mxu0 0
      %1031 = vmatpush1.bf16.msra.mxu0 0
      %1032 = vmatprep.subr.bf16.mxu0 0
      %1033 = vmatpush1.bf16.msra.mxu0 0
      %1034 = vmatprep.subr.bf16.mxu0 0
      %1035 = vmatpush1.bf16.msra.mxu0 0
      %1036 = vmatprep.subr.bf16.mxu0 0
      %1037 = vmatpush1.bf16.msra.mxu0 0
      %1038 = vmatprep.subr.bf16.mxu0 0
      %1039 = vmatpush1.bf16.msra.mxu0 0
      %1040 = vmatprep.subr.bf16.mxu0 0
      %1041 = vmatpush1.bf16.msra.mxu0 0
      %1042 = vmatprep.subr.bf16.mxu0 %v1021
      %1043 = vmatpush1.bf16.msra.mxu0 %v1020
      %1044 = vmatprep.subr.bf16.mxu0 0
      %1045 = vmatpush2.bf16.msra.mxu0 0
      %1046 = vmatprep.subr.bf16.mxu0 0
      %1047 = vmatpush2.bf16.msra.mxu0 0
      %1048 = vmatprep.subr.bf16.mxu0 0
      %1049 = vmatpush2.bf16.msra.mxu0 0
      %1050 = vmatprep.subr.bf16.mxu0 0
      %1051 = vmatpush2.bf16.msra.mxu0 0
      %1052 = vmatprep.subr.bf16.mxu0 0
      %1053 = vmatpush2.bf16.msra.mxu0 0
      %1054 = vmatprep.subr.bf16.mxu0 0
      %1055 = vmatpush2.bf16.msra.mxu0 0
      %1056 = vmatprep.subr.bf16.mxu0 0
      %1057 = vmatpush2.bf16.msra.mxu0 0
      %1058 = vmatprep.subr.bf16.mxu0 0
      %1059 = vmatpush2.bf16.msra.mxu0 0
      %1060 = vmatprep.mubr.bf16.mxu0 0
      %1061 = vmatmul.mubr.bf16.gmra.mxu0 %v1026
      %v1062 = vpop.f32.mrf.mxu0
      %v1063 = vadd.f32 0.0, %v1062
      %v1064 = vpop.f32.mrf.mxu0
      %v1065 = vadd.f32 0.0, %v1064
      %v1066 = vpop.f32.mrf.mxu0
      %v1067 = vadd.f32 0.0, %v1066
      %v1068 = vpop.f32.mrf.mxu0
      %v1069 = vadd.f32 0.0, %v1068
      %1070 = vdwg.mxu0
      %1071 = vmatprep.subr.bf16.mxu0 0
      %1072 = vmatpush1.bf16.msra.mxu0 0
      %1073 = vmatprep.subr.bf16.mxu0 0
      %1074 = vmatpush1.bf16.msra.mxu0 0
      %1075 = vmatprep.subr.bf16.mxu0 0
      %1076 = vmatpush1.bf16.msra.mxu0 0
      %1077 = vmatprep.subr.bf16.mxu0 0
      %1078 = vmatpush1.bf16.msra.mxu0 0
      %1079 = vmatprep.subr.bf16.mxu0 0
      %1080 = vmatpush1.bf16.msra.mxu0 0
      %1081 = vmatprep.subr.bf16.mxu0 0
      %1082 = vmatpush1.bf16.msra.mxu0 0
      %1083 = vmatprep.subr.bf16.mxu0 0
      %1084 = vmatpush1.bf16.msra.mxu0 0
      %1085 = vmatprep.subr.bf16.mxu0 0
      %1086 = vmatpush1.bf16.msra.mxu0 %v1018
      %1087 = vmatprep.subr.bf16.mxu0 0
      %1088 = vmatpush2.bf16.msra.mxu0 0
      %1089 = vmatprep.subr.bf16.mxu0 0
      %1090 = vmatpush2.bf16.msra.mxu0 0
      %1091 = vmatprep.subr.bf16.mxu0 0
      %1092 = vmatpush2.bf16.msra.mxu0 0
      %1093 = vmatprep.subr.bf16.mxu0 0
      %1094 = vmatpush2.bf16.msra.mxu0 0
      %1095 = vmatprep.subr.bf16.mxu0 0
      %1096 = vmatpush2.bf16.msra.mxu0 0
      %1097 = vmatprep.subr.bf16.mxu0 0
      %1098 = vmatpush2.bf16.msra.mxu0 0
      %1099 = vmatprep.subr.bf16.mxu0 0
      %1100 = vmatpush2.bf16.msra.mxu0 0
      %1101 = vmatprep.subr.bf16.mxu0 0
      %1102 = vmatpush2.bf16.msra.mxu0 0
      %1103 = vmatprep.mubr.bf16.mxu0 0
      %1104 = vmatmul.mubr.bf16.gmra.mxu0 %v1026
      %v1105 = vpop.f32.mrf.mxu0
      %v1106 = vadd.f32 0.0, %v1105
      %v1107 = vpop.f32.mrf.mxu0
      %v1108 = vpop.f32.mrf.mxu0
      %v1109 = vadd.f32 0.0, %v1108
      %v1110 = vpop.f32.mrf.mxu0
      %1111 = vdwg.mxu0
      %v1112 = vadd.f32 %v999, %v1063
      %v1113 = vadd.f32 %v1000, %v1065
      %v1114 = vadd.f32 %v1001, %v1106
      %v1115 = vadd.f32 %v1002, %v1067
      %v1116 = vadd.f32 %v1003, %v1069
      %v1117 = vadd.f32 %v1004, %v1109
      %s1118 = scalar_lea.vmem %s3, 56
      %v1119 = vld [vmem:[%s1118] sm:$0xf]
      %v1120 = vld [vmem:[%s1118 + $0x4] sm:$0xf]
      %v1123 = vunpack.c.l.b16 %v1119
      %v1124 = vunpack.c.l.b16 %v1120
      %v1125 = vpack.c.b16 %v1124, %v1123
      %1126 = vrot.lane.b32.xlu0 %v793, 110
      %v1127 = vpop.permute.xlu0 %1126
      %1128 = vrot.lane.b32.xlu0 %v794, 110
      %v1129 = vpop.permute.xlu0 %1128
      %1130 = vrot.lane.b32.xlu0 %v795, 110
      %v1131 = vpop.permute.xlu0 %1130
      %vm1132 = vcmask 900096
      %v1133 = vsel %vm1132, %v1127, %v1129
      %v1134 = vsel %vm1132, %v1129, %v1131
      %v1139 = vsel %vm344, %v1125, 0
      %1141 = vmatprep.subr.bf16.mxu0 0
      %1142 = vmatpush1.bf16.msra.mxu0 0
      %1143 = vmatprep.subr.bf16.mxu0 0
      %1144 = vmatpush1.bf16.msra.mxu0 0
      %1145 = vmatprep.subr.bf16.mxu0 0
      %1146 = vmatpush1.bf16.msra.mxu0 0
      %1147 = vmatprep.subr.bf16.mxu0 0
      %1148 = vmatpush1.bf16.msra.mxu0 0
      %1149 = vmatprep.subr.bf16.mxu0 0
      %1150 = vmatpush1.bf16.msra.mxu0 0
      %1151 = vmatprep.subr.bf16.mxu0 0
      %1152 = vmatpush1.bf16.msra.mxu0 0
      %1153 = vmatprep.subr.bf16.mxu0 0
      %1154 = vmatpush1.bf16.msra.mxu0 0
      %1155 = vmatprep.subr.bf16.mxu0 %v1134
      %1156 = vmatpush1.bf16.msra.mxu0 %v1133
      %1157 = vmatprep.subr.bf16.mxu0 0
      %1158 = vmatpush2.bf16.msra.mxu0 0
      %1159 = vmatprep.subr.bf16.mxu0 0
      %1160 = vmatpush2.bf16.msra.mxu0 0
      %1161 = vmatprep.subr.bf16.mxu0 0
      %1162 = vmatpush2.bf16.msra.mxu0 0
      %1163 = vmatprep.subr.bf16.mxu0 0
      %1164 = vmatpush2.bf16.msra.mxu0 0
      %1165 = vmatprep.subr.bf16.mxu0 0
      %1166 = vmatpush2.bf16.msra.mxu0 0
      %1167 = vmatprep.subr.bf16.mxu0 0
      %1168 = vmatpush2.bf16.msra.mxu0 0
      %1169 = vmatprep.subr.bf16.mxu0 0
      %1170 = vmatpush2.bf16.msra.mxu0 0
      %1171 = vmatprep.subr.bf16.mxu0 0
      %1172 = vmatpush2.bf16.msra.mxu0 0
      %1173 = vmatprep.mubr.bf16.mxu0 0
      %1174 = vmatmul.mubr.bf16.gmra.mxu0 %v1139
      %v1175 = vpop.f32.mrf.mxu0
      %v1176 = vadd.f32 0.0, %v1175
      %v1177 = vpop.f32.mrf.mxu0
      %v1178 = vadd.f32 0.0, %v1177
      %v1179 = vpop.f32.mrf.mxu0
      %v1180 = vadd.f32 0.0, %v1179
      %v1181 = vpop.f32.mrf.mxu0
      %v1182 = vadd.f32 0.0, %v1181
      %1183 = vdwg.mxu0
      %1184 = vmatprep.subr.bf16.mxu0 0
      %1185 = vmatpush1.bf16.msra.mxu0 0
      %1186 = vmatprep.subr.bf16.mxu0 0
      %1187 = vmatpush1.bf16.msra.mxu0 0
      %1188 = vmatprep.subr.bf16.mxu0 0
      %1189 = vmatpush1.bf16.msra.mxu0 0
      %1190 = vmatprep.subr.bf16.mxu0 0
      %1191 = vmatpush1.bf16.msra.mxu0 0
      %1192 = vmatprep.subr.bf16.mxu0 0
      %1193 = vmatpush1.bf16.msra.mxu0 0
      %1194 = vmatprep.subr.bf16.mxu0 0
      %1195 = vmatpush1.bf16.msra.mxu0 0
      %1196 = vmatprep.subr.bf16.mxu0 0
      %1197 = vmatpush1.bf16.msra.mxu0 0
      %1198 = vmatprep.subr.bf16.mxu0 0
      %1199 = vmatpush1.bf16.msra.mxu0 %v1131
      %1200 = vmatprep.subr.bf16.mxu0 0
      %1201 = vmatpush2.bf16.msra.mxu0 0
      %1202 = vmatprep.subr.bf16.mxu0 0
      %1203 = vmatpush2.bf16.msra.mxu0 0
      %1204 = vmatprep.subr.bf16.mxu0 0
      %1205 = vmatpush2.bf16.msra.mxu0 0
      %1206 = vmatprep.subr.bf16.mxu0 0
      %1207 = vmatpush2.bf16.msra.mxu0 0
      %1208 = vmatprep.subr.bf16.mxu0 0
      %1209 = vmatpush2.bf16.msra.mxu0 0
      %1210 = vmatprep.subr.bf16.mxu0 0
      %1211 = vmatpush2.bf16.msra.mxu0 0
      %1212 = vmatprep.subr.bf16.mxu0 0
      %1213 = vmatpush2.bf16.msra.mxu0 0
      %1214 = vmatprep.subr.bf16.mxu0 0
      %1215 = vmatpush2.bf16.msra.mxu0 0
      %1216 = vmatprep.mubr.bf16.mxu0 0
      %1217 = vmatmul.mubr.bf16.gmra.mxu0 %v1139
      %v1218 = vpop.f32.mrf.mxu0
      %v1219 = vadd.f32 0.0, %v1218
      %v1220 = vpop.f32.mrf.mxu0
      %v1221 = vpop.f32.mrf.mxu0
      %v1222 = vadd.f32 0.0, %v1221
      %v1223 = vpop.f32.mrf.mxu0
      %1224 = vdwg.mxu0
      %v1225 = vadd.f32 %v1112, %v1176
      %v1226 = vadd.f32 %v1113, %v1178
      %v1227 = vadd.f32 %v1114, %v1219
      %v1228 = vadd.f32 %v1115, %v1180
      %v1229 = vadd.f32 %v1116, %v1182
      %v1230 = vadd.f32 %v1117, %v1222
      %s1231 = scalar_lea.vmem %s3, 64
      %v1232 = vld [vmem:[%s1231] sm:$0xf]
      %v1233 = vld [vmem:[%s1231 + $0x4] sm:$0xf]
      %v1236 = vunpack.c.l.b16 %v1232
      %v1237 = vunpack.c.l.b16 %v1233
      %v1238 = vpack.c.b16 %v1237, %v1236
      %1239 = vrot.lane.b32.xlu0 %v793, 109
      %v1240 = vpop.permute.xlu0 %1239
      %1241 = vrot.lane.b32.xlu0 %v794, 109
      %v1242 = vpop.permute.xlu0 %1241
      %1243 = vrot.lane.b32.xlu0 %v795, 109
      %v1244 = vpop.permute.xlu0 %1243
      %vm1245 = vcmask 891904
      %v1246 = vsel %vm1245, %v1240, %v1242
      %v1247 = vsel %vm1245, %v1242, %v1244
      %v1252 = vsel %vm344, %v1238, 0
      %1254 = vmatprep.subr.bf16.mxu0 0
      %1255 = vmatpush1.bf16.msra.mxu0 0
      %1256 = vmatprep.subr.bf16.mxu0 0
      %1257 = vmatpush1.bf16.msra.mxu0 0
      %1258 = vmatprep.subr.bf16.mxu0 0
      %1259 = vmatpush1.bf16.msra.mxu0 0
      %1260 = vmatprep.subr.bf16.mxu0 0
      %1261 = vmatpush1.bf16.msra.mxu0 0
      %1262 = vmatprep.subr.bf16.mxu0 0
      %1263 = vmatpush1.bf16.msra.mxu0 0
      %1264 = vmatprep.subr.bf16.mxu0 0
      %1265 = vmatpush1.bf16.msra.mxu0 0
      %1266 = vmatprep.subr.bf16.mxu0 0
      %1267 = vmatpush1.bf16.msra.mxu0 0
      %1268 = vmatprep.subr.bf16.mxu0 %v1247
      %1269 = vmatpush1.bf16.msra.mxu0 %v1246
      %1270 = vmatprep.subr.bf16.mxu0 0
      %1271 = vmatpush2.bf16.msra.mxu0 0
      %1272 = vmatprep.subr.bf16.mxu0 0
      %1273 = vmatpush2.bf16.msra.mxu0 0
      %1274 = vmatprep.subr.bf16.mxu0 0
      %1275 = vmatpush2.bf16.msra.mxu0 0
      %1276 = vmatprep.subr.bf16.mxu0 0
      %1277 = vmatpush2.bf16.msra.mxu0 0
      %1278 = vmatprep.subr.bf16.mxu0 0
      %1279 = vmatpush2.bf16.msra.mxu0 0
      %1280 = vmatprep.subr.bf16.mxu0 0
      %1281 = vmatpush2.bf16.msra.mxu0 0
      %1282 = vmatprep.subr.bf16.mxu0 0
      %1283 = vmatpush2.bf16.msra.mxu0 0
      %1284 = vmatprep.subr.bf16.mxu0 0
      %1285 = vmatpush2.bf16.msra.mxu0 0
      %1286 = vmatprep.mubr.bf16.mxu0 0
      %1287 = vmatmul.mubr.bf16.gmra.mxu0 %v1252
      %v1288 = vpop.f32.mrf.mxu0
      %v1289 = vadd.f32 0.0, %v1288
      %v1290 = vpop.f32.mrf.mxu0
      %v1291 = vadd.f32 0.0, %v1290
      %v1292 = vpop.f32.mrf.mxu0
      %v1293 = vadd.f32 0.0, %v1292
      %v1294 = vpop.f32.mrf.mxu0
      %v1295 = vadd.f32 0.0, %v1294
      %1296 = vdwg.mxu0
      %1297 = vmatprep.subr.bf16.mxu0 0
      %1298 = vmatpush1.bf16.msra.mxu0 0
      %1299 = vmatprep.subr.bf16.mxu0 0
      %1300 = vmatpush1.bf16.msra.mxu0 0
      %1301 = vmatprep.subr.bf16.mxu0 0
      %1302 = vmatpush1.bf16.msra.mxu0 0
      %1303 = vmatprep.subr.bf16.mxu0 0
      %1304 = vmatpush1.bf16.msra.mxu0 0
      %1305 = vmatprep.subr.bf16.mxu0 0
      %1306 = vmatpush1.bf16.msra.mxu0 0
      %1307 = vmatprep.subr.bf16.mxu0 0
      %1308 = vmatpush1.bf16.msra.mxu0 0
      %1309 = vmatprep.subr.bf16.mxu0 0
      %1310 = vmatpush1.bf16.msra.mxu0 0
      %1311 = vmatprep.subr.bf16.mxu0 0
      %1312 = vmatpush1.bf16.msra.mxu0 %v1244
      %1313 = vmatprep.subr.bf16.mxu0 0
      %1314 = vmatpush2.bf16.msra.mxu0 0
      %1315 = vmatprep.subr.bf16.mxu0 0
      %1316 = vmatpush2.bf16.msra.mxu0 0
      %1317 = vmatprep.subr.bf16.mxu0 0
      %1318 = vmatpush2.bf16.msra.mxu0 0
      %1319 = vmatprep.subr.bf16.mxu0 0
      %1320 = vmatpush2.bf16.msra.mxu0 0
      %1321 = vmatprep.subr.bf16.mxu0 0
      %1322 = vmatpush2.bf16.msra.mxu0 0
      %1323 = vmatprep.subr.bf16.mxu0 0
      %1324 = vmatpush2.bf16.msra.mxu0 0
      %1325 = vmatprep.subr.bf16.mxu0 0
      %1326 = vmatpush2.bf16.msra.mxu0 0
      %1327 = vmatprep.subr.bf16.mxu0 0
      %1328 = vmatpush2.bf16.msra.mxu0 0
      %1329 = vmatprep.mubr.bf16.mxu0 0
      %1330 = vmatmul.mubr.bf16.gmra.mxu0 %v1252
      %v1331 = vpop.f32.mrf.mxu0
      %v1332 = vadd.f32 0.0, %v1331
      %v1333 = vpop.f32.mrf.mxu0
      %v1334 = vpop.f32.mrf.mxu0
      %v1335 = vadd.f32 0.0, %v1334
      %v1336 = vpop.f32.mrf.mxu0
      %1337 = vdwg.mxu0
      %v1338 = vadd.f32 %v1225, %v1289
      %v1339 = vadd.f32 %v1226, %v1291
      %v1340 = vadd.f32 %v1227, %v1332
      %v1341 = vadd.f32 %v1228, %v1293
      %v1342 = vadd.f32 %v1229, %v1295
      %v1343 = vadd.f32 %v1230, %v1335
      %v1344 = vld [vmem:[%s4] sm:$0xff]
      %v1345 = vld [vmem:[%s4 + $0x8] sm:$0xff]
      %1347 = vset.pattern.permute.xlu0 0
      %1348 = vperm.xlu0 %1347, %v1344
      %v1349 = vpop.permute.xlu0 %1348
      %1352 = vset.pattern.permute.xlu0 0
      %1353 = vperm.xlu0 %1352, %v1345
      %v1354 = vpop.permute.xlu0 %1353
      %v1356 = vadd.f32 %v1338, %v1349
      %v1357 = vadd.f32 %v1339, %v1349
      %v1358 = vadd.f32 %v1340, %v1349
      %v1359 = vadd.f32 %v1341, %v1354
      %v1360 = vadd.f32 %v1342, %v1354
      %v1361 = vadd.f32 %v1343, %v1354
      %vm1362 = vcmp.ge.f32.partialorder %v1356, 0.0
      %vm1363 = vcmp.ge.f32.partialorder %v1357, 0.0
      %vm1364 = vcmp.ge.f32.partialorder %v1358, 0.0
      %vm1365 = vcmp.ge.f32.partialorder %v1359, 0.0
      %vm1366 = vcmp.ge.f32.partialorder %v1360, 0.0
      %vm1367 = vcmp.ge.f32.partialorder %v1361, 0.0
      %v1368 = vmul.f32 %v1356, 0.1
      %v1369 = vmul.f32 %v1357, 0.1
      %v1370 = vmul.f32 %v1358, 0.1
      %v1371 = vmul.f32 %v1359, 0.1
      %v1372 = vmul.f32 %v1360, 0.1
      %v1373 = vmul.f32 %v1361, 0.1
      %v1374 = vsel %vm1362, %v1356, %v1368
      %v1375 = vsel %vm1363, %v1357, %v1369
      %v1376 = vsel %vm1364, %v1358, %v1370
      %v1377 = vsel %vm1365, %v1359, %v1371
      %v1378 = vsel %vm1366, %v1360, %v1372
      %v1379 = vsel %vm1367, %v1361, %v1373
      %v1381 = vlaneseq
      %v1382 = vshrl.u32 %v1381, 7
      %v1383 = vsub.s32 0, %v1382
      %v1384 = vrot.slane %v298, %v1383
      %v1385 = vlaneseq
      %v1386 = vshrl.u32 %v1385, 7
      %v1387 = vsub.s32 1, %v1386
      %v1388 = vrot.slane %v298, %v1387
      %v1389 = vlaneseq
      %v1390 = vshrl.u32 %v1389, 7
      %v1391 = vsub.s32 2, %v1390
      %v1392 = vrot.slane %v298, %v1391
      %v1396 = vmul.f32 %v1374, %v1384
      %v1397 = vmul.f32 %v1375, %v1388
      %v1398 = vmul.f32 %v1376, %v1392
      %v1399 = vmul.f32 %v1377, %v1384
      %v1400 = vmul.f32 %v1378, %v1388
      %v1401 = vmul.f32 %v1379, %v1392
      %1402 = vst [vmem:[%s244] sm:$0xff] 0.0
      %1403 = vst [vmem:[%s244 + $0x20] sm:$0xff] 0.0
      %1404 = vst [vmem:[%s244 + $0x8] sm:$0xff] %v1396
      %1405 = vst [vmem:[%s244 + $0x10] sm:$0xff] %v1397
      %vm1406 = vcmask 556032
      %1407 = vst.msk [vmem:[%s244 + $0x18] sm:$0xff] %vm1406, %v1398
      %1408 = vst [vmem:[%s244 + $0x28] sm:$0xff] %v1399
      %1409 = vst [vmem:[%s244 + $0x30] sm:$0xff] %v1400
      %1410 = vst.msk [vmem:[%s244 + $0x38] sm:$0xff] %vm1406, %v1401
      %vm1411 = vcmask 1048096
      %1412 = vst.msk [vmem:[%s244 + $0x18] sm:$0xff] %vm1411, 0.0
      %1413 = vst.msk [vmem:[%s244 + $0x38] sm:$0xff] %vm1411, 0.0
      %p1414 = scmp.lt.s32.totalorder %s16, 1
      %s1415 = scalar_select %p1414, %s16, 1
      %s1416 = smul.addr %s1415, 8
      %s1417 = smul.addr %s1416, 8
      %s1418 = scalar_lea.vmem %s5, %s1417
      // Predicated region
      $region41: #{rrdbnet_forward.8} parent=39 // pred_check
        %p1419 = pneg %p149
      $region42: #{rrdbnet_forward.8} parent=39 // pred_check_branch
        %1421 = sbr.rel (%p1419) target = $region44
      $region43: #{rrdbnet_forward.8} parent=39 // pred_region
        _
      $region44: #{rrdbnet_forward.8} parent=39 // pred_fallthru
        _
    $region40: #{rrdbnet_forward.8} parent=5 // pred_fallthru
      _
    %p1422 = scmp.le.s32.totalorder 2, %s11
    // Predicated region
    $region45: #{rrdbnet_forward.8} parent=5 // pred_check
      %p1423 = pneg %p1422
    $region46: #{rrdbnet_forward.8} parent=5 // pred_check_branch
      %1425 = sbr.rel (%p1423) target = $region48
    $region47: #{rrdbnet_forward.8} parent=5 // pred_region
      %s1426 = ssub.s32 %s11, 2
      // Predicated region
      $region49: #{rrdbnet_forward.8} parent=47 // pred_check
        %p1427 = pneg %p155
      $region50: #{rrdbnet_forward.8} parent=47 // pred_check_branch
        %1429 = sbr.rel (%p1427) target = $region52
      $region51: #{rrdbnet_forward.8} parent=47 // pred_region
        %p1430 = scmp.lt.s32.totalorder %s17, 1
        %s1431 = scalar_select %p1430, %s17, 1
        %s1432 = smul.addr %s1431, 8
        %s1433 = smul.addr %s1432, 8
        %s1434 = scalar_lea.vmem %s5, %s1433
      $region52: #{rrdbnet_forward.8} parent=47 // pred_fallthru
        _
    $region48: #{rrdbnet_forward.8} parent=5 // pred_fallthru
      _
  $region6: #{rrdbnet_forward.8} parent=0 // loop_footer
    %s15 = sadd.s32 1, %s11
  $region7: #{rrdbnet_forward.8} parent=0 // loop_footer_branch
    %10 = sbr.rel target = $region3
  $region8: #{rrdbnet_forward.8} parent=0 // loop_exit
    _

// kernel: rrdbnet_forward.6
$region0: #{rrdbnet_forward.6}
  #allocation0 [shape = 'u32[]', space=smem, size = 0x4, offset = 0x4, fixed_abs, tag = 'smem constant byte address 0x4 - core index']
  #allocation1 [shape = 'u32[144,128]{1,0:T(1,128)}', space=vmem, size = 0x12000, scoped, tag = 'internal scratch']
  #allocation2 [shape = 'bf16[16,512]{1,0:T(8,128)(2,1)}', space=vmem, size = 0x4000, scoped, tag = 'scratch operand']
  #allocation3 [shape = 'bf16[576,324]{1,0:T(8,128)(2,1)}', space=vmem, size = 0x6c000, scoped, tag = 'scratch operand']
  #allocation4 [shape = 'bf16[720,324]{1,0:T(8,128)(2,1)}', space=vmem, size = 0x87000, scoped, tag = 'scratch operand']
  %s0 = inlined_call_operand.vmem [shape: f32[1,324], index: 0, kind: input, shape index: {}]
  %s1 = inlined_call_operand.vmem [shape: f32[2,16,512], index: 1, kind: input, shape index: {}]
  %s2 = inlined_call_operand.vmem [shape: bf16[16,144], index: 2, kind: input, shape index: {}]
  %s3 = inlined_call_operand.vmem [shape: bf16[16,288], index: 3, kind: input, shape index: {}]
  %s4 = inlined_call_operand.vmem [shape: bf16[16,432], index: 4, kind: input, shape index: {}]
  %s5 = inlined_call_operand.vmem [shape: bf16[16,576], index: 5, kind: input, shape index: {}]
  %s6 = inlined_call_operand.vmem [shape: bf16[16,720], index: 6, kind: input, shape index: {}]
  %s7 = inlined_call_operand.vmem [shape: f32[5,16,1], index: 7, kind: input, shape index: {}]
  %s8 = inlined_call_operand.vmem [shape: f32[2,16,512], index: 8, kind: output, shape index: {}]
  %s9 = sld [smem:[#allocation0]]
  $region65: #{rrdbnet_forward.6} parent=0
    _
  %s11 = ssub.s32 1, %s9
  %s12 = scalar_select 0, %s11, %s9
  loop: start=0, step=1, limit=4
  $region2: #{rrdbnet_forward.6} parent=0 // loop_pre_header
    _
  $region3: #{rrdbnet_forward.6} parent=0 // loop_header
    %s14 = sphi 0, %s18
    %p15 = scmp.ge.s32.totalorder %s14, 4
    %s22 = sphi 0, %s22
    %s24 = sphi 0, %s22
    %s25 = sphi 0, %s24
    %s39 = sphi 0, %s25
    %s45 = sphi 0, %s47
    %s48 = sphi 0, %s45
    %s49 = sphi 0, %s48
    %s65 = sphi 0, %s49
    %s69 = sphi 0, %s69
    %s71 = sphi 0, %s69
    %s72 = sphi 0, %s71
    %s86 = sphi 0, %s72
    %s90 = sphi 0, %s90
    %s92 = sphi 0, %s90
    %s93 = sphi 0, %s92
    %s107 = sphi 0, %s93
    %s111 = sphi 0, %s111
    %s113 = sphi 0, %s111
    %s114 = sphi 0, %s113
    %s128 = sphi 0, %s114
    %s132 = sphi 0, %s132
    %s134 = sphi 0, %s132
    %s135 = sphi 0, %s134
    %s149 = sphi 0, %s135
    %s153 = sphi 0, %s153
    %s155 = sphi 0, %s153
    %s156 = sphi 0, %s155
    %s170 = sphi 0, %s156
    %s174 = sphi 0, %s174
    %s176 = sphi 0, %s174
    %s177 = sphi 0, %s176
    %s191 = sphi 0, %s177
    %s197 = sphi 0, %s199
    %s200 = sphi 0, %s197
    %s201 = sphi 0, %s200
    %s217 = sphi 0, %s201
  $region4: #{rrdbnet_forward.6} parent=0 // loop_header_branch
    %17 = sbr.rel (%p15) target = $region8
  $region5: #{rrdbnet_forward.6} parent=0 // loop_body
    %s19 = ssub.s32 %s14, 1
    %s20 = ssub.s32 %s14, 2
    %s21 = sadd.s32 %s14, 1
    %s23 = sadd.s32 %s22, 1
    %p26 = scmp.eq.s32.totalorder %s14, 1
    %p27 = scmp.ne.s32.totalorder %s22, %s24
    %p28 = scmp.eq.s32.totalorder %s14, 0
    %p29 = por %p27, %p28
    %p30 = scmp.ne.s32.totalorder %s22, %s24
    %p31 = scmp.eq.s32.totalorder %s19, 1
    %p32 = por %p30, %p31
    %p33 = scmp.ne.s32.totalorder %s24, %s25
    %p34 = scmp.eq.s32.totalorder %s19, 0
    %p35 = por %p33, %p34
    %p36 = scmp.ne.s32.totalorder %s24, %s25
    %p37 = scmp.eq.s32.totalorder %s20, 1
    %p38 = por %p36, %p37
    %p40 = scmp.ne.s32.totalorder %s25, %s39
    %p41 = scmp.eq.s32.totalorder %s20, 0
    %p42 = por %p40, %p41
    %s43 = ssub.s32 %s14, %s21
    %p44 = scmp.eq.s32.totalorder %s43, 0
    %s46 = sadd.s32 %s45, 1
    %s47 = scalar_select %p44, %s45, %s46
    %p50 = pneg %p44
    %p51 = scmp.eq.s32.totalorder %s14, 1
    %p52 = por %p50, %p51
    %p53 = scmp.ne.s32.totalorder %s45, %s48
    %p54 = scmp.eq.s32.totalorder %s14, 0
    %p55 = por %p53, %p54
    %p56 = scmp.ne.s32.totalorder %s45, %s48
    %p57 = scmp.eq.s32.totalorder %s19, 1
    %p58 = por %p56, %p57
    %p59 = scmp.ne.s32.totalorder %s48, %s49
    %p60 = scmp.eq.s32.totalorder %s19, 0
    %p61 = por %p59, %p60
    %p62 = scmp.ne.s32.totalorder %s48, %s49
    %p63 = scmp.eq.s32.totalorder %s20, 1
    %p64 = por %p62, %p63
    %p66 = scmp.ne.s32.totalorder %s49, %s65
    %p67 = scmp.eq.s32.totalorder %s20, 0
    %p68 = por %p66, %p67
    %s70 = sadd.s32 %s69, 1
    %p73 = scmp.eq.s32.totalorder %s14, 1
    %p74 = scmp.ne.s32.totalorder %s69, %s71
    %p75 = scmp.eq.s32.totalorder %s14, 0
    %p76 = por %p74, %p75
    %p77 = scmp.ne.s32.totalorder %s69, %s71
    %p78 = scmp.eq.s32.totalorder %s19, 1
    %p79 = por %p77, %p78
    %p80 = scmp.ne.s32.totalorder %s71, %s72
    %p81 = scmp.eq.s32.totalorder %s19, 0
    %p82 = por %p80, %p81
    %p83 = scmp.ne.s32.totalorder %s71, %s72
    %p84 = scmp.eq.s32.totalorder %s20, 1
    %p85 = por %p83, %p84
    %p87 = scmp.ne.s32.totalorder %s72, %s86
    %p88 = scmp.eq.s32.totalorder %s20, 0
    %p89 = por %p87, %p88
    %s91 = sadd.s32 %s90, 1
    %p94 = scmp.eq.s32.totalorder %s14, 1
    %p95 = scmp.ne.s32.totalorder %s90, %s92
    %p96 = scmp.eq.s32.totalorder %s14, 0
    %p97 = por %p95, %p96
    %p98 = scmp.ne.s32.totalorder %s90, %s92
    %p99 = scmp.eq.s32.totalorder %s19, 1
    %p100 = por %p98, %p99
    %p101 = scmp.ne.s32.totalorder %s92, %s93
    %p102 = scmp.eq.s32.totalorder %s19, 0
    %p103 = por %p101, %p102
    %p104 = scmp.ne.s32.totalorder %s92, %s93
    %p105 = scmp.eq.s32.totalorder %s20, 1
    %p106 = por %p104, %p105
    %p108 = scmp.ne.s32.totalorder %s93, %s107
    %p109 = scmp.eq.s32.totalorder %s20, 0
    %p110 = por %p108, %p109
    %s112 = sadd.s32 %s111, 1
    %p115 = scmp.eq.s32.totalorder %s14, 1
    %p116 = scmp.ne.s32.totalorder %s111, %s113
    %p117 = scmp.eq.s32.totalorder %s14, 0
    %p118 = por %p116, %p117
    %p119 = scmp.ne.s32.totalorder %s111, %s113
    %p120 = scmp.eq.s32.totalorder %s19, 1
    %p121 = por %p119, %p120
    %p122 = scmp.ne.s32.totalorder %s113, %s114
    %p123 = scmp.eq.s32.totalorder %s19, 0
    %p124 = por %p122, %p123
    %p125 = scmp.ne.s32.totalorder %s113, %s114
    %p126 = scmp.eq.s32.totalorder %s20, 1
    %p127 = por %p125, %p126
    %p129 = scmp.ne.s32.totalorder %s114, %s128
    %p130 = scmp.eq.s32.totalorder %s20, 0
    %p131 = por %p129, %p130
    %s133 = sadd.s32 %s132, 1
    %p136 = scmp.eq.s32.totalorder %s14, 1
    %p137 = scmp.ne.s32.totalorder %s132, %s134
    %p138 = scmp.eq.s32.totalorder %s14, 0
    %p139 = por %p137, %p138
    %p140 = scmp.ne.s32.totalorder %s132, %s134
    %p141 = scmp.eq.s32.totalorder %s19, 1
    %p142 = por %p140, %p141
    %p143 = scmp.ne.s32.totalorder %s134, %s135
    %p144 = scmp.eq.s32.totalorder %s19, 0
    %p145 = por %p143, %p144
    %p146 = scmp.ne.s32.totalorder %s134, %s135
    %p147 = scmp.eq.s32.totalorder %s20, 1
    %p148 = por %p146, %p147
    %p150 = scmp.ne.s32.totalorder %s135, %s149
    %p151 = scmp.eq.s32.totalorder %s20, 0
    %p152 = por %p150, %p151
    %s154 = sadd.s32 %s153, 1
    %p157 = scmp.eq.s32.totalorder %s14, 1
    %p158 = scmp.ne.s32.totalorder %s153, %s155
    %p159 = scmp.eq.s32.totalorder %s14, 0
    %p160 = por %p158, %p159
    %p161 = scmp.ne.s32.totalorder %s153, %s155
    %p162 = scmp.eq.s32.totalorder %s19, 1
    %p163 = por %p161, %p162
    %p164 = scmp.ne.s32.totalorder %s155, %s156
    %p165 = scmp.eq.s32.totalorder %s19, 0
    %p166 = por %p164, %p165
    %p167 = scmp.ne.s32.totalorder %s155, %s156
    %p168 = scmp.eq.s32.totalorder %s20, 1
    %p169 = por %p167, %p168
    %p171 = scmp.ne.s32.totalorder %s156, %s170
    %p172 = scmp.eq.s32.totalorder %s20, 0
    %p173 = por %p171, %p172
    %s175 = sadd.s32 %s174, 1
    %p178 = scmp.eq.s32.totalorder %s14, 1
    %p179 = scmp.ne.s32.totalorder %s174, %s176
    %p180 = scmp.eq.s32.totalorder %s14, 0
    %p181 = por %p179, %p180
    %p182 = scmp.ne.s32.totalorder %s174, %s176
    %p183 = scmp.eq.s32.totalorder %s19, 1
    %p184 = por %p182, %p183
    %p185 = scmp.ne.s32.totalorder %s176, %s177
    %p186 = scmp.eq.s32.totalorder %s19, 0
    %p187 = por %p185, %p186
    %p188 = scmp.ne.s32.totalorder %s176, %s177
    %p189 = scmp.eq.s32.totalorder %s20, 1
    %p190 = por %p188, %p189
    %p192 = scmp.ne.s32.totalorder %s177, %s191
    %p193 = scmp.eq.s32.totalorder %s20, 0
    %p194 = por %p192, %p193
    %s195 = ssub.s32 %s14, %s21
    %p196 = scmp.eq.s32.totalorder %s195, 0
    %s198 = sadd.s32 %s197, 1
    %s199 = scalar_select %p196, %s197, %s198
    %p202 = pneg %p196
    %p203 = scmp.eq.s32.totalorder %s14, 1
    %p204 = por %p202, %p203
    %p205 = scmp.ne.s32.totalorder %s197, %s200
    %p206 = scmp.eq.s32.totalorder %s14, 0
    %p207 = por %p205, %p206
    %p208 = scmp.ne.s32.totalorder %s197, %s200
    %p209 = scmp.eq.s32.totalorder %s19, 1
    %p210 = por %p208, %p209
    %p211 = scmp.ne.s32.totalorder %s200, %s201
    %p212 = scmp.eq.s32.totalorder %s19, 0
    %p213 = por %p211, %p212
    %p214 = scmp.ne.s32.totalorder %s200, %s201
    %p215 = scmp.eq.s32.totalorder %s20, 1
    %p216 = por %p214, %p215
    %p218 = scmp.ne.s32.totalorder %s201, %s217
    %p219 = scmp.eq.s32.totalorder %s20, 0
    %p220 = por %p218, %p219
    %p221 = scmp.le.s32.totalorder 1, %s14
    %p222 = scmp.lt.s32.totalorder %s14, 3
    %p223 = pnand %p221, %p222
    %p224 = pneg %p223
    // Predicated region
    $region9: #{rrdbnet_forward.6} parent=5 // pred_check
      _
    $region10: #{rrdbnet_forward.6} parent=5 // pred_check_branch
      %226 = sbr.rel (%p223) target = $region12
    $region11: #{rrdbnet_forward.6} parent=5 // pred_region
      %s227 = ssub.s32 %s14, 1
      // Predicated region
      $region13: #{rrdbnet_forward.6} parent=11 // pred_check
        %p228 = pneg %p35
      $region14: #{rrdbnet_forward.6} parent=11 // pred_check_branch
        %230 = sbr.rel (%p228) target = $region16
      $region15: #{rrdbnet_forward.6} parent=11 // pred_region
        _
      $region16: #{rrdbnet_forward.6} parent=11 // pred_fallthru
        _
      // Predicated region
      $region17: #{rrdbnet_forward.6} parent=11 // pred_check
        %p231 = pneg %p82
      $region18: #{rrdbnet_forward.6} parent=11 // pred_check_branch
        %233 = sbr.rel (%p231) target = $region20
      $region19: #{rrdbnet_forward.6} parent=11 // pred_region
        _
      $region20: #{rrdbnet_forward.6} parent=11 // pred_fallthru
        _
      // Predicated region
      $region21: #{rrdbnet_forward.6} parent=11 // pred_check
        %p234 = pneg %p103
      $region22: #{rrdbnet_forward.6} parent=11 // pred_check_branch
        %236 = sbr.rel (%p234) target = $region24
      $region23: #{rrdbnet_forward.6} parent=11 // pred_region
        _
      $region24: #{rrdbnet_forward.6} parent=11 // pred_fallthru
        _
      // Predicated region
      $region25: #{rrdbnet_forward.6} parent=11 // pred_check
        %p237 = pneg %p124
      $region26: #{rrdbnet_forward.6} parent=11 // pred_check_branch
        %239 = sbr.rel (%p237) target = $region28
      $region27: #{rrdbnet_forward.6} parent=11 // pred_region
        _
      $region28: #{rrdbnet_forward.6} parent=11 // pred_fallthru
        _
      // Predicated region
      $region29: #{rrdbnet_forward.6} parent=11 // pred_check
        %p240 = pneg %p145
      $region30: #{rrdbnet_forward.6} parent=11 // pred_check_branch
        %242 = sbr.rel (%p240) target = $region32
      $region31: #{rrdbnet_forward.6} parent=11 // pred_region
        _
      $region32: #{rrdbnet_forward.6} parent=11 // pred_fallthru
        _
      // Predicated region
      $region33: #{rrdbnet_forward.6} parent=11 // pred_check
        %p243 = pneg %p166
      $region34: #{rrdbnet_forward.6} parent=11 // pred_check_branch
        %245 = sbr.rel (%p243) target = $region36
      $region35: #{rrdbnet_forward.6} parent=11 // pred_region
        _
      $region36: #{rrdbnet_forward.6} parent=11 // pred_fallthru
        _
      // Predicated region
      $region37: #{rrdbnet_forward.6} parent=11 // pred_check
        %p246 = pneg %p187
      $region38: #{rrdbnet_forward.6} parent=11 // pred_check_branch
        %248 = sbr.rel (%p246) target = $region40
      $region39: #{rrdbnet_forward.6} parent=11 // pred_region
        _
      $region40: #{rrdbnet_forward.6} parent=11 // pred_fallthru
        _
    $region12: #{rrdbnet_forward.6} parent=5 // pred_fallthru
      _
    %p249 = scmp.lt.s32.totalorder %s14, 2
    // Predicated region
    $region41: #{rrdbnet_forward.6} parent=5 // pred_check
      %p250 = pneg %p249
    $region42: #{rrdbnet_forward.6} parent=5 // pred_check_branch
      %252 = sbr.rel (%p250) target = $region44
    $region43: #{rrdbnet_forward.6} parent=5 // pred_region
      // Predicated region
      $region45: #{rrdbnet_forward.6} parent=43 // pred_check
        %p253 = pneg %p55
      $region46: #{rrdbnet_forward.6} parent=43 // pred_check_branch
        %255 = sbr.rel (%p253) target = $region48
      $region47: #{rrdbnet_forward.6} parent=43 // pred_region
        %p256 = scmp.lt.s32.totalorder %s14, 1
        %s257 = scalar_select %p256, %s14, 1
        %s258 = smul.addr %s257, 8
        %s259 = smul.addr %s258, 8
        %s260 = scalar_lea.vmem %s1, %s259
      $region48: #{rrdbnet_forward.6} parent=43 // pred_fallthru
        _
    $region44: #{rrdbnet_forward.6} parent=5 // pred_fallthru
      _
    %p261 = scmp.le.s32.totalorder 1, %s14
    %p262 = scmp.lt.s32.totalorder %s14, 3
    %p263 = pnand %p261, %p262
    %p264 = pneg %p263
    // Predicated region
    $region49: #{rrdbnet_forward.6} parent=5 // pred_check
      _
    $region50: #{rrdbnet_forward.6} parent=5 // pred_check_branch
      %266 = sbr.rel (%p263) target = $region52
    $region51: #{rrdbnet_forward.6} parent=5 // pred_region
      %s267 = ssub.s32 %s14, 1
      %p268 = pneg %p35
      %p269 = pneg %p32
      %p270 = scmp.lt.s32.totalorder %s19, 1
      %s271 = scalar_select %p270, %s19, 1
      %s272 = smul.addr %s271, 8
      %s273 = smul.addr %s272, 8
      %s274 = scalar_lea.vmem %s1, %s273
      %p275 = pneg %p61
      %p276 = pneg %p58
      %p277 = pneg %p82
      %p278 = pneg %p79
      %p279 = pneg %p103
      %p280 = pneg %p100
      %p281 = pneg %p124
      %p282 = pneg %p121
      %p283 = pneg %p145
      %p284 = pneg %p142
      %p285 = pneg %p166
      %p286 = pneg %p163
      %p287 = pneg %p187
      %p288 = pneg %p184
      %p289 = pneg %p213
      %p290 = pneg %p210
      %p291 = scmp.lt.s32.totalorder %s19, 1
      %s292 = scalar_select %p291, %s19, 1
      %s293 = smul.addr %s292, 8
      %s294 = smul.addr %s293, 8
      %s295 = scalar_lea.vmem %s8, %s294
      %p296 = scmp.lt.s32.totalorder %s19, 1
      %s297 = scalar_select %p296, %s19, 1
      %s298 = smul.addr %s297, 8
      %s299 = smul.addr %s298, 8
      %s300 = scalar_lea.vmem %s1, %s299
      %p301 = scmp.lt.s32.totalorder %s19, 1
      %s302 = scalar_select %p301, %s19, 1
      %s303 = smul.addr %s302, 8
      %s304 = smul.addr %s303, 8
      %s305 = scalar_lea.vmem %s8, %s304
      %v308 = vld [vmem:[%s0] sm:$0x7]
      %v309 = vld [vmem:[%s300] sm:$0xff]
      %v310 = vld [vmem:[%s300 + $0x8] sm:$0xff]
      %v311 = vld [vmem:[%s300 + $0x10] sm:$0xff]
      %v312 = vld [vmem:[%s300 + $0x18] sm:$0xff]
      %v313 = vld [vmem:[%s300 + $0x20] sm:$0xff]
      %v314 = vld [vmem:[%s300 + $0x28] sm:$0xff]
      %v315 = vld [vmem:[%s300 + $0x30] sm:$0xff]
      %v316 = vld [vmem:[%s300 + $0x38] sm:$0xff]
      %v317 = vpack.c.bf16 %v313, %v309
      %v318 = vpack.c.bf16 %v314, %v310
      %v319 = vpack.c.bf16 %v315, %v311
      %v320 = vpack.c.bf16 %v316, %v312
      %v325 = vunpack.c.l.b16 %v317
      %v326 = vunpack.c.l.b16 %v318
      %v327 = vunpack.c.l.b16 %v319
      %v328 = vunpack.c.l.b16 %v320
      %v329 = vunpack.c.h.b16 %v317
      %v330 = vunpack.c.h.b16 %v318
      %v331 = vunpack.c.h.b16 %v319
      %v332 = vunpack.c.h.b16 %v320
      %v333 = vpack.c.b16 %v326, %v325
      %v334 = vpack.c.b16 %v328, %v327
      %v335 = vpack.c.b16 %v330, %v329
      %v336 = vpack.c.b16 %v332, %v331
      %341 = vst [vmem:[#allocation2] sm:$0xff] %v333
      %342 = vst [vmem:[#allocation2 + $0x8] sm:$0xff] %v334
      %343 = vst [vmem:[#allocation2 + $0x10] sm:$0xff] %v335
      %344 = vst [vmem:[#allocation2 + $0x18] sm:$0xff] %v336
      %v345 = vld [vmem:[#allocation2] sm:$0xff]
      %v346 = vld [vmem:[#allocation2 + $0x8] sm:$0xff]
      %v347 = vld [vmem:[#allocation2 + $0x10] sm:$0xff]
      %v348 = vld [vmem:[#allocation2 + $0x18] sm:$0xff]
      %353 = vrot.lane.b32.xlu0 %v345, 19
      %v354 = vpop.permute.xlu0 %353
      %355 = vrot.lane.b32.xlu0 %v346, 19
      %v356 = vpop.permute.xlu0 %355
      %357 = vrot.lane.b32.xlu0 %v347, 19
      %v358 = vpop.permute.xlu0 %357
      %359 = vrot.lane.b32.xlu0 %v348, 19
      %v360 = vpop.permute.xlu0 %359
      %v361 = vrot.slane %v354, 4
      %v362 = vrot.slane %v356, 4
      %v363 = vrot.slane %v358, 4
      %v364 = vrot.slane %v360, 4
      %vm365 = vcmask 1043456
      %v366 = vsel %vm365, %v361, %v362
      %vm367 = vcmask 154624
      %v368 = vsel %vm367, %v354, %v366
      %v369 = vsel %vm367, %v356, %v362
      %v370 = vsel %vm365, %v363, %v364
      %v371 = vsel %vm367, %v358, %v370
      %v372 = vsel %vm367, %v360, %v364
      %377 = vst [vmem:[#allocation4] sm:$0xff] %v368
      %vm378 = vcmask 551936
      %379 = vst.msk [vmem:[#allocation4 + $0x8] sm:$0xf] %vm378, %v369
      %380 = vst [vmem:[#allocation4 + $0xc] sm:$0xff] %v371
      %381 = vst.msk [vmem:[#allocation4 + $0x14] sm:$0xf] %vm378, %v372
      %v382 = vld [vmem:[#allocation2] sm:$0xff]
      %v383 = vld [vmem:[#allocation2 + $0x8] sm:$0xff]
      %v384 = vld [vmem:[#allocation2 + $0x10] sm:$0xff]
      %v385 = vld [vmem:[#allocation2 + $0x18] sm:$0xff]
      %390 = vrot.lane.b32.xlu0 %v382, 18
      %v391 = vpop.permute.xlu0 %390
      %392 = vrot.lane.b32.xlu0 %v383, 18
      %v393 = vpop.permute.xlu0 %392
      %394 = vrot.lane.b32.xlu0 %v384, 18
      %v395 = vpop.permute.xlu0 %394
      %396 = vrot.lane.b32.xlu0 %v385, 18
      %v397 = vpop.permute.xlu0 %396
      %v398 = vrot.slane %v391, 4
      %v399 = vrot.slane %v393, 4
      %v400 = vrot.slane %v395, 4
      %v401 = vrot.slane %v397, 4
      %v402 = vsel %vm365, %v398, %v399
      %vm403 = vcmask 146432
      %v404 = vsel %vm403, %v391, %v402
      %v405 = vsel %vm403, %v393, %v399
      %v406 = vsel %vm365, %v400, %v401
      %v407 = vsel %vm403, %v395, %v406
      %v408 = vsel %vm403, %v397, %v401
      %413 = vst [vmem:[#allocation4 + $0x18] sm:$0xff] %v404
      %414 = vst.msk [vmem:[#allocation4 + $0x20] sm:$0xf] %vm378, %v405
      %415 = vst [vmem:[#allocation4 + $0x24] sm:$0xff] %v407
      %416 = vst.msk [vmem:[#allocation4 + $0x2c] sm:$0xf] %vm378, %v408
      %v417 = vld [vmem:[#allocation2] sm:$0xff]
      %v418 = vld [vmem:[#allocation2 + $0x8] sm:$0xff]
      %v419 = vld [vmem:[#allocation2 + $0x10] sm:$0xff]
      %v420 = vld [vmem:[#allocation2 + $0x18] sm:$0xff]
      %425 = vrot.lane.b32.xlu0 %v417, 17
      %v426 = vpop.permute.xlu0 %425
      %427 = vrot.lane.b32.xlu0 %v418, 17
      %v428 = vpop.permute.xlu0 %427
      %429 = vrot.lane.b32.xlu0 %v419, 17
      %v430 = vpop.permute.xlu0 %429
      %431 = vrot.lane.b32.xlu0 %v420, 17
      %v432 = vpop.permute.xlu0 %431
      %v433 = vrot.slane %v426, 4
      %v434 = vrot.slane %v428, 4
      %v435 = vrot.slane %v430, 4
      %v436 = vrot.slane %v432, 4
      %v437 = vsel %vm365, %v433, %v434
      %vm438 = vcmask 138240
      %v439 = vsel %vm438, %v426, %v437
      %v440 = vsel %vm438, %v428, %v434
      %v441 = vsel %vm365, %v435, %v436
      %v442 = vsel %vm438, %v430, %v441
      %v443 = vsel %vm438, %v432, %v436
      %448 = vst [vmem:[#allocation4 + $0x30] sm:$0xff] %v439
      %449 = vst.msk [vmem:[#allocation4 + $0x38] sm:$0xf] %vm378, %v440
      %450 = vst [vmem:[#allocation4 + $0x3c] sm:$0xff] %v442
      %451 = vst.msk [vmem:[#allocation4 + $0x44] sm:$0xf] %vm378, %v443
      %v452 = vld [vmem:[#allocation2] sm:$0xff]
      %v453 = vld [vmem:[#allocation2 + $0x8] sm:$0xff]
      %v454 = vld [vmem:[#allocation2 + $0x10] sm:$0xff]
      %v455 = vld [vmem:[#allocation2 + $0x18] sm:$0xff]
      %460 = vrot.lane.b32.xlu0 %v452, 1
      %v461 = vpop.permute.xlu0 %460
      %462 = vrot.lane.b32.xlu0 %v453, 1
      %v463 = vpop.permute.xlu0 %462
      %464 = vrot.lane.b32.xlu0 %v454, 1
      %v465 = vpop.permute.xlu0 %464
      %466 = vrot.lane.b32.xlu0 %v455, 1
      %v467 = vpop.permute.xlu0 %466
      %v468 = vrot.slane %v461, 4
      %v469 = vrot.slane %v463, 4
      %v470 = vrot.slane %v465, 4
      %v471 = vrot.slane %v467, 4
      %v472 = vsel %vm365, %v468, %v469
      %vm473 = vcmask 7168
      %v474 = vsel %vm473, %v461, %v472
      %v475 = vsel %vm473, %v463, %v469
      %v476 = vsel %vm365, %v470, %v471
      %v477 = vsel %vm473, %v465, %v476
      %v478 = vsel %vm473, %v467, %v471
      %483 = vst [vmem:[#allocation4 + $0x48] sm:$0xff] %v474
      %484 = vst.msk [vmem:[#allocation4 + $0x50] sm:$0xf] %vm378, %v475
      %485 = vst [vmem:[#allocation4 + $0x54] sm:$0xff] %v477
      %486 = vst.msk [vmem:[#allocation4 + $0x5c] sm:$0xf] %vm378, %v478
      %v487 = vld [vmem:[#allocation2 + $0x4] sm:$0xff]
      %v488 = vld [vmem:[#allocation2 + $0xc] sm:$0xf]
      %v489 = vld [vmem:[#allocation2 + $0x14] sm:$0xff]
      %v490 = vld [vmem:[#allocation2 + $0x1c] sm:$0xf]
      %491 = vst [vmem:[#allocation4 + $0x60] sm:$0xff] %v487
      %492 = vst.msk [vmem:[#allocation4 + $0x68] sm:$0xf] %vm378, %v488
      %493 = vst [vmem:[#allocation4 + $0x6c] sm:$0xff] %v489
      %494 = vst.msk [vmem:[#allocation4 + $0x74] sm:$0xf] %vm378, %v490
      %v495 = vld [vmem:[#allocation2 + $0x4] sm:$0xff]
      %v496 = vld [vmem:[#allocation2 + $0xc] sm:$0xf]
      %v497 = vld [vmem:[#allocation2 + $0x14] sm:$0xff]
      %v498 = vld [vmem:[#allocation2 + $0x1c] sm:$0xf]
      %503 = vrot.lane.b32.xlu0 %v495, 127
      %v504 = vpop.permute.xlu0 %503
      %505 = vrot.lane.b32.xlu0 %v496, 127
      %v506 = vpop.permute.xlu0 %505
      %507 = vrot.lane.b32.xlu0 %v497, 127
      %v508 = vpop.permute.xlu0 %507
      %509 = vrot.lane.b32.xlu0 %v498, 127
      %v510 = vpop.permute.xlu0 %509
      %v511 = vrot.slane %v504, 4
      %v512 = vrot.slane %v506, 4
      %v513 = vrot.slane %v508, 4
      %v514 = vrot.slane %v510, 4
      %v515 = vsel %vm365, %v511, %v512
      %vm516 = vcmask 1039360
      %v517 = vsel %vm516, %v504, %v515
      %v518 = vsel %vm365, %v513, %v514
      %v519 = vsel %vm516, %v508, %v518
      %524 = vst [vmem:[#allocation4 + $0x78] sm:$0xff] %v517
      %525 = vst.msk [vmem:[#allocation4 + $0x80] sm:$0xf] %vm378, %v506
      %526 = vst [vmem:[#allocation4 + $0x84] sm:$0xff] %v519
      %527 = vst.msk [vmem:[#allocation4 + $0x8c] sm:$0xf] %vm378, %v510
      %v528 = vld [vmem:[#allocation2 + $0x4] sm:$0xff]
      %v529 = vld [vmem:[#allocation2 + $0xc] sm:$0xf]
      %v530 = vld [vmem:[#allocation2 + $0x14] sm:$0xff]
      %v531 = vld [vmem:[#allocation2 + $0x1c] sm:$0xf]
      %536 = vrot.lane.b32.xlu0 %v528, 111
      %v537 = vpop.permute.xlu0 %536
      %538 = vrot.lane.b32.xlu0 %v529, 111
      %v539 = vpop.permute.xlu0 %538
      %540 = vrot.lane.b32.xlu0 %v530, 111
      %v541 = vpop.permute.xlu0 %540
      %542 = vrot.lane.b32.xlu0 %v531, 111
      %v543 = vpop.permute.xlu0 %542
      %v544 = vrot.slane %v537, 4
      %v545 = vrot.slane %v539, 4
      %v546 = vrot.slane %v541, 4
      %v547 = vrot.slane %v543, 4
      %v548 = vsel %vm365, %v544, %v545
      %vm549 = vcmask 908288
      %v550 = vsel %vm549, %v537, %v548
      %v551 = vsel %vm365, %v546, %v547
      %v552 = vsel %vm549, %v541, %v551
      %557 = vst [vmem:[#allocation4 + $0x90] sm:$0xff] %v550
      %558 = vst.msk [vmem:[#allocation4 + $0x98] sm:$0xf] %vm378, %v539
      %559 = vst [vmem:[#allocation4 + $0x9c] sm:$0xff] %v552
      %560 = vst.msk [vmem:[#allocation4 + $0xa4] sm:$0xf] %vm378, %v543
      %v561 = vld [vmem:[#allocation2 + $0x4] sm:$0xff]
      %v562 = vld [vmem:[#allocation2 + $0xc] sm:$0xf]
      %v563 = vld [vmem:[#allocation2 + $0x14] sm:$0xff]
      %v564 = vld [vmem:[#allocation2 + $0x1c] sm:$0xf]
      %569 = vrot.lane.b32.xlu0 %v561, 110
      %v570 = vpop.permute.xlu0 %569
      %571 = vrot.lane.b32.xlu0 %v562, 110
      %v572 = vpop.permute.xlu0 %571
      %573 = vrot.lane.b32.xlu0 %v563, 110
      %v574 = vpop.permute.xlu0 %573
      %575 = vrot.lane.b32.xlu0 %v564, 110
      %v576 = vpop.permute.xlu0 %575
      %v577 = vrot.slane %v570, 4
      %v578 = vrot.slane %v572, 4
      %v579 = vrot.slane %v574, 4
      %v580 = vrot.slane %v576, 4
      %v581 = vsel %vm365, %v577, %v578
      %vm582 = vcmask 900096
      %v583 = vsel %vm582, %v570, %v581
      %v584 = vsel %vm365, %v579, %v580
      %v585 = vsel %vm582, %v574, %v584
      %590 = vst [vmem:[#allocation4 + $0xa8] sm:$0xff] %v583
      %591 = vst.msk [vmem:[#allocation4 + $0xb0] sm:$0xf] %vm378, %v572
      %592 = vst [vmem:[#allocation4 + $0xb4] sm:$0xff] %v585
      %593 = vst.msk [vmem:[#allocation4 + $0xbc] sm:$0xf] %vm378, %v576
      %v594 = vld [vmem:[#allocation2 + $0x4] sm:$0xff]
      %v595 = vld [vmem:[#allocation2 + $0xc] sm:$0xf]
      %v596 = vld [vmem:[#allocation2 + $0x14] sm:$0xff]
      %v597 = vld [vmem:[#allocation2 + $0x1c] sm:$0xf]
      %602 = vrot.lane.b32.xlu0 %v594, 109
      %v603 = vpop.permute.xlu0 %602
      %604 = vrot.lane.b32.xlu0 %v595, 109
      %v605 = vpop.permute.xlu0 %604
      %606 = vrot.lane.b32.xlu0 %v596, 109
      %v607 = vpop.permute.xlu0 %606
      %608 = vrot.lane.b32.xlu0 %v597, 109
      %v609 = vpop.permute.xlu0 %608
      %v610 = vrot.slane %v603, 4
      %v611 = vrot.slane %v605, 4
      %v612 = vrot.slane %v607, 4
      %v613 = vrot.slane %v609, 4
      %v614 = vsel %vm365, %v610, %v611
      %vm615 = vcmask 891904
      %v616 = vsel %vm615, %v603, %v614
      %v617 = vsel %vm365, %v612, %v613
      %v618 = vsel %vm615, %v607, %v617
      %623 = vst [vmem:[#allocation4 + $0xc0] sm:$0xff] %v616
      %624 = vst.msk [vmem:[#allocation4 + $0xc8] sm:$0xf] %vm378, %v605
      %625 = vst [vmem:[#allocation4 + $0xcc] sm:$0xff] %v618
      %626 = vst.msk [vmem:[#allocation4 + $0xd4] sm:$0xf] %vm378, %v609
      %v627 = vld [vmem:[#allocation4] sm:$0xff]
      %v628 = vld [vmem:[#allocation4 + $0x8] sm:$0xf]
      %v629 = vld [vmem:[#allocation4 + $0xc] sm:$0xff]
      %v630 = vld [vmem:[#allocation4 + $0x14] sm:$0xf]
      %v631 = vld [vmem:[#allocation4 + $0x18] sm:$0xff]
      %v632 = vld [vmem:[#allocation4 + $0x20] sm:$0xf]
      %v633 = vld [vmem:[#allocation4 + $0x24] sm:$0xff]
      %v634 = vld [vmem:[#allocation4 + $0x2c] sm:$0xf]
      %v635 = vld [vmem:[#allocation4 + $0x30] sm:$0xff]
      %v636 = vld [vmem:[#allocation4 + $0x38] sm:$0xf]
      %v637 = vld [vmem:[#allocation4 + $0x3c] sm:$0xff]
      %v638 = vld [vmem:[#allocation4 + $0x44] sm:$0xf]
      %v639 = vld [vmem:[#allocation4 + $0x48] sm:$0xff]
      %v640 = vld [vmem:[#allocation4 + $0x50] sm:$0xf]
      %v641 = vld [vmem:[#allocation4 + $0x54] sm:$0xff]
      %v642 = vld [vmem:[#allocation4 + $0x5c] sm:$0xf]
      %v643 = vld [vmem:[#allocation4 + $0x60] sm:$0xff]
      %v644 = vld [vmem:[#allocation4 + $0x68] sm:$0xf]
      %v645 = vld [vmem:[#allocation4 + $0x6c] sm:$0xff]
      %v646 = vld [vmem:[#allocation4 + $0x74] sm:$0xf]
      %v647 = vld [vmem:[#allocation4 + $0x78] sm:$0xff]
      %v648 = vld [vmem:[#allocation4 + $0x80] sm:$0xf]
      %v649 = vld [vmem:[#allocation4 + $0x84] sm:$0xff]
      %v650 = vld [vmem:[#allocation4 + $0x8c] sm:$0xf]
      %v651 = vld [vmem:[#allocation4 + $0x90] sm:$0xff]
      %v652 = vld [vmem:[#allocation4 + $0x98] sm:$0xf]
      %v653 = vld [vmem:[#allocation4 + $0x9c] sm:$0xff]
      %v654 = vld [vmem:[#allocation4 + $0xa4] sm:$0xf]
      %v655 = vld [vmem:[#allocation4 + $0xa8] sm:$0xff]
      %v656 = vld [vmem:[#allocation4 + $0xb0] sm:$0xf]
      %v657 = vld [vmem:[#allocation4 + $0xb4] sm:$0xff]
      %v658 = vld [vmem:[#allocation4 + $0xbc] sm:$0xf]
      %v659 = vld [vmem:[#allocation4 + $0xc0] sm:$0xff]
      %v660 = vld [vmem:[#allocation4 + $0xc8] sm:$0xf]
      %v661 = vld [vmem:[#allocation4 + $0xcc] sm:$0xff]
      %v662 = vld [vmem:[#allocation4 + $0xd4] sm:$0xf]
      %vm663 = vcmp.ge.bf16.partialorder %v627, 0
      %vm664 = vcmp.ge.bf16.partialorder %v628, 0
      %vm665 = vcmp.ge.bf16.partialorder %v629, 0
      %vm666 = vcmp.ge.bf16.partialorder %v630, 0
      %vm667 = vcmp.ge.bf16.partialorder %v631, 0
      %vm668 = vcmp.ge.bf16.partialorder %v632, 0
      %vm669 = vcmp.ge.bf16.partialorder %v633, 0
      %vm670 = vcmp.ge.bf16.partialorder %v634, 0
      %vm671 = vcmp.ge.bf16.partialorder %v635, 0
      %vm672 = vcmp.ge.bf16.partialorder %v636, 0
      %vm673 = vcmp.ge.bf16.partialorder %v637, 0
      %vm674 = vcmp.ge.bf16.partialorder %v638, 0
      %vm675 = vcmp.ge.bf16.partialorder %v639, 0
      %vm676 = vcmp.ge.bf16.partialorder %v640, 0
      %vm677 = vcmp.ge.bf16.partialorder %v641, 0
      %vm678 = vcmp.ge.bf16.partialorder %v642, 0
      %vm679 = vcmp.ge.bf16.partialorder %v643, 0
      %vm680 = vcmp.ge.bf16.partialorder %v644, 0
      %vm681 = vcmp.ge.bf16.partialorder %v645, 0
      %vm682 = vcmp.ge.bf16.partialorder %v646, 0
      %vm683 = vcmp.ge.bf16.partialorder %v647, 0
      %vm684 = vcmp.ge.bf16.partialorder %v648, 0
      %vm685 = vcmp.ge.bf16.partialorder %v649, 0
      %vm686 = vcmp.ge.bf16.partialorder %v650, 0
      %vm687 = vcmp.ge.bf16.partialorder %v651, 0
      %vm688 = vcmp.ge.bf16.partialorder %v652, 0
      %vm689 = vcmp.ge.bf16.partialorder %v653, 0
      %vm690 = vcmp.ge.bf16.partialorder %v654, 0
      %vm691 = vcmp.ge.bf16.partialorder %v655, 0
      %vm692 = vcmp.ge.bf16.partialorder %v656, 0
      %vm693 = vcmp.ge.bf16.partialorder %v657, 0
      %vm694 = vcmp.ge.bf16.partialorder %v658, 0
      %vm695 = vcmp.ge.bf16.partialorder %v659, 0
      %vm696 = vcmp.ge.bf16.partialorder %v660, 0
      %vm697 = vcmp.ge.bf16.partialorder %v661, 0
      %vm698 = vcmp.ge.bf16.partialorder %v662, 0
      %v699 = vmul.bf16 %v627, 1036860877
      %v700 = vmul.bf16 %v628, 1036860877
      %v701 = vmul.bf16 %v629, 1036860877
      %v702 = vmul.bf16 %v630, 1036860877
      %v703 = vmul.bf16 %v631, 1036860877
      %v704 = vmul.bf16 %v632, 1036860877
      %v705 = vmul.bf16 %v633, 1036860877
      %v706 = vmul.bf16 %v634, 1036860877
      %v707 = vmul.bf16 %v635, 1036860877
      %v708 = vmul.bf16 %v636, 1036860877
      %v709 = vmul.bf16 %v637, 1036860877
      %v710 = vmul.bf16 %v638, 1036860877
      %v711 = vmul.bf16 %v639, 1036860877
      %v712 = vmul.bf16 %v640, 1036860877
      %v713 = vmul.bf16 %v641, 1036860877
      %v714 = vmul.bf16 %v642, 1036860877
      %v715 = vmul.bf16 %v643, 1036860877
      %v716 = vmul.bf16 %v644, 1036860877
      %v717 = vmul.bf16 %v645, 1036860877
      %v718 = vmul.bf16 %v646, 1036860877
      %v719 = vmul.bf16 %v647, 1036860877
      %v720 = vmul.bf16 %v648, 1036860877
      %v721 = vmul.bf16 %v649, 1036860877
      %v722 = vmul.bf16 %v650, 1036860877
      %v723 = vmul.bf16 %v651, 1036860877
      %v724 = vmul.bf16 %v652, 1036860877
      %v725 = vmul.bf16 %v653, 1036860877
      %v726 = vmul.bf16 %v654, 1036860877
      %v727 = vmul.bf16 %v655, 1036860877
      %v728 = vmul.bf16 %v656, 1036860877
      %v729 = vmul.bf16 %v657, 1036860877
      %v730 = vmul.bf16 %v658, 1036860877
      %v731 = vmul.bf16 %v659, 1036860877
      %v732 = vmul.bf16 %v660, 1036860877
      %v733 = vmul.bf16 %v661, 1036860877
      %v734 = vmul.bf16 %v662, 1036860877
      %v735 = vsel %vm663, %v627, %v699
      %v736 = vsel %vm664, %v628, %v700
      %v737 = vsel %vm665, %v629, %v701
      %v738 = vsel %vm666, %v630, %v702
      %v739 = vsel %vm667, %v631, %v703
      %v740 = vsel %vm668, %v632, %v704
      %v741 = vsel %vm669, %v633, %v705
      %v742 = vsel %vm670, %v634, %v706
      %v743 = vsel %vm671, %v635, %v707
      %v744 = vsel %vm672, %v636, %v708
      %v745 = vsel %vm673, %v637, %v709
      %v746 = vsel %vm674, %v638, %v710
      %v747 = vsel %vm675, %v639, %v711
      %v748 = vsel %vm676, %v640, %v712
      %v749 = vsel %vm677, %v641, %v713
      %v750 = vsel %vm678, %v642, %v714
      %v751 = vsel %vm679, %v643, %v715
      %v752 = vsel %vm680, %v644, %v716
      %v753 = vsel %vm681, %v645, %v717
      %v754 = vsel %vm682, %v646, %v718
      %v755 = vsel %vm683, %v647, %v719
      %v756 = vsel %vm684, %v648, %v720
      %v757 = vsel %vm685, %v649, %v721
      %v758 = vsel %vm686, %v650, %v722
      %v759 = vsel %vm687, %v651, %v723
      %v760 = vsel %vm688, %v652, %v724
      %v761 = vsel %vm689, %v653, %v725
      %v762 = vsel %vm690, %v654, %v726
      %v763 = vsel %vm691, %v655, %v727
      %v764 = vsel %vm692, %v656, %v728
      %v765 = vsel %vm693, %v657, %v729
      %v766 = vsel %vm694, %v658, %v730
      %v767 = vsel %vm695, %v659, %v731
      %v768 = vsel %vm696, %v660, %v732
      %v769 = vsel %vm697, %v661, %v733
      %v770 = vsel %vm698, %v662, %v734
      %771 = vst [vmem:[#allocation3] sm:$0xff] %v735
      %772 = vst.msk [vmem:[#allocation3 + $0x8] sm:$0xf] %vm378, %v736
      %773 = vst [vmem:[#allocation3 + $0xc] sm:$0xff] %v737
      %774 = vst.msk [vmem:[#allocation3 + $0x14] sm:$0xf] %vm378, %v738
      %775 = vst [vmem:[#allocation3 + $0x18] sm:$0xff] %v739
      %776 = vst.msk [vmem:[#allocation3 + $0x20] sm:$0xf] %vm378, %v740
      %777 = vst [vmem:[#allocation3 + $0x24] sm:$0xff] %v741
      %778 = vst.msk [vmem:[#allocation3 + $0x2c] sm:$0xf] %vm378, %v742
      %779 = vst [vmem:[#allocation3 + $0x30] sm:$0xff] %v743
      %780 = vst.msk [vmem:[#allocation3 + $0x38] sm:$0xf] %vm378, %v744
      %781 = vst [vmem:[#allocation3 + $0x3c] sm:$0xff] %v745
      %782 = vst.msk [vmem:[#allocation3 + $0x44] sm:$0xf] %vm378, %v746
      %783 = vst [vmem:[#allocation3 + $0x48] sm:$0xff] %v747
      %784 = vst.msk [vmem:[#allocation3 + $0x50] sm:$0xf] %vm378, %v748
      %785 = vst [vmem:[#allocation3 + $0x54] sm:$0xff] %v749
      %786 = vst.msk [vmem:[#allocation3 + $0x5c] sm:$0xf] %vm378, %v750
      %787 = vst [vmem:[#allocation3 + $0x60] sm:$0xff] %v751
      %788 = vst.msk [vmem:[#allocation3 + $0x68] sm:$0xf] %vm378, %v752
      %789 = vst [vmem:[#allocation3 + $0x6c] sm:$0xff] %v753
      %790 = vst.msk [vmem:[#allocation3 + $0x74] sm:$0xf] %vm378, %v754
      %791 = vst [vmem:[#allocation3 + $0x78] sm:$0xff] %v755
      %792 = vst.msk [vmem:[#allocation3 + $0x80] sm:$0xf] %vm378, %v756
      %793 = vst [vmem:[#allocation3 + $0x84] sm:$0xff] %v757
      %794 = vst.msk [vmem:[#allocation3 + $0x8c] sm:$0xf] %vm378, %v758
      %795 = vst [vmem:[#allocation3 + $0x90] sm:$0xff] %v759
      %796 = vst.msk [vmem:[#allocation3 + $0x98] sm:$0xf] %vm378, %v760
      %797 = vst [vmem:[#allocation3 + $0x9c] sm:$0xff] %v761
      %798 = vst.msk [vmem:[#allocation3 + $0xa4] sm:$0xf] %vm378, %v762
      %799 = vst [vmem:[#allocation3 + $0xa8] sm:$0xff] %v763
      %800 = vst.msk [vmem:[#allocation3 + $0xb0] sm:$0xf] %vm378, %v764
      %801 = vst [vmem:[#allocation3 + $0xb4] sm:$0xff] %v765
      %802 = vst.msk [vmem:[#allocation3 + $0xbc] sm:$0xf] %vm378, %v766
      %803 = vst [vmem:[#allocation3 + $0xc0] sm:$0xff] %v767
      %804 = vst.msk [vmem:[#allocation3 + $0xc8] sm:$0xf] %vm378, %v768
      %805 = vst [vmem:[#allocation3 + $0xcc] sm:$0xff] %v769
      %806 = vst.msk [vmem:[#allocation3 + $0xd4] sm:$0xf] %vm378, %v770
      %v807 = vld [vmem:[%s2] sm:$0xff]
      %v808 = vld [vmem:[%s2 + $0x8] sm:$0xff]
      %v809 = vld [vmem:[#allocation3] sm:$0xff]
      %v810 = vld [vmem:[#allocation3 + $0x8] sm:$0xf]
      %v811 = vld [vmem:[#allocation3 + $0xc] sm:$0xff]
      %v812 = vld [vmem:[#allocation3 + $0x14] sm:$0xf]
      %v813 = vld [vmem:[#allocation3 + $0x18] sm:$0xff]
      %v814 = vld [vmem:[#allocation3 + $0x20] sm:$0xf]
      %v815 = vld [vmem:[#allocation3 + $0x24] sm:$0xff]
      %v816 = vld [vmem:[#allocation3 + $0x2c] sm:$0xf]
      %v817 = vld [vmem:[#allocation3 + $0x30] sm:$0xff]
      %v818 = vld [vmem:[#allocation3 + $0x38] sm:$0xf]
      %v819 = vld [vmem:[#allocation3 + $0x3c] sm:$0xff]
      %v820 = vld [vmem:[#allocation3 + $0x44] sm:$0xf]
      %v821 = vld [vmem:[#allocation3 + $0x48] sm:$0xff]
      %v822 = vld [vmem:[#allocation3 + $0x50] sm:$0xf]
      %v823 = vld [vmem:[#allocation3 + $0x54] sm:$0xff]
      %v824 = vld [vmem:[#allocation3 + $0x5c] sm:$0xf]
      %v825 = vld [vmem:[#allocation3 + $0x60] sm:$0xff]
      %v826 = vld [vmem:[#allocation3 + $0x68] sm:$0xf]
      %v827 = vld [vmem:[#allocation3 + $0x6c] sm:$0xff]
      %v828 = vld [vmem:[#allocation3 + $0x74] sm:$0xf]
      %v829 = vld [vmem:[#allocation3 + $0x78] sm:$0xff]
      %v830 = vld [vmem:[#allocation3 + $0x80] sm:$0xf]
      %v831 = vld [vmem:[#allocation3 + $0x84] sm:$0xff]
      %v832 = vld [vmem:[#allocation3 + $0x8c] sm:$0xf]
      %v833 = vld [vmem:[#allocation3 + $0x90] sm:$0xff]
      %v834 = vld [vmem:[#allocation3 + $0x98] sm:$0xf]
      %v835 = vld [vmem:[#allocation3 + $0x9c] sm:$0xff]
      %v836 = vld [vmem:[#allocation3 + $0xa4] sm:$0xf]
      %v837 = vld [vmem:[#allocation3 + $0xa8] sm:$0xff]
      %v838 = vld [vmem:[#allocation3 + $0xb0] sm:$0xf]
      %v839 = vld [vmem:[#allocation3 + $0xb4] sm:$0xff]
      %v840 = vld [vmem:[#allocation3 + $0xbc] sm:$0xf]
      %v841 = vld [vmem:[#allocation3 + $0xc0] sm:$0xff]
      %v842 = vld [vmem:[#allocation3 + $0xc8] sm:$0xf]
      %v843 = vld [vmem:[#allocation3 + $0xcc] sm:$0xff]
      %v844 = vld [vmem:[#allocation3 + $0xd4] sm:$0xf]
      %v845 = vld [vmem:[%s7] sm:$0xff]
      %v846 = vld [vmem:[%s7 + $0x8] sm:$0xff]
      %848 = vset.pattern.permute.xlu0 0
      %849 = vperm.xlu0 %848, %v845
      %v850 = vpop.permute.xlu0 %849
      %853 = vset.pattern.permute.xlu0 0
      %854 = vperm.xlu0 %853, %v846
      %v855 = vpop.permute.xlu0 %854
      %v859 = vunpack.c.l.b16 %v807
      %v860 = vunpack.c.h.b16 %v807
      %v861 = vunpack.c.l.b16 %v808
      %v862 = vunpack.c.h.b16 %v808
      %v863 = vpack.c.b16 %v861, %v859
      %v864 = vpack.c.b16 %v862, %v860
      %v902 = vunpack.c.l.b16 %v809
      %v903 = vunpack.c.h.b16 %v809
      %v904 = vunpack.c.l.b16 %v810
      %v905 = vunpack.c.l.b16 %v811
      %v906 = vunpack.c.h.b16 %v811
      %v907 = vunpack.c.l.b16 %v812
      %v908 = vunpack.c.l.b16 %v813
      %v909 = vunpack.c.h.b16 %v813
      %v910 = vunpack.c.l.b16 %v814
      %v911 = vunpack.c.l.b16 %v815
      %v912 = vunpack.c.h.b16 %v815
      %v913 = vunpack.c.l.b16 %v816
      %v914 = vunpack.c.l.b16 %v817
      %v915 = vunpack.c.h.b16 %v817
      %v916 = vunpack.c.l.b16 %v818
      %v917 = vunpack.c.l.b16 %v819
      %v918 = vunpack.c.h.b16 %v819
      %v919 = vunpack.c.l.b16 %v820
      %v920 = vunpack.c.l.b16 %v821
      %v921 = vunpack.c.h.b16 %v821
      %v922 = vunpack.c.l.b16 %v822
      %v923 = vunpack.c.l.b16 %v823
      %v924 = vunpack.c.h.b16 %v823
      %v925 = vunpack.c.l.b16 %v824
      %v926 = vunpack.c.l.b16 %v825
      %v927 = vunpack.c.h.b16 %v825
      %v928 = vunpack.c.l.b16 %v826
      %v929 = vunpack.c.l.b16 %v827
      %v930 = vunpack.c.h.b16 %v827
      %v931 = vunpack.c.l.b16 %v828
      %v932 = vunpack.c.l.b16 %v829
      %v933 = vunpack.c.h.b16 %v829
      %v934 = vunpack.c.l.b16 %v830
      %v935 = vunpack.c.l.b16 %v831
      %v936 = vunpack.c.h.b16 %v831
      %v937 = vunpack.c.l.b16 %v832
      %v938 = vunpack.c.l.b16 %v833
      %v939 = vunpack.c.h.b16 %v833
      %v940 = vunpack.c.l.b16 %v834
      %v941 = vunpack.c.l.b16 %v835
      %v942 = vunpack.c.h.b16 %v835
      %v943 = vunpack.c.l.b16 %v836
      %v944 = vunpack.c.l.b16 %v837
      %v945 = vunpack.c.h.b16 %v837
      %v946 = vunpack.c.l.b16 %v838
      %v947 = vunpack.c.l.b16 %v839
      %v948 = vunpack.c.h.b16 %v839
      %v949 = vunpack.c.l.b16 %v840
      %v950 = vunpack.c.l.b16 %v841
      %v951 = vunpack.c.h.b16 %v841
      %v952 = vunpack.c.l.b16 %v842
      %v953 = vunpack.c.l.b16 %v843
      %v954 = vunpack.c.h.b16 %v843
      %v955 = vunpack.c.l.b16 %v844
      %v956 = vpack.c.b16 %v905, %v902
      %v957 = vpack.c.b16 %v906, %v903
      %v958 = vpack.c.b16 %v907, %v904
      %v959 = vpack.c.b16 %v911, %v908
      %v960 = vpack.c.b16 %v912, %v909
      %v961 = vpack.c.b16 %v913, %v910
      %v962 = vpack.c.b16 %v917, %v914
      %v963 = vpack.c.b16 %v918, %v915
      %v964 = vpack.c.b16 %v919, %v916
      %v965 = vpack.c.b16 %v923, %v920
      %v966 = vpack.c.b16 %v924, %v921
      %v967 = vpack.c.b16 %v925, %v922
      %v968 = vpack.c.b16 %v929, %v926
      %v969 = vpack.c.b16 %v930, %v927
      %v970 = vpack.c.b16 %v931, %v928
      %v971 = vpack.c.b16 %v935, %v932
      %v972 = vpack.c.b16 %v936, %v933
      %v973 = vpack.c.b16 %v937, %v934
      %v974 = vpack.c.b16 %v941, %v938
      %v975 = vpack.c.b16 %v942, %v939
      %v976 = vpack.c.b16 %v943, %v940
      %v977 = vpack.c.b16 %v947, %v944
      %v978 = vpack.c.b16 %v948, %v945
      %v979 = vpack.c.b16 %v949, %v946
      %v980 = vpack.c.b16 %v953, %v950
      %v981 = vpack.c.b16 %v954, %v951
      %v982 = vpack.c.b16 %v955, %v952
      %vm1010 = vcmask 130048
      %v1012 = vsel %vm1010, %v864, 0
      %1014 = vmatprep.subr.bf16.mxu0 %v978
      %1015 = vmatpush1.bf16.msra.mxu0 %v977
      %1016 = vmatprep.subr.bf16.mxu0 %v975
      %1017 = vmatpush1.bf16.msra.mxu0 %v974
      %1018 = vmatprep.subr.bf16.mxu0 %v972
      %1019 = vmatpush1.bf16.msra.mxu0 %v971
      %1020 = vmatprep.subr.bf16.mxu0 %v969
      %1021 = vmatpush1.bf16.msra.mxu0 %v968
      %1022 = vmatprep.subr.bf16.mxu0 %v966
      %1023 = vmatpush1.bf16.msra.mxu0 %v965
      %1024 = vmatprep.subr.bf16.mxu0 %v963
      %1025 = vmatpush1.bf16.msra.mxu0 %v962
      %1026 = vmatprep.subr.bf16.mxu0 %v960
      %1027 = vmatpush1.bf16.msra.mxu0 %v959
      %1028 = vmatprep.subr.bf16.mxu0 %v957
      %1029 = vmatpush1.bf16.msra.mxu0 %v956
      %1030 = vmatprep.subr.bf16.mxu0 0
      %1031 = vmatpush2.bf16.msra.mxu0 0
      %1032 = vmatprep.subr.bf16.mxu0 0
      %1033 = vmatpush2.bf16.msra.mxu0 0
      %1034 = vmatprep.subr.bf16.mxu0 0
      %1035 = vmatpush2.bf16.msra.mxu0 0
      %1036 = vmatprep.subr.bf16.mxu0 0
      %1037 = vmatpush2.bf16.msra.mxu0 0
      %1038 = vmatprep.subr.bf16.mxu0 0
      %1039 = vmatpush2.bf16.msra.mxu0 0
      %1040 = vmatprep.subr.bf16.mxu0 0
      %1041 = vmatpush2.bf16.msra.mxu0 0
      %1042 = vmatprep.subr.bf16.mxu0 0
      %1043 = vmatpush2.bf16.msra.mxu0 0
      %1044 = vmatprep.subr.bf16.mxu0 %v981
      %1045 = vmatpush2.bf16.msra.mxu0 %v980
      %1046 = vmatprep.mubr.bf16.mxu0 %v1012
      %1047 = vmatmul.mubr.bf16.gmra.mxu0 %v863
      %v1048 = vpop.f32.mrf.mxu0
      %v1049 = vadd.f32 %v850, %v1048
      %v1050 = vpop.f32.mrf.mxu0
      %v1051 = vadd.f32 %v850, %v1050
      %v1052 = vpop.f32.mrf.mxu0
      %v1053 = vadd.f32 %v855, %v1052
      %v1054 = vpop.f32.mrf.mxu0
      %v1055 = vadd.f32 %v855, %v1054
      %1056 = vdwg.mxu0
      %1057 = vmatprep.subr.bf16.mxu0 0
      %1058 = vmatpush1.bf16.msra.mxu0 %v979
      %1059 = vmatprep.subr.bf16.mxu0 0
      %1060 = vmatpush1.bf16.msra.mxu0 %v976
      %1061 = vmatprep.subr.bf16.mxu0 0
      %1062 = vmatpush1.bf16.msra.mxu0 %v973
      %1063 = vmatprep.subr.bf16.mxu0 0
      %1064 = vmatpush1.bf16.msra.mxu0 %v970
      %1065 = vmatprep.subr.bf16.mxu0 0
      %1066 = vmatpush1.bf16.msra.mxu0 %v967
      %1067 = vmatprep.subr.bf16.mxu0 0
      %1068 = vmatpush1.bf16.msra.mxu0 %v964
      %1069 = vmatprep.subr.bf16.mxu0 0
      %1070 = vmatpush1.bf16.msra.mxu0 %v961
      %1071 = vmatprep.subr.bf16.mxu0 0
      %1072 = vmatpush1.bf16.msra.mxu0 %v958
      %1073 = vmatprep.subr.bf16.mxu0 0
      %1074 = vmatpush2.bf16.msra.mxu0 0
      %1075 = vmatprep.subr.bf16.mxu0 0
      %1076 = vmatpush2.bf16.msra.mxu0 0
      %1077 = vmatprep.subr.bf16.mxu0 0
      %1078 = vmatpush2.bf16.msra.mxu0 0
      %1079 = vmatprep.subr.bf16.mxu0 0
      %1080 = vmatpush2.bf16.msra.mxu0 0
      %1081 = vmatprep.subr.bf16.mxu0 0
      %1082 = vmatpush2.bf16.msra.mxu0 0
      %1083 = vmatprep.subr.bf16.mxu0 0
      %1084 = vmatpush2.bf16.msra.mxu0 0
      %1085 = vmatprep.subr.bf16.mxu0 0
      %1086 = vmatpush2.bf16.msra.mxu0 0
      %1087 = vmatprep.subr.bf16.mxu0 0
      %1088 = vmatpush2.bf16.msra.mxu0 %v982
      %1089 = vmatprep.mubr.bf16.mxu0 %v1012
      %1090 = vmatmul.mubr.bf16.gmra.mxu0 %v863
      %v1091 = vpop.f32.mrf.mxu0
      %v1092 = vadd.f32 %v850, %v1091
      %v1093 = vpop.f32.mrf.mxu0
      %v1094 = vpop.f32.mrf.mxu0
      %v1095 = vadd.f32 %v855, %v1094
      %v1096 = vpop.f32.mrf.mxu0
      %1097 = vdwg.mxu0
      %v1099 = vlaneseq
      %v1100 = vshrl.u32 %v1099, 7
      %v1101 = vsub.s32 0, %v1100
      %v1102 = vrot.slane %v308, %v1101
      %v1103 = vlaneseq
      %v1104 = vshrl.u32 %v1103, 7
      %v1105 = vsub.s32 1, %v1104
      %v1106 = vrot.slane %v308, %v1105
      %v1107 = vlaneseq
      %v1108 = vshrl.u32 %v1107, 7
      %v1109 = vsub.s32 2, %v1108
      %v1110 = vrot.slane %v308, %v1109
      %v1114 = vmul.f32 %v1049, %v1102
      %v1115 = vmul.f32 %v1051, %v1106
      %v1116 = vmul.f32 %v1092, %v1110
      %v1117 = vmul.f32 %v1053, %v1102
      %v1118 = vmul.f32 %v1055, %v1106
      %v1119 = vmul.f32 %v1095, %v1110
      %v1120 = vpack.c.bf16 %v1117, %v1114
      %v1121 = vpack.c.bf16 %v1118, %v1115
      %v1122 = vpack.c.bf16 %v1119, %v1116
      %v1126 = vunpack.c.l.b16 %v1120
      %v1127 = vunpack.c.l.b16 %v1121
      %v1128 = vunpack.c.l.b16 %v1122
      %v1129 = vunpack.c.h.b16 %v1120
      %v1130 = vunpack.c.h.b16 %v1121
      %v1131 = vunpack.c.h.b16 %v1122
      %v1132 = vpack.c.b16 %v1127, %v1126
      %v1133 = vpack.c.b16 %v1128, %v1128
      %v1134 = vpack.c.b16 %v1130, %v1129
      %v1135 = vpack.c.b16 %v1131, %v1131
      %1140 = vst [vmem:[#allocation2 + $0x4] sm:$0xff] %v1132
      %1141 = vst.msk [vmem:[#allocation2 + $0xc] sm:$0xf] %vm378, %v1133
      %1142 = vst [vmem:[#allocation2 + $0x14] sm:$0xff] %v1134
      %1143 = vst.msk [vmem:[#allocation2 + $0x1c] sm:$0xf] %vm378, %v1135
      %v1144 = vld [vmem:[#allocation2] sm:$0xff]
      %v1145 = vld [vmem:[#allocation2 + $0x8] sm:$0xff]
      %v1146 = vld [vmem:[#allocation2 + $0x10] sm:$0xff]
      %v1147 = vld [vmem:[#allocation2 + $0x18] sm:$0xff]
      %1152 = vrot.lane.b32.xlu0 %v1144, 19
      %v1153 = vpop.permute.xlu0 %1152
      %1154 = vrot.lane.b32.xlu0 %v1145, 19
      %v1155 = vpop.permute.xlu0 %1154
      %1156 = vrot.lane.b32.xlu0 %v1146, 19
      %v1157 = vpop.permute.xlu0 %1156
      %1158 = vrot.lane.b32.xlu0 %v1147, 19
      %v1159 = vpop.permute.xlu0 %1158
      %v1160 = vrot.slane %v1153, 4
      %v1161 = vrot.slane %v1155, 4
      %v1162 = vrot.slane %v1157, 4
      %v1163 = vrot.slane %v1159, 4
      %v1164 = vsel %vm365, %v1160, %v1161
      %v1165 = vsel %vm367, %v1153, %v1164
      %v1166 = vsel %vm367, %v1155, %v1161
      %v1167 = vsel %vm365, %v1162, %v1163
      %v1168 = vsel %vm367, %v1157, %v1167
      %v1169 = vsel %vm367, %v1159, %v1163
      %1174 = vst [vmem:[#allocation4 + $0xd8] sm:$0xff] %v1165
      %1175 = vst.msk [vmem:[#allocation4 + $0xe0] sm:$0xf] %vm378, %v1166
      %1176 = vst [vmem:[#allocation4 + $0xe4] sm:$0xff] %v1168
      %1177 = vst.msk [vmem:[#allocation4 + $0xec] sm:$0xf] %vm378, %v1169
      %v1178 = vld [vmem:[#allocation2] sm:$0xff]
      %v1179 = vld [vmem:[#allocation2 + $0x8] sm:$0xff]
      %v1180 = vld [vmem:[#allocation2 + $0x10] sm:$0xff]
      %v1181 = vld [vmem:[#allocation2 + $0x18] sm:$0xff]
      %1186 = vrot.lane.b32.xlu0 %v1178, 18
      %v1187 = vpop.permute.xlu0 %1186
      %1188 = vrot.lane.b32.xlu0 %v1179, 18
      %v1189 = vpop.permute.xlu0 %1188
      %1190 = vrot.lane.b32.xlu0 %v1180, 18
      %v1191 = vpop.permute.xlu0 %1190
      %1192 = vrot.lane.b32.xlu0 %v1181, 18
      %v1193 = vpop.permute.xlu0 %1192
      %v1194 = vrot.slane %v1187, 4
      %v1195 = vrot.slane %v1189, 4
      %v1196 = vrot.slane %v1191, 4
      %v1197 = vrot.slane %v1193, 4
      %v1198 = vsel %vm365, %v1194, %v1195
      %v1199 = vsel %vm403, %v1187, %v1198
      %v1200 = vsel %vm403, %v1189, %v1195
      %v1201 = vsel %vm365, %v1196, %v1197
      %v1202 = vsel %vm403, %v1191, %v1201
      %v1203 = vsel %vm403, %v1193, %v1197
      %1208 = vst [vmem:[#allocation4 + $0xf0] sm:$0xff] %v1199
      %1209 = vst.msk [vmem:[#allocation4 + $0xf8] sm:$0xf] %vm378, %v1200
      %1210 = vst [vmem:[#allocation4 + $0xfc] sm:$0xff] %v1202
      %1211 = vst.msk [vmem:[#allocation4 + $0x104] sm:$0xf] %vm378, %v1203
      %v1212 = vld [vmem:[#allocation2] sm:$0xff]
      %v1213 = vld [vmem:[#allocation2 + $0x8] sm:$0xff]
      %v1214 = vld [vmem:[#allocation2 + $0x10] sm:$0xff]
      %v1215 = vld [vmem:[#allocation2 + $0x18] sm:$0xff]
      %1220 = vrot.lane.b32.xlu0 %v1212, 17
      %v1221 = vpop.permute.xlu0 %1220
      %1222 = vrot.lane.b32.xlu0 %v1213, 17
      %v1223 = vpop.permute.xlu0 %1222
      %1224 = vrot.lane.b32.xlu0 %v1214, 17
      %v1225 = vpop.permute.xlu0 %1224
      %1226 = vrot.lane.b32.xlu0 %v1215, 17
      %v1227 = vpop.permute.xlu0 %1226
      %v1228 = vrot.slane %v1221, 4
      %v1229 = vrot.slane %v1223, 4
      %v1230 = vrot.slane %v1225, 4
      %v1231 = vrot.slane %v1227, 4
      %v1232 = vsel %vm365, %v1228, %v1229
      %v1233 = vsel %vm438, %v1221, %v1232
      %v1234 = vsel %vm438, %v1223, %v1229
      %v1235 = vsel %vm365, %v1230, %v1231
      %v1236 = vsel %vm438, %v1225, %v1235
      %v1237 = vsel %vm438, %v1227, %v1231
      %1242 = vst [vmem:[#allocation4 + $0x108] sm:$0xff] %v1233
      %1243 = vst.msk [vmem:[#allocation4 + $0x110] sm:$0xf] %vm378, %v1234
      %1244 = vst [vmem:[#allocation4 + $0x114] sm:$0xff] %v1236
      %1245 = vst.msk [vmem:[#allocation4 + $0x11c] sm:$0xf] %vm378, %v1237
      %v1246 = vld [vmem:[#allocation2] sm:$0xff]
      %v1247 = vld [vmem:[#allocation2 + $0x8] sm:$0xff]
      %v1248 = vld [vmem:[#allocation2 + $0x10] sm:$0xff]
      %v1249 = vld [vmem:[#allocation2 + $0x18] sm:$0xff]
      %1254 = vrot.lane.b32.xlu0 %v1246, 1
      %v1255 = vpop.permute.xlu0 %1254
      %1256 = vrot.lane.b32.xlu0 %v1247, 1
      %v1257 = vpop.permute.xlu0 %1256
      %1258 = vrot.lane.b32.xlu0 %v1248, 1
      %v1259 = vpop.permute.xlu0 %1258
      %1260 = vrot.lane.b32.xlu0 %v1249, 1
      %v1261 = vpop.permute.xlu0 %1260
      %v1262 = vrot.slane %v1255, 4
      %v1263 = vrot.slane %v1257, 4
      %v1264 = vrot.slane %v1259, 4
      %v1265 = vrot.slane %v1261, 4
      %v1266 = vsel %vm365, %v1262, %v1263
      %v1267 = vsel %vm473, %v1255, %v1266
      %v1268 = vsel %vm473, %v1257, %v1263
      %v1269 = vsel %vm365, %v1264, %v1265
      %v1270 = vsel %vm473, %v1259, %v1269
      %v1271 = vsel %vm473, %v1261, %v1265
      %1276 = vst [vmem:[#allocation4 + $0x120] sm:$0xff] %v1267
      %1277 = vst.msk [vmem:[#allocation4 + $0x128] sm:$0xf] %vm378, %v1268
      %1278 = vst [vmem:[#allocation4 + $0x12c] sm:$0xff] %v1270
      %1279 = vst.msk [vmem:[#allocation4 + $0x134] sm:$0xf] %vm378, %v1271
      %v1280 = vld [vmem:[#allocation2 + $0x4] sm:$0xff]
      %v1281 = vld [vmem:[#allocation2 + $0xc] sm:$0xf]
      %v1282 = vld [vmem:[#allocation2 + $0x14] sm:$0xff]
      %v1283 = vld [vmem:[#allocation2 + $0x1c] sm:$0xf]
      %1284 = vst [vmem:[#allocation4 + $0x138] sm:$0xff] %v1280
      %1285 = vst.msk [vmem:[#allocation4 + $0x140] sm:$0xf] %vm378, %v1281
      %1286 = vst [vmem:[#allocation4 + $0x144] sm:$0xff] %v1282
      %1287 = vst.msk [vmem:[#allocation4 + $0x14c] sm:$0xf] %vm378, %v1283
      %v1288 = vld [vmem:[#allocation2 + $0x4] sm:$0xff]
      %v1289 = vld [vmem:[#allocation2 + $0xc] sm:$0xf]
      %v1290 = vld [vmem:[#allocation2 + $0x14] sm:$0xff]
      %v1291 = vld [vmem:[#allocation2 + $0x1c] sm:$0xf]
      %1296 = vrot.lane.b32.xlu0 %v1288, 127
      %v1297 = vpop.permute.xlu0 %1296
      %1298 = vrot.lane.b32.xlu0 %v1289, 127
      %v1299 = vpop.permute.xlu0 %1298
      %1300 = vrot.lane.b32.xlu0 %v1290, 127
      %v1301 = vpop.permute.xlu0 %1300
      %1302 = vrot.lane.b32.xlu0 %v1291, 127
      %v1303 = vpop.permute.xlu0 %1302
      %v1304 = vrot.slane %v1297, 4
      %v1305 = vrot.slane %v1299, 4
      %v1306 = vrot.slane %v1301, 4
      %v1307 = vrot.slane %v1303, 4
      %v1308 = vsel %vm365, %v1304, %v1305
      %v1309 = vsel %vm516, %v1297, %v1308
      %v1310 = vsel %vm365, %v1306, %v1307
      %v1311 = vsel %vm516, %v1301, %v1310
      %1316 = vst [vmem:[#allocation4 + $0x150] sm:$0xff] %v1309
      %1317 = vst.msk [vmem:[#allocation4 + $0x158] sm:$0xf] %vm378, %v1299
      %1318 = vst [vmem:[#allocation4 + $0x15c] sm:$0xff] %v1311
      %1319 = vst.msk [vmem:[#allocation4 + $0x164] sm:$0xf] %vm378, %v1303
      %v1320 = vld [vmem:[#allocation2 + $0x4] sm:$0xff]
      %v1321 = vld [vmem:[#allocation2 + $0xc] sm:$0xf]
      %v1322 = vld [vmem:[#allocation2 + $0x14] sm:$0xff]
      %v1323 = vld [vmem:[#allocation2 + $0x1c] sm:$0xf]
      %1328 = vrot.lane.b32.xlu0 %v1320, 111
      %v1329 = vpop.permute.xlu0 %1328
      %1330 = vrot.lane.b32.xlu0 %v1321, 111
      %v1331 = vpop.permute.xlu0 %1330
      %1332 = vrot.lane.b32.xlu0 %v1322, 111
      %v1333 = vpop.permute.xlu0 %1332
      %1334 = vrot.lane.b32.xlu0 %v1323, 111
      %v1335 = vpop.permute.xlu0 %1334
      %v1336 = vrot.slane %v1329, 4
      %v1337 = vrot.slane %v1331, 4
      %v1338 = vrot.slane %v1333, 4
      %v1339 = vrot.slane %v1335, 4
      %v1340 = vsel %vm365, %v1336, %v1337
      %v1341 = vsel %vm549, %v1329, %v1340
      %v1342 = vsel %vm365, %v1338, %v1339
      %v1343 = vsel %vm549, %v1333, %v1342
      %1348 = vst [vmem:[#allocation4 + $0x168] sm:$0xff] %v1341
      %1349 = vst.msk [vmem:[#allocation4 + $0x170] sm:$0xf] %vm378, %v1331
      %1350 = vst [vmem:[#allocation4 + $0x174] sm:$0xff] %v1343
      %1351 = vst.msk [vmem:[#allocation4 + $0x17c] sm:$0xf] %vm378, %v1335
      %v1352 = vld [vmem:[#allocation2 + $0x4] sm:$0xff]
      %v1353 = vld [vmem:[#allocation2 + $0xc] sm:$0xf]
      %v1354 = vld [vmem:[#allocation2 + $0x14] sm:$0xff]
      %v1355 = vld [vmem:[#allocation2 + $0x1c] sm:$0xf]
      %1360 = vrot.lane.b32.xlu0 %v1352, 110
      %v1361 = vpop.permute.xlu0 %1360
      %1362 = vrot.lane.b32.xlu0 %v1353, 110
      %v1363 = vpop.permute.xlu0 %1362
      %1364 = vrot.lane.b32.xlu0 %v1354, 110
      %v1365 = vpop.permute.xlu0 %1364
      %1366 = vrot.lane.b32.xlu0 %v1355, 110
      %v1367 = vpop.permute.xlu0 %1366
      %v1368 = vrot.slane %v1361, 4
      %v1369 = vrot.slane %v1363, 4
      %v1370 = vrot.slane %v1365, 4
      %v1371 = vrot.slane %v1367, 4
      %v1372 = vsel %vm365, %v1368, %v1369
      %v1373 = vsel %vm582, %v1361, %v1372
      %v1374 = vsel %vm365, %v1370, %v1371
      %v1375 = vsel %vm582, %v1365, %v1374
      %1380 = vst [vmem:[#allocation4 + $0x180] sm:$0xff] %v1373
      %1381 = vst.msk [vmem:[#allocation4 + $0x188] sm:$0xf] %vm378, %v1363
      %1382 = vst [vmem:[#allocation4 + $0x18c] sm:$0xff] %v1375
      %1383 = vst.msk [vmem:[#allocation4 + $0x194] sm:$0xf] %vm378, %v1367
      %v1384 = vld [vmem:[#allocation2 + $0x4] sm:$0xff]
      %v1385 = vld [vmem:[#allocation2 + $0xc] sm:$0xf]
      %v1386 = vld [vmem:[#allocation2 + $0x14] sm:$0xff]
      %v1387 = vld [vmem:[#allocation2 + $0x1c] sm:$0xf]
      %1392 = vrot.lane.b32.xlu0 %v1384, 109
      %v1393 = vpop.permute.xlu0 %1392
      %1394 = vrot.lane.b32.xlu0 %v1385, 109
      %v1395 = vpop.permute.xlu0 %1394
      %1396 = vrot.lane.b32.xlu0 %v1386, 109
      %v1397 = vpop.permute.xlu0 %1396
      %1398 = vrot.lane.b32.xlu0 %v1387, 109
      %v1399 = vpop.permute.xlu0 %1398
      %v1400 = vrot.slane %v1393, 4
      %v1401 = vrot.slane %v1395, 4
      %v1402 = vrot.slane %v1397, 4
      %v1403 = vrot.slane %v1399, 4
      %v1404 = vsel %vm365, %v1400, %v1401
      %v1405 = vsel %vm615, %v1393, %v1404
      %v1406 = vsel %vm365, %v1402, %v1403
      %v1407 = vsel %vm615, %v1397, %v1406
      %1412 = vst [vmem:[#allocation4 + $0x198] sm:$0xff] %v1405
      %1413 = vst.msk [vmem:[#allocation4 + $0x1a0] sm:$0xf] %vm378, %v1395
      %1414 = vst [vmem:[#allocation4 + $0x1a4] sm:$0xff] %v1407
      %1415 = vst.msk [vmem:[#allocation4 + $0x1ac] sm:$0xf] %vm378, %v1399
      %v1416 = vld [vmem:[#allocation4 + $0xd8] sm:$0xff]
      %v1417 = vld [vmem:[#allocation4 + $0xe0] sm:$0xf]
      %v1418 = vld [vmem:[#allocation4 + $0xe4] sm:$0xff]
      %v1419 = vld [vmem:[#allocation4 + $0xec] sm:$0xf]
      %v1420 = vld [vmem:[#allocation4 + $0xf0] sm:$0xff]
      %v1421 = vld [vmem:[#allocation4 + $0xf8] sm:$0xf]
      %v1422 = vld [vmem:[#allocation4 + $0xfc] sm:$0xff]
      %v1423 = vld [vmem:[#allocation4 + $0x104] sm:$0xf]
      %v1424 = vld [vmem:[#allocation4 + $0x108] sm:$0xff]
      %v1425 = vld [vmem:[#allocation4 + $0x110] sm:$0xf]
      %v1426 = vld [vmem:[#allocation4 + $0x114] sm:$0xff]
      %v1427 = vld [vmem:[#allocation4 + $0x11c] sm:$0xf]
      %v1428 = vld [vmem:[#allocation4 + $0x120] sm:$0xff]
      %v1429 = vld [vmem:[#allocation4 + $0x128] sm:$0xf]
      %v1430 = vld [vmem:[#allocation4 + $0x12c] sm:$0xff]
      %v1431 = vld [vmem:[#allocation4 + $0x134] sm:$0xf]
      %v1432 = vld [vmem:[#allocation4 + $0x138] sm:$0xff]
      %v1433 = vld [vmem:[#allocation4 + $0x140] sm:$0xf]
      %v1434 = vld [vmem:[#allocation4 + $0x144] sm:$0xff]
      %v1435 = vld [vmem:[#allocation4 + $0x14c] sm:$0xf]
      %v1436 = vld [vmem:[#allocation4 + $0x150] sm:$0xff]
      %v1437 = vld [vmem:[#allocation4 + $0x158] sm:$0xf]
      %v1438 = vld [vmem:[#allocation4 + $0x15c] sm:$0xff]
      %v1439 = vld [vmem:[#allocation4 + $0x164] sm:$0xf]
      %v1440 = vld [vmem:[#allocation4 + $0x168] sm:$0xff]
      %v1441 = vld [vmem:[#allocation4 + $0x170] sm:$0xf]
      %v1442 = vld [vmem:[#allocation4 + $0x174] sm:$0xff]
      %v1443 = vld [vmem:[#allocation4 + $0x17c] sm:$0xf]
      %v1444 = vld [vmem:[#allocation4 + $0x180] sm:$0xff]
      %v1445 = vld [vmem:[#allocation4 + $0x188] sm:$0xf]
      %v1446 = vld [vmem:[#allocation4 + $0x18c] sm:$0xff]
      %v1447 = vld [vmem:[#allocation4 + $0x194] sm:$0xf]
      %v1448 = vld [vmem:[#allocation4 + $0x198] sm:$0xff]
      %v1449 = vld [vmem:[#allocation4 + $0x1a0] sm:$0xf]
      %v1450 = vld [vmem:[#allocation4 + $0x1a4] sm:$0xff]
      %v1451 = vld [vmem:[#allocation4 + $0x1ac] sm:$0xf]
      %vm1452 = vcmp.ge.bf16.partialorder %v1416, 0
      %vm1453 = vcmp.ge.bf16.partialorder %v1417, 0
      %vm1454 = vcmp.ge.bf16.partialorder %v1418, 0
      %vm1455 = vcmp.ge.bf16.partialorder %v1419, 0
      %vm1456 = vcmp.ge.bf16.partialorder %v1420, 0
      %vm1457 = vcmp.ge.bf16.partialorder %v1421, 0
      %vm1458 = vcmp.ge.bf16.partialorder %v1422, 0
      %vm1459 = vcmp.ge.bf16.partialorder %v1423, 0
      %vm1460 = vcmp.ge.bf16.partialorder %v1424, 0
      %vm1461 = vcmp.ge.bf16.partialorder %v1425, 0
      %vm1462 = vcmp.ge.bf16.partialorder %v1426, 0
      %vm1463 = vcmp.ge.bf16.partialorder %v1427, 0
      %vm1464 = vcmp.ge.bf16.partialorder %v1428, 0
      %vm1465 = vcmp.ge.bf16.partialorder %v1429, 0
      %vm1466 = vcmp.ge.bf16.partialorder %v1430, 0
      %vm1467 = vcmp.ge.bf16.partialorder %v1431, 0
      %vm1468 = vcmp.ge.bf16.partialorder %v1432, 0
      %vm1469 = vcmp.ge.bf16.partialorder %v1433, 0
      %vm1470 = vcmp.ge.bf16.partialorder %v1434, 0
      %vm1471 = vcmp.ge.bf16.partialorder %v1435, 0
      %vm1472 = vcmp.ge.bf16.partialorder %v1436, 0
      %vm1473 = vcmp.ge.bf16.partialorder %v1437, 0
      %vm1474 = vcmp.ge.bf16.partialorder %v1438, 0
      %vm1475 = vcmp.ge.bf16.partialorder %v1439, 0
      %vm1476 = vcmp.ge.bf16.partialorder %v1440, 0
      %vm1477 = vcmp.ge.bf16.partialorder %v1441, 0
      %vm1478 = vcmp.ge.bf16.partialorder %v1442, 0
      %vm1479 = vcmp.ge.bf16.partialorder %v1443, 0
      %vm1480 = vcmp.ge.bf16.partialorder %v1444, 0
      %vm1481 = vcmp.ge.bf16.partialorder %v1445, 0
      %vm1482 = vcmp.ge.bf16.partialorder %v1446, 0
      %vm1483 = vcmp.ge.bf16.partialorder %v1447, 0
      %vm1484 = vcmp.ge.bf16.partialorder %v1448, 0
      %vm1485 = vcmp.ge.bf16.partialorder %v1449, 0
      %vm1486 = vcmp.ge.bf16.partialorder %v1450, 0
      %vm1487 = vcmp.ge.bf16.partialorder %v1451, 0
      %v1488 = vmul.bf16 %v1416, 1036860877
      %v1489 = vmul.bf16 %v1417, 1036860877
      %v1490 = vmul.bf16 %v1418, 1036860877
      %v1491 = vmul.bf16 %v1419, 1036860877
      %v1492 = vmul.bf16 %v1420, 1036860877
      %v1493 = vmul.bf16 %v1421, 1036860877
      %v1494 = vmul.bf16 %v1422, 1036860877
      %v1495 = vmul.bf16 %v1423, 1036860877
      %v1496 = vmul.bf16 %v1424, 1036860877
      %v1497 = vmul.bf16 %v1425, 1036860877
      %v1498 = vmul.bf16 %v1426, 1036860877
      %v1499 = vmul.bf16 %v1427, 1036860877
      %v1500 = vmul.bf16 %v1428, 1036860877
      %v1501 = vmul.bf16 %v1429, 1036860877
      %v1502 = vmul.bf16 %v1430, 1036860877
      %v1503 = vmul.bf16 %v1431, 1036860877
      %v1504 = vmul.bf16 %v1432, 1036860877
      %v1505 = vmul.bf16 %v1433, 1036860877
      %v1506 = vmul.bf16 %v1434, 1036860877
      %v1507 = vmul.bf16 %v1435, 1036860877
      %v1508 = vmul.bf16 %v1436, 1036860877
      %v1509 = vmul.bf16 %v1437, 1036860877
      %v1510 = vmul.bf16 %v1438, 1036860877
      %v1511 = vmul.bf16 %v1439, 1036860877
      %v1512 = vmul.bf16 %v1440, 1036860877
      %v1513 = vmul.bf16 %v1441, 1036860877
      %v1514 = vmul.bf16 %v1442, 1036860877
      %v1515 = vmul.bf16 %v1443, 1036860877
      %v1516 = vmul.bf16 %v1444, 1036860877
      %v1517 = vmul.bf16 %v1445, 1036860877
      %v1518 = vmul.bf16 %v1446, 1036860877
      %v1519 = vmul.bf16 %v1447, 1036860877
      %v1520 = vmul.bf16 %v1448, 1036860877
      %v1521 = vmul.bf16 %v1449, 1036860877
      %v1522 = vmul.bf16 %v1450, 1036860877
      %v1523 = vmul.bf16 %v1451, 1036860877
      %v1524 = vsel %vm1452, %v1416, %v1488
      %v1525 = vsel %vm1453, %v1417, %v1489
      %v1526 = vsel %vm1454, %v1418, %v1490
      %v1527 = vsel %vm1455, %v1419, %v1491
      %v1528 = vsel %vm1456, %v1420, %v1492
      %v1529 = vsel %vm1457, %v1421, %v1493
      %v1530 = vsel %vm1458, %v1422, %v1494
      %v1531 = vsel %vm1459, %v1423, %v1495
      %v1532 = vsel %vm1460, %v1424, %v1496
      %v1533 = vsel %vm1461, %v1425, %v1497
      %v1534 = vsel %vm1462, %v1426, %v1498
      %v1535 = vsel %vm1463, %v1427, %v1499
      %v1536 = vsel %vm1464, %v1428, %v1500
      %v1537 = vsel %vm1465, %v1429, %v1501
      %v1538 = vsel %vm1466, %v1430, %v1502
      %v1539 = vsel %vm1467, %v1431, %v1503
      %v1540 = vsel %vm1468, %v1432, %v1504
      %v1541 = vsel %vm1469, %v1433, %v1505
      %v1542 = vsel %vm1470, %v1434, %v1506
      %v1543 = vsel %vm1471, %v1435, %v1507
      %v1544 = vsel %vm1472, %v1436, %v1508
      %v1545 = vsel %vm1473, %v1437, %v1509
      %v1546 = vsel %vm1474, %v1438, %v1510
      %v1547 = vsel %vm1475, %v1439, %v1511
      %v1548 = vsel %vm1476, %v1440, %v1512
      %v1549 = vsel %vm1477, %v1441, %v1513
      %v1550 = vsel %vm1478, %v1442, %v1514
      %v1551 = vsel %vm1479, %v1443, %v1515
      %v1552 = vsel %vm1480, %v1444, %v1516
      %v1553 = vsel %vm1481, %v1445, %v1517
      %v1554 = vsel %vm1482, %v1446, %v1518
      %v1555 = vsel %vm1483, %v1447, %v1519
      %v1556 = vsel %vm1484, %v1448, %v1520
      %v1557 = vsel %vm1485, %v1449, %v1521
      %v1558 = vsel %vm1486, %v1450, %v1522
      %v1559 = vsel %vm1487, %v1451, %v1523
      %1560 = vst [vmem:[#allocation3 + $0xd8] sm:$0xff] %v1524
      %1561 = vst.msk [vmem:[#allocation3 + $0xe0] sm:$0xf] %vm378, %v1525
      %1562 = vst [vmem:[#allocation3 + $0xe4] sm:$0xff] %v1526
      %1563 = vst.msk [vmem:[#allocation3 + $0xec] sm:$0xf] %vm378, %v1527
      %1564 = vst [vmem:[#allocation3 + $0xf0] sm:$0xff] %v1528
      %1565 = vst.msk [vmem:[#allocation3 + $0xf8] sm:$0xf] %vm378, %v1529
      %1566 = vst [vmem:[#allocation3 + $0xfc] sm:$0xff] %v1530
      %1567 = vst.msk [vmem:[#allocation3 + $0x104] sm:$0xf] %vm378, %v1531
      %1568 = vst [vmem:[#allocation3 + $0x108] sm:$0xff] %v1532
      %1569 = vst.msk [vmem:[#allocation3 + $0x110] sm:$0xf] %vm378, %v1533
      %1570 = vst [vmem:[#allocation3 + $0x114] sm:$0xff] %v1534
      %1571 = vst.msk [vmem:[#allocation3 + $0x11c] sm:$0xf] %vm378, %v1535
      %1572 = vst [vmem:[#allocation3 + $0x120] sm:$0xff] %v1536
      %1573 = vst.msk [vmem:[#allocation3 + $0x128] sm:$0xf] %vm378, %v1537
      %1574 = vst [vmem:[#allocation3 + $0x12c] sm:$0xff] %v1538
      %1575 = vst.msk [vmem:[#allocation3 + $0x134] sm:$0xf] %vm378, %v1539
      %1576 = vst [vmem:[#allocation3 + $0x138] sm:$0xff] %v1540
      %1577 = vst.msk [vmem:[#allocation3 + $0x140] sm:$0xf] %vm378, %v1541
      %1578 = vst [vmem:[#allocation3 + $0x144] sm:$0xff] %v1542
      %1579 = vst.msk [vmem:[#allocation3 + $0x14c] sm:$0xf] %vm378, %v1543
      %1580 = vst [vmem:[#allocation3 + $0x150] sm:$0xff] %v1544
      %1581 = vst.msk [vmem:[#allocation3 + $0x158] sm:$0xf] %vm378, %v1545
      %1582 = vst [vmem:[#allocation3 + $0x15c] sm:$0xff] %v1546
      %1583 = vst.msk [vmem:[#allocation3 + $0x164] sm:$0xf] %vm378, %v1547
      %1584 = vst [vmem:[#allocation3 + $0x168] sm:$0xff] %v1548
      %1585 = vst.msk [vmem:[#allocation3 + $0x170] sm:$0xf] %vm378, %v1549
      %1586 = vst [vmem:[#allocation3 + $0x174] sm:$0xff] %v1550
      %1587 = vst.msk [vmem:[#allocation3 + $0x17c] sm:$0xf] %vm378, %v1551
      %1588 = vst [vmem:[#allocation3 + $0x180] sm:$0xff] %v1552
      %1589 = vst.msk [vmem:[#allocation3 + $0x188] sm:$0xf] %vm378, %v1553
      %1590 = vst [vmem:[#allocation3 + $0x18c] sm:$0xff] %v1554
      %1591 = vst.msk [vmem:[#allocation3 + $0x194] sm:$0xf] %vm378, %v1555
      %1592 = vst [vmem:[#allocation3 + $0x198] sm:$0xff] %v1556
      %1593 = vst.msk [vmem:[#allocation3 + $0x1a0] sm:$0xf] %vm378, %v1557
      %1594 = vst [vmem:[#allocation3 + $0x1a4] sm:$0xff] %v1558
      %1595 = vst.msk [vmem:[#allocation3 + $0x1ac] sm:$0xf] %vm378, %v1559
      %v1596 = vld [vmem:[%s3] sm:$0xff]
      %v1597 = vld [vmem:[%s3 + $0x8] sm:$0xf]
      %v1598 = vld [vmem:[%s3 + $0xc] sm:$0xff]
      %v1599 = vld [vmem:[%s3 + $0x14] sm:$0xf]
      %v1600 = vld [vmem:[#allocation3] sm:$0xff]
      %v1601 = vld [vmem:[#allocation3 + $0x8] sm:$0xf]
      %v1602 = vld [vmem:[#allocation3 + $0xc] sm:$0xff]
      %v1603 = vld [vmem:[#allocation3 + $0x14] sm:$0xf]
      %v1604 = vld [vmem:[#allocation3 + $0x18] sm:$0xff]
      %v1605 = vld [vmem:[#allocation3 + $0x20] sm:$0xf]
      %v1606 = vld [vmem:[#allocation3 + $0x24] sm:$0xff]
      %v1607 = vld [vmem:[#allocation3 + $0x2c] sm:$0xf]
      %v1608 = vld [vmem:[#allocation3 + $0x30] sm:$0xff]
      %v1609 = vld [vmem:[#allocation3 + $0x38] sm:$0xf]
      %v1610 = vld [vmem:[#allocation3 + $0x3c] sm:$0xff]
      %v1611 = vld [vmem:[#allocation3 + $0x44] sm:$0xf]
      %v1612 = vld [vmem:[#allocation3 + $0x48] sm:$0xff]
      %v1613 = vld [vmem:[#allocation3 + $0x50] sm:$0xf]
      %v1614 = vld [vmem:[#allocation3 + $0x54] sm:$0xff]
      %v1615 = vld [vmem:[#allocation3 + $0x5c] sm:$0xf]
      %v1616 = vld [vmem:[#allocation3 + $0x60] sm:$0xff]
      %v1617 = vld [vmem:[#allocation3 + $0x68] sm:$0xf]
      %v1618 = vld [vmem:[#allocation3 + $0x6c] sm:$0xff]
      %v1619 = vld [vmem:[#allocation3 + $0x74] sm:$0xf]
      %v1620 = vld [vmem:[#allocation3 + $0x78] sm:$0xff]
      %v1621 = vld [vmem:[#allocation3 + $0x80] sm:$0xf]
      %v1622 = vld [vmem:[#allocation3 + $0x84] sm:$0xff]
      %v1623 = vld [vmem:[#allocation3 + $0x8c] sm:$0xf]
      %v1624 = vld [vmem:[#allocation3 + $0x90] sm:$0xff]
      %v1625 = vld [vmem:[#allocation3 + $0x98] sm:$0xf]
      %v1626 = vld [vmem:[#allocation3 + $0x9c] sm:$0xff]
      %v1627 = vld [vmem:[#allocation3 + $0xa4] sm:$0xf]
      %v1628 = vld [vmem:[#allocation3 + $0xa8] sm:$0xff]
      %v1629 = vld [vmem:[#allocation3 + $0xb0] sm:$0xf]
      %v1630 = vld [vmem:[#allocation3 + $0xb4] sm:$0xff]
      %v1631 = vld [vmem:[#allocation3 + $0xbc] sm:$0xf]
      %v1632 = vld [vmem:[#allocation3 + $0xc0] sm:$0xff]
      %v1633 = vld [vmem:[#allocation3 + $0xc8] sm:$0xf]
      %v1634 = vld [vmem:[#allocation3 + $0xcc] sm:$0xff]
      %v1635 = vld [vmem:[#allocation3 + $0xd4] sm:$0xf]
      %v1636 = vld [vmem:[#allocation3 + $0xd8] sm:$0xff]
      %v1637 = vld [vmem:[#allocation3 + $0xe0] sm:$0xf]
      %v1638 = vld [vmem:[#allocation3 + $0xe4] sm:$0xff]
      %v1639 = vld [vmem:[#allocation3 + $0xec] sm:$0xf]
      %v1640 = vld [vmem:[#allocation3 + $0xf0] sm:$0xff]
      %v1641 = vld [vmem:[#allocation3 + $0xf8] sm:$0xf]
      %v1642 = vld [vmem:[#allocation3 + $0xfc] sm:$0xff]
      %v1643 = vld [vmem:[#allocation3 + $0x104] sm:$0xf]
      %v1644 = vld [vmem:[#allocation3 + $0x108] sm:$0xff]
      %v1645 = vld [vmem:[#allocation3 + $0x110] sm:$0xf]
      %v1646 = vld [vmem:[#allocation3 + $0x114] sm:$0xff]
      %v1647 = vld [vmem:[#allocation3 + $0x11c] sm:$0xf]
      %v1648 = vld [vmem:[#allocation3 + $0x120] sm:$0xff]
      %v1649 = vld [vmem:[#allocation3 + $0x128] sm:$0xf]
      %v1650 = vld [vmem:[#allocation3 + $0x12c] sm:$0xff]
      %v1651 = vld [vmem:[#allocation3 + $0x134] sm:$0xf]
      %v1652 = vld [vmem:[#allocation3 + $0x138] sm:$0xff]
      %v1653 = vld [vmem:[#allocation3 + $0x140] sm:$0xf]
      %v1654 = vld [vmem:[#allocation3 + $0x144] sm:$0xff]
      %v1655 = vld [vmem:[#allocation3 + $0x14c] sm:$0xf]
      %v1656 = vld [vmem:[#allocation3 + $0x150] sm:$0xff]
      %v1657 = vld [vmem:[#allocation3 + $0x158] sm:$0xf]
      %v1658 = vld [vmem:[#allocation3 + $0x15c] sm:$0xff]
      %v1659 = vld [vmem:[#allocation3 + $0x164] sm:$0xf]
      %v1660 = vld [vmem:[#allocation3 + $0x168] sm:$0xff]
      %v1661 = vld [vmem:[#allocation3 + $0x170] sm:$0xf]
      %v1662 = vld [vmem:[#allocation3 + $0x174] sm:$0xff]
      %v1663 = vld [vmem:[#allocation3 + $0x17c] sm:$0xf]
      %v1664 = vld [vmem:[#allocation3 + $0x180] sm:$0xff]
      %v1665 = vld [vmem:[#allocation3 + $0x188] sm:$0xf]
      %v1666 = vld [vmem:[#allocation3 + $0x18c] sm:$0xff]
      %v1667 = vld [vmem:[#allocation3 + $0x194] sm:$0xf]
      %v1668 = vld [vmem:[#allocation3 + $0x198] sm:$0xff]
      %v1669 = vld [vmem:[#allocation3 + $0x1a0] sm:$0xf]
      %v1670 = vld [vmem:[#allocation3 + $0x1a4] sm:$0xff]
      %v1671 = vld [vmem:[#allocation3 + $0x1ac] sm:$0xf]
      %s1672 = scalar_lea.vmem %s7, 16
      %v1673 = vld [vmem:[%s1672] sm:$0xff]
      %v1674 = vld [vmem:[%s1672 + $0x8] sm:$0xff]
      %1676 = vset.pattern.permute.xlu0 0
      %1677 = vperm.xlu0 %1676, %v1673
      %v1678 = vpop.permute.xlu0 %1677
      %1681 = vset.pattern.permute.xlu0 0
      %1682 = vperm.xlu0 %1681, %v1674
      %v1683 = vpop.permute.xlu0 %1682
      %v1689 = vunpack.c.l.b16 %v1596
      %v1690 = vunpack.c.h.b16 %v1596
      %v1691 = vunpack.c.l.b16 %v1597
      %v1692 = vunpack.c.l.b16 %v1598
      %v1693 = vunpack.c.h.b16 %v1598
      %v1694 = vunpack.c.l.b16 %v1599
      %v1695 = vpack.c.b16 %v1692, %v1689
      %v1696 = vpack.c.b16 %v1693, %v1690
      %v1697 = vpack.c.b16 %v1694, %v1691
      %v1772 = vunpack.c.l.b16 %v1600
      %v1773 = vunpack.c.h.b16 %v1600
      %v1774 = vunpack.c.l.b16 %v1601
      %v1775 = vunpack.c.l.b16 %v1602
      %v1776 = vunpack.c.h.b16 %v1602
      %v1777 = vunpack.c.l.b16 %v1603
      %v1778 = vunpack.c.l.b16 %v1604
      %v1779 = vunpack.c.h.b16 %v1604
      %v1780 = vunpack.c.l.b16 %v1605
      %v1781 = vunpack.c.l.b16 %v1606
      %v1782 = vunpack.c.h.b16 %v1606
      %v1783 = vunpack.c.l.b16 %v1607
      %v1784 = vunpack.c.l.b16 %v1608
      %v1785 = vunpack.c.h.b16 %v1608
      %v1786 = vunpack.c.l.b16 %v1609
      %v1787 = vunpack.c.l.b16 %v1610
      %v1788 = vunpack.c.h.b16 %v1610
      %v1789 = vunpack.c.l.b16 %v1611
      %v1790 = vunpack.c.l.b16 %v1612
      %v1791 = vunpack.c.h.b16 %v1612
      %v1792 = vunpack.c.l.b16 %v1613
      %v1793 = vunpack.c.l.b16 %v1614
      %v1794 = vunpack.c.h.b16 %v1614
      %v1795 = vunpack.c.l.b16 %v1615
      %v1796 = vunpack.c.l.b16 %v1616
      %v1797 = vunpack.c.h.b16 %v1616
      %v1798 = vunpack.c.l.b16 %v1617
      %v1799 = vunpack.c.l.b16 %v1618
      %v1800 = vunpack.c.h.b16 %v1618
      %v1801 = vunpack.c.l.b16 %v1619
      %v1802 = vunpack.c.l.b16 %v1620
      %v1803 = vunpack.c.h.b16 %v1620
      %v1804 = vunpack.c.l.b16 %v1621
      %v1805 = vunpack.c.l.b16 %v1622
      %v1806 = vunpack.c.h.b16 %v1622
      %v1807 = vunpack.c.l.b16 %v1623
      %v1808 = vunpack.c.l.b16 %v1624
      %v1809 = vunpack.c.h.b16 %v1624
      %v1810 = vunpack.c.l.b16 %v1625
      %v1811 = vunpack.c.l.b16 %v1626
      %v1812 = vunpack.c.h.b16 %v1626
      %v1813 = vunpack.c.l.b16 %v1627
      %v1814 = vunpack.c.l.b16 %v1628
      %v1815 = vunpack.c.h.b16 %v1628
      %v1816 = vunpack.c.l.b16 %v1629
      %v1817 = vunpack.c.l.b16 %v1630
      %v1818 = vunpack.c.h.b16 %v1630
      %v1819 = vunpack.c.l.b16 %v1631
      %v1820 = vunpack.c.l.b16 %v1632
      %v1821 = vunpack.c.h.b16 %v1632
      %v1822 = vunpack.c.l.b16 %v1633
      %v1823 = vunpack.c.l.b16 %v1634
      %v1824 = vunpack.c.h.b16 %v1634
      %v1825 = vunpack.c.l.b16 %v1635
      %v1826 = vunpack.c.l.b16 %v1636
      %v1827 = vunpack.c.h.b16 %v1636
      %v1828 = vunpack.c.l.b16 %v1637
      %v1829 = vunpack.c.l.b16 %v1638
      %v1830 = vunpack.c.h.b16 %v1638
      %v1831 = vunpack.c.l.b16 %v1639
      %v1832 = vunpack.c.l.b16 %v1640
      %v1833 = vunpack.c.h.b16 %v1640
      %v1834 = vunpack.c.l.b16 %v1641
      %v1835 = vunpack.c.l.b16 %v1642
      %v1836 = vunpack.c.h.b16 %v1642
      %v1837 = vunpack.c.l.b16 %v1643
      %v1838 = vunpack.c.l.b16 %v1644
      %v1839 = vunpack.c.h.b16 %v1644
      %v1840 = vunpack.c.l.b16 %v1645
      %v1841 = vunpack.c.l.b16 %v1646
      %v1842 = vunpack.c.h.b16 %v1646
      %v1843 = vunpack.c.l.b16 %v1647
      %v1844 = vunpack.c.l.b16 %v1648
      %v1845 = vunpack.c.h.b16 %v1648
      %v1846 = vunpack.c.l.b16 %v1649
      %v1847 = vunpack.c.l.b16 %v1650
      %v1848 = vunpack.c.h.b16 %v1650
      %v1849 = vunpack.c.l.b16 %v1651
      %v1850 = vunpack.c.l.b16 %v1652
      %v1851 = vunpack.c.h.b16 %v1652
      %v1852 = vunpack.c.l.b16 %v1653
      %v1853 = vunpack.c.l.b16 %v1654
      %v1854 = vunpack.c.h.b16 %v1654
      %v1855 = vunpack.c.l.b16 %v1655
      %v1856 = vunpack.c.l.b16 %v1656
      %v1857 = vunpack.c.h.b16 %v1656
      %v1858 = vunpack.c.l.b16 %v1657
      %v1859 = vunpack.c.l.b16 %v1658
      %v1860 = vunpack.c.h.b16 %v1658
      %v1861 = vunpack.c.l.b16 %v1659
      %v1862 = vunpack.c.l.b16 %v1660
      %v1863 = vunpack.c.h.b16 %v1660
      %v1864 = vunpack.c.l.b16 %v1661
      %v1865 = vunpack.c.l.b16 %v1662
      %v1866 = vunpack.c.h.b16 %v1662
      %v1867 = vunpack.c.l.b16 %v1663
      %v1868 = vunpack.c.l.b16 %v1664
      %v1869 = vunpack.c.h.b16 %v1664
      %v1870 = vunpack.c.l.b16 %v1665
      %v1871 = vunpack.c.l.b16 %v1666
      %v1872 = vunpack.c.h.b16 %v1666
      %v1873 = vunpack.c.l.b16 %v1667
      %v1874 = vunpack.c.l.b16 %v1668
      %v1875 = vunpack.c.h.b16 %v1668
      %v1876 = vunpack.c.l.b16 %v1669
      %v1877 = vunpack.c.l.b16 %v1670
      %v1878 = vunpack.c.h.b16 %v1670
      %v1879 = vunpack.c.l.b16 %v1671
      %v1880 = vpack.c.b16 %v1775, %v1772
      %v1881 = vpack.c.b16 %v1776, %v1773
      %v1882 = vpack.c.b16 %v1777, %v1774
      %v1883 = vpack.c.b16 %v1781, %v1778
      %v1884 = vpack.c.b16 %v1782, %v1779
      %v1885 = vpack.c.b16 %v1783, %v1780
      %v1886 = vpack.c.b16 %v1787, %v1784
      %v1887 = vpack.c.b16 %v1788, %v1785
      %v1888 = vpack.c.b16 %v1789, %v1786
      %v1889 = vpack.c.b16 %v1793, %v1790
      %v1890 = vpack.c.b16 %v1794, %v1791
      %v1891 = vpack.c.b16 %v1795, %v1792
      %v1892 = vpack.c.b16 %v1799, %v1796
      %v1893 = vpack.c.b16 %v1800, %v1797
      %v1894 = vpack.c.b16 %v1801, %v1798
      %v1895 = vpack.c.b16 %v1805, %v1802
      %v1896 = vpack.c.b16 %v1806, %v1803
      %v1897 = vpack.c.b16 %v1807, %v1804
      %v1898 = vpack.c.b16 %v1811, %v1808
      %v1899 = vpack.c.b16 %v1812, %v1809
      %v1900 = vpack.c.b16 %v1813, %v1810
      %v1901 = vpack.c.b16 %v1817, %v1814
      %v1902 = vpack.c.b16 %v1818, %v1815
      %v1903 = vpack.c.b16 %v1819, %v1816
      %v1904 = vpack.c.b16 %v1823, %v1820
      %v1905 = vpack.c.b16 %v1824, %v1821
      %v1906 = vpack.c.b16 %v1825, %v1822
      %v1907 = vpack.c.b16 %v1829, %v1826
      %v1908 = vpack.c.b16 %v1830, %v1827
      %v1909 = vpack.c.b16 %v1831, %v1828
      %v1910 = vpack.c.b16 %v1835, %v1832
      %v1911 = vpack.c.b16 %v1836, %v1833
      %v1912 = vpack.c.b16 %v1837, %v1834
      %v1913 = vpack.c.b16 %v1841, %v1838
      %v1914 = vpack.c.b16 %v1842, %v1839
      %v1915 = vpack.c.b16 %v1843, %v1840
      %v1916 = vpack.c.b16 %v1847, %v1844
      %v1917 = vpack.c.b16 %v1848, %v1845
      %v1918 = vpack.c.b16 %v1849, %v1846
      %v1919 = vpack.c.b16 %v1853, %v1850
      %v1920 = vpack.c.b16 %v1854, %v1851
      %v1921 = vpack.c.b16 %v1855, %v1852
      %v1922 = vpack.c.b16 %v1859, %v1856
      %v1923 = vpack.c.b16 %v1860, %v1857
      %v1924 = vpack.c.b16 %v1861, %v1858
      %v1925 = vpack.c.b16 %v1865, %v1862
      %v1926 = vpack.c.b16 %v1866, %v1863
      %v1927 = vpack.c.b16 %v1867, %v1864
      %v1928 = vpack.c.b16 %v1871, %v1868
      %v1929 = vpack.c.b16 %v1872, %v1869
      %v1930 = vpack.c.b16 %v1873, %v1870
      %v1931 = vpack.c.b16 %v1877, %v1874
      %v1932 = vpack.c.b16 %v1878, %v1875
      %v1933 = vpack.c.b16 %v1879, %v1876
      %vm1988 = vcmask 261120
      %v1990 = vsel %vm1988, %v1697, 0
      %1992 = vmatprep.subr.bf16.mxu0 %v1902
      %1993 = vmatpush1.bf16.msra.mxu0 %v1901
      %1994 = vmatprep.subr.bf16.mxu0 %v1899
      %1995 = vmatpush1.bf16.msra.mxu0 %v1898
      %1996 = vmatprep.subr.bf16.mxu0 %v1896
      %1997 = vmatpush1.bf16.msra.mxu0 %v1895
      %1998 = vmatprep.subr.bf16.mxu0 %v1893
      %1999 = vmatpush1.bf16.msra.mxu0 %v1892
      %2000 = vmatprep.subr.bf16.mxu0 %v1890
      %2001 = vmatpush1.bf16.msra.mxu0 %v1889
      %2002 = vmatprep.subr.bf16.mxu0 %v1887
      %2003 = vmatpush1.bf16.msra.mxu0 %v1886
      %2004 = vmatprep.subr.bf16.mxu0 %v1884
      %2005 = vmatpush1.bf16.msra.mxu0 %v1883
      %2006 = vmatprep.subr.bf16.mxu0 %v1881
      %2007 = vmatpush1.bf16.msra.mxu0 %v1880
      %2008 = vmatprep.subr.bf16.mxu0 %v1926
      %2009 = vmatpush2.bf16.msra.mxu0 %v1925
      %2010 = vmatprep.subr.bf16.mxu0 %v1923
      %2011 = vmatpush2.bf16.msra.mxu0 %v1922
      %2012 = vmatprep.subr.bf16.mxu0 %v1920
      %2013 = vmatpush2.bf16.msra.mxu0 %v1919
      %2014 = vmatprep.subr.bf16.mxu0 %v1917
      %2015 = vmatpush2.bf16.msra.mxu0 %v1916
      %2016 = vmatprep.subr.bf16.mxu0 %v1914
      %2017 = vmatpush2.bf16.msra.mxu0 %v1913
      %2018 = vmatprep.subr.bf16.mxu0 %v1911
      %2019 = vmatpush2.bf16.msra.mxu0 %v1910
      %2020 = vmatprep.subr.bf16.mxu0 %v1908
      %2021 = vmatpush2.bf16.msra.mxu0 %v1907
      %2022 = vmatprep.subr.bf16.mxu0 %v1905
      %2023 = vmatpush2.bf16.msra.mxu0 %v1904
      %2024 = vmatprep.mubr.bf16.mxu0 %v1696
      %2025 = vmatmul.mubr.bf16.gmra.mxu0 %v1695
      %v2026 = vpop.f32.mrf.mxu0
      %v2027 = vadd.f32 %v1678, %v2026
      %v2028 = vpop.f32.mrf.mxu0
      %v2029 = vadd.f32 %v1678, %v2028
      %v2030 = vpop.f32.mrf.mxu0
      %v2031 = vadd.f32 %v1683, %v2030
      %v2032 = vpop.f32.mrf.mxu0
      %v2033 = vadd.f32 %v1683, %v2032
      %2034 = vdwg.mxu0
      %2035 = vmatprep.subr.bf16.mxu0 0
      %2036 = vmatpush1.bf16.msra.mxu0 0
      %2037 = vmatprep.subr.bf16.mxu0 0
      %2038 = vmatpush1.bf16.msra.mxu0 0
      %2039 = vmatprep.subr.bf16.mxu0 0
      %2040 = vmatpush1.bf16.msra.mxu0 0
      %2041 = vmatprep.subr.bf16.mxu0 0
      %2042 = vmatpush1.bf16.msra.mxu0 0
      %2043 = vmatprep.subr.bf16.mxu0 0
      %2044 = vmatpush1.bf16.msra.mxu0 0
      %2045 = vmatprep.subr.bf16.mxu0 0
      %2046 = vmatpush1.bf16.msra.mxu0 0
      %2047 = vmatprep.subr.bf16.mxu0 %v1932
      %2048 = vmatpush1.bf16.msra.mxu0 %v1931
      %2049 = vmatprep.subr.bf16.mxu0 %v1929
      %2050 = vmatpush1.bf16.msra.mxu0 %v1928
      %2051 = vmatprep.subr.bf16.mxu0 0
      %2052 = vmatpush2.bf16.msra.mxu0 0
      %2053 = vmatprep.subr.bf16.mxu0 0
      %2054 = vmatpush2.bf16.msra.mxu0 0
      %2055 = vmatprep.subr.bf16.mxu0 0
      %2056 = vmatpush2.bf16.msra.mxu0 0
      %2057 = vmatprep.subr.bf16.mxu0 0
      %2058 = vmatpush2.bf16.msra.mxu0 0
      %2059 = vmatprep.subr.bf16.mxu0 0
      %2060 = vmatpush2.bf16.msra.mxu0 0
      %2061 = vmatprep.subr.bf16.mxu0 0
      %2062 = vmatpush2.bf16.msra.mxu0 0
      %2063 = vmatprep.subr.bf16.mxu0 0
      %2064 = vmatpush2.bf16.msra.mxu0 0
      %2065 = vmatprep.subr.bf16.mxu0 0
      %2066 = vmatpush2.bf16.msra.mxu0 0
      %2067 = vmatprep.mubr.bf16.mxu0 0
      %2068 = vmatmul.mubr.bf16.gmra.mxu0 %v1990
      %v2069 = vpop.f32.mrf.mxu0
      %v2070 = vadd.f32 %v2027, %v2069
      %v2071 = vpop.f32.mrf.mxu0
      %v2072 = vadd.f32 %v2029, %v2071
      %v2073 = vpop.f32.mrf.mxu0
      %v2074 = vadd.f32 %v2031, %v2073
      %v2075 = vpop.f32.mrf.mxu0
      %v2076 = vadd.f32 %v2033, %v2075
      %2077 = vdwg.mxu0
      %2078 = vmatprep.subr.bf16.mxu0 0
      %2079 = vmatpush1.bf16.msra.mxu0 %v1903
      %2080 = vmatprep.subr.bf16.mxu0 0
      %2081 = vmatpush1.bf16.msra.mxu0 %v1900
      %2082 = vmatprep.subr.bf16.mxu0 0
      %2083 = vmatpush1.bf16.msra.mxu0 %v1897
      %2084 = vmatprep.subr.bf16.mxu0 0
      %2085 = vmatpush1.bf16.msra.mxu0 %v1894
      %2086 = vmatprep.subr.bf16.mxu0 0
      %2087 = vmatpush1.bf16.msra.mxu0 %v1891
      %2088 = vmatprep.subr.bf16.mxu0 0
      %2089 = vmatpush1.bf16.msra.mxu0 %v1888
      %2090 = vmatprep.subr.bf16.mxu0 0
      %2091 = vmatpush1.bf16.msra.mxu0 %v1885
      %2092 = vmatprep.subr.bf16.mxu0 0
      %2093 = vmatpush1.bf16.msra.mxu0 %v1882
      %2094 = vmatprep.subr.bf16.mxu0 0
      %2095 = vmatpush2.bf16.msra.mxu0 %v1927
      %2096 = vmatprep.subr.bf16.mxu0 0
      %2097 = vmatpush2.bf16.msra.mxu0 %v1924
      %2098 = vmatprep.subr.bf16.mxu0 0
      %2099 = vmatpush2.bf16.msra.mxu0 %v1921
      %2100 = vmatprep.subr.bf16.mxu0 0
      %2101 = vmatpush2.bf16.msra.mxu0 %v1918
      %2102 = vmatprep.subr.bf16.mxu0 0
      %2103 = vmatpush2.bf16.msra.mxu0 %v1915
      %2104 = vmatprep.subr.bf16.mxu0 0
      %2105 = vmatpush2.bf16.msra.mxu0 %v1912
      %2106 = vmatprep.subr.bf16.mxu0 0
      %2107 = vmatpush2.bf16.msra.mxu0 %v1909
      %2108 = vmatprep.subr.bf16.mxu0 0
      %2109 = vmatpush2.bf16.msra.mxu0 %v1906
      %2110 = vmatprep.mubr.bf16.mxu0 %v1696
      %2111 = vmatmul.mubr.bf16.gmra.mxu0 %v1695
      %v2112 = vpop.f32.mrf.mxu0
      %v2113 = vadd.f32 %v1678, %v2112
      %v2114 = vpop.f32.mrf.mxu0
      %v2115 = vpop.f32.mrf.mxu0
      %v2116 = vadd.f32 %v1683, %v2115
      %v2117 = vpop.f32.mrf.mxu0
      %2118 = vdwg.mxu0
      %2119 = vmatprep.subr.bf16.mxu0 0
      %2120 = vmatpush1.bf16.msra.mxu0 0
      %2121 = vmatprep.subr.bf16.mxu0 0
      %2122 = vmatpush1.bf16.msra.mxu0 0
      %2123 = vmatprep.subr.bf16.mxu0 0
      %2124 = vmatpush1.bf16.msra.mxu0 0
      %2125 = vmatprep.subr.bf16.mxu0 0
      %2126 = vmatpush1.bf16.msra.mxu0 0
      %2127 = vmatprep.subr.bf16.mxu0 0
      %2128 = vmatpush1.bf16.msra.mxu0 0
      %2129 = vmatprep.subr.bf16.mxu0 0
      %2130 = vmatpush1.bf16.msra.mxu0 0
      %2131 = vmatprep.subr.bf16.mxu0 0
      %2132 = vmatpush1.bf16.msra.mxu0 %v1933
      %2133 = vmatprep.subr.bf16.mxu0 0
      %2134 = vmatpush1.bf16.msra.mxu0 %v1930
      %2135 = vmatprep.subr.bf16.mxu0 0
      %2136 = vmatpush2.bf16.msra.mxu0 0
      %2137 = vmatprep.subr.bf16.mxu0 0
      %2138 = vmatpush2.bf16.msra.mxu0 0
      %2139 = vmatprep.subr.bf16.mxu0 0
      %2140 = vmatpush2.bf16.msra.mxu0 0
      %2141 = vmatprep.subr.bf16.mxu0 0
      %2142 = vmatpush2.bf16.msra.mxu0 0
      %2143 = vmatprep.subr.bf16.mxu0 0
      %2144 = vmatpush2.bf16.msra.mxu0 0
      %2145 = vmatprep.subr.bf16.mxu0 0
      %2146 = vmatpush2.bf16.msra.mxu0 0
      %2147 = vmatprep.subr.bf16.mxu0 0
      %2148 = vmatpush2.bf16.msra.mxu0 0
      %2149 = vmatprep.subr.bf16.mxu0 0
      %2150 = vmatpush2.bf16.msra.mxu0 0
      %2151 = vmatprep.mubr.bf16.mxu0 0
      %2152 = vmatmul.mubr.bf16.gmra.mxu0 %v1990
      %v2153 = vpop.f32.mrf.mxu0
      %v2154 = vadd.f32 %v2113, %v2153
      %v2155 = vpop.f32.mrf.mxu0
      %v2156 = vpop.f32.mrf.mxu0
      %v2157 = vadd.f32 %v2116, %v2156
      %v2158 = vpop.f32.mrf.mxu0
      %2159 = vdwg.mxu0
      %v2160 = vmul.f32 %v2070, %v1102
      %v2161 = vmul.f32 %v2072, %v1106
      %v2162 = vmul.f32 %v2154, %v1110
      %v2163 = vmul.f32 %v2074, %v1102
      %v2164 = vmul.f32 %v2076, %v1106
      %v2165 = vmul.f32 %v2157, %v1110
      %v2166 = vpack.c.bf16 %v2163, %v2160
      %v2167 = vpack.c.bf16 %v2164, %v2161
      %v2168 = vpack.c.bf16 %v2165, %v2162
      %v2172 = vunpack.c.l.b16 %v2166
      %v2173 = vunpack.c.l.b16 %v2167
      %v2174 = vunpack.c.l.b16 %v2168
      %v2175 = vunpack.c.h.b16 %v2166
      %v2176 = vunpack.c.h.b16 %v2167
      %v2177 = vunpack.c.h.b16 %v2168
      %v2178 = vpack.c.b16 %v2173, %v2172
      %v2179 = vpack.c.b16 %v2174, %v2174
      %v2180 = vpack.c.b16 %v2176, %v2175
      %v2181 = vpack.c.b16 %v2177, %v2177
      %2186 = vst [vmem:[#allocation2 + $0x4] sm:$0xff] %v2178
      %2187 = vst.msk [vmem:[#allocation2 + $0xc] sm:$0xf] %vm378, %v2179
      %2188 = vst [vmem:[#allocation2 + $0x14] sm:$0xff] %v2180
      %2189 = vst.msk [vmem:[#allocation2 + $0x1c] sm:$0xf] %vm378, %v2181
      %v2190 = vld [vmem:[#allocation2] sm:$0xff]
      %v2191 = vld [vmem:[#allocation2 + $0x8] sm:$0xff]
      %v2192 = vld [vmem:[#allocation2 + $0x10] sm:$0xff]
      %v2193 = vld [vmem:[#allocation2 + $0x18] sm:$0xff]
      %2198 = vrot.lane.b32.xlu0 %v2190, 19
      %v2199 = vpop.permute.xlu0 %2198
      %2200 = vrot.lane.b32.xlu0 %v2191, 19
      %v2201 = vpop.permute.xlu0 %2200
      %2202 = vrot.lane.b32.xlu0 %v2192, 19
      %v2203 = vpop.permute.xlu0 %2202
      %2204 = vrot.lane.b32.xlu0 %v2193, 19
      %v2205 = vpop.permute.xlu0 %2204
      %v2206 = vrot.slane %v2199, 4
      %v2207 = vrot.slane %v2201, 4
      %v2208 = vrot.slane %v2203, 4
      %v2209 = vrot.slane %v2205, 4
      %v2210 = vsel %vm365, %v2206, %v2207
      %v2211 = vsel %vm367, %v2199, %v2210
      %v2212 = vsel %vm367, %v2201, %v2207
      %v2213 = vsel %vm365, %v2208, %v2209
      %v2214 = vsel %vm367, %v2203, %v2213
      %v2215 = vsel %vm367, %v2205, %v2209
      %2220 = vst [vmem:[#allocation4 + $0x1b0] sm:$0xff] %v2211
      %2221 = vst.msk [vmem:[#allocation4 + $0x1b8] sm:$0xf] %vm378, %v2212
      %2222 = vst [vmem:[#allocation4 + $0x1bc] sm:$0xff] %v2214
      %2223 = vst.msk [vmem:[#allocation4 + $0x1c4] sm:$0xf] %vm378, %v2215
      %v2224 = vld [vmem:[#allocation2] sm:$0xff]
      %v2225 = vld [vmem:[#allocation2 + $0x8] sm:$0xff]
      %v2226 = vld [vmem:[#allocation2 + $0x10] sm:$0xff]
      %v2227 = vld [vmem:[#allocation2 + $0x18] sm:$0xff]
      %2232 = vrot.lane.b32.xlu0 %v2224, 18
      %v2233 = vpop.permute.xlu0 %2232
      %2234 = vrot.lane.b32.xlu0 %v2225, 18
      %v2235 = vpop.permute.xlu0 %2234
      %2236 = vrot.lane.b32.xlu0 %v2226, 18
      %v2237 = vpop.permute.xlu0 %2236
      %2238 = vrot.lane.b32.xlu0 %v2227, 18
      %v2239 = vpop.permute.xlu0 %2238
      %v2240 = vrot.slane %v2233, 4
      %v2241 = vrot.slane %v2235, 4
      %v2242 = vrot.slane %v2237, 4
      %v2243 = vrot.slane %v2239, 4
      %v2244 = vsel %vm365, %v2240, %v2241
      %v2245 = vsel %vm403, %v2233, %v2244
      %v2246 = vsel %vm403, %v2235, %v2241
      %v2247 = vsel %vm365, %v2242, %v2243
      %v2248 = vsel %vm403, %v2237, %v2247
      %v2249 = vsel %vm403, %v2239, %v2243
      %2254 = vst [vmem:[#allocation4 + $0x1c8] sm:$0xff] %v2245
      %2255 = vst.msk [vmem:[#allocation4 + $0x1d0] sm:$0xf] %vm378, %v2246
      %2256 = vst [vmem:[#allocation4 + $0x1d4] sm:$0xff] %v2248
      %2257 = vst.msk [vmem:[#allocation4 + $0x1dc] sm:$0xf] %vm378, %v2249
      %v2258 = vld [vmem:[#allocation2] sm:$0xff]
      %v2259 = vld [vmem:[#allocation2 + $0x8] sm:$0xff]
      %v2260 = vld [vmem:[#allocation2 + $0x10] sm:$0xff]
      %v2261 = vld [vmem:[#allocation2 + $0x18] sm:$0xff]
      %2266 = vrot.lane.b32.xlu0 %v2258, 17
      %v2267 = vpop.permute.xlu0 %2266
      %2268 = vrot.lane.b32.xlu0 %v2259, 17
      %v2269 = vpop.permute.xlu0 %2268
      %2270 = vrot.lane.b32.xlu0 %v2260, 17
      %v2271 = vpop.permute.xlu0 %2270
      %2272 = vrot.lane.b32.xlu0 %v2261, 17
      %v2273 = vpop.permute.xlu0 %2272
      %v2274 = vrot.slane %v2267, 4
      %v2275 = vrot.slane %v2269, 4
      %v2276 = vrot.slane %v2271, 4
      %v2277 = vrot.slane %v2273, 4
      %v2278 = vsel %vm365, %v2274, %v2275
      %v2279 = vsel %vm438, %v2267, %v2278
      %v2280 = vsel %vm438, %v2269, %v2275
      %v2281 = vsel %vm365, %v2276, %v2277
      %v2282 = vsel %vm438, %v2271, %v2281
      %v2283 = vsel %vm438, %v2273, %v2277
      %2288 = vst [vmem:[#allocation4 + $0x1e0] sm:$0xff] %v2279
      %2289 = vst.msk [vmem:[#allocation4 + $0x1e8] sm:$0xf] %vm378, %v2280
      %2290 = vst [vmem:[#allocation4 + $0x1ec] sm:$0xff] %v2282
      %2291 = vst.msk [vmem:[#allocation4 + $0x1f4] sm:$0xf] %vm378, %v2283
      %v2292 = vld [vmem:[#allocation2] sm:$0xff]
      %v2293 = vld [vmem:[#allocation2 + $0x8] sm:$0xff]
      %v2294 = vld [vmem:[#allocation2 + $0x10] sm:$0xff]
      %v2295 = vld [vmem:[#allocation2 + $0x18] sm:$0xff]
      %2300 = vrot.lane.b32.xlu0 %v2292, 1
      %v2301 = vpop.permute.xlu0 %2300
      %2302 = vrot.lane.b32.xlu0 %v2293, 1
      %v2303 = vpop.permute.xlu0 %2302
      %2304 = vrot.lane.b32.xlu0 %v2294, 1
      %v2305 = vpop.permute.xlu0 %2304
      %2306 = vrot.lane.b32.xlu0 %v2295, 1
      %v2307 = vpop.permute.xlu0 %2306
      %v2308 = vrot.slane %v2301, 4
      %v2309 = vrot.slane %v2303, 4
      %v2310 = vrot.slane %v2305, 4
      %v2311 = vrot.slane %v2307, 4
      %v2312 = vsel %vm365, %v2308, %v2309
      %v2313 = vsel %vm473, %v2301, %v2312
      %v2314 = vsel %vm473, %v2303, %v2309
      %v2315 = vsel %vm365, %v2310, %v2311
      %v2316 = vsel %vm473, %v2305, %v2315
      %v2317 = vsel %vm473, %v2307, %v2311
      %2322 = vst [vmem:[#allocation4 + $0x1f8] sm:$0xff] %v2313
      %2323 = vst.msk [vmem:[#allocation4 + $0x200] sm:$0xf] %vm378, %v2314
      %2324 = vst [vmem:[#allocation4 + $0x204] sm:$0xff] %v2316
      %2325 = vst.msk [vmem:[#allocation4 + $0x20c] sm:$0xf] %vm378, %v2317
      %v2326 = vld [vmem:[#allocation2 + $0x4] sm:$0xff]
      %v2327 = vld [vmem:[#allocation2 + $0xc] sm:$0xf]
      %v2328 = vld [vmem:[#allocation2 + $0x14] sm:$0xff]
      %v2329 = vld [vmem:[#allocation2 + $0x1c] sm:$0xf]
      %2330 = vst [vmem:[#allocation4 + $0x210] sm:$0xff] %v2326
      %2331 = vst.msk [vmem:[#allocation4 + $0x218] sm:$0xf] %vm378, %v2327
      %2332 = vst [vmem:[#allocation4 + $0x21c] sm:$0xff] %v2328
      %2333 = vst.msk [vmem:[#allocation4 + $0x224] sm:$0xf] %vm378, %v2329
      %v2334 = vld [vmem:[#allocation2 + $0x4] sm:$0xff]
      %v2335 = vld [vmem:[#allocation2 + $0xc] sm:$0xf]
      %v2336 = vld [vmem:[#allocation2 + $0x14] sm:$0xff]
      %v2337 = vld [vmem:[#allocation2 + $0x1c] sm:$0xf]
      %2342 = vrot.lane.b32.xlu0 %v2334, 127
      %v2343 = vpop.permute.xlu0 %2342
      %2344 = vrot.lane.b32.xlu0 %v2335, 127
      %v2345 = vpop.permute.xlu0 %2344
      %2346 = vrot.lane.b32.xlu0 %v2336, 127
      %v2347 = vpop.permute.xlu0 %2346
      %2348 = vrot.lane.b32.xlu0 %v2337, 127
      %v2349 = vpop.permute.xlu0 %2348
      %v2350 = vrot.slane %v2343, 4
      %v2351 = vrot.slane %v2345, 4
      %v2352 = vrot.slane %v2347, 4
      %v2353 = vrot.slane %v2349, 4
      %v2354 = vsel %vm365, %v2350, %v2351
      %v2355 = vsel %vm516, %v2343, %v2354
      %v2356 = vsel %vm365, %v2352, %v2353
      %v2357 = vsel %vm516, %v2347, %v2356
      %2362 = vst [vmem:[#allocation4 + $0x228] sm:$0xff] %v2355
      %2363 = vst.msk [vmem:[#allocation4 + $0x230] sm:$0xf] %vm378, %v2345
      %2364 = vst [vmem:[#allocation4 + $0x234] sm:$0xff] %v2357
      %2365 = vst.msk [vmem:[#allocation4 + $0x23c] sm:$0xf] %vm378, %v2349
      %v2366 = vld [vmem:[#allocation2 + $0x4] sm:$0xff]
      %v2367 = vld [vmem:[#allocation2 + $0xc] sm:$0xf]
      %v2368 = vld [vmem:[#allocation2 + $0x14] sm:$0xff]
      %v2369 = vld [vmem:[#allocation2 + $0x1c] sm:$0xf]
      %2374 = vrot.lane.b32.xlu0 %v2366, 111
      %v2375 = vpop.permute.xlu0 %2374
      %2376 = vrot.lane.b32.xlu0 %v2367, 111
      %v2377 = vpop.permute.xlu0 %2376
      %2378 = vrot.lane.b32.xlu0 %v2368, 111
      %v2379 = vpop.permute.xlu0 %2378
      %2380 = vrot.lane.b32.xlu0 %v2369, 111
      %v2381 = vpop.permute.xlu0 %2380
      %v2382 = vrot.slane %v2375, 4
      %v2383 = vrot.slane %v2377, 4
      %v2384 = vrot.slane %v2379, 4
      %v2385 = vrot.slane %v2381, 4
      %v2386 = vsel %vm365, %v2382, %v2383
      %v2387 = vsel %vm549, %v2375, %v2386
      %v2388 = vsel %vm365, %v2384, %v2385
      %v2389 = vsel %vm549, %v2379, %v2388
      %2394 = vst [vmem:[#allocation4 + $0x240] sm:$0xff] %v2387
      %2395 = vst.msk [vmem:[#allocation4 + $0x248] sm:$0xf] %vm378, %v2377
      %2396 = vst [vmem:[#allocation4 + $0x24c] sm:$0xff] %v2389
      %2397 = vst.msk [vmem:[#allocation4 + $0x254] sm:$0xf] %vm378, %v2381
      %v2398 = vld [vmem:[#allocation2 + $0x4] sm:$0xff]
      %v2399 = vld [vmem:[#allocation2 + $0xc] sm:$0xf]
      %v2400 = vld [vmem:[#allocation2 + $0x14] sm:$0xff]
      %v2401 = vld [vmem:[#allocation2 + $0x1c] sm:$0xf]
      %2406 = vrot.lane.b32.xlu0 %v2398, 110
      %v2407 = vpop.permute.xlu0 %2406
      %2408 = vrot.lane.b32.xlu0 %v2399, 110
      %v2409 = vpop.permute.xlu0 %2408
      %2410 = vrot.lane.b32.xlu0 %v2400, 110
      %v2411 = vpop.permute.xlu0 %2410
      %2412 = vrot.lane.b32.xlu0 %v2401, 110
      %v2413 = vpop.permute.xlu0 %2412
      %v2414 = vrot.slane %v2407, 4
      %v2415 = vrot.slane %v2409, 4
      %v2416 = vrot.slane %v2411, 4
      %v2417 = vrot.slane %v2413, 4
      %v2418 = vsel %vm365, %v2414, %v2415
      %v2419 = vsel %vm582, %v2407, %v2418
      %v2420 = vsel %vm365, %v2416, %v2417
      %v2421 = vsel %vm582, %v2411, %v2420
      %2426 = vst [vmem:[#allocation4 + $0x258] sm:$0xff] %v2419
      %2427 = vst.msk [vmem:[#allocation4 + $0x260] sm:$0xf] %vm378, %v2409
      %2428 = vst [vmem:[#allocation4 + $0x264] sm:$0xff] %v2421
      %2429 = vst.msk [vmem:[#allocation4 + $0x26c] sm:$0xf] %vm378, %v2413
      %v2430 = vld [vmem:[#allocation2 + $0x4] sm:$0xff]
      %v2431 = vld [vmem:[#allocation2 + $0xc] sm:$0xf]
      %v2432 = vld [vmem:[#allocation2 + $0x14] sm:$0xff]
      %v2433 = vld [vmem:[#allocation2 + $0x1c] sm:$0xf]
      %2438 = vrot.lane.b32.xlu0 %v2430, 109
      %v2439 = vpop.permute.xlu0 %2438
      %2440 = vrot.lane.b32.xlu0 %v2431, 109
      %v2441 = vpop.permute.xlu0 %2440
      %2442 = vrot.lane.b32.xlu0 %v2432, 109
      %v2443 = vpop.permute.xlu0 %2442
      %2444 = vrot.lane.b32.xlu0 %v2433, 109
      %v2445 = vpop.permute.xlu0 %2444
      %v2446 = vrot.slane %v2439, 4
      %v2447 = vrot.slane %v2441, 4
      %v2448 = vrot.slane %v2443, 4
      %v2449 = vrot.slane %v2445, 4
      %v2450 = vsel %vm365, %v2446, %v2447
      %v2451 = vsel %vm615, %v2439, %v2450
      %v2452 = vsel %vm365, %v2448, %v2449
      %v2453 = vsel %vm615, %v2443, %v2452
      %2458 = vst [vmem:[#allocation4 + $0x270] sm:$0xff] %v2451
      %2459 = vst.msk [vmem:[#allocation4 + $0x278] sm:$0xf] %vm378, %v2441
      %2460 = vst [vmem:[#allocation4 + $0x27c] sm:$0xff] %v2453
      %2461 = vst.msk [vmem:[#allocation4 + $0x284] sm:$0xf] %vm378, %v2445
      %v2462 = vld [vmem:[#allocation4 + $0x1b0] sm:$0xff]
      %v2463 = vld [vmem:[#allocation4 + $0x1b8] sm:$0xf]
      %v2464 = vld [vmem:[#allocation4 + $0x1bc] sm:$0xff]
      %v2465 = vld [vmem:[#allocation4 + $0x1c4] sm:$0xf]
      %v2466 = vld [vmem:[#allocation4 + $0x1c8] sm:$0xff]
      %v2467 = vld [vmem:[#allocation4 + $0x1d0] sm:$0xf]
      %v2468 = vld [vmem:[#allocation4 + $0x1d4] sm:$0xff]
      %v2469 = vld [vmem:[#allocation4 + $0x1dc] sm:$0xf]
      %v2470 = vld [vmem:[#allocation4 + $0x1e0] sm:$0xff]
      %v2471 = vld [vmem:[#allocation4 + $0x1e8] sm:$0xf]
      %v2472 = vld [vmem:[#allocation4 + $0x1ec] sm:$0xff]
      %v2473 = vld [vmem:[#allocation4 + $0x1f4] sm:$0xf]
      %v2474 = vld [vmem:[#allocation4 + $0x1f8] sm:$0xff]
      %v2475 = vld [vmem:[#allocation4 + $0x200] sm:$0xf]
      %v2476 = vld [vmem:[#allocation4 + $0x204] sm:$0xff]
      %v2477 = vld [vmem:[#allocation4 + $0x20c] sm:$0xf]
      %v2478 = vld [vmem:[#allocation4 + $0x210] sm:$0xff]
      %v2479 = vld [vmem:[#allocation4 + $0x218] sm:$0xf]
      %v2480 = vld [vmem:[#allocation4 + $0x21c] sm:$0xff]
      %v2481 = vld [vmem:[#allocation4 + $0x224] sm:$0xf]
      %v2482 = vld [vmem:[#allocation4 + $0x228] sm:$0xff]
      %v2483 = vld [vmem:[#allocation4 + $0x230] sm:$0xf]
      %v2484 = vld [vmem:[#allocation4 + $0x234] sm:$0xff]
      %v2485 = vld [vmem:[#allocation4 + $0x23c] sm:$0xf]
      %v2486 = vld [vmem:[#allocation4 + $0x240] sm:$0xff]
      %v2487 = vld [vmem:[#allocation4 + $0x248] sm:$0xf]
      %v2488 = vld [vmem:[#allocation4 + $0x24c] sm:$0xff]
      %v2489 = vld [vmem:[#allocation4 + $0x254] sm:$0xf]
      %v2490 = vld [vmem:[#allocation4 + $0x258] sm:$0xff]
      %v2491 = vld [vmem:[#allocation4 + $0x260] sm:$0xf]
      %v2492 = vld [vmem:[#allocation4 + $0x264] sm:$0xff]
      %v2493 = vld [vmem:[#allocation4 + $0x26c] sm:$0xf]
      %v2494 = vld [vmem:[#allocation4 + $0x270] sm:$0xff]
      %v2495 = vld [vmem:[#allocation4 + $0x278] sm:$0xf]
      %v2496 = vld [vmem:[#allocation4 + $0x27c] sm:$0xff]
      %v2497 = vld [vmem:[#allocation4 + $0x284] sm:$0xf]
      %vm2498 = vcmp.ge.bf16.partialorder %v2462, 0
      %vm2499 = vcmp.ge.bf16.partialorder %v2463, 0
      %vm2500 = vcmp.ge.bf16.partialorder %v2464, 0
      %vm2501 = vcmp.ge.bf16.partialorder %v2465, 0
      %vm2502 = vcmp.ge.bf16.partialorder %v2466, 0
      %vm2503 = vcmp.ge.bf16.partialorder %v2467, 0
      %vm2504 = vcmp.ge.bf16.partialorder %v2468, 0
      %vm2505 = vcmp.ge.bf16.partialorder %v2469, 0
      %vm2506 = vcmp.ge.bf16.partialorder %v2470, 0
      %vm2507 = vcmp.ge.bf16.partialorder %v2471, 0
      %vm2508 = vcmp.ge.bf16.partialorder %v2472, 0
      %vm2509 = vcmp.ge.bf16.partialorder %v2473, 0
      %vm2510 = vcmp.ge.bf16.partialorder %v2474, 0
      %vm2511 = vcmp.ge.bf16.partialorder %v2475, 0
      %vm2512 = vcmp.ge.bf16.partialorder %v2476, 0
      %vm2513 = vcmp.ge.bf16.partialorder %v2477, 0
      %vm2514 = vcmp.ge.bf16.partialorder %v2478, 0
      %vm2515 = vcmp.ge.bf16.partialorder %v2479, 0
      %vm2516 = vcmp.ge.bf16.partialorder %v2480, 0
      %vm2517 = vcmp.ge.bf16.partialorder %v2481, 0
      %vm2518 = vcmp.ge.bf16.partialorder %v2482, 0
      %vm2519 = vcmp.ge.bf16.partialorder %v2483, 0
      %vm2520 = vcmp.ge.bf16.partialorder %v2484, 0
      %vm2521 = vcmp.ge.bf16.partialorder %v2485, 0
      %vm2522 = vcmp.ge.bf16.partialorder %v2486, 0
      %vm2523 = vcmp.ge.bf16.partialorder %v2487, 0
      %vm2524 = vcmp.ge.bf16.partialorder %v2488, 0
      %vm2525 = vcmp.ge.bf16.partialorder %v2489, 0
      %vm2526 = vcmp.ge.bf16.partialorder %v2490, 0
      %vm2527 = vcmp.ge.bf16.partialorder %v2491, 0
      %vm2528 = vcmp.ge.bf16.partialorder %v2492, 0
      %vm2529 = vcmp.ge.bf16.partialorder %v2493, 0
      %vm2530 = vcmp.ge.bf16.partialorder %v2494, 0
      %vm2531 = vcmp.ge.bf16.partialorder %v2495, 0
      %vm2532 = vcmp.ge.bf16.partialorder %v2496, 0
      %vm2533 = vcmp.ge.bf16.partialorder %v2497, 0
      %v2534 = vmul.bf16 %v2462, 1036860877
      %v2535 = vmul.bf16 %v2463, 1036860877
      %v2536 = vmul.bf16 %v2464, 1036860877
      %v2537 = vmul.bf16 %v2465, 1036860877
      %v2538 = vmul.bf16 %v2466, 1036860877
      %v2539 = vmul.bf16 %v2467, 1036860877
      %v2540 = vmul.bf16 %v2468, 1036860877
      %v2541 = vmul.bf16 %v2469, 1036860877
      %v2542 = vmul.bf16 %v2470, 1036860877
      %v2543 = vmul.bf16 %v2471, 1036860877
      %v2544 = vmul.bf16 %v2472, 1036860877
      %v2545 = vmul.bf16 %v2473, 1036860877
      %v2546 = vmul.bf16 %v2474, 1036860877
      %v2547 = vmul.bf16 %v2475, 1036860877
      %v2548 = vmul.bf16 %v2476, 1036860877
      %v2549 = vmul.bf16 %v2477, 1036860877
      %v2550 = vmul.bf16 %v2478, 1036860877
      %v2551 = vmul.bf16 %v2479, 1036860877
      %v2552 = vmul.bf16 %v2480, 1036860877
      %v2553 = vmul.bf16 %v2481, 1036860877
      %v2554 = vmul.bf16 %v2482, 1036860877
      %v2555 = vmul.bf16 %v2483, 1036860877
      %v2556 = vmul.bf16 %v2484, 1036860877
      %v2557 = vmul.bf16 %v2485, 1036860877
      %v2558 = vmul.bf16 %v2486, 1036860877
      %v2559 = vmul.bf16 %v2487, 1036860877
      %v2560 = vmul.bf16 %v2488, 1036860877
      %v2561 = vmul.bf16 %v2489, 1036860877
      %v2562 = vmul.bf16 %v2490, 1036860877
      %v2563 = vmul.bf16 %v2491, 1036860877
      %v2564 = vmul.bf16 %v2492, 1036860877
      %v2565 = vmul.bf16 %v2493, 1036860877
      %v2566 = vmul.bf16 %v2494, 1036860877
      %v2567 = vmul.bf16 %v2495, 1036860877
      %v2568 = vmul.bf16 %v2496, 1036860877
      %v2569 = vmul.bf16 %v2497, 1036860877
      %v2570 = vsel %vm2498, %v2462, %v2534
      %v2571 = vsel %vm2499, %v2463, %v2535
      %v2572 = vsel %vm2500, %v2464, %v2536
      %v2573 = vsel %vm2501, %v2465, %v2537
      %v2574 = vsel %vm2502, %v2466, %v2538
      %v2575 = vsel %vm2503, %v2467, %v2539
      %v2576 = vsel %vm2504, %v2468, %v2540
      %v2577 = vsel %vm2505, %v2469, %v2541
      %v2578 = vsel %vm2506, %v2470, %v2542
      %v2579 = vsel %vm2507, %v2471, %v2543
      %v2580 = vsel %vm2508, %v2472, %v2544
      %v2581 = vsel %vm2509, %v2473, %v2545
      %v2582 = vsel %vm2510, %v2474, %v2546
      %v2583 = vsel %vm2511, %v2475, %v2547
      %v2584 = vsel %vm2512, %v2476, %v2548
      %v2585 = vsel %vm2513, %v2477, %v2549
      %v2586 = vsel %vm2514, %v2478, %v2550
      %v2587 = vsel %vm2515, %v2479, %v2551
      %v2588 = vsel %vm2516, %v2480, %v2552
      %v2589 = vsel %vm2517, %v2481, %v2553
      %v2590 = vsel %vm2518, %v2482, %v2554
      %v2591 = vsel %vm2519, %v2483, %v2555
      %v2592 = vsel %vm2520, %v2484, %v2556
      %v2593 = vsel %vm2521, %v2485, %v2557
      %v2594 = vsel %vm2522, %v2486, %v2558
      %v2595 = vsel %vm2523, %v2487, %v2559
      %v2596 = vsel %vm2524, %v2488, %v2560
      %v2597 = vsel %vm2525, %v2489, %v2561
      %v2598 = vsel %vm2526, %v2490, %v2562
      %v2599 = vsel %vm2527, %v2491, %v2563
      %v2600 = vsel %vm2528, %v2492, %v2564
      %v2601 = vsel %vm2529, %v2493, %v2565
      %v2602 = vsel %vm2530, %v2494, %v2566
      %v2603 = vsel %vm2531, %v2495, %v2567
      %v2604 = vsel %vm2532, %v2496, %v2568
      %v2605 = vsel %vm2533, %v2497, %v2569
      %2606 = vst [vmem:[#allocation3 + $0x1b0] sm:$0xff] %v2570
      %2607 = vst.msk [vmem:[#allocation3 + $0x1b8] sm:$0xf] %vm378, %v2571
      %2608 = vst [vmem:[#allocation3 + $0x1bc] sm:$0xff] %v2572
      %2609 = vst.msk [vmem:[#allocation3 + $0x1c4] sm:$0xf] %vm378, %v2573
      %2610 = vst [vmem:[#allocation3 + $0x1c8] sm:$0xff] %v2574
      %2611 = vst.msk [vmem:[#allocation3 + $0x1d0] sm:$0xf] %vm378, %v2575
      %2612 = vst [vmem:[#allocation3 + $0x1d4] sm:$0xff] %v2576
      %2613 = vst.msk [vmem:[#allocation3 + $0x1dc] sm:$0xf] %vm378, %v2577
      %2614 = vst [vmem:[#allocation3 + $0x1e0] sm:$0xff] %v2578
      %2615 = vst.msk [vmem:[#allocation3 + $0x1e8] sm:$0xf] %vm378, %v2579
      %2616 = vst [vmem:[#allocation3 + $0x1ec] sm:$0xff] %v2580
      %2617 = vst.msk [vmem:[#allocation3 + $0x1f4] sm:$0xf] %vm378, %v2581
      %2618 = vst [vmem:[#allocation3 + $0x1f8] sm:$0xff] %v2582
      %2619 = vst.msk [vmem:[#allocation3 + $0x200] sm:$0xf] %vm378, %v2583
      %2620 = vst [vmem:[#allocation3 + $0x204] sm:$0xff] %v2584
      %2621 = vst.msk [vmem:[#allocation3 + $0x20c] sm:$0xf] %vm378, %v2585
      %2622 = vst [vmem:[#allocation3 + $0x210] sm:$0xff] %v2586
      %2623 = vst.msk [vmem:[#allocation3 + $0x218] sm:$0xf] %vm378, %v2587
      %2624 = vst [vmem:[#allocation3 + $0x21c] sm:$0xff] %v2588
      %2625 = vst.msk [vmem:[#allocation3 + $0x224] sm:$0xf] %vm378, %v2589
      %2626 = vst [vmem:[#allocation3 + $0x228] sm:$0xff] %v2590
      %2627 = vst.msk [vmem:[#allocation3 + $0x230] sm:$0xf] %vm378, %v2591
      %2628 = vst [vmem:[#allocation3 + $0x234] sm:$0xff] %v2592
      %2629 = vst.msk [vmem:[#allocation3 + $0x23c] sm:$0xf] %vm378, %v2593
      %2630 = vst [vmem:[#allocation3 + $0x240] sm:$0xff] %v2594
      %2631 = vst.msk [vmem:[#allocation3 + $0x248] sm:$0xf] %vm378, %v2595
      %2632 = vst [vmem:[#allocation3 + $0x24c] sm:$0xff] %v2596
      %2633 = vst.msk [vmem:[#allocation3 + $0x254] sm:$0xf] %vm378, %v2597
      %2634 = vst [vmem:[#allocation3 + $0x258] sm:$0xff] %v2598
      %2635 = vst.msk [vmem:[#allocation3 + $0x260] sm:$0xf] %vm378, %v2599
      %2636 = vst [vmem:[#allocation3 + $0x264] sm:$0xff] %v2600
      %2637 = vst.msk [vmem:[#allocation3 + $0x26c] sm:$0xf] %vm378, %v2601
      %2638 = vst [vmem:[#allocation3 + $0x270] sm:$0xff] %v2602
      %2639 = vst.msk [vmem:[#allocation3 + $0x278] sm:$0xf] %vm378, %v2603
      %2640 = vst [vmem:[#allocation3 + $0x27c] sm:$0xff] %v2604
      %2641 = vst.msk [vmem:[#allocation3 + $0x284] sm:$0xf] %vm378, %v2605
      %v2642 = vld [vmem:[%s4] sm:$0xff]
      %v2643 = vld [vmem:[%s4 + $0x8] sm:$0xff]
      %v2644 = vld [vmem:[%s4 + $0x10] sm:$0xff]
      %v2645 = vld [vmem:[%s4 + $0x18] sm:$0xff]
      %v2646 = vld [vmem:[#allocation3] sm:$0xff]
      %v2647 = vld [vmem:[#allocation3 + $0x8] sm:$0xf]
      %v2648 = vld [vmem:[#allocation3 + $0xc] sm:$0xff]
      %v2649 = vld [vmem:[#allocation3 + $0x14] sm:$0xf]
      %v2650 = vld [vmem:[#allocation3 + $0x18] sm:$0xff]
      %v2651 = vld [vmem:[#allocation3 + $0x20] sm:$0xf]
      %v2652 = vld [vmem:[#allocation3 + $0x24] sm:$0xff]
      %v2653 = vld [vmem:[#allocation3 + $0x2c] sm:$0xf]
      %v2654 = vld [vmem:[#allocation3 + $0x30] sm:$0xff]
      %v2655 = vld [vmem:[#allocation3 + $0x38] sm:$0xf]
      %v2656 = vld [vmem:[#allocation3 + $0x3c] sm:$0xff]
      %v2657 = vld [vmem:[#allocation3 + $0x44] sm:$0xf]
      %v2658 = vld [vmem:[#allocation3 + $0x48] sm:$0xff]
      %v2659 = vld [vmem:[#allocation3 + $0x50] sm:$0xf]
      %v2660 = vld [vmem:[#allocation3 + $0x54] sm:$0xff]
      %v2661 = vld [vmem:[#allocation3 + $0x5c] sm:$0xf]
      %v2662 = vld [vmem:[#allocation3 + $0x60] sm:$0xff]
      %v2663 = vld [vmem:[#allocation3 + $0x68] sm:$0xf]
      %v2664 = vld [vmem:[#allocation3 + $0x6c] sm:$0xff]
      %v2665 = vld [vmem:[#allocation3 + $0x74] sm:$0xf]
      %v2666 = vld [vmem:[#allocation3 + $0x78] sm:$0xff]
      %v2667 = vld [vmem:[#allocation3 + $0x80] sm:$0xf]
      %v2668 = vld [vmem:[#allocation3 + $0x84] sm:$0xff]
      %v2669 = vld [vmem:[#allocation3 + $0x8c] sm:$0xf]
      %v2670 = vld [vmem:[#allocation3 + $0x90] sm:$0xff]
      %v2671 = vld [vmem:[#allocation3 + $0x98] sm:$0xf]
      %v2672 = vld [vmem:[#allocation3 + $0x9c] sm:$0xff]
      %v2673 = vld [vmem:[#allocation3 + $0xa4] sm:$0xf]
      %v2674 = vld [vmem:[#allocation3 + $0xa8] sm:$0xff]
      %v2675 = vld [vmem:[#allocation3 + $0xb0] sm:$0xf]
      %v2676 = vld [vmem:[#allocation3 + $0xb4] sm:$0xff]
      %v2677 = vld [vmem:[#allocation3 + $0xbc] sm:$0xf]
      %v2678 = vld [vmem:[#allocation3 + $0xc0] sm:$0xff]
      %v2679 = vld [vmem:[#allocation3 + $0xc8] sm:$0xf]
      %v2680 = vld [vmem:[#allocation3 + $0xcc] sm:$0xff]
      %v2681 = vld [vmem:[#allocation3 + $0xd4] sm:$0xf]
      %v2682 = vld [vmem:[#allocation3 + $0xd8] sm:$0xff]
      %v2683 = vld [vmem:[#allocation3 + $0xe0] sm:$0xf]
      %v2684 = vld [vmem:[#allocation3 + $0xe4] sm:$0xff]
      %v2685 = vld [vmem:[#allocation3 + $0xec] sm:$0xf]
      %v2686 = vld [vmem:[#allocation3 + $0xf0] sm:$0xff]
      %v2687 = vld [vmem:[#allocation3 + $0xf8] sm:$0xf]
      %v2688 = vld [vmem:[#allocation3 + $0xfc] sm:$0xff]
      %v2689 = vld [vmem:[#allocation3 + $0x104] sm:$0xf]
      %v2690 = vld [vmem:[#allocation3 + $0x108] sm:$0xff]
      %v2691 = vld [vmem:[#allocation3 + $0x110] sm:$0xf]
      %v2692 = vld [vmem:[#allocation3 + $0x114] sm:$0xff]
      %v2693 = vld [vmem:[#allocation3 + $0x11c] sm:$0xf]
      %v2694 = vld [vmem:[#allocation3 + $0x120] sm:$0xff]
      %v2695 = vld [vmem:[#allocation3 + $0x128] sm:$0xf]
      %v2696 = vld [vmem:[#allocation3 + $0x12c] sm:$0xff]
      %v2697 = vld [vmem:[#allocation3 + $0x134] sm:$0xf]
      %v2698 = vld [vmem:[#allocation3 + $0x138] sm:$0xff]
      %v2699 = vld [vmem:[#allocation3 + $0x140] sm:$0xf]
      %v2700 = vld [vmem:[#allocation3 + $0x144] sm:$0xff]
      %v2701 = vld [vmem:[#allocation3 + $0x14c] sm:$0xf]
      %v2702 = vld [vmem:[#allocation3 + $0x150] sm:$0xff]
      %v2703 = vld [vmem:[#allocation3 + $0x158] sm:$0xf]
      %v2704 = vld [vmem:[#allocation3 + $0x15c] sm:$0xff]
      %v2705 = vld [vmem:[#allocation3 + $0x164] sm:$0xf]
      %v2706 = vld [vmem:[#allocation3 + $0x168] sm:$0xff]
      %v2707 = vld [vmem:[#allocation3 + $0x170] sm:$0xf]
      %v2708 = vld [vmem:[#allocation3 + $0x174] sm:$0xff]
      %v2709 = vld [vmem:[#allocation3 + $0x17c] sm:$0xf]
      %v2710 = vld [vmem:[#allocation3 + $0x180] sm:$0xff]
      %v2711 = vld [vmem:[#allocation3 + $0x188] sm:$0xf]
      %v2712 = vld [vmem:[#allocation3 + $0x18c] sm:$0xff]
      %v2713 = vld [vmem:[#allocation3 + $0x194] sm:$0xf]
      %v2714 = vld [vmem:[#allocation3 + $0x198] sm:$0xff]
      %v2715 = vld [vmem:[#allocation3 + $0x1a0] sm:$0xf]
      %v2716 = vld [vmem:[#allocation3 + $0x1a4] sm:$0xff]
      %v2717 = vld [vmem:[#allocation3 + $0x1ac] sm:$0xf]
      %v2718 = vld [vmem:[#allocation3 + $0x1b0] sm:$0xff]
      %v2719 = vld [vmem:[#allocation3 + $0x1b8] sm:$0xf]
      %v2720 = vld [vmem:[#allocation3 + $0x1bc] sm:$0xff]
      %v2721 = vld [vmem:[#allocation3 + $0x1c4] sm:$0xf]
      %v2722 = vld [vmem:[#allocation3 + $0x1c8] sm:$0xff]
      %v2723 = vld [vmem:[#allocation3 + $0x1d0] sm:$0xf]
      %v2724 = vld [vmem:[#allocation3 + $0x1d4] sm:$0xff]
      %v2725 = vld [vmem:[#allocation3 + $0x1dc] sm:$0xf]
      %v2726 = vld [vmem:[#allocation3 + $0x1e0] sm:$0xff]
      %v2727 = vld [vmem:[#allocation3 + $0x1e8] sm:$0xf]
      %v2728 = vld [vmem:[#allocation3 + $0x1ec] sm:$0xff]
      %v2729 = vld [vmem:[#allocation3 + $0x1f4] sm:$0xf]
      %v2730 = vld [vmem:[#allocation3 + $0x1f8] sm:$0xff]
      %v2731 = vld [vmem:[#allocation3 + $0x200] sm:$0xf]
      %v2732 = vld [vmem:[#allocation3 + $0x204] sm:$0xff]
      %v2733 = vld [vmem:[#allocation3 + $0x20c] sm:$0xf]
      %v2734 = vld [vmem:[#allocation3 + $0x210] sm:$0xff]
      %v2735 = vld [vmem:[#allocation3 + $0x218] sm:$0xf]
      %v2736 = vld [vmem:[#allocation3 + $0x21c] sm:$0xff]
      %v2737 = vld [vmem:[#allocation3 + $0x224] sm:$0xf]
      %v2738 = vld [vmem:[#allocation3 + $0x228] sm:$0xff]
      %v2739 = vld [vmem:[#allocation3 + $0x230] sm:$0xf]
      %v2740 = vld [vmem:[#allocation3 + $0x234] sm:$0xff]
      %v2741 = vld [vmem:[#allocation3 + $0x23c] sm:$0xf]
      %v2742 = vld [vmem:[#allocation3 + $0x240] sm:$0xff]
      %v2743 = vld [vmem:[#allocation3 + $0x248] sm:$0xf]
      %v2744 = vld [vmem:[#allocation3 + $0x24c] sm:$0xff]
      %v2745 = vld [vmem:[#allocation3 + $0x254] sm:$0xf]
      %v2746 = vld [vmem:[#allocation3 + $0x258] sm:$0xff]
      %v2747 = vld [vmem:[#allocation3 + $0x260] sm:$0xf]
      %v2748 = vld [vmem:[#allocation3 + $0x264] sm:$0xff]
      %v2749 = vld [vmem:[#allocation3 + $0x26c] sm:$0xf]
      %v2750 = vld [vmem:[#allocation3 + $0x270] sm:$0xff]
      %v2751 = vld [vmem:[#allocation3 + $0x278] sm:$0xf]
      %v2752 = vld [vmem:[#allocation3 + $0x27c] sm:$0xff]
      %v2753 = vld [vmem:[#allocation3 + $0x284] sm:$0xf]
      %s2754 = scalar_lea.vmem %s7, 32
      %v2755 = vld [vmem:[%s2754] sm:$0xff]
      %v2756 = vld [vmem:[%s2754 + $0x8] sm:$0xff]
      %2758 = vset.pattern.permute.xlu0 0
      %2759 = vperm.xlu0 %2758, %v2755
      %v2760 = vpop.permute.xlu0 %2759
      %2763 = vset.pattern.permute.xlu0 0
      %2764 = vperm.xlu0 %2763, %v2756
      %v2765 = vpop.permute.xlu0 %2764
      %v2771 = vunpack.c.l.b16 %v2642
      %v2772 = vunpack.c.h.b16 %v2642
      %v2773 = vunpack.c.l.b16 %v2643
      %v2774 = vunpack.c.h.b16 %v2643
      %v2775 = vunpack.c.l.b16 %v2644
      %v2776 = vunpack.c.h.b16 %v2644
      %v2777 = vunpack.c.l.b16 %v2645
      %v2778 = vunpack.c.h.b16 %v2645
      %v2779 = vpack.c.b16 %v2775, %v2771
      %v2780 = vpack.c.b16 %v2776, %v2772
      %v2781 = vpack.c.b16 %v2777, %v2773
      %v2782 = vpack.c.b16 %v2778, %v2774
      %v2894 = vunpack.c.l.b16 %v2646
      %v2895 = vunpack.c.h.b16 %v2646
      %v2896 = vunpack.c.l.b16 %v2647
      %v2897 = vunpack.c.l.b16 %v2648
      %v2898 = vunpack.c.h.b16 %v2648
      %v2899 = vunpack.c.l.b16 %v2649
      %v2900 = vunpack.c.l.b16 %v2650
      %v2901 = vunpack.c.h.b16 %v2650
      %v2902 = vunpack.c.l.b16 %v2651
      %v2903 = vunpack.c.l.b16 %v2652
      %v2904 = vunpack.c.h.b16 %v2652
      %v2905 = vunpack.c.l.b16 %v2653
      %v2906 = vunpack.c.l.b16 %v2654
      %v2907 = vunpack.c.h.b16 %v2654
      %v2908 = vunpack.c.l.b16 %v2655
      %v2909 = vunpack.c.l.b16 %v2656
      %v2910 = vunpack.c.h.b16 %v2656
      %v2911 = vunpack.c.l.b16 %v2657
      %v2912 = vunpack.c.l.b16 %v2658
      %v2913 = vunpack.c.h.b16 %v2658
      %v2914 = vunpack.c.l.b16 %v2659
      %v2915 = vunpack.c.l.b16 %v2660
      %v2916 = vunpack.c.h.b16 %v2660
      %v2917 = vunpack.c.l.b16 %v2661
      %v2918 = vunpack.c.l.b16 %v2662
      %v2919 = vunpack.c.h.b16 %v2662
      %v2920 = vunpack.c.l.b16 %v2663
      %v2921 = vunpack.c.l.b16 %v2664
      %v2922 = vunpack.c.h.b16 %v2664
      %v2923 = vunpack.c.l.b16 %v2665
      %v2924 = vunpack.c.l.b16 %v2666
      %v2925 = vunpack.c.h.b16 %v2666
      %v2926 = vunpack.c.l.b16 %v2667
      %v2927 = vunpack.c.l.b16 %v2668
      %v2928 = vunpack.c.h.b16 %v2668
      %v2929 = vunpack.c.l.b16 %v2669
      %v2930 = vunpack.c.l.b16 %v2670
      %v2931 = vunpack.c.h.b16 %v2670
      %v2932 = vunpack.c.l.b16 %v2671
      %v2933 = vunpack.c.l.b16 %v2672
      %v2934 = vunpack.c.h.b16 %v2672
      %v2935 = vunpack.c.l.b16 %v2673
      %v2936 = vunpack.c.l.b16 %v2674
      %v2937 = vunpack.c.h.b16 %v2674
      %v2938 = vunpack.c.l.b16 %v2675
      %v2939 = vunpack.c.l.b16 %v2676
      %v2940 = vunpack.c.h.b16 %v2676
      %v2941 = vunpack.c.l.b16 %v2677
      %v2942 = vunpack.c.l.b16 %v2678
      %v2943 = vunpack.c.h.b16 %v2678
      %v2944 = vunpack.c.l.b16 %v2679
      %v2945 = vunpack.c.l.b16 %v2680
      %v2946 = vunpack.c.h.b16 %v2680
      %v2947 = vunpack.c.l.b16 %v2681
      %v2948 = vunpack.c.l.b16 %v2682
      %v2949 = vunpack.c.h.b16 %v2682
      %v2950 = vunpack.c.l.b16 %v2683
      %v2951 = vunpack.c.l.b16 %v2684
      %v2952 = vunpack.c.h.b16 %v2684
      %v2953 = vunpack.c.l.b16 %v2685
      %v2954 = vunpack.c.l.b16 %v2686
      %v2955 = vunpack.c.h.b16 %v2686
      %v2956 = vunpack.c.l.b16 %v2687
      %v2957 = vunpack.c.l.b16 %v2688
      %v2958 = vunpack.c.h.b16 %v2688
      %v2959 = vunpack.c.l.b16 %v2689
      %v2960 = vunpack.c.l.b16 %v2690
      %v2961 = vunpack.c.h.b16 %v2690
      %v2962 = vunpack.c.l.b16 %v2691
      %v2963 = vunpack.c.l.b16 %v2692
      %v2964 = vunpack.c.h.b16 %v2692
      %v2965 = vunpack.c.l.b16 %v2693
      %v2966 = vunpack.c.l.b16 %v2694
      %v2967 = vunpack.c.h.b16 %v2694
      %v2968 = vunpack.c.l.b16 %v2695
      %v2969 = vunpack.c.l.b16 %v2696
      %v2970 = vunpack.c.h.b16 %v2696
      %v2971 = vunpack.c.l.b16 %v2697
      %v2972 = vunpack.c.l.b16 %v2698
      %v2973 = vunpack.c.h.b16 %v2698
      %v2974 = vunpack.c.l.b16 %v2699
      %v2975 = vunpack.c.l.b16 %v2700
      %v2976 = vunpack.c.h.b16 %v2700
      %v2977 = vunpack.c.l.b16 %v2701
      %v2978 = vunpack.c.l.b16 %v2702
      %v2979 = vunpack.c.h.b16 %v2702
      %v2980 = vunpack.c.l.b16 %v2703
      %v2981 = vunpack.c.l.b16 %v2704
      %v2982 = vunpack.c.h.b16 %v2704
      %v2983 = vunpack.c.l.b16 %v2705
      %v2984 = vunpack.c.l.b16 %v2706
      %v2985 = vunpack.c.h.b16 %v2706
      %v2986 = vunpack.c.l.b16 %v2707
      %v2987 = vunpack.c.l.b16 %v2708
      %v2988 = vunpack.c.h.b16 %v2708
      %v2989 = vunpack.c.l.b16 %v2709
      %v2990 = vunpack.c.l.b16 %v2710
      %v2991 = vunpack.c.h.b16 %v2710
      %v2992 = vunpack.c.l.b16 %v2711
      %v2993 = vunpack.c.l.b16 %v2712
      %v2994 = vunpack.c.h.b16 %v2712
      %v2995 = vunpack.c.l.b16 %v2713
      %v2996 = vunpack.c.l.b16 %v2714
      %v2997 = vunpack.c.h.b16 %v2714
      %v2998 = vunpack.c.l.b16 %v2715
      %v2999 = vunpack.c.l.b16 %v2716
      %v3000 = vunpack.c.h.b16 %v2716
      %v3001 = vunpack.c.l.b16 %v2717
      %v3002 = vunpack.c.l.b16 %v2718
      %v3003 = vunpack.c.h.b16 %v2718
      %v3004 = vunpack.c.l.b16 %v2719
      %v3005 = vunpack.c.l.b16 %v2720
      %v3006 = vunpack.c.h.b16 %v2720
      %v3007 = vunpack.c.l.b16 %v2721
      %v3008 = vunpack.c.l.b16 %v2722
      %v3009 = vunpack.c.h.b16 %v2722
      %v3010 = vunpack.c.l.b16 %v2723
      %v3011 = vunpack.c.l.b16 %v2724
      %v3012 = vunpack.c.h.b16 %v2724
      %v3013 = vunpack.c.l.b16 %v2725
      %v3014 = vunpack.c.l.b16 %v2726
      %v3015 = vunpack.c.h.b16 %v2726
      %v3016 = vunpack.c.l.b16 %v2727
      %v3017 = vunpack.c.l.b16 %v2728
      %v3018 = vunpack.c.h.b16 %v2728
      %v3019 = vunpack.c.l.b16 %v2729
      %v3020 = vunpack.c.l.b16 %v2730
      %v3021 = vunpack.c.h.b16 %v2730
      %v3022 = vunpack.c.l.b16 %v2731
      %v3023 = vunpack.c.l.b16 %v2732
      %v3024 = vunpack.c.h.b16 %v2732
      %v3025 = vunpack.c.l.b16 %v2733
      %v3026 = vunpack.c.l.b16 %v2734
      %v3027 = vunpack.c.h.b16 %v2734
      %v3028 = vunpack.c.l.b16 %v2735
      %v3029 = vunpack.c.l.b16 %v2736
      %v3030 = vunpack.c.h.b16 %v2736
      %v3031 = vunpack.c.l.b16 %v2737
      %v3032 = vunpack.c.l.b16 %v2738
      %v3033 = vunpack.c.h.b16 %v2738
      %v3034 = vunpack.c.l.b16 %v2739
      %v3035 = vunpack.c.l.b16 %v2740
      %v3036 = vunpack.c.h.b16 %v2740
      %v3037 = vunpack.c.l.b16 %v2741
      %v3038 = vunpack.c.l.b16 %v2742
      %v3039 = vunpack.c.h.b16 %v2742
      %v3040 = vunpack.c.l.b16 %v2743
      %v3041 = vunpack.c.l.b16 %v2744
      %v3042 = vunpack.c.h.b16 %v2744
      %v3043 = vunpack.c.l.b16 %v2745
      %v3044 = vunpack.c.l.b16 %v2746
      %v3045 = vunpack.c.h.b16 %v2746
      %v3046 = vunpack.c.l.b16 %v2747
      %v3047 = vunpack.c.l.b16 %v2748
      %v3048 = vunpack.c.h.b16 %v2748
      %v3049 = vunpack.c.l.b16 %v2749
      %v3050 = vunpack.c.l.b16 %v2750
      %v3051 = vunpack.c.h.b16 %v2750
      %v3052 = vunpack.c.l.b16 %v2751
      %v3053 = vunpack.c.l.b16 %v2752
      %v3054 = vunpack.c.h.b16 %v2752
      %v3055 = vunpack.c.l.b16 %v2753
      %v3056 = vpack.c.b16 %v2897, %v2894
      %v3057 = vpack.c.b16 %v2898, %v2895
      %v3058 = vpack.c.b16 %v2899, %v2896
      %v3059 = vpack.c.b16 %v2903, %v2900
      %v3060 = vpack.c.b16 %v2904, %v2901
      %v3061 = vpack.c.b16 %v2905, %v2902
      %v3062 = vpack.c.b16 %v2909, %v2906
      %v3063 = vpack.c.b16 %v2910, %v2907
      %v3064 = vpack.c.b16 %v2911, %v2908
      %v3065 = vpack.c.b16 %v2915, %v2912
      %v3066 = vpack.c.b16 %v2916, %v2913
      %v3067 = vpack.c.b16 %v2917, %v2914
      %v3068 = vpack.c.b16 %v2921, %v2918
      %v3069 = vpack.c.b16 %v2922, %v2919
      %v3070 = vpack.c.b16 %v2923, %v2920
      %v3071 = vpack.c.b16 %v2927, %v2924
      %v3072 = vpack.c.b16 %v2928, %v2925
      %v3073 = vpack.c.b16 %v2929, %v2926
      %v3074 = vpack.c.b16 %v2933, %v2930
      %v3075 = vpack.c.b16 %v2934, %v2931
      %v3076 = vpack.c.b16 %v2935, %v2932
      %v3077 = vpack.c.b16 %v2939, %v2936
      %v3078 = vpack.c.b16 %v2940, %v2937
      %v3079 = vpack.c.b16 %v2941, %v2938
      %v3080 = vpack.c.b16 %v2945, %v2942
      %v3081 = vpack.c.b16 %v2946, %v2943
      %v3082 = vpack.c.b16 %v2947, %v2944
      %v3083 = vpack.c.b16 %v2951, %v2948
      %v3084 = vpack.c.b16 %v2952, %v2949
      %v3085 = vpack.c.b16 %v2953, %v2950
      %v3086 = vpack.c.b16 %v2957, %v2954
      %v3087 = vpack.c.b16 %v2958, %v2955
      %v3088 = vpack.c.b16 %v2959, %v2956
      %v3089 = vpack.c.b16 %v2963, %v2960
      %v3090 = vpack.c.b16 %v2964, %v2961
      %v3091 = vpack.c.b16 %v2965, %v2962
      %v3092 = vpack.c.b16 %v2969, %v2966
      %v3093 = vpack.c.b16 %v2970, %v2967
      %v3094 = vpack.c.b16 %v2971, %v2968
      %v3095 = vpack.c.b16 %v2975, %v2972
      %v3096 = vpack.c.b16 %v2976, %v2973
      %v3097 = vpack.c.b16 %v2977, %v2974
      %v3098 = vpack.c.b16 %v2981, %v2978
      %v3099 = vpack.c.b16 %v2982, %v2979
      %v3100 = vpack.c.b16 %v2983, %v2980
      %v3101 = vpack.c.b16 %v2987, %v2984
      %v3102 = vpack.c.b16 %v2988, %v2985
      %v3103 = vpack.c.b16 %v2989, %v2986
      %v3104 = vpack.c.b16 %v2993, %v2990
      %v3105 = vpack.c.b16 %v2994, %v2991
      %v3106 = vpack.c.b16 %v2995, %v2992
      %v3107 = vpack.c.b16 %v2999, %v2996
      %v3108 = vpack.c.b16 %v3000, %v2997
      %v3109 = vpack.c.b16 %v3001, %v2998
      %v3110 = vpack.c.b16 %v3005, %v3002
      %v3111 = vpack.c.b16 %v3006, %v3003
      %v3112 = vpack.c.b16 %v3007, %v3004
      %v3113 = vpack.c.b16 %v3011, %v3008
      %v3114 = vpack.c.b16 %v3012, %v3009
      %v3115 = vpack.c.b16 %v3013, %v3010
      %v3116 = vpack.c.b16 %v3017, %v3014
      %v3117 = vpack.c.b16 %v3018, %v3015
      %v3118 = vpack.c.b16 %v3019, %v3016
      %v3119 = vpack.c.b16 %v3023, %v3020
      %v3120 = vpack.c.b16 %v3024, %v3021
      %v3121 = vpack.c.b16 %v3025, %v3022
      %v3122 = vpack.c.b16 %v3029, %v3026
      %v3123 = vpack.c.b16 %v3030, %v3027
      %v3124 = vpack.c.b16 %v3031, %v3028
      %v3125 = vpack.c.b16 %v3035, %v3032
      %v3126 = vpack.c.b16 %v3036, %v3033
      %v3127 = vpack.c.b16 %v3037, %v3034
      %v3128 = vpack.c.b16 %v3041, %v3038
      %v3129 = vpack.c.b16 %v3042, %v3039
      %v3130 = vpack.c.b16 %v3043, %v3040
      %v3131 = vpack.c.b16 %v3047, %v3044
      %v3132 = vpack.c.b16 %v3048, %v3045
      %v3133 = vpack.c.b16 %v3049, %v3046
      %v3134 = vpack.c.b16 %v3053, %v3050
      %v3135 = vpack.c.b16 %v3054, %v3051
      %v3136 = vpack.c.b16 %v3055, %v3052
      %vm3218 = vcmask 392192
      %v3220 = vsel %vm3218, %v2782, 0
      %3222 = vmatprep.subr.bf16.mxu0 %v3078
      %3223 = vmatpush1.bf16.msra.mxu0 %v3077
      %3224 = vmatprep.subr.bf16.mxu0 %v3075
      %3225 = vmatpush1.bf16.msra.mxu0 %v3074
      %3226 = vmatprep.subr.bf16.mxu0 %v3072
      %3227 = vmatpush1.bf16.msra.mxu0 %v3071
      %3228 = vmatprep.subr.bf16.mxu0 %v3069
      %3229 = vmatpush1.bf16.msra.mxu0 %v3068
      %3230 = vmatprep.subr.bf16.mxu0 %v3066
      %3231 = vmatpush1.bf16.msra.mxu0 %v3065
      %3232 = vmatprep.subr.bf16.mxu0 %v3063
      %3233 = vmatpush1.bf16.msra.mxu0 %v3062
      %3234 = vmatprep.subr.bf16.mxu0 %v3060
      %3235 = vmatpush1.bf16.msra.mxu0 %v3059
      %3236 = vmatprep.subr.bf16.mxu0 %v3057
      %3237 = vmatpush1.bf16.msra.mxu0 %v3056
      %3238 = vmatprep.subr.bf16.mxu0 %v3102
      %3239 = vmatpush2.bf16.msra.mxu0 %v3101
      %3240 = vmatprep.subr.bf16.mxu0 %v3099
      %3241 = vmatpush2.bf16.msra.mxu0 %v3098
      %3242 = vmatprep.subr.bf16.mxu0 %v3096
      %3243 = vmatpush2.bf16.msra.mxu0 %v3095
      %3244 = vmatprep.subr.bf16.mxu0 %v3093
      %3245 = vmatpush2.bf16.msra.mxu0 %v3092
      %3246 = vmatprep.subr.bf16.mxu0 %v3090
      %3247 = vmatpush2.bf16.msra.mxu0 %v3089
      %3248 = vmatprep.subr.bf16.mxu0 %v3087
      %3249 = vmatpush2.bf16.msra.mxu0 %v3086
      %3250 = vmatprep.subr.bf16.mxu0 %v3084
      %3251 = vmatpush2.bf16.msra.mxu0 %v3083
      %3252 = vmatprep.subr.bf16.mxu0 %v3081
      %3253 = vmatpush2.bf16.msra.mxu0 %v3080
      %3254 = vmatprep.mubr.bf16.mxu0 %v2780
      %3255 = vmatmul.mubr.bf16.gmra.mxu0 %v2779
      %v3256 = vpop.f32.mrf.mxu0
      %v3257 = vadd.f32 %v2760, %v3256
      %v3258 = vpop.f32.mrf.mxu0
      %v3259 = vadd.f32 %v2760, %v3258
      %v3260 = vpop.f32.mrf.mxu0
      %v3261 = vadd.f32 %v2765, %v3260
      %v3262 = vpop.f32.mrf.mxu0
      %v3263 = vadd.f32 %v2765, %v3262
      %3264 = vdwg.mxu0
      %3265 = vmatprep.subr.bf16.mxu0 %v3126
      %3266 = vmatpush1.bf16.msra.mxu0 %v3125
      %3267 = vmatprep.subr.bf16.mxu0 %v3123
      %3268 = vmatpush1.bf16.msra.mxu0 %v3122
      %3269 = vmatprep.subr.bf16.mxu0 %v3120
      %3270 = vmatpush1.bf16.msra.mxu0 %v3119
      %3271 = vmatprep.subr.bf16.mxu0 %v3117
      %3272 = vmatpush1.bf16.msra.mxu0 %v3116
      %3273 = vmatprep.subr.bf16.mxu0 %v3114
      %3274 = vmatpush1.bf16.msra.mxu0 %v3113
      %3275 = vmatprep.subr.bf16.mxu0 %v3111
      %3276 = vmatpush1.bf16.msra.mxu0 %v3110
      %3277 = vmatprep.subr.bf16.mxu0 %v3108
      %3278 = vmatpush1.bf16.msra.mxu0 %v3107
      %3279 = vmatprep.subr.bf16.mxu0 %v3105
      %3280 = vmatpush1.bf16.msra.mxu0 %v3104
      %3281 = vmatprep.subr.bf16.mxu0 0
      %3282 = vmatpush2.bf16.msra.mxu0 0
      %3283 = vmatprep.subr.bf16.mxu0 0
      %3284 = vmatpush2.bf16.msra.mxu0 0
      %3285 = vmatprep.subr.bf16.mxu0 0
      %3286 = vmatpush2.bf16.msra.mxu0 0
      %3287 = vmatprep.subr.bf16.mxu0 0
      %3288 = vmatpush2.bf16.msra.mxu0 0
      %3289 = vmatprep.subr.bf16.mxu0 0
      %3290 = vmatpush2.bf16.msra.mxu0 0
      %3291 = vmatprep.subr.bf16.mxu0 %v3135
      %3292 = vmatpush2.bf16.msra.mxu0 %v3134
      %3293 = vmatprep.subr.bf16.mxu0 %v3132
      %3294 = vmatpush2.bf16.msra.mxu0 %v3131
      %3295 = vmatprep.subr.bf16.mxu0 %v3129
      %3296 = vmatpush2.bf16.msra.mxu0 %v3128
      %3297 = vmatprep.mubr.bf16.mxu0 %v3220
      %3298 = vmatmul.mubr.bf16.gmra.mxu0 %v2781
      %v3299 = vpop.f32.mrf.mxu0
      %v3300 = vadd.f32 %v3257, %v3299
      %v3301 = vpop.f32.mrf.mxu0
      %v3302 = vadd.f32 %v3259, %v3301
      %v3303 = vpop.f32.mrf.mxu0
      %v3304 = vadd.f32 %v3261, %v3303
      %v3305 = vpop.f32.mrf.mxu0
      %v3306 = vadd.f32 %v3263, %v3305
      %3307 = vdwg.mxu0
      %3308 = vmatprep.subr.bf16.mxu0 0
      %3309 = vmatpush1.bf16.msra.mxu0 %v3079
      %3310 = vmatprep.subr.bf16.mxu0 0
      %3311 = vmatpush1.bf16.msra.mxu0 %v3076
      %3312 = vmatprep.subr.bf16.mxu0 0
      %3313 = vmatpush1.bf16.msra.mxu0 %v3073
      %3314 = vmatprep.subr.bf16.mxu0 0
      %3315 = vmatpush1.bf16.msra.mxu0 %v3070
      %3316 = vmatprep.subr.bf16.mxu0 0
      %3317 = vmatpush1.bf16.msra.mxu0 %v3067
      %3318 = vmatprep.subr.bf16.mxu0 0
      %3319 = vmatpush1.bf16.msra.mxu0 %v3064
      %3320 = vmatprep.subr.bf16.mxu0 0
      %3321 = vmatpush1.bf16.msra.mxu0 %v3061
      %3322 = vmatprep.subr.bf16.mxu0 0
      %3323 = vmatpush1.bf16.msra.mxu0 %v3058
      %3324 = vmatprep.subr.bf16.mxu0 0
      %3325 = vmatpush2.bf16.msra.mxu0 %v3103
      %3326 = vmatprep.subr.bf16.mxu0 0
      %3327 = vmatpush2.bf16.msra.mxu0 %v3100
      %3328 = vmatprep.subr.bf16.mxu0 0
      %3329 = vmatpush2.bf16.msra.mxu0 %v3097
      %3330 = vmatprep.subr.bf16.mxu0 0
      %3331 = vmatpush2.bf16.msra.mxu0 %v3094
      %3332 = vmatprep.subr.bf16.mxu0 0
      %3333 = vmatpush2.bf16.msra.mxu0 %v3091
      %3334 = vmatprep.subr.bf16.mxu0 0
      %3335 = vmatpush2.bf16.msra.mxu0 %v3088
      %3336 = vmatprep.subr.bf16.mxu0 0
      %3337 = vmatpush2.bf16.msra.mxu0 %v3085
      %3338 = vmatprep.subr.bf16.mxu0 0
      %3339 = vmatpush2.bf16.msra.mxu0 %v3082
      %3340 = vmatprep.mubr.bf16.mxu0 %v2780
      %3341 = vmatmul.mubr.bf16.gmra.mxu0 %v2779
      %v3342 = vpop.f32.mrf.mxu0
      %v3343 = vadd.f32 %v2760, %v3342
      %v3344 = vpop.f32.mrf.mxu0
      %v3345 = vpop.f32.mrf.mxu0
      %v3346 = vadd.f32 %v2765, %v3345
      %v3347 = vpop.f32.mrf.mxu0
      %3348 = vdwg.mxu0
      %3349 = vmatprep.subr.bf16.mxu0 0
      %3350 = vmatpush1.bf16.msra.mxu0 %v3127
      %3351 = vmatprep.subr.bf16.mxu0 0
      %3352 = vmatpush1.bf16.msra.mxu0 %v3124
      %3353 = vmatprep.subr.bf16.mxu0 0
      %3354 = vmatpush1.bf16.msra.mxu0 %v3121
      %3355 = vmatprep.subr.bf16.mxu0 0
      %3356 = vmatpush1.bf16.msra.mxu0 %v3118
      %3357 = vmatprep.subr.bf16.mxu0 0
      %3358 = vmatpush1.bf16.msra.mxu0 %v3115
      %3359 = vmatprep.subr.bf16.mxu0 0
      %3360 = vmatpush1.bf16.msra.mxu0 %v3112
      %3361 = vmatprep.subr.bf16.mxu0 0
      %3362 = vmatpush1.bf16.msra.mxu0 %v3109
      %3363 = vmatprep.subr.bf16.mxu0 0
      %3364 = vmatpush1.bf16.msra.mxu0 %v3106
      %3365 = vmatprep.subr.bf16.mxu0 0
      %3366 = vmatpush2.bf16.msra.mxu0 0
      %3367 = vmatprep.subr.bf16.mxu0 0
      %3368 = vmatpush2.bf16.msra.mxu0 0
      %3369 = vmatprep.subr.bf16.mxu0 0
      %3370 = vmatpush2.bf16.msra.mxu0 0
      %3371 = vmatprep.subr.bf16.mxu0 0
      %3372 = vmatpush2.bf16.msra.mxu0 0
      %3373 = vmatprep.subr.bf16.mxu0 0
      %3374 = vmatpush2.bf16.msra.mxu0 0
      %3375 = vmatprep.subr.bf16.mxu0 0
      %3376 = vmatpush2.bf16.msra.mxu0 %v3136
      %3377 = vmatprep.subr.bf16.mxu0 0
      %3378 = vmatpush2.bf16.msra.mxu0 %v3133
      %3379 = vmatprep.subr.bf16.mxu0 0
      %3380 = vmatpush2.bf16.msra.mxu0 %v3130
      %3381 = vmatprep.mubr.bf16.mxu0 %v3220
      %3382 = vmatmul.mubr.bf16.gmra.mxu0 %v2781
      %v3383 = vpop.f32.mrf.mxu0
      %v3384 = vadd.f32 %v3343, %v3383
      %v3385 = vpop.f32.mrf.mxu0
      %v3386 = vpop.f32.mrf.mxu0
      %v3387 = vadd.f32 %v3346, %v3386
      %v3388 = vpop.f32.mrf.mxu0
      %3389 = vdwg.mxu0
      %v3390 = vmul.f32 %v3300, %v1102
      %v3391 = vmul.f32 %v3302, %v1106
      %v3392 = vmul.f32 %v3384, %v1110
      %v3393 = vmul.f32 %v3304, %v1102
      %v3394 = vmul.f32 %v3306, %v1106
      %v3395 = vmul.f32 %v3387, %v1110
      %v3396 = vpack.c.bf16 %v3393, %v3390
      %v3397 = vpack.c.bf16 %v3394, %v3391
      %v3398 = vpack.c.bf16 %v3395, %v3392
      %v3402 = vunpack.c.l.b16 %v3396
      %v3403 = vunpack.c.l.b16 %v3397
      %v3404 = vunpack.c.l.b16 %v3398
      %v3405 = vunpack.c.h.b16 %v3396
      %v3406 = vunpack.c.h.b16 %v3397
      %v3407 = vunpack.c.h.b16 %v3398
      %v3408 = vpack.c.b16 %v3403, %v3402
      %v3409 = vpack.c.b16 %v3404, %v3404
      %v3410 = vpack.c.b16 %v3406, %v3405
      %v3411 = vpack.c.b16 %v3407, %v3407
      %3416 = vst [vmem:[#allocation2 + $0x4] sm:$0xff] %v3408
      %3417 = vst.msk [vmem:[#allocation2 + $0xc] sm:$0xf] %vm378, %v3409
      %3418 = vst [vmem:[#allocation2 + $0x14] sm:$0xff] %v3410
      %3419 = vst.msk [vmem:[#allocation2 + $0x1c] sm:$0xf] %vm378, %v3411
      %v3420 = vld [vmem:[#allocation2] sm:$0xff]
      %v3421 = vld [vmem:[#allocation2 + $0x8] sm:$0xff]
      %v3422 = vld [vmem:[#allocation2 + $0x10] sm:$0xff]
      %v3423 = vld [vmem:[#allocation2 + $0x18] sm:$0xff]
      %3428 = vrot.lane.b32.xlu0 %v3420, 19
      %v3429 = vpop.permute.xlu0 %3428
      %3430 = vrot.lane.b32.xlu0 %v3421, 19
      %v3431 = vpop.permute.xlu0 %3430
      %3432 = vrot.lane.b32.xlu0 %v3422, 19
      %v3433 = vpop.permute.xlu0 %3432
      %3434 = vrot.lane.b32.xlu0 %v3423, 19
      %v3435 = vpop.permute.xlu0 %3434
      %v3436 = vrot.slane %v3429, 4
      %v3437 = vrot.slane %v3431, 4
      %v3438 = vrot.slane %v3433, 4
      %v3439 = vrot.slane %v3435, 4
      %v3440 = vsel %vm365, %v3436, %v3437
      %v3441 = vsel %vm367, %v3429, %v3440
      %v3442 = vsel %vm367, %v3431, %v3437
      %v3443 = vsel %vm365, %v3438, %v3439
      %v3444 = vsel %vm367, %v3433, %v3443
      %v3445 = vsel %vm367, %v3435, %v3439
      %3450 = vst [vmem:[#allocation4 + $0x288] sm:$0xff] %v3441
      %3451 = vst.msk [vmem:[#allocation4 + $0x290] sm:$0xf] %vm378, %v3442
      %3452 = vst [vmem:[#allocation4 + $0x294] sm:$0xff] %v3444
      %3453 = vst.msk [vmem:[#allocation4 + $0x29c] sm:$0xf] %vm378, %v3445
      %v3454 = vld [vmem:[#allocation2] sm:$0xff]
      %v3455 = vld [vmem:[#allocation2 + $0x8] sm:$0xff]
      %v3456 = vld [vmem:[#allocation2 + $0x10] sm:$0xff]
      %v3457 = vld [vmem:[#allocation2 + $0x18] sm:$0xff]
      %3462 = vrot.lane.b32.xlu0 %v3454, 18
      %v3463 = vpop.permute.xlu0 %3462
      %3464 = vrot.lane.b32.xlu0 %v3455, 18
      %v3465 = vpop.permute.xlu0 %3464
      %3466 = vrot.lane.b32.xlu0 %v3456, 18
      %v3467 = vpop.permute.xlu0 %3466
      %3468 = vrot.lane.b32.xlu0 %v3457, 18
      %v3469 = vpop.permute.xlu0 %3468
      %v3470 = vrot.slane %v3463, 4
      %v3471 = vrot.slane %v3465, 4
      %v3472 = vrot.slane %v3467, 4
      %v3473 = vrot.slane %v3469, 4
      %v3474 = vsel %vm365, %v3470, %v3471
      %v3475 = vsel %vm403, %v3463, %v3474
      %v3476 = vsel %vm403, %v3465, %v3471
      %v3477 = vsel %vm365, %v3472, %v3473
      %v3478 = vsel %vm403, %v3467, %v3477
      %v3479 = vsel %vm403, %v3469, %v3473
      %3484 = vst [vmem:[#allocation4 + $0x2a0] sm:$0xff] %v3475
      %3485 = vst.msk [vmem:[#allocation4 + $0x2a8] sm:$0xf] %vm378, %v3476
      %3486 = vst [vmem:[#allocation4 + $0x2ac] sm:$0xff] %v3478
      %3487 = vst.msk [vmem:[#allocation4 + $0x2b4] sm:$0xf] %vm378, %v3479
      %v3488 = vld [vmem:[#allocation2] sm:$0xff]
      %v3489 = vld [vmem:[#allocation2 + $0x8] sm:$0xff]
      %v3490 = vld [vmem:[#allocation2 + $0x10] sm:$0xff]
      %v3491 = vld [vmem:[#allocation2 + $0x18] sm:$0xff]
      %3496 = vrot.lane.b32.xlu0 %v3488, 17
      %v3497 = vpop.permute.xlu0 %3496
      %3498 = vrot.lane.b32.xlu0 %v3489, 17
      %v3499 = vpop.permute.xlu0 %3498
      %3500 = vrot.lane.b32.xlu0 %v3490, 17
      %v3501 = vpop.permute.xlu0 %3500
      %3502 = vrot.lane.b32.xlu0 %v3491, 17
      %v3503 = vpop.permute.xlu0 %3502
      %v3504 = vrot.slane %v3497, 4
      %v3505 = vrot.slane %v3499, 4
      %v3506 = vrot.slane %v3501, 4
      %v3507 = vrot.slane %v3503, 4
      %v3508 = vsel %vm365, %v3504, %v3505
      %v3509 = vsel %vm438, %v3497, %v3508
      %v3510 = vsel %vm438, %v3499, %v3505
      %v3511 = vsel %vm365, %v3506, %v3507
      %v3512 = vsel %vm438, %v3501, %v3511
      %v3513 = vsel %vm438, %v3503, %v3507
      %3518 = vst [vmem:[#allocation4 + $0x2b8] sm:$0xff] %v3509
      %3519 = vst.msk [vmem:[#allocation4 + $0x2c0] sm:$0xf] %vm378, %v3510
      %3520 = vst [vmem:[#allocation4 + $0x2c4] sm:$0xff] %v3512
      %3521 = vst.msk [vmem:[#allocation4 + $0x2cc] sm:$0xf] %vm378, %v3513
      %v3522 = vld [vmem:[#allocation2] sm:$0xff]
      %v3523 = vld [vmem:[#allocation2 + $0x8] sm:$0xff]
      %v3524 = vld [vmem:[#allocation2 + $0x10] sm:$0xff]
      %v3525 = vld [vmem:[#allocation2 + $0x18] sm:$0xff]
      %3530 = vrot.lane.b32.xlu0 %v3522, 1
      %v3531 = vpop.permute.xlu0 %3530
      %3532 = vrot.lane.b32.xlu0 %v3523, 1
      %v3533 = vpop.permute.xlu0 %3532
      %3534 = vrot.lane.b32.xlu0 %v3524, 1
      %v3535 = vpop.permute.xlu0 %3534
      %3536 = vrot.lane.b32.xlu0 %v3525, 1
      %v3537 = vpop.permute.xlu0 %3536
      %v3538 = vrot.slane %v3531, 4
      %v3539 = vrot.slane %v3533, 4
      %v3540 = vrot.slane %v3535, 4
      %v3541 = vrot.slane %v3537, 4
      %v3542 = vsel %vm365, %v3538, %v3539
      %v3543 = vsel %vm473, %v3531, %v3542
      %v3544 = vsel %vm473, %v3533, %v3539
      %v3545 = vsel %vm365, %v3540, %v3541
      %v3546 = vsel %vm473, %v3535, %v3545
      %v3547 = vsel %vm473, %v3537, %v3541
      %3552 = vst [vmem:[#allocation4 + $0x2d0] sm:$0xff] %v3543
      %3553 = vst.msk [vmem:[#allocation4 + $0x2d8] sm:$0xf] %vm378, %v3544
      %3554 = vst [vmem:[#allocation4 + $0x2dc] sm:$0xff] %v3546
      %3555 = vst.msk [vmem:[#allocation4 + $0x2e4] sm:$0xf] %vm378, %v3547
      %v3556 = vld [vmem:[#allocation2 + $0x4] sm:$0xff]
      %v3557 = vld [vmem:[#allocation2 + $0xc] sm:$0xf]
      %v3558 = vld [vmem:[#allocation2 + $0x14] sm:$0xff]
      %v3559 = vld [vmem:[#allocation2 + $0x1c] sm:$0xf]
      %3560 = vst [vmem:[#allocation4 + $0x2e8] sm:$0xff] %v3556
      %3561 = vst.msk [vmem:[#allocation4 + $0x2f0] sm:$0xf] %vm378, %v3557
      %3562 = vst [vmem:[#allocation4 + $0x2f4] sm:$0xff] %v3558
      %3563 = vst.msk [vmem:[#allocation4 + $0x2fc] sm:$0xf] %vm378, %v3559
      %v3564 = vld [vmem:[#allocation2 + $0x4] sm:$0xff]
      %v3565 = vld [vmem:[#allocation2 + $0xc] sm:$0xf]
      %v3566 = vld [vmem:[#allocation2 + $0x14] sm:$0xff]
      %v3567 = vld [vmem:[#allocation2 + $0x1c] sm:$0xf]
      %3572 = vrot.lane.b32.xlu0 %v3564, 127
      %v3573 = vpop.permute.xlu0 %3572
      %3574 = vrot.lane.b32.xlu0 %v3565, 127
      %v3575 = vpop.permute.xlu0 %3574
      %3576 = vrot.lane.b32.xlu0 %v3566, 127
      %v3577 = vpop.permute.xlu0 %3576
      %3578 = vrot.lane.b32.xlu0 %v3567, 127
      %v3579 = vpop.permute.xlu0 %3578
      %v3580 = vrot.slane %v3573, 4
      %v3581 = vrot.slane %v3575, 4
      %v3582 = vrot.slane %v3577, 4
      %v3583 = vrot.slane %v3579, 4
      %v3584 = vsel %vm365, %v3580, %v3581
      %v3585 = vsel %vm516, %v3573, %v3584
      %v3586 = vsel %vm365, %v3582, %v3583
      %v3587 = vsel %vm516, %v3577, %v3586
      %3592 = vst [vmem:[#allocation4 + $0x300] sm:$0xff] %v3585
      %3593 = vst.msk [vmem:[#allocation4 + $0x308] sm:$0xf] %vm378, %v3575
      %3594 = vst [vmem:[#allocation4 + $0x30c] sm:$0xff] %v3587
      %3595 = vst.msk [vmem:[#allocation4 + $0x314] sm:$0xf] %vm378, %v3579
      %v3596 = vld [vmem:[#allocation2 + $0x4] sm:$0xff]
      %v3597 = vld [vmem:[#allocation2 + $0xc] sm:$0xf]
      %v3598 = vld [vmem:[#allocation2 + $0x14] sm:$0xff]
      %v3599 = vld [vmem:[#allocation2 + $0x1c] sm:$0xf]
      %3604 = vrot.lane.b32.xlu0 %v3596, 111
      %v3605 = vpop.permute.xlu0 %3604
      %3606 = vrot.lane.b32.xlu0 %v3597, 111
      %v3607 = vpop.permute.xlu0 %3606
      %3608 = vrot.lane.b32.xlu0 %v3598, 111
      %v3609 = vpop.permute.xlu0 %3608
      %3610 = vrot.lane.b32.xlu0 %v3599, 111
      %v3611 = vpop.permute.xlu0 %3610
      %v3612 = vrot.slane %v3605, 4
      %v3613 = vrot.slane %v3607, 4
      %v3614 = vrot.slane %v3609, 4
      %v3615 = vrot.slane %v3611, 4
      %v3616 = vsel %vm365, %v3612, %v3613
      %v3617 = vsel %vm549, %v3605, %v3616
      %v3618 = vsel %vm365, %v3614, %v3615
      %v3619 = vsel %vm549, %v3609, %v3618
      %3624 = vst [vmem:[#allocation4 + $0x318] sm:$0xff] %v3617
      %3625 = vst.msk [vmem:[#allocation4 + $0x320] sm:$0xf] %vm378, %v3607
      %3626 = vst [vmem:[#allocation4 + $0x324] sm:$0xff] %v3619
      %3627 = vst.msk [vmem:[#allocation4 + $0x32c] sm:$0xf] %vm378, %v3611
      %v3628 = vld [vmem:[#allocation2 + $0x4] sm:$0xff]
      %v3629 = vld [vmem:[#allocation2 + $0xc] sm:$0xf]
      %v3630 = vld [vmem:[#allocation2 + $0x14] sm:$0xff]
      %v3631 = vld [vmem:[#allocation2 + $0x1c] sm:$0xf]
      %3636 = vrot.lane.b32.xlu0 %v3628, 110
      %v3637 = vpop.permute.xlu0 %3636
      %3638 = vrot.lane.b32.xlu0 %v3629, 110
      %v3639 = vpop.permute.xlu0 %3638
      %3640 = vrot.lane.b32.xlu0 %v3630, 110
      %v3641 = vpop.permute.xlu0 %3640
      %3642 = vrot.lane.b32.xlu0 %v3631, 110
      %v3643 = vpop.permute.xlu0 %3642
      %v3644 = vrot.slane %v3637, 4
      %v3645 = vrot.slane %v3639, 4
      %v3646 = vrot.slane %v3641, 4
      %v3647 = vrot.slane %v3643, 4
      %v3648 = vsel %vm365, %v3644, %v3645
      %v3649 = vsel %vm582, %v3637, %v3648
      %v3650 = vsel %vm365, %v3646, %v3647
      %v3651 = vsel %vm582, %v3641, %v3650
      %3656 = vst [vmem:[#allocation4 + $0x330] sm:$0xff] %v3649
      %3657 = vst.msk [vmem:[#allocation4 + $0x338] sm:$0xf] %vm378, %v3639
      %3658 = vst [vmem:[#allocation4 + $0x33c] sm:$0xff] %v3651
      %3659 = vst.msk [vmem:[#allocation4 + $0x344] sm:$0xf] %vm378, %v3643
      %v3660 = vld [vmem:[#allocation2 + $0x4] sm:$0xff]
      %v3661 = vld [vmem:[#allocation2 + $0xc] sm:$0xf]
      %v3662 = vld [vmem:[#allocation2 + $0x14] sm:$0xff]
      %v3663 = vld [vmem:[#allocation2 + $0x1c] sm:$0xf]
      %3668 = vrot.lane.b32.xlu0 %v3660, 109
      %v3669 = vpop.permute.xlu0 %3668
      %3670 = vrot.lane.b32.xlu0 %v3661, 109
      %v3671 = vpop.permute.xlu0 %3670
      %3672 = vrot.lane.b32.xlu0 %v3662, 109
      %v3673 = vpop.permute.xlu0 %3672
      %3674 = vrot.lane.b32.xlu0 %v3663, 109
      %v3675 = vpop.permute.xlu0 %3674
      %v3676 = vrot.slane %v3669, 4
      %v3677 = vrot.slane %v3671, 4
      %v3678 = vrot.slane %v3673, 4
      %v3679 = vrot.slane %v3675, 4
      %v3680 = vsel %vm365, %v3676, %v3677
      %v3681 = vsel %vm615, %v3669, %v3680
      %v3682 = vsel %vm365, %v3678, %v3679
      %v3683 = vsel %vm615, %v3673, %v3682
      %3688 = vst [vmem:[#allocation4 + $0x348] sm:$0xff] %v3681
      %3689 = vst.msk [vmem:[#allocation4 + $0x350] sm:$0xf] %vm378, %v3671
      %3690 = vst [vmem:[#allocation4 + $0x354] sm:$0xff] %v3683
      %3691 = vst.msk [vmem:[#allocation4 + $0x35c] sm:$0xf] %vm378, %v3675
      %v3692 = vld [vmem:[#allocation4 + $0x288] sm:$0xff]
      %v3693 = vld [vmem:[#allocation4 + $0x290] sm:$0xf]
      %v3694 = vld [vmem:[#allocation4 + $0x294] sm:$0xff]
      %v3695 = vld [vmem:[#allocation4 + $0x29c] sm:$0xf]
      %v3696 = vld [vmem:[#allocation4 + $0x2a0] sm:$0xff]
      %v3697 = vld [vmem:[#allocation4 + $0x2a8] sm:$0xf]
      %v3698 = vld [vmem:[#allocation4 + $0x2ac] sm:$0xff]
      %v3699 = vld [vmem:[#allocation4 + $0x2b4] sm:$0xf]
      %v3700 = vld [vmem:[#allocation4 + $0x2b8] sm:$0xff]
      %v3701 = vld [vmem:[#allocation4 + $0x2c0] sm:$0xf]
      %v3702 = vld [vmem:[#allocation4 + $0x2c4] sm:$0xff]
      %v3703 = vld [vmem:[#allocation4 + $0x2cc] sm:$0xf]
      %v3704 = vld [vmem:[#allocation4 + $0x2d0] sm:$0xff]
      %v3705 = vld [vmem:[#allocation4 + $0x2d8] sm:$0xf]
      %v3706 = vld [vmem:[#allocation4 + $0x2dc] sm:$0xff]
      %v3707 = vld [vmem:[#allocation4 + $0x2e4] sm:$0xf]
      %v3708 = vld [vmem:[#allocation4 + $0x2e8] sm:$0xff]
      %v3709 = vld [vmem:[#allocation4 + $0x2f0] sm:$0xf]
      %v3710 = vld [vmem:[#allocation4 + $0x2f4] sm:$0xff]
      %v3711 = vld [vmem:[#allocation4 + $0x2fc] sm:$0xf]
      %v3712 = vld [vmem:[#allocation4 + $0x300] sm:$0xff]
      %v3713 = vld [vmem:[#allocation4 + $0x308] sm:$0xf]
      %v3714 = vld [vmem:[#allocation4 + $0x30c] sm:$0xff]
      %v3715 = vld [vmem:[#allocation4 + $0x314] sm:$0xf]
      %v3716 = vld [vmem:[#allocation4 + $0x318] sm:$0xff]
      %v3717 = vld [vmem:[#allocation4 + $0x320] sm:$0xf]
      %v3718 = vld [vmem:[#allocation4 + $0x324] sm:$0xff]
      %v3719 = vld [vmem:[#allocation4 + $0x32c] sm:$0xf]
      %v3720 = vld [vmem:[#allocation4 + $0x330] sm:$0xff]
      %v3721 = vld [vmem:[#allocation4 + $0x338] sm:$0xf]
      %v3722 = vld [vmem:[#allocation4 + $0x33c] sm:$0xff]
      %v3723 = vld [vmem:[#allocation4 + $0x344] sm:$0xf]
      %v3724 = vld [vmem:[#allocation4 + $0x348] sm:$0xff]
      %v3725 = vld [vmem:[#allocation4 + $0x350] sm:$0xf]
      %v3726 = vld [vmem:[#allocation4 + $0x354] sm:$0xff]
      %v3727 = vld [vmem:[#allocation4 + $0x35c] sm:$0xf]
      %vm3728 = vcmp.ge.bf16.partialorder %v3692, 0
      %vm3729 = vcmp.ge.bf16.partialorder %v3693, 0
      %vm3730 = vcmp.ge.bf16.partialorder %v3694, 0
      %vm3731 = vcmp.ge.bf16.partialorder %v3695, 0
      %vm3732 = vcmp.ge.bf16.partialorder %v3696, 0
      %vm3733 = vcmp.ge.bf16.partialorder %v3697, 0
      %vm3734 = vcmp.ge.bf16.partialorder %v3698, 0
      %vm3735 = vcmp.ge.bf16.partialorder %v3699, 0
      %vm3736 = vcmp.ge.bf16.partialorder %v3700, 0
      %vm3737 = vcmp.ge.bf16.partialorder %v3701, 0
      %vm3738 = vcmp.ge.bf16.partialorder %v3702, 0
      %vm3739 = vcmp.ge.bf16.partialorder %v3703, 0
      %vm3740 = vcmp.ge.bf16.partialorder %v3704, 0
      %vm3741 = vcmp.ge.bf16.partialorder %v3705, 0
      %vm3742 = vcmp.ge.bf16.partialorder %v3706, 0
      %vm3743 = vcmp.ge.bf16.partialorder %v3707, 0
      %vm3744 = vcmp.ge.bf16.partialorder %v3708, 0
      %vm3745 = vcmp.ge.bf16.partialorder %v3709, 0
      %vm3746 = vcmp.ge.bf16.partialorder %v3710, 0
      %vm3747 = vcmp.ge.bf16.partialorder %v3711, 0
      %vm3748 = vcmp.ge.bf16.partialorder %v3712, 0
      %vm3749 = vcmp.ge.bf16.partialorder %v3713, 0
      %vm3750 = vcmp.ge.bf16.partialorder %v3714, 0
      %vm3751 = vcmp.ge.bf16.partialorder %v3715, 0
      %vm3752 = vcmp.ge.bf16.partialorder %v3716, 0
      %vm3753 = vcmp.ge.bf16.partialorder %v3717, 0
      %vm3754 = vcmp.ge.bf16.partialorder %v3718, 0
      %vm3755 = vcmp.ge.bf16.partialorder %v3719, 0
      %vm3756 = vcmp.ge.bf16.partialorder %v3720, 0
      %vm3757 = vcmp.ge.bf16.partialorder %v3721, 0
      %vm3758 = vcmp.ge.bf16.partialorder %v3722, 0
      %vm3759 = vcmp.ge.bf16.partialorder %v3723, 0
      %vm3760 = vcmp.ge.bf16.partialorder %v3724, 0
      %vm3761 = vcmp.ge.bf16.partialorder %v3725, 0
      %vm3762 = vcmp.ge.bf16.partialorder %v3726, 0
      %vm3763 = vcmp.ge.bf16.partialorder %v3727, 0
      %v3764 = vmul.bf16 %v3692, 1036860877
      %v3765 = vmul.bf16 %v3693, 1036860877
      %v3766 = vmul.bf16 %v3694, 1036860877
      %v3767 = vmul.bf16 %v3695, 1036860877
      %v3768 = vmul.bf16 %v3696, 1036860877
      %v3769 = vmul.bf16 %v3697, 1036860877
      %v3770 = vmul.bf16 %v3698, 1036860877
      %v3771 = vmul.bf16 %v3699, 1036860877
      %v3772 = vmul.bf16 %v3700, 1036860877
      %v3773 = vmul.bf16 %v3701, 1036860877
      %v3774 = vmul.bf16 %v3702, 1036860877
      %v3775 = vmul.bf16 %v3703, 1036860877
      %v3776 = vmul.bf16 %v3704, 1036860877
      %v3777 = vmul.bf16 %v3705, 1036860877
      %v3778 = vmul.bf16 %v3706, 1036860877
      %v3779 = vmul.bf16 %v3707, 1036860877
      %v3780 = vmul.bf16 %v3708, 1036860877
      %v3781 = vmul.bf16 %v3709, 1036860877
      %v3782 = vmul.bf16 %v3710, 1036860877
      %v3783 = vmul.bf16 %v3711, 1036860877
      %v3784 = vmul.bf16 %v3712, 1036860877
      %v3785 = vmul.bf16 %v3713, 1036860877
      %v3786 = vmul.bf16 %v3714, 1036860877
      %v3787 = vmul.bf16 %v3715, 1036860877
      %v3788 = vmul.bf16 %v3716, 1036860877
      %v3789 = vmul.bf16 %v3717, 1036860877
      %v3790 = vmul.bf16 %v3718, 1036860877
      %v3791 = vmul.bf16 %v3719, 1036860877
      %v3792 = vmul.bf16 %v3720, 1036860877
      %v3793 = vmul.bf16 %v3721, 1036860877
      %v3794 = vmul.bf16 %v3722, 1036860877
      %v3795 = vmul.bf16 %v3723, 1036860877
      %v3796 = vmul.bf16 %v3724, 1036860877
      %v3797 = vmul.bf16 %v3725, 1036860877
      %v3798 = vmul.bf16 %v3726, 1036860877
      %v3799 = vmul.bf16 %v3727, 1036860877
      %v3800 = vsel %vm3728, %v3692, %v3764
      %v3801 = vsel %vm3729, %v3693, %v3765
      %v3802 = vsel %vm3730, %v3694, %v3766
      %v3803 = vsel %vm3731, %v3695, %v3767
      %v3804 = vsel %vm3732, %v3696, %v3768
      %v3805 = vsel %vm3733, %v3697, %v3769
      %v3806 = vsel %vm3734, %v3698, %v3770
      %v3807 = vsel %vm3735, %v3699, %v3771
      %v3808 = vsel %vm3736, %v3700, %v3772
      %v3809 = vsel %vm3737, %v3701, %v3773
      %v3810 = vsel %vm3738, %v3702, %v3774
      %v3811 = vsel %vm3739, %v3703, %v3775
      %v3812 = vsel %vm3740, %v3704, %v3776
      %v3813 = vsel %vm3741, %v3705, %v3777
      %v3814 = vsel %vm3742, %v3706, %v3778
      %v3815 = vsel %vm3743, %v3707, %v3779
      %v3816 = vsel %vm3744, %v3708, %v3780
      %v3817 = vsel %vm3745, %v3709, %v3781
      %v3818 = vsel %vm3746, %v3710, %v3782
      %v3819 = vsel %vm3747, %v3711, %v3783
      %v3820 = vsel %vm3748, %v3712, %v3784
      %v3821 = vsel %vm3749, %v3713, %v3785
      %v3822 = vsel %vm3750, %v3714, %v3786
      %v3823 = vsel %vm3751, %v3715, %v3787
      %v3824 = vsel %vm3752, %v3716, %v3788
      %v3825 = vsel %vm3753, %v3717, %v3789
      %v3826 = vsel %vm3754, %v3718, %v3790
      %v3827 = vsel %vm3755, %v3719, %v3791
      %v3828 = vsel %vm3756, %v3720, %v3792
      %v3829 = vsel %vm3757, %v3721, %v3793
      %v3830 = vsel %vm3758, %v3722, %v3794
      %v3831 = vsel %vm3759, %v3723, %v3795
      %v3832 = vsel %vm3760, %v3724, %v3796
      %v3833 = vsel %vm3761, %v3725, %v3797
      %v3834 = vsel %vm3762, %v3726, %v3798
      %v3835 = vsel %vm3763, %v3727, %v3799
      %3836 = vst [vmem:[#allocation3 + $0x288] sm:$0xff] %v3800
      %3837 = vst.msk [vmem:[#allocation3 + $0x290] sm:$0xf] %vm378, %v3801
      %3838 = vst [vmem:[#allocation3 + $0x294] sm:$0xff] %v3802
      %3839 = vst.msk [vmem:[#allocation3 + $0x29c] sm:$0xf] %vm378, %v3803
      %3840 = vst [vmem:[#allocation3 + $0x2a0] sm:$0xff] %v3804
      %3841 = vst.msk [vmem:[#allocation3 + $0x2a8] sm:$0xf] %vm378, %v3805
      %3842 = vst [vmem:[#allocation3 + $0x2ac] sm:$0xff] %v3806
      %3843 = vst.msk [vmem:[#allocation3 + $0x2b4] sm:$0xf] %vm378, %v3807
      %3844 = vst [vmem:[#allocation3 + $0x2b8] sm:$0xff] %v3808
      %3845 = vst.msk [vmem:[#allocation3 + $0x2c0] sm:$0xf] %vm378, %v3809
      %3846 = vst [vmem:[#allocation3 + $0x2c4] sm:$0xff] %v3810
      %3847 = vst.msk [vmem:[#allocation3 + $0x2cc] sm:$0xf] %vm378, %v3811
      %3848 = vst [vmem:[#allocation3 + $0x2d0] sm:$0xff] %v3812
      %3849 = vst.msk [vmem:[#allocation3 + $0x2d8] sm:$0xf] %vm378, %v3813
      %3850 = vst [vmem:[#allocation3 + $0x2dc] sm:$0xff] %v3814
      %3851 = vst.msk [vmem:[#allocation3 + $0x2e4] sm:$0xf] %vm378, %v3815
      %3852 = vst [vmem:[#allocation3 + $0x2e8] sm:$0xff] %v3816
      %3853 = vst.msk [vmem:[#allocation3 + $0x2f0] sm:$0xf] %vm378, %v3817
      %3854 = vst [vmem:[#allocation3 + $0x2f4] sm:$0xff] %v3818
      %3855 = vst.msk [vmem:[#allocation3 + $0x2fc] sm:$0xf] %vm378, %v3819
      %3856 = vst [vmem:[#allocation3 + $0x300] sm:$0xff] %v3820
      %3857 = vst.msk [vmem:[#allocation3 + $0x308] sm:$0xf] %vm378, %v3821
      %3858 = vst [vmem:[#allocation3 + $0x30c] sm:$0xff] %v3822
      %3859 = vst.msk [vmem:[#allocation3 + $0x314] sm:$0xf] %vm378, %v3823
      %3860 = vst [vmem:[#allocation3 + $0x318] sm:$0xff] %v3824
      %3861 = vst.msk [vmem:[#allocation3 + $0x320] sm:$0xf] %vm378, %v3825
      %3862 = vst [vmem:[#allocation3 + $0x324] sm:$0xff] %v3826
      %3863 = vst.msk [vmem:[#allocation3 + $0x32c] sm:$0xf] %vm378, %v3827
      %3864 = vst [vmem:[#allocation3 + $0x330] sm:$0xff] %v3828
      %3865 = vst.msk [vmem:[#allocation3 + $0x338] sm:$0xf] %vm378, %v3829
      %3866 = vst [vmem:[#allocation3 + $0x33c] sm:$0xff] %v3830
      %3867 = vst.msk [vmem:[#allocation3 + $0x344] sm:$0xf] %vm378, %v3831
      %3868 = vst [vmem:[#allocation3 + $0x348] sm:$0xff] %v3832
      %3869 = vst.msk [vmem:[#allocation3 + $0x350] sm:$0xf] %vm378, %v3833
      %3870 = vst [vmem:[#allocation3 + $0x354] sm:$0xff] %v3834
      %3871 = vst.msk [vmem:[#allocation3 + $0x35c] sm:$0xf] %vm378, %v3835
      %v3872 = vld [vmem:[%s5] sm:$0xff]
      %v3873 = vld [vmem:[%s5 + $0x8] sm:$0xff]
      %v3874 = vld [vmem:[%s5 + $0x10] sm:$0xf]
      %v3875 = vld [vmem:[%s5 + $0x14] sm:$0xff]
      %v3876 = vld [vmem:[%s5 + $0x1c] sm:$0xff]
      %v3877 = vld [vmem:[%s5 + $0x24] sm:$0xf]
      %v3878 = vld [vmem:[#allocation3] sm:$0xff]
      %v3879 = vld [vmem:[#allocation3 + $0x8] sm:$0xf]
      %v3880 = vld [vmem:[#allocation3 + $0xc] sm:$0xff]
      %v3881 = vld [vmem:[#allocation3 + $0x14] sm:$0xf]
      %v3882 = vld [vmem:[#allocation3 + $0x18] sm:$0xff]
      %v3883 = vld [vmem:[#allocation3 + $0x20] sm:$0xf]
      %v3884 = vld [vmem:[#allocation3 + $0x24] sm:$0xff]
      %v3885 = vld [vmem:[#allocation3 + $0x2c] sm:$0xf]
      %v3886 = vld [vmem:[#allocation3 + $0x30] sm:$0xff]
      %v3887 = vld [vmem:[#allocation3 + $0x38] sm:$0xf]
      %v3888 = vld [vmem:[#allocation3 + $0x3c] sm:$0xff]
      %v3889 = vld [vmem:[#allocation3 + $0x44] sm:$0xf]
      %v3890 = vld [vmem:[#allocation3 + $0x48] sm:$0xff]
      %v3891 = vld [vmem:[#allocation3 + $0x50] sm:$0xf]
      %v3892 = vld [vmem:[#allocation3 + $0x54] sm:$0xff]
      %v3893 = vld [vmem:[#allocation3 + $0x5c] sm:$0xf]
      %v3894 = vld [vmem:[#allocation3 + $0x60] sm:$0xff]
      %v3895 = vld [vmem:[#allocation3 + $0x68] sm:$0xf]
      %v3896 = vld [vmem:[#allocation3 + $0x6c] sm:$0xff]
      %v3897 = vld [vmem:[#allocation3 + $0x74] sm:$0xf]
      %v3898 = vld [vmem:[#allocation3 + $0x78] sm:$0xff]
      %v3899 = vld [vmem:[#allocation3 + $0x80] sm:$0xf]
      %v3900 = vld [vmem:[#allocation3 + $0x84] sm:$0xff]
      %v3901 = vld [vmem:[#allocation3 + $0x8c] sm:$0xf]
      %v3902 = vld [vmem:[#allocation3 + $0x90] sm:$0xff]
      %v3903 = vld [vmem:[#allocation3 + $0x98] sm:$0xf]
      %v3904 = vld [vmem:[#allocation3 + $0x9c] sm:$0xff]
      %v3905 = vld [vmem:[#allocation3 + $0xa4] sm:$0xf]
      %v3906 = vld [vmem:[#allocation3 + $0xa8] sm:$0xff]
      %v3907 = vld [vmem:[#allocation3 + $0xb0] sm:$0xf]
      %v3908 = vld [vmem:[#allocation3 + $0xb4] sm:$0xff]
      %v3909 = vld [vmem:[#allocation3 + $0xbc] sm:$0xf]
      %v3910 = vld [vmem:[#allocation3 + $0xc0] sm:$0xff]
      %v3911 = vld [vmem:[#allocation3 + $0xc8] sm:$0xf]
      %v3912 = vld [vmem:[#allocation3 + $0xcc] sm:$0xff]
      %v3913 = vld [vmem:[#allocation3 + $0xd4] sm:$0xf]
      %v3914 = vld [vmem:[#allocation3 + $0xd8] sm:$0xff]
      %v3915 = vld [vmem:[#allocation3 + $0xe0] sm:$0xf]
      %v3916 = vld [vmem:[#allocation3 + $0xe4] sm:$0xff]
      %v3917 = vld [vmem:[#allocation3 + $0xec] sm:$0xf]
      %v3918 = vld [vmem:[#allocation3 + $0xf0] sm:$0xff]
      %v3919 = vld [vmem:[#allocation3 + $0xf8] sm:$0xf]
      %v3920 = vld [vmem:[#allocation3 + $0xfc] sm:$0xff]
      %v3921 = vld [vmem:[#allocation3 + $0x104] sm:$0xf]
      %v3922 = vld [vmem:[#allocation3 + $0x108] sm:$0xff]
      %v3923 = vld [vmem:[#allocation3 + $0x110] sm:$0xf]
      %v3924 = vld [vmem:[#allocation3 + $0x114] sm:$0xff]
      %v3925 = vld [vmem:[#allocation3 + $0x11c] sm:$0xf]
      %v3926 = vld [vmem:[#allocation3 + $0x120] sm:$0xff]
      %v3927 = vld [vmem:[#allocation3 + $0x128] sm:$0xf]
      %v3928 = vld [vmem:[#allocation3 + $0x12c] sm:$0xff]
      %v3929 = vld [vmem:[#allocation3 + $0x134] sm:$0xf]
      %v3930 = vld [vmem:[#allocation3 + $0x138] sm:$0xff]
      %v3931 = vld [vmem:[#allocation3 + $0x140] sm:$0xf]
      %v3932 = vld [vmem:[#allocation3 + $0x144] sm:$0xff]
      %v3933 = vld [vmem:[#allocation3 + $0x14c] sm:$0xf]
      %v3934 = vld [vmem:[#allocation3 + $0x150] sm:$0xff]
      %v3935 = vld [vmem:[#allocation3 + $0x158] sm:$0xf]
      %v3936 = vld [vmem:[#allocation3 + $0x15c] sm:$0xff]
      %v3937 = vld [vmem:[#allocation3 + $0x164] sm:$0xf]
      %v3938 = vld [vmem:[#allocation3 + $0x168] sm:$0xff]
      %v3939 = vld [vmem:[#allocation3 + $0x170] sm:$0xf]
      %v3940 = vld [vmem:[#allocation3 + $0x174] sm:$0xff]
      %v3941 = vld [vmem:[#allocation3 + $0x17c] sm:$0xf]
      %v3942 = vld [vmem:[#allocation3 + $0x180] sm:$0xff]
      %v3943 = vld [vmem:[#allocation3 + $0x188] sm:$0xf]
      %v3944 = vld [vmem:[#allocation3 + $0x18c] sm:$0xff]
      %v3945 = vld [vmem:[#allocation3 + $0x194] sm:$0xf]
      %v3946 = vld [vmem:[#allocation3 + $0x198] sm:$0xff]
      %v3947 = vld [vmem:[#allocation3 + $0x1a0] sm:$0xf]
      %v3948 = vld [vmem:[#allocation3 + $0x1a4] sm:$0xff]
      %v3949 = vld [vmem:[#allocation3 + $0x1ac] sm:$0xf]
      %v3950 = vld [vmem:[#allocation3 + $0x1b0] sm:$0xff]
      %v3951 = vld [vmem:[#allocation3 + $0x1b8] sm:$0xf]
      %v3952 = vld [vmem:[#allocation3 + $0x1bc] sm:$0xff]
      %v3953 = vld [vmem:[#allocation3 + $0x1c4] sm:$0xf]
      %v3954 = vld [vmem:[#allocation3 + $0x1c8] sm:$0xff]
      %v3955 = vld [vmem:[#allocation3 + $0x1d0] sm:$0xf]
      %v3956 = vld [vmem:[#allocation3 + $0x1d4] sm:$0xff]
      %v3957 = vld [vmem:[#allocation3 + $0x1dc] sm:$0xf]
      %v3958 = vld [vmem:[#allocation3 + $0x1e0] sm:$0xff]
      %v3959 = vld [vmem:[#allocation3 + $0x1e8] sm:$0xf]
      %v3960 = vld [vmem:[#allocation3 + $0x1ec] sm:$0xff]
      %v3961 = vld [vmem:[#allocation3 + $0x1f4] sm:$0xf]
      %v3962 = vld [vmem:[#allocation3 + $0x1f8] sm:$0xff]
      %v3963 = vld [vmem:[#allocation3 + $0x200] sm:$0xf]
      %v3964 = vld [vmem:[#allocation3 + $0x204] sm:$0xff]
      %v3965 = vld [vmem:[#allocation3 + $0x20c] sm:$0xf]
      %v3966 = vld [vmem:[#allocation3 + $0x210] sm:$0xff]
      %v3967 = vld [vmem:[#allocation3 + $0x218] sm:$0xf]
      %v3968 = vld [vmem:[#allocation3 + $0x21c] sm:$0xff]
      %v3969 = vld [vmem:[#allocation3 + $0x224] sm:$0xf]
      %v3970 = vld [vmem:[#allocation3 + $0x228] sm:$0xff]
      %v3971 = vld [vmem:[#allocation3 + $0x230] sm:$0xf]
      %v3972 = vld [vmem:[#allocation3 + $0x234] sm:$0xff]
      %v3973 = vld [vmem:[#allocation3 + $0x23c] sm:$0xf]
      %v3974 = vld [vmem:[#allocation3 + $0x240] sm:$0xff]
      %v3975 = vld [vmem:[#allocation3 + $0x248] sm:$0xf]
      %v3976 = vld [vmem:[#allocation3 + $0x24c] sm:$0xff]
      %v3977 = vld [vmem:[#allocation3 + $0x254] sm:$0xf]
      %v3978 = vld [vmem:[#allocation3 + $0x258] sm:$0xff]
      %v3979 = vld [vmem:[#allocation3 + $0x260] sm:$0xf]
      %v3980 = vld [vmem:[#allocation3 + $0x264] sm:$0xff]
      %v3981 = vld [vmem:[#allocation3 + $0x26c] sm:$0xf]
      %v3982 = vld [vmem:[#allocation3 + $0x270] sm:$0xff]
      %v3983 = vld [vmem:[#allocation3 + $0x278] sm:$0xf]
      %v3984 = vld [vmem:[#allocation3 + $0x27c] sm:$0xff]
      %v3985 = vld [vmem:[#allocation3 + $0x284] sm:$0xf]
      %v3986 = vld [vmem:[#allocation3 + $0x288] sm:$0xff]
      %v3987 = vld [vmem:[#allocation3 + $0x290] sm:$0xf]
      %v3988 = vld [vmem:[#allocation3 + $0x294] sm:$0xff]
      %v3989 = vld [vmem:[#allocation3 + $0x29c] sm:$0xf]
      %v3990 = vld [vmem:[#allocation3 + $0x2a0] sm:$0xff]
      %v3991 = vld [vmem:[#allocation3 + $0x2a8] sm:$0xf]
      %v3992 = vld [vmem:[#allocation3 + $0x2ac] sm:$0xff]
      %v3993 = vld [vmem:[#allocation3 + $0x2b4] sm:$0xf]
      %v3994 = vld [vmem:[#allocation3 + $0x2b8] sm:$0xff]
      %v3995 = vld [vmem:[#allocation3 + $0x2c0] sm:$0xf]
      %v3996 = vld [vmem:[#allocation3 + $0x2c4] sm:$0xff]
      %v3997 = vld [vmem:[#allocation3 + $0x2cc] sm:$0xf]
      %v3998 = vld [vmem:[#allocation3 + $0x2d0] sm:$0xff]
      %v3999 = vld [vmem:[#allocation3 + $0x2d8] sm:$0xf]
      %v4000 = vld [vmem:[#allocation3 + $0x2dc] sm:$0xff]
      %v4001 = vld [vmem:[#allocation3 + $0x2e4] sm:$0xf]
      %v4002 = vld [vmem:[#allocation3 + $0x2e8] sm:$0xff]
      %v4003 = vld [vmem:[#allocation3 + $0x2f0] sm:$0xf]
      %v4004 = vld [vmem:[#allocation3 + $0x2f4] sm:$0xff]
      %v4005 = vld [vmem:[#allocation3 + $0x2fc] sm:$0xf]
      %v4006 = vld [vmem:[#allocation3 + $0x300] sm:$0xff]
      %v4007 = vld [vmem:[#allocation3 + $0x308] sm:$0xf]
      %v4008 = vld [vmem:[#allocation3 + $0x30c] sm:$0xff]
      %v4009 = vld [vmem:[#allocation3 + $0x314] sm:$0xf]
      %v4010 = vld [vmem:[#allocation3 + $0x318] sm:$0xff]
      %v4011 = vld [vmem:[#allocation3 + $0x320] sm:$0xf]
      %v4012 = vld [vmem:[#allocation3 + $0x324] sm:$0xff]
      %v4013 = vld [vmem:[#allocation3 + $0x32c] sm:$0xf]
      %v4014 = vld [vmem:[#allocation3 + $0x330] sm:$0xff]
      %v4015 = vld [vmem:[#allocation3 + $0x338] sm:$0xf]
      %v4016 = vld [vmem:[#allocation3 + $0x33c] sm:$0xff]
      %v4017 = vld [vmem:[#allocation3 + $0x344] sm:$0xf]
      %v4018 = vld [vmem:[#allocation3 + $0x348] sm:$0xff]
      %v4019 = vld [vmem:[#allocation3 + $0x350] sm:$0xf]
      %v4020 = vld [vmem:[#allocation3 + $0x354] sm:$0xff]
      %v4021 = vld [vmem:[#allocation3 + $0x35c] sm:$0xf]
      %s4022 = scalar_lea.vmem %s7, 48
      %v4023 = vld [vmem:[%s4022] sm:$0xff]
      %v4024 = vld [vmem:[%s4022 + $0x8] sm:$0xff]
      %4026 = vset.pattern.permute.xlu0 0
      %4027 = vperm.xlu0 %4026, %v4023
      %v4028 = vpop.permute.xlu0 %4027
      %4031 = vset.pattern.permute.xlu0 0
      %4032 = vperm.xlu0 %4031, %v4024
      %v4033 = vpop.permute.xlu0 %4032
      %v4041 = vunpack.c.l.b16 %v3872
      %v4042 = vunpack.c.h.b16 %v3872
      %v4043 = vunpack.c.l.b16 %v3873
      %v4044 = vunpack.c.h.b16 %v3873
      %v4045 = vunpack.c.l.b16 %v3874
      %v4046 = vunpack.c.l.b16 %v3875
      %v4047 = vunpack.c.h.b16 %v3875
      %v4048 = vunpack.c.l.b16 %v3876
      %v4049 = vunpack.c.h.b16 %v3876
      %v4050 = vunpack.c.l.b16 %v3877
      %v4051 = vpack.c.b16 %v4046, %v4041
      %v4052 = vpack.c.b16 %v4047, %v4042
      %v4053 = vpack.c.b16 %v4048, %v4043
      %v4054 = vpack.c.b16 %v4049, %v4044
      %v4055 = vpack.c.b16 %v4050, %v4045
      %v4204 = vunpack.c.l.b16 %v3878
      %v4205 = vunpack.c.h.b16 %v3878
      %v4206 = vunpack.c.l.b16 %v3879
      %v4207 = vunpack.c.l.b16 %v3880
      %v4208 = vunpack.c.h.b16 %v3880
      %v4209 = vunpack.c.l.b16 %v3881
      %v4210 = vunpack.c.l.b16 %v3882
      %v4211 = vunpack.c.h.b16 %v3882
      %v4212 = vunpack.c.l.b16 %v3883
      %v4213 = vunpack.c.l.b16 %v3884
      %v4214 = vunpack.c.h.b16 %v3884
      %v4215 = vunpack.c.l.b16 %v3885
      %v4216 = vunpack.c.l.b16 %v3886
      %v4217 = vunpack.c.h.b16 %v3886
      %v4218 = vunpack.c.l.b16 %v3887
      %v4219 = vunpack.c.l.b16 %v3888
      %v4220 = vunpack.c.h.b16 %v3888
      %v4221 = vunpack.c.l.b16 %v3889
      %v4222 = vunpack.c.l.b16 %v3890
      %v4223 = vunpack.c.h.b16 %v3890
      %v4224 = vunpack.c.l.b16 %v3891
      %v4225 = vunpack.c.l.b16 %v3892
      %v4226 = vunpack.c.h.b16 %v3892
      %v4227 = vunpack.c.l.b16 %v3893
      %v4228 = vunpack.c.l.b16 %v3894
      %v4229 = vunpack.c.h.b16 %v3894
      %v4230 = vunpack.c.l.b16 %v3895
      %v4231 = vunpack.c.l.b16 %v3896
      %v4232 = vunpack.c.h.b16 %v3896
      %v4233 = vunpack.c.l.b16 %v3897
      %v4234 = vunpack.c.l.b16 %v3898
      %v4235 = vunpack.c.h.b16 %v3898
      %v4236 = vunpack.c.l.b16 %v3899
      %v4237 = vunpack.c.l.b16 %v3900
      %v4238 = vunpack.c.h.b16 %v3900
      %v4239 = vunpack.c.l.b16 %v3901
      %v4240 = vunpack.c.l.b16 %v3902
      %v4241 = vunpack.c.h.b16 %v3902
      %v4242 = vunpack.c.l.b16 %v3903
      %v4243 = vunpack.c.l.b16 %v3904
      %v4244 = vunpack.c.h.b16 %v3904
      %v4245 = vunpack.c.l.b16 %v3905
      %v4246 = vunpack.c.l.b16 %v3906
      %v4247 = vunpack.c.h.b16 %v3906
      %v4248 = vunpack.c.l.b16 %v3907
      %v4249 = vunpack.c.l.b16 %v3908
      %v4250 = vunpack.c.h.b16 %v3908
      %v4251 = vunpack.c.l.b16 %v3909
      %v4252 = vunpack.c.l.b16 %v3910
      %v4253 = vunpack.c.h.b16 %v3910
      %v4254 = vunpack.c.l.b16 %v3911
      %v4255 = vunpack.c.l.b16 %v3912
      %v4256 = vunpack.c.h.b16 %v3912
      %v4257 = vunpack.c.l.b16 %v3913
      %v4258 = vunpack.c.l.b16 %v3914
      %v4259 = vunpack.c.h.b16 %v3914
      %v4260 = vunpack.c.l.b16 %v3915
      %v4261 = vunpack.c.l.b16 %v3916
      %v4262 = vunpack.c.h.b16 %v3916
      %v4263 = vunpack.c.l.b16 %v3917
      %v4264 = vunpack.c.l.b16 %v3918
      %v4265 = vunpack.c.h.b16 %v3918
      %v4266 = vunpack.c.l.b16 %v3919
      %v4267 = vunpack.c.l.b16 %v3920
      %v4268 = vunpack.c.h.b16 %v3920
      %v4269 = vunpack.c.l.b16 %v3921
      %v4270 = vunpack.c.l.b16 %v3922
      %v4271 = vunpack.c.h.b16 %v3922
      %v4272 = vunpack.c.l.b16 %v3923
      %v4273 = vunpack.c.l.b16 %v3924
      %v4274 = vunpack.c.h.b16 %v3924
      %v4275 = vunpack.c.l.b16 %v3925
      %v4276 = vunpack.c.l.b16 %v3926
      %v4277 = vunpack.c.h.b16 %v3926
      %v4278 = vunpack.c.l.b16 %v3927
      %v4279 = vunpack.c.l.b16 %v3928
      %v4280 = vunpack.c.h.b16 %v3928
      %v4281 = vunpack.c.l.b16 %v3929
      %v4282 = vunpack.c.l.b16 %v3930
      %v4283 = vunpack.c.h.b16 %v3930
      %v4284 = vunpack.c.l.b16 %v3931
      %v4285 = vunpack.c.l.b16 %v3932
      %v4286 = vunpack.c.h.b16 %v3932
      %v4287 = vunpack.c.l.b16 %v3933
      %v4288 = vunpack.c.l.b16 %v3934
      %v4289 = vunpack.c.h.b16 %v3934
      %v4290 = vunpack.c.l.b16 %v3935
      %v4291 = vunpack.c.l.b16 %v3936
      %v4292 = vunpack.c.h.b16 %v3936
      %v4293 = vunpack.c.l.b16 %v3937
      %v4294 = vunpack.c.l.b16 %v3938
      %v4295 = vunpack.c.h.b16 %v3938
      %v4296 = vunpack.c.l.b16 %v3939
      %v4297 = vunpack.c.l.b16 %v3940
      %v4298 = vunpack.c.h.b16 %v3940
      %v4299 = vunpack.c.l.b16 %v3941
      %v4300 = vunpack.c.l.b16 %v3942
      %v4301 = vunpack.c.h.b16 %v3942
      %v4302 = vunpack.c.l.b16 %v3943
      %v4303 = vunpack.c.l.b16 %v3944
      %v4304 = vunpack.c.h.b16 %v3944
      %v4305 = vunpack.c.l.b16 %v3945
      %v4306 = vunpack.c.l.b16 %v3946
      %v4307 = vunpack.c.h.b16 %v3946
      %v4308 = vunpack.c.l.b16 %v3947
      %v4309 = vunpack.c.l.b16 %v3948
      %v4310 = vunpack.c.h.b16 %v3948
      %v4311 = vunpack.c.l.b16 %v3949
      %v4312 = vunpack.c.l.b16 %v3950
      %v4313 = vunpack.c.h.b16 %v3950
      %v4314 = vunpack.c.l.b16 %v3951
      %v4315 = vunpack.c.l.b16 %v3952
      %v4316 = vunpack.c.h.b16 %v3952
      %v4317 = vunpack.c.l.b16 %v3953
      %v4318 = vunpack.c.l.b16 %v3954
      %v4319 = vunpack.c.h.b16 %v3954
      %v4320 = vunpack.c.l.b16 %v3955
      %v4321 = vunpack.c.l.b16 %v3956
      %v4322 = vunpack.c.h.b16 %v3956
      %v4323 = vunpack.c.l.b16 %v3957
      %v4324 = vunpack.c.l.b16 %v3958
      %v4325 = vunpack.c.h.b16 %v3958
      %v4326 = vunpack.c.l.b16 %v3959
      %v4327 = vunpack.c.l.b16 %v3960
      %v4328 = vunpack.c.h.b16 %v3960
      %v4329 = vunpack.c.l.b16 %v3961
      %v4330 = vunpack.c.l.b16 %v3962
      %v4331 = vunpack.c.h.b16 %v3962
      %v4332 = vunpack.c.l.b16 %v3963
      %v4333 = vunpack.c.l.b16 %v3964
      %v4334 = vunpack.c.h.b16 %v3964
      %v4335 = vunpack.c.l.b16 %v3965
      %v4336 = vunpack.c.l.b16 %v3966
      %v4337 = vunpack.c.h.b16 %v3966
      %v4338 = vunpack.c.l.b16 %v3967
      %v4339 = vunpack.c.l.b16 %v3968
      %v4340 = vunpack.c.h.b16 %v3968
      %v4341 = vunpack.c.l.b16 %v3969
      %v4342 = vunpack.c.l.b16 %v3970
      %v4343 = vunpack.c.h.b16 %v3970
      %v4344 = vunpack.c.l.b16 %v3971
      %v4345 = vunpack.c.l.b16 %v3972
      %v4346 = vunpack.c.h.b16 %v3972
      %v4347 = vunpack.c.l.b16 %v3973
      %v4348 = vunpack.c.l.b16 %v3974
      %v4349 = vunpack.c.h.b16 %v3974
      %v4350 = vunpack.c.l.b16 %v3975
      %v4351 = vunpack.c.l.b16 %v3976
      %v4352 = vunpack.c.h.b16 %v3976
      %v4353 = vunpack.c.l.b16 %v3977
      %v4354 = vunpack.c.l.b16 %v3978
      %v4355 = vunpack.c.h.b16 %v3978
      %v4356 = vunpack.c.l.b16 %v3979
      %v4357 = vunpack.c.l.b16 %v3980
      %v4358 = vunpack.c.h.b16 %v3980
      %v4359 = vunpack.c.l.b16 %v3981
      %v4360 = vunpack.c.l.b16 %v3982
      %v4361 = vunpack.c.h.b16 %v3982
      %v4362 = vunpack.c.l.b16 %v3983
      %v4363 = vunpack.c.l.b16 %v3984
      %v4364 = vunpack.c.h.b16 %v3984
      %v4365 = vunpack.c.l.b16 %v3985
      %v4366 = vunpack.c.l.b16 %v3986
      %v4367 = vunpack.c.h.b16 %v3986
      %v4368 = vunpack.c.l.b16 %v3987
      %v4369 = vunpack.c.l.b16 %v3988
      %v4370 = vunpack.c.h.b16 %v3988
      %v4371 = vunpack.c.l.b16 %v3989
      %v4372 = vunpack.c.l.b16 %v3990
      %v4373 = vunpack.c.h.b16 %v3990
      %v4374 = vunpack.c.l.b16 %v3991
      %v4375 = vunpack.c.l.b16 %v3992
      %v4376 = vunpack.c.h.b16 %v3992
      %v4377 = vunpack.c.l.b16 %v3993
      %v4378 = vunpack.c.l.b16 %v3994
      %v4379 = vunpack.c.h.b16 %v3994
      %v4380 = vunpack.c.l.b16 %v3995
      %v4381 = vunpack.c.l.b16 %v3996
      %v4382 = vunpack.c.h.b16 %v3996
      %v4383 = vunpack.c.l.b16 %v3997
      %v4384 = vunpack.c.l.b16 %v3998
      %v4385 = vunpack.c.h.b16 %v3998
      %v4386 = vunpack.c.l.b16 %v3999
      %v4387 = vunpack.c.l.b16 %v4000
      %v4388 = vunpack.c.h.b16 %v4000
      %v4389 = vunpack.c.l.b16 %v4001
      %v4390 = vunpack.c.l.b16 %v4002
      %v4391 = vunpack.c.h.b16 %v4002
      %v4392 = vunpack.c.l.b16 %v4003
      %v4393 = vunpack.c.l.b16 %v4004
      %v4394 = vunpack.c.h.b16 %v4004
      %v4395 = vunpack.c.l.b16 %v4005
      %v4396 = vunpack.c.l.b16 %v4006
      %v4397 = vunpack.c.h.b16 %v4006
      %v4398 = vunpack.c.l.b16 %v4007
      %v4399 = vunpack.c.l.b16 %v4008
      %v4400 = vunpack.c.h.b16 %v4008
      %v4401 = vunpack.c.l.b16 %v4009
      %v4402 = vunpack.c.l.b16 %v4010
      %v4403 = vunpack.c.h.b16 %v4010
      %v4404 = vunpack.c.l.b16 %v4011
      %v4405 = vunpack.c.l.b16 %v4012
      %v4406 = vunpack.c.h.b16 %v4012
      %v4407 = vunpack.c.l.b16 %v4013
      %v4408 = vunpack.c.l.b16 %v4014
      %v4409 = vunpack.c.h.b16 %v4014
      %v4410 = vunpack.c.l.b16 %v4015
      %v4411 = vunpack.c.l.b16 %v4016
      %v4412 = vunpack.c.h.b16 %v4016
      %v4413 = vunpack.c.l.b16 %v4017
      %v4414 = vunpack.c.l.b16 %v4018
      %v4415 = vunpack.c.h.b16 %v4018
      %v4416 = vunpack.c.l.b16 %v4019
      %v4417 = vunpack.c.l.b16 %v4020
      %v4418 = vunpack.c.h.b16 %v4020
      %v4419 = vunpack.c.l.b16 %v4021
      %v4420 = vpack.c.b16 %v4207, %v4204
      %v4421 = vpack.c.b16 %v4208, %v4205
      %v4422 = vpack.c.b16 %v4209, %v4206
      %v4423 = vpack.c.b16 %v4213, %v4210
      %v4424 = vpack.c.b16 %v4214, %v4211
      %v4425 = vpack.c.b16 %v4215, %v4212
      %v4426 = vpack.c.b16 %v4219, %v4216
      %v4427 = vpack.c.b16 %v4220, %v4217
      %v4428 = vpack.c.b16 %v4221, %v4218
      %v4429 = vpack.c.b16 %v4225, %v4222
      %v4430 = vpack.c.b16 %v4226, %v4223
      %v4431 = vpack.c.b16 %v4227, %v4224
      %v4432 = vpack.c.b16 %v4231, %v4228
      %v4433 = vpack.c.b16 %v4232, %v4229
      %v4434 = vpack.c.b16 %v4233, %v4230
      %v4435 = vpack.c.b16 %v4237, %v4234
      %v4436 = vpack.c.b16 %v4238, %v4235
      %v4437 = vpack.c.b16 %v4239, %v4236
      %v4438 = vpack.c.b16 %v4243, %v4240
      %v4439 = vpack.c.b16 %v4244, %v4241
      %v4440 = vpack.c.b16 %v4245, %v4242
      %v4441 = vpack.c.b16 %v4249, %v4246
      %v4442 = vpack.c.b16 %v4250, %v4247
      %v4443 = vpack.c.b16 %v4251, %v4248
      %v4444 = vpack.c.b16 %v4255, %v4252
      %v4445 = vpack.c.b16 %v4256, %v4253
      %v4446 = vpack.c.b16 %v4257, %v4254
      %v4447 = vpack.c.b16 %v4261, %v4258
      %v4448 = vpack.c.b16 %v4262, %v4259
      %v4449 = vpack.c.b16 %v4263, %v4260
      %v4450 = vpack.c.b16 %v4267, %v4264
      %v4451 = vpack.c.b16 %v4268, %v4265
      %v4452 = vpack.c.b16 %v4269, %v4266
      %v4453 = vpack.c.b16 %v4273, %v4270
      %v4454 = vpack.c.b16 %v4274, %v4271
      %v4455 = vpack.c.b16 %v4275, %v4272
      %v4456 = vpack.c.b16 %v4279, %v4276
      %v4457 = vpack.c.b16 %v4280, %v4277
      %v4458 = vpack.c.b16 %v4281, %v4278
      %v4459 = vpack.c.b16 %v4285, %v4282
      %v4460 = vpack.c.b16 %v4286, %v4283
      %v4461 = vpack.c.b16 %v4287, %v4284
      %v4462 = vpack.c.b16 %v4291, %v4288
      %v4463 = vpack.c.b16 %v4292, %v4289
      %v4464 = vpack.c.b16 %v4293, %v4290
      %v4465 = vpack.c.b16 %v4297, %v4294
      %v4466 = vpack.c.b16 %v4298, %v4295
      %v4467 = vpack.c.b16 %v4299, %v4296
      %v4468 = vpack.c.b16 %v4303, %v4300
      %v4469 = vpack.c.b16 %v4304, %v4301
      %v4470 = vpack.c.b16 %v4305, %v4302
      %v4471 = vpack.c.b16 %v4309, %v4306
      %v4472 = vpack.c.b16 %v4310, %v4307
      %v4473 = vpack.c.b16 %v4311, %v4308
      %v4474 = vpack.c.b16 %v4315, %v4312
      %v4475 = vpack.c.b16 %v4316, %v4313
      %v4476 = vpack.c.b16 %v4317, %v4314
      %v4477 = vpack.c.b16 %v4321, %v4318
      %v4478 = vpack.c.b16 %v4322, %v4319
      %v4479 = vpack.c.b16 %v4323, %v4320
      %v4480 = vpack.c.b16 %v4327, %v4324
      %v4481 = vpack.c.b16 %v4328, %v4325
      %v4482 = vpack.c.b16 %v4329, %v4326
      %v4483 = vpack.c.b16 %v4333, %v4330
      %v4484 = vpack.c.b16 %v4334, %v4331
      %v4485 = vpack.c.b16 %v4335, %v4332
      %v4486 = vpack.c.b16 %v4339, %v4336
      %v4487 = vpack.c.b16 %v4340, %v4337
      %v4488 = vpack.c.b16 %v4341, %v4338
      %v4489 = vpack.c.b16 %v4345, %v4342
      %v4490 = vpack.c.b16 %v4346, %v4343
      %v4491 = vpack.c.b16 %v4347, %v4344
      %v4492 = vpack.c.b16 %v4351, %v4348
      %v4493 = vpack.c.b16 %v4352, %v4349
      %v4494 = vpack.c.b16 %v4353, %v4350
      %v4495 = vpack.c.b16 %v4357, %v4354
      %v4496 = vpack.c.b16 %v4358, %v4355
      %v4497 = vpack.c.b16 %v4359, %v4356
      %v4498 = vpack.c.b16 %v4363, %v4360
      %v4499 = vpack.c.b16 %v4364, %v4361
      %v4500 = vpack.c.b16 %v4365, %v4362
      %v4501 = vpack.c.b16 %v4369, %v4366
      %v4502 = vpack.c.b16 %v4370, %v4367
      %v4503 = vpack.c.b16 %v4371, %v4368
      %v4504 = vpack.c.b16 %v4375, %v4372
      %v4505 = vpack.c.b16 %v4376, %v4373
      %v4506 = vpack.c.b16 %v4377, %v4374
      %v4507 = vpack.c.b16 %v4381, %v4378
      %v4508 = vpack.c.b16 %v4382, %v4379
      %v4509 = vpack.c.b16 %v4383, %v4380
      %v4510 = vpack.c.b16 %v4387, %v4384
      %v4511 = vpack.c.b16 %v4388, %v4385
      %v4512 = vpack.c.b16 %v4389, %v4386
      %v4513 = vpack.c.b16 %v4393, %v4390
      %v4514 = vpack.c.b16 %v4394, %v4391
      %v4515 = vpack.c.b16 %v4395, %v4392
      %v4516 = vpack.c.b16 %v4399, %v4396
      %v4517 = vpack.c.b16 %v4400, %v4397
      %v4518 = vpack.c.b16 %v4401, %v4398
      %v4519 = vpack.c.b16 %v4405, %v4402
      %v4520 = vpack.c.b16 %v4406, %v4403
      %v4521 = vpack.c.b16 %v4407, %v4404
      %v4522 = vpack.c.b16 %v4411, %v4408
      %v4523 = vpack.c.b16 %v4412, %v4409
      %v4524 = vpack.c.b16 %v4413, %v4410
      %v4525 = vpack.c.b16 %v4417, %v4414
      %v4526 = vpack.c.b16 %v4418, %v4415
      %v4527 = vpack.c.b16 %v4419, %v4416
      %vm4636 = vcmask 523264
      %v4638 = vsel %vm4636, %v4055, 0
      %4640 = vmatprep.subr.bf16.mxu0 %v4442
      %4641 = vmatpush1.bf16.msra.mxu0 %v4441
      %4642 = vmatprep.subr.bf16.mxu0 %v4439
      %4643 = vmatpush1.bf16.msra.mxu0 %v4438
      %4644 = vmatprep.subr.bf16.mxu0 %v4436
      %4645 = vmatpush1.bf16.msra.mxu0 %v4435
      %4646 = vmatprep.subr.bf16.mxu0 %v4433
      %4647 = vmatpush1.bf16.msra.mxu0 %v4432
      %4648 = vmatprep.subr.bf16.mxu0 %v4430
      %4649 = vmatpush1.bf16.msra.mxu0 %v4429
      %4650 = vmatprep.subr.bf16.mxu0 %v4427
      %4651 = vmatpush1.bf16.msra.mxu0 %v4426
      %4652 = vmatprep.subr.bf16.mxu0 %v4424
      %4653 = vmatpush1.bf16.msra.mxu0 %v4423
      %4654 = vmatprep.subr.bf16.mxu0 %v4421
      %4655 = vmatpush1.bf16.msra.mxu0 %v4420
      %4656 = vmatprep.subr.bf16.mxu0 %v4466
      %4657 = vmatpush2.bf16.msra.mxu0 %v4465
      %4658 = vmatprep.subr.bf16.mxu0 %v4463
      %4659 = vmatpush2.bf16.msra.mxu0 %v4462
      %4660 = vmatprep.subr.bf16.mxu0 %v4460
      %4661 = vmatpush2.bf16.msra.mxu0 %v4459
      %4662 = vmatprep.subr.bf16.mxu0 %v4457
      %4663 = vmatpush2.bf16.msra.mxu0 %v4456
      %4664 = vmatprep.subr.bf16.mxu0 %v4454
      %4665 = vmatpush2.bf16.msra.mxu0 %v4453
      %4666 = vmatprep.subr.bf16.mxu0 %v4451
      %4667 = vmatpush2.bf16.msra.mxu0 %v4450
      %4668 = vmatprep.subr.bf16.mxu0 %v4448
      %4669 = vmatpush2.bf16.msra.mxu0 %v4447
      %4670 = vmatprep.subr.bf16.mxu0 %v4445
      %4671 = vmatpush2.bf16.msra.mxu0 %v4444
      %4672 = vmatprep.mubr.bf16.mxu0 %v4052
      %4673 = vmatmul.mubr.bf16.gmra.mxu0 %v4051
      %v4674 = vpop.f32.mrf.mxu0
      %v4675 = vadd.f32 %v4028, %v4674
      %v4676 = vpop.f32.mrf.mxu0
      %v4677 = vadd.f32 %v4028, %v4676
      %v4678 = vpop.f32.mrf.mxu0
      %v4679 = vadd.f32 %v4033, %v4678
      %v4680 = vpop.f32.mrf.mxu0
      %v4681 = vadd.f32 %v4033, %v4680
      %4682 = vdwg.mxu0
      %4683 = vmatprep.subr.bf16.mxu0 %v4490
      %4684 = vmatpush1.bf16.msra.mxu0 %v4489
      %4685 = vmatprep.subr.bf16.mxu0 %v4487
      %4686 = vmatpush1.bf16.msra.mxu0 %v4486
      %4687 = vmatprep.subr.bf16.mxu0 %v4484
      %4688 = vmatpush1.bf16.msra.mxu0 %v4483
      %4689 = vmatprep.subr.bf16.mxu0 %v4481
      %4690 = vmatpush1.bf16.msra.mxu0 %v4480
      %4691 = vmatprep.subr.bf16.mxu0 %v4478
      %4692 = vmatpush1.bf16.msra.mxu0 %v4477
      %4693 = vmatprep.subr.bf16.mxu0 %v4475
      %4694 = vmatpush1.bf16.msra.mxu0 %v4474
      %4695 = vmatprep.subr.bf16.mxu0 %v4472
      %4696 = vmatpush1.bf16.msra.mxu0 %v4471
      %4697 = vmatprep.subr.bf16.mxu0 %v4469
      %4698 = vmatpush1.bf16.msra.mxu0 %v4468
      %4699 = vmatprep.subr.bf16.mxu0 %v4514
      %4700 = vmatpush2.bf16.msra.mxu0 %v4513
      %4701 = vmatprep.subr.bf16.mxu0 %v4511
      %4702 = vmatpush2.bf16.msra.mxu0 %v4510
      %4703 = vmatprep.subr.bf16.mxu0 %v4508
      %4704 = vmatpush2.bf16.msra.mxu0 %v4507
      %4705 = vmatprep.subr.bf16.mxu0 %v4505
      %4706 = vmatpush2.bf16.msra.mxu0 %v4504
      %4707 = vmatprep.subr.bf16.mxu0 %v4502
      %4708 = vmatpush2.bf16.msra.mxu0 %v4501
      %4709 = vmatprep.subr.bf16.mxu0 %v4499
      %4710 = vmatpush2.bf16.msra.mxu0 %v4498
      %4711 = vmatprep.subr.bf16.mxu0 %v4496
      %4712 = vmatpush2.bf16.msra.mxu0 %v4495
      %4713 = vmatprep.subr.bf16.mxu0 %v4493
      %4714 = vmatpush2.bf16.msra.mxu0 %v4492
      %4715 = vmatprep.mubr.bf16.mxu0 %v4054
      %4716 = vmatmul.mubr.bf16.gmra.mxu0 %v4053
      %v4717 = vpop.f32.mrf.mxu0
      %v4718 = vadd.f32 %v4675, %v4717
      %v4719 = vpop.f32.mrf.mxu0
      %v4720 = vadd.f32 %v4677, %v4719
      %v4721 = vpop.f32.mrf.mxu0
      %v4722 = vadd.f32 %v4679, %v4721
      %v4723 = vpop.f32.mrf.mxu0
      %v4724 = vadd.f32 %v4681, %v4723
      %4725 = vdwg.mxu0
      %4726 = vmatprep.subr.bf16.mxu0 0
      %4727 = vmatpush1.bf16.msra.mxu0 0
      %4728 = vmatprep.subr.bf16.mxu0 0
      %4729 = vmatpush1.bf16.msra.mxu0 0
      %4730 = vmatprep.subr.bf16.mxu0 0
      %4731 = vmatpush1.bf16.msra.mxu0 0
      %4732 = vmatprep.subr.bf16.mxu0 0
      %4733 = vmatpush1.bf16.msra.mxu0 0
      %4734 = vmatprep.subr.bf16.mxu0 %v4526
      %4735 = vmatpush1.bf16.msra.mxu0 %v4525
      %4736 = vmatprep.subr.bf16.mxu0 %v4523
      %4737 = vmatpush1.bf16.msra.mxu0 %v4522
      %4738 = vmatprep.subr.bf16.mxu0 %v4520
      %4739 = vmatpush1.bf16.msra.mxu0 %v4519
      %4740 = vmatprep.subr.bf16.mxu0 %v4517
      %4741 = vmatpush1.bf16.msra.mxu0 %v4516
      %4742 = vmatprep.subr.bf16.mxu0 0
      %4743 = vmatpush2.bf16.msra.mxu0 0
      %4744 = vmatprep.subr.bf16.mxu0 0
      %4745 = vmatpush2.bf16.msra.mxu0 0
      %4746 = vmatprep.subr.bf16.mxu0 0
      %4747 = vmatpush2.bf16.msra.mxu0 0
      %4748 = vmatprep.subr.bf16.mxu0 0
      %4749 = vmatpush2.bf16.msra.mxu0 0
      %4750 = vmatprep.subr.bf16.mxu0 0
      %4751 = vmatpush2.bf16.msra.mxu0 0
      %4752 = vmatprep.subr.bf16.mxu0 0
      %4753 = vmatpush2.bf16.msra.mxu0 0
      %4754 = vmatprep.subr.bf16.mxu0 0
      %4755 = vmatpush2.bf16.msra.mxu0 0
      %4756 = vmatprep.subr.bf16.mxu0 0
      %4757 = vmatpush2.bf16.msra.mxu0 0
      %4758 = vmatprep.mubr.bf16.mxu0 0
      %4759 = vmatmul.mubr.bf16.gmra.mxu0 %v4638
      %v4760 = vpop.f32.mrf.mxu0
      %v4761 = vadd.f32 %v4718, %v4760
      %v4762 = vpop.f32.mrf.mxu0
      %v4763 = vadd.f32 %v4720, %v4762
      %v4764 = vpop.f32.mrf.mxu0
      %v4765 = vadd.f32 %v4722, %v4764
      %v4766 = vpop.f32.mrf.mxu0
      %v4767 = vadd.f32 %v4724, %v4766
      %4768 = vdwg.mxu0
      %4769 = vmatprep.subr.bf16.mxu0 0
      %4770 = vmatpush1.bf16.msra.mxu0 %v4443
      %4771 = vmatprep.subr.bf16.mxu0 0
      %4772 = vmatpush1.bf16.msra.mxu0 %v4440
      %4773 = vmatprep.subr.bf16.mxu0 0
      %4774 = vmatpush1.bf16.msra.mxu0 %v4437
      %4775 = vmatprep.subr.bf16.mxu0 0
      %4776 = vmatpush1.bf16.msra.mxu0 %v4434
      %4777 = vmatprep.subr.bf16.mxu0 0
      %4778 = vmatpush1.bf16.msra.mxu0 %v4431
      %4779 = vmatprep.subr.bf16.mxu0 0
      %4780 = vmatpush1.bf16.msra.mxu0 %v4428
      %4781 = vmatprep.subr.bf16.mxu0 0
      %4782 = vmatpush1.bf16.msra.mxu0 %v4425
      %4783 = vmatprep.subr.bf16.mxu0 0
      %4784 = vmatpush1.bf16.msra.mxu0 %v4422
      %4785 = vmatprep.subr.bf16.mxu0 0
      %4786 = vmatpush2.bf16.msra.mxu0 %v4467
      %4787 = vmatprep.subr.bf16.mxu0 0
      %4788 = vmatpush2.bf16.msra.mxu0 %v4464
      %4789 = vmatprep.subr.bf16.mxu0 0
      %4790 = vmatpush2.bf16.msra.mxu0 %v4461
      %4791 = vmatprep.subr.bf16.mxu0 0
      %4792 = vmatpush2.bf16.msra.mxu0 %v4458
      %4793 = vmatprep.subr.bf16.mxu0 0
      %4794 = vmatpush2.bf16.msra.mxu0 %v4455
      %4795 = vmatprep.subr.bf16.mxu0 0
      %4796 = vmatpush2.bf16.msra.mxu0 %v4452
      %4797 = vmatprep.subr.bf16.mxu0 0
      %4798 = vmatpush2.bf16.msra.mxu0 %v4449
      %4799 = vmatprep.subr.bf16.mxu0 0
      %4800 = vmatpush2.bf16.msra.mxu0 %v4446
      %4801 = vmatprep.mubr.bf16.mxu0 %v4052
      %4802 = vmatmul.mubr.bf16.gmra.mxu0 %v4051
      %v4803 = vpop.f32.mrf.mxu0
      %v4804 = vadd.f32 %v4028, %v4803
      %v4805 = vpop.f32.mrf.mxu0
      %v4806 = vpop.f32.mrf.mxu0
      %v4807 = vadd.f32 %v4033, %v4806
      %v4808 = vpop.f32.mrf.mxu0
      %4809 = vdwg.mxu0
      %4810 = vmatprep.subr.bf16.mxu0 0
      %4811 = vmatpush1.bf16.msra.mxu0 %v4491
      %4812 = vmatprep.subr.bf16.mxu0 0
      %4813 = vmatpush1.bf16.msra.mxu0 %v4488
      %4814 = vmatprep.subr.bf16.mxu0 0
      %4815 = vmatpush1.bf16.msra.mxu0 %v4485
      %4816 = vmatprep.subr.bf16.mxu0 0
      %4817 = vmatpush1.bf16.msra.mxu0 %v4482
      %4818 = vmatprep.subr.bf16.mxu0 0
      %4819 = vmatpush1.bf16.msra.mxu0 %v4479
      %4820 = vmatprep.subr.bf16.mxu0 0
      %4821 = vmatpush1.bf16.msra.mxu0 %v4476
      %4822 = vmatprep.subr.bf16.mxu0 0
      %4823 = vmatpush1.bf16.msra.mxu0 %v4473
      %4824 = vmatprep.subr.bf16.mxu0 0
      %4825 = vmatpush1.bf16.msra.mxu0 %v4470
      %4826 = vmatprep.subr.bf16.mxu0 0
      %4827 = vmatpush2.bf16.msra.mxu0 %v4515
      %4828 = vmatprep.subr.bf16.mxu0 0
      %4829 = vmatpush2.bf16.msra.mxu0 %v4512
      %4830 = vmatprep.subr.bf16.mxu0 0
      %4831 = vmatpush2.bf16.msra.mxu0 %v4509
      %4832 = vmatprep.subr.bf16.mxu0 0
      %4833 = vmatpush2.bf16.msra.mxu0 %v4506
      %4834 = vmatprep.subr.bf16.mxu0 0
      %4835 = vmatpush2.bf16.msra.mxu0 %v4503
      %4836 = vmatprep.subr.bf16.mxu0 0
      %4837 = vmatpush2.bf16.msra.mxu0 %v4500
      %4838 = vmatprep.subr.bf16.mxu0 0
      %4839 = vmatpush2.bf16.msra.mxu0 %v4497
      %4840 = vmatprep.subr.bf16.mxu0 0
      %4841 = vmatpush2.bf16.msra.mxu0 %v4494
      %4842 = vmatprep.mubr.bf16.mxu0 %v4054
      %4843 = vmatmul.mubr.bf16.gmra.mxu0 %v4053
      %v4844 = vpop.f32.mrf.mxu0
      %v4845 = vadd.f32 %v4804, %v4844
      %v4846 = vpop.f32.mrf.mxu0
      %v4847 = vpop.f32.mrf.mxu0
      %v4848 = vadd.f32 %v4807, %v4847
      %v4849 = vpop.f32.mrf.mxu0
      %4850 = vdwg.mxu0
      %4851 = vmatprep.subr.bf16.mxu0 0
      %4852 = vmatpush1.bf16.msra.mxu0 0
      %4853 = vmatprep.subr.bf16.mxu0 0
      %4854 = vmatpush1.bf16.msra.mxu0 0
      %4855 = vmatprep.subr.bf16.mxu0 0
      %4856 = vmatpush1.bf16.msra.mxu0 0
      %4857 = vmatprep.subr.bf16.mxu0 0
      %4858 = vmatpush1.bf16.msra.mxu0 0
      %4859 = vmatprep.subr.bf16.mxu0 0
      %4860 = vmatpush1.bf16.msra.mxu0 %v4527
      %4861 = vmatprep.subr.bf16.mxu0 0
      %4862 = vmatpush1.bf16.msra.mxu0 %v4524
      %4863 = vmatprep.subr.bf16.mxu0 0
      %4864 = vmatpush1.bf16.msra.mxu0 %v4521
      %4865 = vmatprep.subr.bf16.mxu0 0
      %4866 = vmatpush1.bf16.msra.mxu0 %v4518
      %4867 = vmatprep.subr.bf16.mxu0 0
      %4868 = vmatpush2.bf16.msra.mxu0 0
      %4869 = vmatprep.subr.bf16.mxu0 0
      %4870 = vmatpush2.bf16.msra.mxu0 0
      %4871 = vmatprep.subr.bf16.mxu0 0
      %4872 = vmatpush2.bf16.msra.mxu0 0
      %4873 = vmatprep.subr.bf16.mxu0 0
      %4874 = vmatpush2.bf16.msra.mxu0 0
      %4875 = vmatprep.subr.bf16.mxu0 0
      %4876 = vmatpush2.bf16.msra.mxu0 0
      %4877 = vmatprep.subr.bf16.mxu0 0
      %4878 = vmatpush2.bf16.msra.mxu0 0
      %4879 = vmatprep.subr.bf16.mxu0 0
      %4880 = vmatpush2.bf16.msra.mxu0 0
      %4881 = vmatprep.subr.bf16.mxu0 0
      %4882 = vmatpush2.bf16.msra.mxu0 0
      %4883 = vmatprep.mubr.bf16.mxu0 0
      %4884 = vmatmul.mubr.bf16.gmra.mxu0 %v4638
      %v4885 = vpop.f32.mrf.mxu0
      %v4886 = vadd.f32 %v4845, %v4885
      %v4887 = vpop.f32.mrf.mxu0
      %v4888 = vpop.f32.mrf.mxu0
      %v4889 = vadd.f32 %v4848, %v4888
      %v4890 = vpop.f32.mrf.mxu0
      %4891 = vdwg.mxu0
      %v4892 = vmul.f32 %v4761, %v1102
      %v4893 = vmul.f32 %v4763, %v1106
      %v4894 = vmul.f32 %v4886, %v1110
      %v4895 = vmul.f32 %v4765, %v1102
      %v4896 = vmul.f32 %v4767, %v1106
      %v4897 = vmul.f32 %v4889, %v1110
      %v4898 = vpack.c.bf16 %v4895, %v4892
      %v4899 = vpack.c.bf16 %v4896, %v4893
      %v4900 = vpack.c.bf16 %v4897, %v4894
      %v4904 = vunpack.c.l.b16 %v4898
      %v4905 = vunpack.c.l.b16 %v4899
      %v4906 = vunpack.c.l.b16 %v4900
      %v4907 = vunpack.c.h.b16 %v4898
      %v4908 = vunpack.c.h.b16 %v4899
      %v4909 = vunpack.c.h.b16 %v4900
      %v4910 = vpack.c.b16 %v4905, %v4904
      %v4911 = vpack.c.b16 %v4906, %v4906
      %v4912 = vpack.c.b16 %v4908, %v4907
      %v4913 = vpack.c.b16 %v4909, %v4909
      %4918 = vst [vmem:[#allocation2 + $0x4] sm:$0xff] %v4910
      %4919 = vst.msk [vmem:[#allocation2 + $0xc] sm:$0xf] %vm378, %v4911
      %4920 = vst [vmem:[#allocation2 + $0x14] sm:$0xff] %v4912
      %4921 = vst.msk [vmem:[#allocation2 + $0x1c] sm:$0xf] %vm378, %v4913
      %v4922 = vld [vmem:[#allocation2] sm:$0xff]
      %v4923 = vld [vmem:[#allocation2 + $0x8] sm:$0xff]
      %v4924 = vld [vmem:[#allocation2 + $0x10] sm:$0xff]
      %v4925 = vld [vmem:[#allocation2 + $0x18] sm:$0xff]
      %4930 = vrot.lane.b32.xlu0 %v4922, 19
      %v4931 = vpop.permute.xlu0 %4930
      %4932 = vrot.lane.b32.xlu0 %v4923, 19
      %v4933 = vpop.permute.xlu0 %4932
      %4934 = vrot.lane.b32.xlu0 %v4924, 19
      %v4935 = vpop.permute.xlu0 %4934
      %4936 = vrot.lane.b32.xlu0 %v4925, 19
      %v4937 = vpop.permute.xlu0 %4936
      %v4938 = vrot.slane %v4931, 4
      %v4939 = vrot.slane %v4933, 4
      %v4940 = vrot.slane %v4935, 4
      %v4941 = vrot.slane %v4937, 4
      %v4942 = vsel %vm365, %v4938, %v4939
      %v4943 = vsel %vm367, %v4931, %v4942
      %v4944 = vsel %vm367, %v4933, %v4939
      %v4945 = vsel %vm365, %v4940, %v4941
      %v4946 = vsel %vm367, %v4935, %v4945
      %v4947 = vsel %vm367, %v4937, %v4941
      %4952 = vst [vmem:[#allocation4 + $0x360] sm:$0xff] %v4943
      %4953 = vst.msk [vmem:[#allocation4 + $0x368] sm:$0xf] %vm378, %v4944
      %4954 = vst [vmem:[#allocation4 + $0x36c] sm:$0xff] %v4946
      %4955 = vst.msk [vmem:[#allocation4 + $0x374] sm:$0xf] %vm378, %v4947
      %v4956 = vld [vmem:[#allocation2] sm:$0xff]
      %v4957 = vld [vmem:[#allocation2 + $0x8] sm:$0xff]
      %v4958 = vld [vmem:[#allocation2 + $0x10] sm:$0xff]
      %v4959 = vld [vmem:[#allocation2 + $0x18] sm:$0xff]
      %4964 = vrot.lane.b32.xlu0 %v4956, 18
      %v4965 = vpop.permute.xlu0 %4964
      %4966 = vrot.lane.b32.xlu0 %v4957, 18
      %v4967 = vpop.permute.xlu0 %4966
      %4968 = vrot.lane.b32.xlu0 %v4958, 18
      %v4969 = vpop.permute.xlu0 %4968
      %4970 = vrot.lane.b32.xlu0 %v4959, 18
      %v4971 = vpop.permute.xlu0 %4970
      %v4972 = vrot.slane %v4965, 4
      %v4973 = vrot.slane %v4967, 4
      %v4974 = vrot.slane %v4969, 4
      %v4975 = vrot.slane %v4971, 4
      %v4976 = vsel %vm365, %v4972, %v4973
      %v4977 = vsel %vm403, %v4965, %v4976
      %v4978 = vsel %vm403, %v4967, %v4973
      %v4979 = vsel %vm365, %v4974, %v4975
      %v4980 = vsel %vm403, %v4969, %v4979
      %v4981 = vsel %vm403, %v4971, %v4975
      %4986 = vst [vmem:[#allocation4 + $0x378] sm:$0xff] %v4977
      %4987 = vst.msk [vmem:[#allocation4 + $0x380] sm:$0xf] %vm378, %v4978
      %4988 = vst [vmem:[#allocation4 + $0x384] sm:$0xff] %v4980
      %4989 = vst.msk [vmem:[#allocation4 + $0x38c] sm:$0xf] %vm378, %v4981
      %v4990 = vld [vmem:[#allocation2] sm:$0xff]
      %v4991 = vld [vmem:[#allocation2 + $0x8] sm:$0xff]
      %v4992 = vld [vmem:[#allocation2 + $0x10] sm:$0xff]
      %v4993 = vld [vmem:[#allocation2 + $0x18] sm:$0xff]
      %4998 = vrot.lane.b32.xlu0 %v4990, 17
      %v4999 = vpop.permute.xlu0 %4998
      %5000 = vrot.lane.b32.xlu0 %v4991, 17
      %v5001 = vpop.permute.xlu0 %5000
      %5002 = vrot.lane.b32.xlu0 %v4992, 17
      %v5003 = vpop.permute.xlu0 %5002
      %5004 = vrot.lane.b32.xlu0 %v4993, 17
      %v5005 = vpop.permute.xlu0 %5004
      %v5006 = vrot.slane %v4999, 4
      %v5007 = vrot.slane %v5001, 4
      %v5008 = vrot.slane %v5003, 4
      %v5009 = vrot.slane %v5005, 4
      %v5010 = vsel %vm365, %v5006, %v5007
      %v5011 = vsel %vm438, %v4999, %v5010
      %v5012 = vsel %vm438, %v5001, %v5007
      %v5013 = vsel %vm365, %v5008, %v5009
      %v5014 = vsel %vm438, %v5003, %v5013
      %v5015 = vsel %vm438, %v5005, %v5009
      %5020 = vst [vmem:[#allocation4 + $0x390] sm:$0xff] %v5011
      %5021 = vst.msk [vmem:[#allocation4 + $0x398] sm:$0xf] %vm378, %v5012
      %5022 = vst [vmem:[#allocation4 + $0x39c] sm:$0xff] %v5014
      %5023 = vst.msk [vmem:[#allocation4 + $0x3a4] sm:$0xf] %vm378, %v5015
      %v5024 = vld [vmem:[#allocation2] sm:$0xff]
      %v5025 = vld [vmem:[#allocation2 + $0x8] sm:$0xff]
      %v5026 = vld [vmem:[#allocation2 + $0x10] sm:$0xff]
      %v5027 = vld [vmem:[#allocation2 + $0x18] sm:$0xff]
      %5032 = vrot.lane.b32.xlu0 %v5024, 1
      %v5033 = vpop.permute.xlu0 %5032
      %5034 = vrot.lane.b32.xlu0 %v5025, 1
      %v5035 = vpop.permute.xlu0 %5034
      %5036 = vrot.lane.b32.xlu0 %v5026, 1
      %v5037 = vpop.permute.xlu0 %5036
      %5038 = vrot.lane.b32.xlu0 %v5027, 1
      %v5039 = vpop.permute.xlu0 %5038
      %v5040 = vrot.slane %v5033, 4
      %v5041 = vrot.slane %v5035, 4
      %v5042 = vrot.slane %v5037, 4
      %v5043 = vrot.slane %v5039, 4
      %v5044 = vsel %vm365, %v5040, %v5041
      %v5045 = vsel %vm473, %v5033, %v5044
      %v5046 = vsel %vm473, %v5035, %v5041
      %v5047 = vsel %vm365, %v5042, %v5043
      %v5048 = vsel %vm473, %v5037, %v5047
      %v5049 = vsel %vm473, %v5039, %v5043
      %5054 = vst [vmem:[#allocation4 + $0x3a8] sm:$0xff] %v5045
      %5055 = vst.msk [vmem:[#allocation4 + $0x3b0] sm:$0xf] %vm378, %v5046
      %5056 = vst [vmem:[#allocation4 + $0x3b4] sm:$0xff] %v5048
      %5057 = vst.msk [vmem:[#allocation4 + $0x3bc] sm:$0xf] %vm378, %v5049
      %v5058 = vld [vmem:[#allocation2 + $0x4] sm:$0xff]
      %v5059 = vld [vmem:[#allocation2 + $0xc] sm:$0xf]
      %v5060 = vld [vmem:[#allocation2 + $0x14] sm:$0xff]
      %v5061 = vld [vmem:[#allocation2 + $0x1c] sm:$0xf]
      %5062 = vst [vmem:[#allocation4 + $0x3c0] sm:$0xff] %v5058
      %5063 = vst.msk [vmem:[#allocation4 + $0x3c8] sm:$0xf] %vm378, %v5059
      %5064 = vst [vmem:[#allocation4 + $0x3cc] sm:$0xff] %v5060
      %5065 = vst.msk [vmem:[#allocation4 + $0x3d4] sm:$0xf] %vm378, %v5061
      %v5066 = vld [vmem:[#allocation2 + $0x4] sm:$0xff]
      %v5067 = vld [vmem:[#allocation2 + $0xc] sm:$0xf]
      %v5068 = vld [vmem:[#allocation2 + $0x14] sm:$0xff]
      %v5069 = vld [vmem:[#allocation2 + $0x1c] sm:$0xf]
      %5074 = vrot.lane.b32.xlu0 %v5066, 127
      %v5075 = vpop.permute.xlu0 %5074
      %5076 = vrot.lane.b32.xlu0 %v5067, 127
      %v5077 = vpop.permute.xlu0 %5076
      %5078 = vrot.lane.b32.xlu0 %v5068, 127
      %v5079 = vpop.permute.xlu0 %5078
      %5080 = vrot.lane.b32.xlu0 %v5069, 127
      %v5081 = vpop.permute.xlu0 %5080
      %v5082 = vrot.slane %v5075, 4
      %v5083 = vrot.slane %v5077, 4
      %v5084 = vrot.slane %v5079, 4
      %v5085 = vrot.slane %v5081, 4
      %v5086 = vsel %vm365, %v5082, %v5083
      %v5087 = vsel %vm516, %v5075, %v5086
      %v5088 = vsel %vm365, %v5084, %v5085
      %v5089 = vsel %vm516, %v5079, %v5088
      %5094 = vst [vmem:[#allocation4 + $0x3d8] sm:$0xff] %v5087
      %5095 = vst.msk [vmem:[#allocation4 + $0x3e0] sm:$0xf] %vm378, %v5077
      %5096 = vst [vmem:[#allocation4 + $0x3e4] sm:$0xff] %v5089
      %5097 = vst.msk [vmem:[#allocation4 + $0x3ec] sm:$0xf] %vm378, %v5081
      %v5098 = vld [vmem:[#allocation2 + $0x4] sm:$0xff]
      %v5099 = vld [vmem:[#allocation2 + $0xc] sm:$0xf]
      %v5100 = vld [vmem:[#allocation2 + $0x14] sm:$0xff]
      %v5101 = vld [vmem:[#allocation2 + $0x1c] sm:$0xf]
      %5106 = vrot.lane.b32.xlu0 %v5098, 111
      %v5107 = vpop.permute.xlu0 %5106
      %5108 = vrot.lane.b32.xlu0 %v5099, 111
      %v5109 = vpop.permute.xlu0 %5108
      %5110 = vrot.lane.b32.xlu0 %v5100, 111
      %v5111 = vpop.permute.xlu0 %5110
      %5112 = vrot.lane.b32.xlu0 %v5101, 111
      %v5113 = vpop.permute.xlu0 %5112
      %v5114 = vrot.slane %v5107, 4
      %v5115 = vrot.slane %v5109, 4
      %v5116 = vrot.slane %v5111, 4
      %v5117 = vrot.slane %v5113, 4
      %v5118 = vsel %vm365, %v5114, %v5115
      %v5119 = vsel %vm549, %v5107, %v5118
      %v5120 = vsel %vm365, %v5116, %v5117
      %v5121 = vsel %vm549, %v5111, %v5120
      %5126 = vst [vmem:[#allocation4 + $0x3f0] sm:$0xff] %v5119
      %5127 = vst.msk [vmem:[#allocation4 + $0x3f8] sm:$0xf] %vm378, %v5109
      %5128 = vst [vmem:[#allocation4 + $0x3fc] sm:$0xff] %v5121
      %5129 = vst.msk [vmem:[#allocation4 + $0x404] sm:$0xf] %vm378, %v5113
      %v5130 = vld [vmem:[#allocation2 + $0x4] sm:$0xff]
      %v5131 = vld [vmem:[#allocation2 + $0xc] sm:$0xf]
      %v5132 = vld [vmem:[#allocation2 + $0x14] sm:$0xff]
      %v5133 = vld [vmem:[#allocation2 + $0x1c] sm:$0xf]
      %5138 = vrot.lane.b32.xlu0 %v5130, 110
      %v5139 = vpop.permute.xlu0 %5138
      %5140 = vrot.lane.b32.xlu0 %v5131, 110
      %v5141 = vpop.permute.xlu0 %5140
      %5142 = vrot.lane.b32.xlu0 %v5132, 110
      %v5143 = vpop.permute.xlu0 %5142
      %5144 = vrot.lane.b32.xlu0 %v5133, 110
      %v5145 = vpop.permute.xlu0 %5144
      %v5146 = vrot.slane %v5139, 4
      %v5147 = vrot.slane %v5141, 4
      %v5148 = vrot.slane %v5143, 4
      %v5149 = vrot.slane %v5145, 4
      %v5150 = vsel %vm365, %v5146, %v5147
      %v5151 = vsel %vm582, %v5139, %v5150
      %v5152 = vsel %vm365, %v5148, %v5149
      %v5153 = vsel %vm582, %v5143, %v5152
      %5158 = vst [vmem:[#allocation4 + $0x408] sm:$0xff] %v5151
      %5159 = vst.msk [vmem:[#allocation4 + $0x410] sm:$0xf] %vm378, %v5141
      %5160 = vst [vmem:[#allocation4 + $0x414] sm:$0xff] %v5153
      %5161 = vst.msk [vmem:[#allocation4 + $0x41c] sm:$0xf] %vm378, %v5145
      %v5162 = vld [vmem:[#allocation2 + $0x4] sm:$0xff]
      %v5163 = vld [vmem:[#allocation2 + $0xc] sm:$0xf]
      %v5164 = vld [vmem:[#allocation2 + $0x14] sm:$0xff]
      %v5165 = vld [vmem:[#allocation2 + $0x1c] sm:$0xf]
      %5170 = vrot.lane.b32.xlu0 %v5162, 109
      %v5171 = vpop.permute.xlu0 %5170
      %5172 = vrot.lane.b32.xlu0 %v5163, 109
      %v5173 = vpop.permute.xlu0 %5172
      %5174 = vrot.lane.b32.xlu0 %v5164, 109
      %v5175 = vpop.permute.xlu0 %5174
      %5176 = vrot.lane.b32.xlu0 %v5165, 109
      %v5177 = vpop.permute.xlu0 %5176
      %v5178 = vrot.slane %v5171, 4
      %v5179 = vrot.slane %v5173, 4
      %v5180 = vrot.slane %v5175, 4
      %v5181 = vrot.slane %v5177, 4
      %v5182 = vsel %vm365, %v5178, %v5179
      %v5183 = vsel %vm615, %v5171, %v5182
      %v5184 = vsel %vm365, %v5180, %v5181
      %v5185 = vsel %vm615, %v5175, %v5184
      %5190 = vst [vmem:[#allocation4 + $0x420] sm:$0xff] %v5183
      %5191 = vst.msk [vmem:[#allocation4 + $0x428] sm:$0xf] %vm378, %v5173
      %5192 = vst [vmem:[#allocation4 + $0x42c] sm:$0xff] %v5185
      %5193 = vst.msk [vmem:[#allocation4 + $0x434] sm:$0xf] %vm378, %v5177
      %v5194 = vld [vmem:[%s6] sm:$0xff]
      %v5195 = vld [vmem:[%s6 + $0x8] sm:$0xff]
      %v5196 = vld [vmem:[%s6 + $0x10] sm:$0xff]
      %v5197 = vld [vmem:[%s6 + $0x18] sm:$0xff]
      %v5198 = vld [vmem:[%s6 + $0x20] sm:$0xff]
      %v5199 = vld [vmem:[%s6 + $0x28] sm:$0xff]
      %v5200 = vld [vmem:[#allocation4] sm:$0xff]
      %v5201 = vld [vmem:[#allocation4 + $0x8] sm:$0xf]
      %v5202 = vld [vmem:[#allocation4 + $0xc] sm:$0xff]
      %v5203 = vld [vmem:[#allocation4 + $0x14] sm:$0xf]
      %v5204 = vld [vmem:[#allocation4 + $0x18] sm:$0xff]
      %v5205 = vld [vmem:[#allocation4 + $0x20] sm:$0xf]
      %v5206 = vld [vmem:[#allocation4 + $0x24] sm:$0xff]
      %v5207 = vld [vmem:[#allocation4 + $0x2c] sm:$0xf]
      %v5208 = vld [vmem:[#allocation4 + $0x30] sm:$0xff]
      %v5209 = vld [vmem:[#allocation4 + $0x38] sm:$0xf]
      %v5210 = vld [vmem:[#allocation4 + $0x3c] sm:$0xff]
      %v5211 = vld [vmem:[#allocation4 + $0x44] sm:$0xf]
      %v5212 = vld [vmem:[#allocation4 + $0x48] sm:$0xff]
      %v5213 = vld [vmem:[#allocation4 + $0x50] sm:$0xf]
      %v5214 = vld [vmem:[#allocation4 + $0x54] sm:$0xff]
      %v5215 = vld [vmem:[#allocation4 + $0x5c] sm:$0xf]
      %v5216 = vld [vmem:[#allocation4 + $0x60] sm:$0xff]
      %v5217 = vld [vmem:[#allocation4 + $0x68] sm:$0xf]
      %v5218 = vld [vmem:[#allocation4 + $0x6c] sm:$0xff]
      %v5219 = vld [vmem:[#allocation4 + $0x74] sm:$0xf]
      %v5220 = vld [vmem:[#allocation4 + $0x78] sm:$0xff]
      %v5221 = vld [vmem:[#allocation4 + $0x80] sm:$0xf]
      %v5222 = vld [vmem:[#allocation4 + $0x84] sm:$0xff]
      %v5223 = vld [vmem:[#allocation4 + $0x8c] sm:$0xf]
      %v5224 = vld [vmem:[#allocation4 + $0x90] sm:$0xff]
      %v5225 = vld [vmem:[#allocation4 + $0x98] sm:$0xf]
      %v5226 = vld [vmem:[#allocation4 + $0x9c] sm:$0xff]
      %v5227 = vld [vmem:[#allocation4 + $0xa4] sm:$0xf]
      %v5228 = vld [vmem:[#allocation4 + $0xa8] sm:$0xff]
      %v5229 = vld [vmem:[#allocation4 + $0xb0] sm:$0xf]
      %v5230 = vld [vmem:[#allocation4 + $0xb4] sm:$0xff]
      %v5231 = vld [vmem:[#allocation4 + $0xbc] sm:$0xf]
      %v5232 = vld [vmem:[#allocation4 + $0xc0] sm:$0xff]
      %v5233 = vld [vmem:[#allocation4 + $0xc8] sm:$0xf]
      %v5234 = vld [vmem:[#allocation4 + $0xcc] sm:$0xff]
      %v5235 = vld [vmem:[#allocation4 + $0xd4] sm:$0xf]
      %v5236 = vld [vmem:[#allocation4 + $0xd8] sm:$0xff]
      %v5237 = vld [vmem:[#allocation4 + $0xe0] sm:$0xf]
      %v5238 = vld [vmem:[#allocation4 + $0xe4] sm:$0xff]
      %v5239 = vld [vmem:[#allocation4 + $0xec] sm:$0xf]
      %v5240 = vld [vmem:[#allocation4 + $0xf0] sm:$0xff]
      %v5241 = vld [vmem:[#allocation4 + $0xf8] sm:$0xf]
      %v5242 = vld [vmem:[#allocation4 + $0xfc] sm:$0xff]
      %v5243 = vld [vmem:[#allocation4 + $0x104] sm:$0xf]
      %v5244 = vld [vmem:[#allocation4 + $0x108] sm:$0xff]
      %v5245 = vld [vmem:[#allocation4 + $0x110] sm:$0xf]
      %v5246 = vld [vmem:[#allocation4 + $0x114] sm:$0xff]
      %v5247 = vld [vmem:[#allocation4 + $0x11c] sm:$0xf]
      %v5248 = vld [vmem:[#allocation4 + $0x120] sm:$0xff]
      %v5249 = vld [vmem:[#allocation4 + $0x128] sm:$0xf]
      %v5250 = vld [vmem:[#allocation4 + $0x12c] sm:$0xff]
      %v5251 = vld [vmem:[#allocation4 + $0x134] sm:$0xf]
      %v5252 = vld [vmem:[#allocation4 + $0x138] sm:$0xff]
      %v5253 = vld [vmem:[#allocation4 + $0x140] sm:$0xf]
      %v5254 = vld [vmem:[#allocation4 + $0x144] sm:$0xff]
      %v5255 = vld [vmem:[#allocation4 + $0x14c] sm:$0xf]
      %v5256 = vld [vmem:[#allocation4 + $0x150] sm:$0xff]
      %v5257 = vld [vmem:[#allocation4 + $0x158] sm:$0xf]
      %v5258 = vld [vmem:[#allocation4 + $0x15c] sm:$0xff]
      %v5259 = vld [vmem:[#allocation4 + $0x164] sm:$0xf]
      %v5260 = vld [vmem:[#allocation4 + $0x168] sm:$0xff]
      %v5261 = vld [vmem:[#allocation4 + $0x170] sm:$0xf]
      %v5262 = vld [vmem:[#allocation4 + $0x174] sm:$0xff]
      %v5263 = vld [vmem:[#allocation4 + $0x17c] sm:$0xf]
      %v5264 = vld [vmem:[#allocation4 + $0x180] sm:$0xff]
      %v5265 = vld [vmem:[#allocation4 + $0x188] sm:$0xf]
      %v5266 = vld [vmem:[#allocation4 + $0x18c] sm:$0xff]
      %v5267 = vld [vmem:[#allocation4 + $0x194] sm:$0xf]
      %v5268 = vld [vmem:[#allocation4 + $0x198] sm:$0xff]
      %v5269 = vld [vmem:[#allocation4 + $0x1a0] sm:$0xf]
      %v5270 = vld [vmem:[#allocation4 + $0x1a4] sm:$0xff]
      %v5271 = vld [vmem:[#allocation4 + $0x1ac] sm:$0xf]
      %v5272 = vld [vmem:[#allocation4 + $0x1b0] sm:$0xff]
      %v5273 = vld [vmem:[#allocation4 + $0x1b8] sm:$0xf]
      %v5274 = vld [vmem:[#allocation4 + $0x1bc] sm:$0xff]
      %v5275 = vld [vmem:[#allocation4 + $0x1c4] sm:$0xf]
      %v5276 = vld [vmem:[#allocation4 + $0x1c8] sm:$0xff]
      %v5277 = vld [vmem:[#allocation4 + $0x1d0] sm:$0xf]
      %v5278 = vld [vmem:[#allocation4 + $0x1d4] sm:$0xff]
      %v5279 = vld [vmem:[#allocation4 + $0x1dc] sm:$0xf]
      %v5280 = vld [vmem:[#allocation4 + $0x1e0] sm:$0xff]
      %v5281 = vld [vmem:[#allocation4 + $0x1e8] sm:$0xf]
      %v5282 = vld [vmem:[#allocation4 + $0x1ec] sm:$0xff]
      %v5283 = vld [vmem:[#allocation4 + $0x1f4] sm:$0xf]
      %v5284 = vld [vmem:[#allocation4 + $0x1f8] sm:$0xff]
      %v5285 = vld [vmem:[#allocation4 + $0x200] sm:$0xf]
      %v5286 = vld [vmem:[#allocation4 + $0x204] sm:$0xff]
      %v5287 = vld [vmem:[#allocation4 + $0x20c] sm:$0xf]
      %v5288 = vld [vmem:[#allocation4 + $0x210] sm:$0xff]
      %v5289 = vld [vmem:[#allocation4 + $0x218] sm:$0xf]
      %v5290 = vld [vmem:[#allocation4 + $0x21c] sm:$0xff]
      %v5291 = vld [vmem:[#allocation4 + $0x224] sm:$0xf]
      %v5292 = vld [vmem:[#allocation4 + $0x228] sm:$0xff]
      %v5293 = vld [vmem:[#allocation4 + $0x230] sm:$0xf]
      %v5294 = vld [vmem:[#allocation4 + $0x234] sm:$0xff]
      %v5295 = vld [vmem:[#allocation4 + $0x23c] sm:$0xf]
      %v5296 = vld [vmem:[#allocation4 + $0x240] sm:$0xff]
      %v5297 = vld [vmem:[#allocation4 + $0x248] sm:$0xf]
      %v5298 = vld [vmem:[#allocation4 + $0x24c] sm:$0xff]
      %v5299 = vld [vmem:[#allocation4 + $0x254] sm:$0xf]
      %v5300 = vld [vmem:[#allocation4 + $0x258] sm:$0xff]
      %v5301 = vld [vmem:[#allocation4 + $0x260] sm:$0xf]
      %v5302 = vld [vmem:[#allocation4 + $0x264] sm:$0xff]
      %v5303 = vld [vmem:[#allocation4 + $0x26c] sm:$0xf]
      %v5304 = vld [vmem:[#allocation4 + $0x270] sm:$0xff]
      %v5305 = vld [vmem:[#allocation4 + $0x278] sm:$0xf]
      %v5306 = vld [vmem:[#allocation4 + $0x27c] sm:$0xff]
      %v5307 = vld [vmem:[#allocation4 + $0x284] sm:$0xf]
      %v5308 = vld [vmem:[#allocation4 + $0x288] sm:$0xff]
      %v5309 = vld [vmem:[#allocation4 + $0x290] sm:$0xf]
      %v5310 = vld [vmem:[#allocation4 + $0x294] sm:$0xff]
      %v5311 = vld [vmem:[#allocation4 + $0x29c] sm:$0xf]
      %v5312 = vld [vmem:[#allocation4 + $0x2a0] sm:$0xff]
      %v5313 = vld [vmem:[#allocation4 + $0x2a8] sm:$0xf]
      %v5314 = vld [vmem:[#allocation4 + $0x2ac] sm:$0xff]
      %v5315 = vld [vmem:[#allocation4 + $0x2b4] sm:$0xf]
      %v5316 = vld [vmem:[#allocation4 + $0x2b8] sm:$0xff]
      %v5317 = vld [vmem:[#allocation4 + $0x2c0] sm:$0xf]
      %v5318 = vld [vmem:[#allocation4 + $0x2c4] sm:$0xff]
      %v5319 = vld [vmem:[#allocation4 + $0x2cc] sm:$0xf]
      %v5320 = vld [vmem:[#allocation4 + $0x2d0] sm:$0xff]
      %v5321 = vld [vmem:[#allocation4 + $0x2d8] sm:$0xf]
      %v5322 = vld [vmem:[#allocation4 + $0x2dc] sm:$0xff]
      %v5323 = vld [vmem:[#allocation4 + $0x2e4] sm:$0xf]
      %v5324 = vld [vmem:[#allocation4 + $0x2e8] sm:$0xff]
      %v5325 = vld [vmem:[#allocation4 + $0x2f0] sm:$0xf]
      %v5326 = vld [vmem:[#allocation4 + $0x2f4] sm:$0xff]
      %v5327 = vld [vmem:[#allocation4 + $0x2fc] sm:$0xf]
      %v5328 = vld [vmem:[#allocation4 + $0x300] sm:$0xff]
      %v5329 = vld [vmem:[#allocation4 + $0x308] sm:$0xf]
      %v5330 = vld [vmem:[#allocation4 + $0x30c] sm:$0xff]
      %v5331 = vld [vmem:[#allocation4 + $0x314] sm:$0xf]
      %v5332 = vld [vmem:[#allocation4 + $0x318] sm:$0xff]
      %v5333 = vld [vmem:[#allocation4 + $0x320] sm:$0xf]
      %v5334 = vld [vmem:[#allocation4 + $0x324] sm:$0xff]
      %v5335 = vld [vmem:[#allocation4 + $0x32c] sm:$0xf]
      %v5336 = vld [vmem:[#allocation4 + $0x330] sm:$0xff]
      %v5337 = vld [vmem:[#allocation4 + $0x338] sm:$0xf]
      %v5338 = vld [vmem:[#allocation4 + $0x33c] sm:$0xff]
      %v5339 = vld [vmem:[#allocation4 + $0x344] sm:$0xf]
      %v5340 = vld [vmem:[#allocation4 + $0x348] sm:$0xff]
      %v5341 = vld [vmem:[#allocation4 + $0x350] sm:$0xf]
      %v5342 = vld [vmem:[#allocation4 + $0x354] sm:$0xff]
      %v5343 = vld [vmem:[#allocation4 + $0x35c] sm:$0xf]
      %v5344 = vld [vmem:[#allocation4 + $0x360] sm:$0xff]
      %v5345 = vld [vmem:[#allocation4 + $0x368] sm:$0xf]
      %v5346 = vld [vmem:[#allocation4 + $0x36c] sm:$0xff]
      %v5347 = vld [vmem:[#allocation4 + $0x374] sm:$0xf]
      %v5348 = vld [vmem:[#allocation4 + $0x378] sm:$0xff]
      %v5349 = vld [vmem:[#allocation4 + $0x380] sm:$0xf]
      %v5350 = vld [vmem:[#allocation4 + $0x384] sm:$0xff]
      %v5351 = vld [vmem:[#allocation4 + $0x38c] sm:$0xf]
      %v5352 = vld [vmem:[#allocation4 + $0x390] sm:$0xff]
      %v5353 = vld [vmem:[#allocation4 + $0x398] sm:$0xf]
      %v5354 = vld [vmem:[#allocation4 + $0x39c] sm:$0xff]
      %v5355 = vld [vmem:[#allocation4 + $0x3a4] sm:$0xf]
      %v5356 = vld [vmem:[#allocation4 + $0x3a8] sm:$0xff]
      %v5357 = vld [vmem:[#allocation4 + $0x3b0] sm:$0xf]
      %v5358 = vld [vmem:[#allocation4 + $0x3b4] sm:$0xff]
      %v5359 = vld [vmem:[#allocation4 + $0x3bc] sm:$0xf]
      %v5360 = vld [vmem:[#allocation4 + $0x3c0] sm:$0xff]
      %v5361 = vld [vmem:[#allocation4 + $0x3c8] sm:$0xf]
      %v5362 = vld [vmem:[#allocation4 + $0x3cc] sm:$0xff]
      %v5363 = vld [vmem:[#allocation4 + $0x3d4] sm:$0xf]
      %v5364 = vld [vmem:[#allocation4 + $0x3d8] sm:$0xff]
      %v5365 = vld [vmem:[#allocation4 + $0x3e0] sm:$0xf]
      %v5366 = vld [vmem:[#allocation4 + $0x3e4] sm:$0xff]
      %v5367 = vld [vmem:[#allocation4 + $0x3ec] sm:$0xf]
      %v5368 = vld [vmem:[#allocation4 + $0x3f0] sm:$0xff]
      %v5369 = vld [vmem:[#allocation4 + $0x3f8] sm:$0xf]
      %v5370 = vld [vmem:[#allocation4 + $0x3fc] sm:$0xff]
      %v5371 = vld [vmem:[#allocation4 + $0x404] sm:$0xf]
      %v5372 = vld [vmem:[#allocation4 + $0x408] sm:$0xff]
      %v5373 = vld [vmem:[#allocation4 + $0x410] sm:$0xf]
      %v5374 = vld [vmem:[#allocation4 + $0x414] sm:$0xff]
      %v5375 = vld [vmem:[#allocation4 + $0x41c] sm:$0xf]
      %v5376 = vld [vmem:[#allocation4 + $0x420] sm:$0xff]
      %v5377 = vld [vmem:[#allocation4 + $0x428] sm:$0xf]
      %v5378 = vld [vmem:[#allocation4 + $0x42c] sm:$0xff]
      %v5379 = vld [vmem:[#allocation4 + $0x434] sm:$0xf]
      %s5380 = scalar_lea.vmem %s7, 64
      %v5381 = vld [vmem:[%s5380] sm:$0xff]
      %v5382 = vld [vmem:[%s5380 + $0x8] sm:$0xff]
      %5384 = vset.pattern.permute.xlu0 0
      %5385 = vperm.xlu0 %5384, %v5381
      %v5386 = vpop.permute.xlu0 %5385
      %5389 = vset.pattern.permute.xlu0 0
      %5390 = vperm.xlu0 %5389, %v5382
      %v5391 = vpop.permute.xlu0 %5390
      %v5399 = vunpack.c.l.b16 %v5194
      %v5400 = vunpack.c.h.b16 %v5194
      %v5401 = vunpack.c.l.b16 %v5195
      %v5402 = vunpack.c.h.b16 %v5195
      %v5403 = vunpack.c.l.b16 %v5196
      %v5404 = vunpack.c.h.b16 %v5196
      %v5405 = vunpack.c.l.b16 %v5197
      %v5406 = vunpack.c.h.b16 %v5197
      %v5407 = vunpack.c.l.b16 %v5198
      %v5408 = vunpack.c.h.b16 %v5198
      %v5409 = vunpack.c.l.b16 %v5199
      %v5410 = vunpack.c.h.b16 %v5199
      %v5411 = vpack.c.b16 %v5405, %v5399
      %v5412 = vpack.c.b16 %v5406, %v5400
      %v5413 = vpack.c.b16 %v5407, %v5401
      %v5414 = vpack.c.b16 %v5408, %v5402
      %v5415 = vpack.c.b16 %v5409, %v5403
      %v5416 = vpack.c.b16 %v5410, %v5404
      %v5602 = vunpack.c.l.b16 %v5200
      %v5603 = vunpack.c.h.b16 %v5200
      %v5604 = vunpack.c.l.b16 %v5201
      %v5605 = vunpack.c.l.b16 %v5202
      %v5606 = vunpack.c.h.b16 %v5202
      %v5607 = vunpack.c.l.b16 %v5203
      %v5608 = vunpack.c.l.b16 %v5204
      %v5609 = vunpack.c.h.b16 %v5204
      %v5610 = vunpack.c.l.b16 %v5205
      %v5611 = vunpack.c.l.b16 %v5206
      %v5612 = vunpack.c.h.b16 %v5206
      %v5613 = vunpack.c.l.b16 %v5207
      %v5614 = vunpack.c.l.b16 %v5208
      %v5615 = vunpack.c.h.b16 %v5208
      %v5616 = vunpack.c.l.b16 %v5209
      %v5617 = vunpack.c.l.b16 %v5210
      %v5618 = vunpack.c.h.b16 %v5210
      %v5619 = vunpack.c.l.b16 %v5211
      %v5620 = vunpack.c.l.b16 %v5212
      %v5621 = vunpack.c.h.b16 %v5212
      %v5622 = vunpack.c.l.b16 %v5213
      %v5623 = vunpack.c.l.b16 %v5214
      %v5624 = vunpack.c.h.b16 %v5214
      %v5625 = vunpack.c.l.b16 %v5215
      %v5626 = vunpack.c.l.b16 %v5216
      %v5627 = vunpack.c.h.b16 %v5216
      %v5628 = vunpack.c.l.b16 %v5217
      %v5629 = vunpack.c.l.b16 %v5218
      %v5630 = vunpack.c.h.b16 %v5218
      %v5631 = vunpack.c.l.b16 %v5219
      %v5632 = vunpack.c.l.b16 %v5220
      %v5633 = vunpack.c.h.b16 %v5220
      %v5634 = vunpack.c.l.b16 %v5221
      %v5635 = vunpack.c.l.b16 %v5222
      %v5636 = vunpack.c.h.b16 %v5222
      %v5637 = vunpack.c.l.b16 %v5223
      %v5638 = vunpack.c.l.b16 %v5224
      %v5639 = vunpack.c.h.b16 %v5224
      %v5640 = vunpack.c.l.b16 %v5225
      %v5641 = vunpack.c.l.b16 %v5226
      %v5642 = vunpack.c.h.b16 %v5226
      %v5643 = vunpack.c.l.b16 %v5227
      %v5644 = vunpack.c.l.b16 %v5228
      %v5645 = vunpack.c.h.b16 %v5228
      %v5646 = vunpack.c.l.b16 %v5229
      %v5647 = vunpack.c.l.b16 %v5230
      %v5648 = vunpack.c.h.b16 %v5230
      %v5649 = vunpack.c.l.b16 %v5231
      %v5650 = vunpack.c.l.b16 %v5232
      %v5651 = vunpack.c.h.b16 %v5232
      %v5652 = vunpack.c.l.b16 %v5233
      %v5653 = vunpack.c.l.b16 %v5234
      %v5654 = vunpack.c.h.b16 %v5234
      %v5655 = vunpack.c.l.b16 %v5235
      %v5656 = vunpack.c.l.b16 %v5236
      %v5657 = vunpack.c.h.b16 %v5236
      %v5658 = vunpack.c.l.b16 %v5237
      %v5659 = vunpack.c.l.b16 %v5238
      %v5660 = vunpack.c.h.b16 %v5238
      %v5661 = vunpack.c.l.b16 %v5239
      %v5662 = vunpack.c.l.b16 %v5240
      %v5663 = vunpack.c.h.b16 %v5240
      %v5664 = vunpack.c.l.b16 %v5241
      %v5665 = vunpack.c.l.b16 %v5242
      %v5666 = vunpack.c.h.b16 %v5242
      %v5667 = vunpack.c.l.b16 %v5243
      %v5668 = vunpack.c.l.b16 %v5244
      %v5669 = vunpack.c.h.b16 %v5244
      %v5670 = vunpack.c.l.b16 %v5245
      %v5671 = vunpack.c.l.b16 %v5246
      %v5672 = vunpack.c.h.b16 %v5246
      %v5673 = vunpack.c.l.b16 %v5247
      %v5674 = vunpack.c.l.b16 %v5248
      %v5675 = vunpack.c.h.b16 %v5248
      %v5676 = vunpack.c.l.b16 %v5249
      %v5677 = vunpack.c.l.b16 %v5250
      %v5678 = vunpack.c.h.b16 %v5250
      %v5679 = vunpack.c.l.b16 %v5251
      %v5680 = vunpack.c.l.b16 %v5252
      %v5681 = vunpack.c.h.b16 %v5252
      %v5682 = vunpack.c.l.b16 %v5253
      %v5683 = vunpack.c.l.b16 %v5254
      %v5684 = vunpack.c.h.b16 %v5254
      %v5685 = vunpack.c.l.b16 %v5255
      %v5686 = vunpack.c.l.b16 %v5256
      %v5687 = vunpack.c.h.b16 %v5256
      %v5688 = vunpack.c.l.b16 %v5257
      %v5689 = vunpack.c.l.b16 %v5258
      %v5690 = vunpack.c.h.b16 %v5258
      %v5691 = vunpack.c.l.b16 %v5259
      %v5692 = vunpack.c.l.b16 %v5260
      %v5693 = vunpack.c.h.b16 %v5260
      %v5694 = vunpack.c.l.b16 %v5261
      %v5695 = vunpack.c.l.b16 %v5262
      %v5696 = vunpack.c.h.b16 %v5262
      %v5697 = vunpack.c.l.b16 %v5263
      %v5698 = vunpack.c.l.b16 %v5264
      %v5699 = vunpack.c.h.b16 %v5264
      %v5700 = vunpack.c.l.b16 %v5265
      %v5701 = vunpack.c.l.b16 %v5266
      %v5702 = vunpack.c.h.b16 %v5266
      %v5703 = vunpack.c.l.b16 %v5267
      %v5704 = vunpack.c.l.b16 %v5268
      %v5705 = vunpack.c.h.b16 %v5268
      %v5706 = vunpack.c.l.b16 %v5269
      %v5707 = vunpack.c.l.b16 %v5270
      %v5708 = vunpack.c.h.b16 %v5270
      %v5709 = vunpack.c.l.b16 %v5271
      %v5710 = vunpack.c.l.b16 %v5272
      %v5711 = vunpack.c.h.b16 %v5272
      %v5712 = vunpack.c.l.b16 %v5273
      %v5713 = vunpack.c.l.b16 %v5274
      %v5714 = vunpack.c.h.b16 %v5274
      %v5715 = vunpack.c.l.b16 %v5275
      %v5716 = vunpack.c.l.b16 %v5276
      %v5717 = vunpack.c.h.b16 %v5276
      %v5718 = vunpack.c.l.b16 %v5277
      %v5719 = vunpack.c.l.b16 %v5278
      %v5720 = vunpack.c.h.b16 %v5278
      %v5721 = vunpack.c.l.b16 %v5279
      %v5722 = vunpack.c.l.b16 %v5280
      %v5723 = vunpack.c.h.b16 %v5280
      %v5724 = vunpack.c.l.b16 %v5281
      %v5725 = vunpack.c.l.b16 %v5282
      %v5726 = vunpack.c.h.b16 %v5282
      %v5727 = vunpack.c.l.b16 %v5283
      %v5728 = vunpack.c.l.b16 %v5284
      %v5729 = vunpack.c.h.b16 %v5284
      %v5730 = vunpack.c.l.b16 %v5285
      %v5731 = vunpack.c.l.b16 %v5286
      %v5732 = vunpack.c.h.b16 %v5286
      %v5733 = vunpack.c.l.b16 %v5287
      %v5734 = vunpack.c.l.b16 %v5288
      %v5735 = vunpack.c.h.b16 %v5288
      %v5736 = vunpack.c.l.b16 %v5289
      %v5737 = vunpack.c.l.b16 %v5290
      %v5738 = vunpack.c.h.b16 %v5290
      %v5739 = vunpack.c.l.b16 %v5291
      %v5740 = vunpack.c.l.b16 %v5292
      %v5741 = vunpack.c.h.b16 %v5292
      %v5742 = vunpack.c.l.b16 %v5293
      %v5743 = vunpack.c.l.b16 %v5294
      %v5744 = vunpack.c.h.b16 %v5294
      %v5745 = vunpack.c.l.b16 %v5295
      %v5746 = vunpack.c.l.b16 %v5296
      %v5747 = vunpack.c.h.b16 %v5296
      %v5748 = vunpack.c.l.b16 %v5297
      %v5749 = vunpack.c.l.b16 %v5298
      %v5750 = vunpack.c.h.b16 %v5298
      %v5751 = vunpack.c.l.b16 %v5299
      %v5752 = vunpack.c.l.b16 %v5300
      %v5753 = vunpack.c.h.b16 %v5300
      %v5754 = vunpack.c.l.b16 %v5301
      %v5755 = vunpack.c.l.b16 %v5302
      %v5756 = vunpack.c.h.b16 %v5302
      %v5757 = vunpack.c.l.b16 %v5303
      %v5758 = vunpack.c.l.b16 %v5304
      %v5759 = vunpack.c.h.b16 %v5304
      %v5760 = vunpack.c.l.b16 %v5305
      %v5761 = vunpack.c.l.b16 %v5306
      %v5762 = vunpack.c.h.b16 %v5306
      %v5763 = vunpack.c.l.b16 %v5307
      %v5764 = vunpack.c.l.b16 %v5308
      %v5765 = vunpack.c.h.b16 %v5308
      %v5766 = vunpack.c.l.b16 %v5309
      %v5767 = vunpack.c.l.b16 %v5310
      %v5768 = vunpack.c.h.b16 %v5310
      %v5769 = vunpack.c.l.b16 %v5311
      %v5770 = vunpack.c.l.b16 %v5312
      %v5771 = vunpack.c.h.b16 %v5312
      %v5772 = vunpack.c.l.b16 %v5313
      %v5773 = vunpack.c.l.b16 %v5314
      %v5774 = vunpack.c.h.b16 %v5314
      %v5775 = vunpack.c.l.b16 %v5315
      %v5776 = vunpack.c.l.b16 %v5316
      %v5777 = vunpack.c.h.b16 %v5316
      %v5778 = vunpack.c.l.b16 %v5317
      %v5779 = vunpack.c.l.b16 %v5318
      %v5780 = vunpack.c.h.b16 %v5318
      %v5781 = vunpack.c.l.b16 %v5319
      %v5782 = vunpack.c.l.b16 %v5320
      %v5783 = vunpack.c.h.b16 %v5320
      %v5784 = vunpack.c.l.b16 %v5321
      %v5785 = vunpack.c.l.b16 %v5322
      %v5786 = vunpack.c.h.b16 %v5322
      %v5787 = vunpack.c.l.b16 %v5323
      %v5788 = vunpack.c.l.b16 %v5324
      %v5789 = vunpack.c.h.b16 %v5324
      %v5790 = vunpack.c.l.b16 %v5325
      %v5791 = vunpack.c.l.b16 %v5326
      %v5792 = vunpack.c.h.b16 %v5326
      %v5793 = vunpack.c.l.b16 %v5327
      %v5794 = vunpack.c.l.b16 %v5328
      %v5795 = vunpack.c.h.b16 %v5328
      %v5796 = vunpack.c.l.b16 %v5329
      %v5797 = vunpack.c.l.b16 %v5330
      %v5798 = vunpack.c.h.b16 %v5330
      %v5799 = vunpack.c.l.b16 %v5331
      %v5800 = vunpack.c.l.b16 %v5332
      %v5801 = vunpack.c.h.b16 %v5332
      %v5802 = vunpack.c.l.b16 %v5333
      %v5803 = vunpack.c.l.b16 %v5334
      %v5804 = vunpack.c.h.b16 %v5334
      %v5805 = vunpack.c.l.b16 %v5335
      %v5806 = vunpack.c.l.b16 %v5336
      %v5807 = vunpack.c.h.b16 %v5336
      %v5808 = vunpack.c.l.b16 %v5337
      %v5809 = vunpack.c.l.b16 %v5338
      %v5810 = vunpack.c.h.b16 %v5338
      %v5811 = vunpack.c.l.b16 %v5339
      %v5812 = vunpack.c.l.b16 %v5340
      %v5813 = vunpack.c.h.b16 %v5340
      %v5814 = vunpack.c.l.b16 %v5341
      %v5815 = vunpack.c.l.b16 %v5342
      %v5816 = vunpack.c.h.b16 %v5342
      %v5817 = vunpack.c.l.b16 %v5343
      %v5818 = vunpack.c.l.b16 %v5344
      %v5819 = vunpack.c.h.b16 %v5344
      %v5820 = vunpack.c.l.b16 %v5345
      %v5821 = vunpack.c.l.b16 %v5346
      %v5822 = vunpack.c.h.b16 %v5346
      %v5823 = vunpack.c.l.b16 %v5347
      %v5824 = vunpack.c.l.b16 %v5348
      %v5825 = vunpack.c.h.b16 %v5348
      %v5826 = vunpack.c.l.b16 %v5349
      %v5827 = vunpack.c.l.b16 %v5350
      %v5828 = vunpack.c.h.b16 %v5350
      %v5829 = vunpack.c.l.b16 %v5351
      %v5830 = vunpack.c.l.b16 %v5352
      %v5831 = vunpack.c.h.b16 %v5352
      %v5832 = vunpack.c.l.b16 %v5353
      %v5833 = vunpack.c.l.b16 %v5354
      %v5834 = vunpack.c.h.b16 %v5354
      %v5835 = vunpack.c.l.b16 %v5355
      %v5836 = vunpack.c.l.b16 %v5356
      %v5837 = vunpack.c.h.b16 %v5356
      %v5838 = vunpack.c.l.b16 %v5357
      %v5839 = vunpack.c.l.b16 %v5358
      %v5840 = vunpack.c.h.b16 %v5358
      %v5841 = vunpack.c.l.b16 %v5359
      %v5842 = vunpack.c.l.b16 %v5360
      %v5843 = vunpack.c.h.b16 %v5360
      %v5844 = vunpack.c.l.b16 %v5361
      %v5845 = vunpack.c.l.b16 %v5362
      %v5846 = vunpack.c.h.b16 %v5362
      %v5847 = vunpack.c.l.b16 %v5363
      %v5848 = vunpack.c.l.b16 %v5364
      %v5849 = vunpack.c.h.b16 %v5364
      %v5850 = vunpack.c.l.b16 %v5365
      %v5851 = vunpack.c.l.b16 %v5366
      %v5852 = vunpack.c.h.b16 %v5366
      %v5853 = vunpack.c.l.b16 %v5367
      %v5854 = vunpack.c.l.b16 %v5368
      %v5855 = vunpack.c.h.b16 %v5368
      %v5856 = vunpack.c.l.b16 %v5369
      %v5857 = vunpack.c.l.b16 %v5370
      %v5858 = vunpack.c.h.b16 %v5370
      %v5859 = vunpack.c.l.b16 %v5371
      %v5860 = vunpack.c.l.b16 %v5372
      %v5861 = vunpack.c.h.b16 %v5372
      %v5862 = vunpack.c.l.b16 %v5373
      %v5863 = vunpack.c.l.b16 %v5374
      %v5864 = vunpack.c.h.b16 %v5374
      %v5865 = vunpack.c.l.b16 %v5375
      %v5866 = vunpack.c.l.b16 %v5376
      %v5867 = vunpack.c.h.b16 %v5376
      %v5868 = vunpack.c.l.b16 %v5377
      %v5869 = vunpack.c.l.b16 %v5378
      %v5870 = vunpack.c.h.b16 %v5378
      %v5871 = vunpack.c.l.b16 %v5379
      %v5872 = vpack.c.b16 %v5605, %v5602
      %v5873 = vpack.c.b16 %v5606, %v5603
      %v5874 = vpack.c.b16 %v5607, %v5604
      %v5875 = vpack.c.b16 %v5611, %v5608
      %v5876 = vpack.c.b16 %v5612, %v5609
      %v5877 = vpack.c.b16 %v5613, %v5610
      %v5878 = vpack.c.b16 %v5617, %v5614
      %v5879 = vpack.c.b16 %v5618, %v5615
      %v5880 = vpack.c.b16 %v5619, %v5616
      %v5881 = vpack.c.b16 %v5623, %v5620
      %v5882 = vpack.c.b16 %v5624, %v5621
      %v5883 = vpack.c.b16 %v5625, %v5622
      %v5884 = vpack.c.b16 %v5629, %v5626
      %v5885 = vpack.c.b16 %v5630, %v5627
      %v5886 = vpack.c.b16 %v5631, %v5628
      %v5887 = vpack.c.b16 %v5635, %v5632
      %v5888 = vpack.c.b16 %v5636, %v5633
      %v5889 = vpack.c.b16 %v5637, %v5634
      %v5890 = vpack.c.b16 %v5641, %v5638
      %v5891 = vpack.c.b16 %v5642, %v5639
      %v5892 = vpack.c.b16 %v5643, %v5640
      %v5893 = vpack.c.b16 %v5647, %v5644
      %v5894 = vpack.c.b16 %v5648, %v5645
      %v5895 = vpack.c.b16 %v5649, %v5646
      %v5896 = vpack.c.b16 %v5653, %v5650
      %v5897 = vpack.c.b16 %v5654, %v5651
      %v5898 = vpack.c.b16 %v5655, %v5652
      %v5899 = vpack.c.b16 %v5659, %v5656
      %v5900 = vpack.c.b16 %v5660, %v5657
      %v5901 = vpack.c.b16 %v5661, %v5658
      %v5902 = vpack.c.b16 %v5665, %v5662
      %v5903 = vpack.c.b16 %v5666, %v5663
      %v5904 = vpack.c.b16 %v5667, %v5664
      %v5905 = vpack.c.b16 %v5671, %v5668
      %v5906 = vpack.c.b16 %v5672, %v5669
      %v5907 = vpack.c.b16 %v5673, %v5670
      %v5908 = vpack.c.b16 %v5677, %v5674
      %v5909 = vpack.c.b16 %v5678, %v5675
      %v5910 = vpack.c.b16 %v5679, %v5676
      %v5911 = vpack.c.b16 %v5683, %v5680
      %v5912 = vpack.c.b16 %v5684, %v5681
      %v5913 = vpack.c.b16 %v5685, %v5682
      %v5914 = vpack.c.b16 %v5689, %v5686
      %v5915 = vpack.c.b16 %v5690, %v5687
      %v5916 = vpack.c.b16 %v5691, %v5688
      %v5917 = vpack.c.b16 %v5695, %v5692
      %v5918 = vpack.c.b16 %v5696, %v5693
      %v5919 = vpack.c.b16 %v5697, %v5694
      %v5920 = vpack.c.b16 %v5701, %v5698
      %v5921 = vpack.c.b16 %v5702, %v5699
      %v5922 = vpack.c.b16 %v5703, %v5700
      %v5923 = vpack.c.b16 %v5707, %v5704
      %v5924 = vpack.c.b16 %v5708, %v5705
      %v5925 = vpack.c.b16 %v5709, %v5706
      %v5926 = vpack.c.b16 %v5713, %v5710
      %v5927 = vpack.c.b16 %v5714, %v5711
      %v5928 = vpack.c.b16 %v5715, %v5712
      %v5929 = vpack.c.b16 %v5719, %v5716
      %v5930 = vpack.c.b16 %v5720, %v5717
      %v5931 = vpack.c.b16 %v5721, %v5718
      %v5932 = vpack.c.b16 %v5725, %v5722
      %v5933 = vpack.c.b16 %v5726, %v5723
      %v5934 = vpack.c.b16 %v5727, %v5724
      %v5935 = vpack.c.b16 %v5731, %v5728
      %v5936 = vpack.c.b16 %v5732, %v5729
      %v5937 = vpack.c.b16 %v5733, %v5730
      %v5938 = vpack.c.b16 %v5737, %v5734
      %v5939 = vpack.c.b16 %v5738, %v5735
      %v5940 = vpack.c.b16 %v5739, %v5736
      %v5941 = vpack.c.b16 %v5743, %v5740
      %v5942 = vpack.c.b16 %v5744, %v5741
      %v5943 = vpack.c.b16 %v5745, %v5742
      %v5944 = vpack.c.b16 %v5749, %v5746
      %v5945 = vpack.c.b16 %v5750, %v5747
      %v5946 = vpack.c.b16 %v5751, %v5748
      %v5947 = vpack.c.b16 %v5755, %v5752
      %v5948 = vpack.c.b16 %v5756, %v5753
      %v5949 = vpack.c.b16 %v5757, %v5754
      %v5950 = vpack.c.b16 %v5761, %v5758
      %v5951 = vpack.c.b16 %v5762, %v5759
      %v5952 = vpack.c.b16 %v5763, %v5760
      %v5953 = vpack.c.b16 %v5767, %v5764
      %v5954 = vpack.c.b16 %v5768, %v5765
      %v5955 = vpack.c.b16 %v5769, %v5766
      %v5956 = vpack.c.b16 %v5773, %v5770
      %v5957 = vpack.c.b16 %v5774, %v5771
      %v5958 = vpack.c.b16 %v5775, %v5772
      %v5959 = vpack.c.b16 %v5779, %v5776
      %v5960 = vpack.c.b16 %v5780, %v5777
      %v5961 = vpack.c.b16 %v5781, %v5778
      %v5962 = vpack.c.b16 %v5785, %v5782
      %v5963 = vpack.c.b16 %v5786, %v5783
      %v5964 = vpack.c.b16 %v5787, %v5784
      %v5965 = vpack.c.b16 %v5791, %v5788
      %v5966 = vpack.c.b16 %v5792, %v5789
      %v5967 = vpack.c.b16 %v5793, %v5790
      %v5968 = vpack.c.b16 %v5797, %v5794
      %v5969 = vpack.c.b16 %v5798, %v5795
      %v5970 = vpack.c.b16 %v5799, %v5796
      %v5971 = vpack.c.b16 %v5803, %v5800
      %v5972 = vpack.c.b16 %v5804, %v5801
      %v5973 = vpack.c.b16 %v5805, %v5802
      %v5974 = vpack.c.b16 %v5809, %v5806
      %v5975 = vpack.c.b16 %v5810, %v5807
      %v5976 = vpack.c.b16 %v5811, %v5808
      %v5977 = vpack.c.b16 %v5815, %v5812
      %v5978 = vpack.c.b16 %v5816, %v5813
      %v5979 = vpack.c.b16 %v5817, %v5814
      %v5980 = vpack.c.b16 %v5821, %v5818
      %v5981 = vpack.c.b16 %v5822, %v5819
      %v5982 = vpack.c.b16 %v5823, %v5820
      %v5983 = vpack.c.b16 %v5827, %v5824
      %v5984 = vpack.c.b16 %v5828, %v5825
      %v5985 = vpack.c.b16 %v5829, %v5826
      %v5986 = vpack.c.b16 %v5833, %v5830
      %v5987 = vpack.c.b16 %v5834, %v5831
      %v5988 = vpack.c.b16 %v5835, %v5832
      %v5989 = vpack.c.b16 %v5839, %v5836
      %v5990 = vpack.c.b16 %v5840, %v5837
      %v5991 = vpack.c.b16 %v5841, %v5838
      %v5992 = vpack.c.b16 %v5845, %v5842
      %v5993 = vpack.c.b16 %v5846, %v5843
      %v5994 = vpack.c.b16 %v5847, %v5844
      %v5995 = vpack.c.b16 %v5851, %v5848
      %v5996 = vpack.c.b16 %v5852, %v5849
      %v5997 = vpack.c.b16 %v5853, %v5850
      %v5998 = vpack.c.b16 %v5857, %v5854
      %v5999 = vpack.c.b16 %v5858, %v5855
      %v6000 = vpack.c.b16 %v5859, %v5856
      %v6001 = vpack.c.b16 %v5863, %v5860
      %v6002 = vpack.c.b16 %v5864, %v5861
      %v6003 = vpack.c.b16 %v5865, %v5862
      %v6004 = vpack.c.b16 %v5869, %v5866
      %v6005 = vpack.c.b16 %v5870, %v5867
      %v6006 = vpack.c.b16 %v5871, %v5868
      %vm6142 = vcmask 654336
      %v6144 = vsel %vm6142, %v5416, 0
      %6146 = vmatprep.subr.bf16.mxu0 %v5894
      %6147 = vmatpush1.bf16.msra.mxu0 %v5893
      %6148 = vmatprep.subr.bf16.mxu0 %v5891
      %6149 = vmatpush1.bf16.msra.mxu0 %v5890
      %6150 = vmatprep.subr.bf16.mxu0 %v5888
      %6151 = vmatpush1.bf16.msra.mxu0 %v5887
      %6152 = vmatprep.subr.bf16.mxu0 %v5885
      %6153 = vmatpush1.bf16.msra.mxu0 %v5884
      %6154 = vmatprep.subr.bf16.mxu0 %v5882
      %6155 = vmatpush1.bf16.msra.mxu0 %v5881
      %6156 = vmatprep.subr.bf16.mxu0 %v5879
      %6157 = vmatpush1.bf16.msra.mxu0 %v5878
      %6158 = vmatprep.subr.bf16.mxu0 %v5876
      %6159 = vmatpush1.bf16.msra.mxu0 %v5875
      %6160 = vmatprep.subr.bf16.mxu0 %v5873
      %6161 = vmatpush1.bf16.msra.mxu0 %v5872
      %6162 = vmatprep.subr.bf16.mxu0 %v5918
      %6163 = vmatpush2.bf16.msra.mxu0 %v5917
      %6164 = vmatprep.subr.bf16.mxu0 %v5915
      %6165 = vmatpush2.bf16.msra.mxu0 %v5914
      %6166 = vmatprep.subr.bf16.mxu0 %v5912
      %6167 = vmatpush2.bf16.msra.mxu0 %v5911
      %6168 = vmatprep.subr.bf16.mxu0 %v5909
      %6169 = vmatpush2.bf16.msra.mxu0 %v5908
      %6170 = vmatprep.subr.bf16.mxu0 %v5906
      %6171 = vmatpush2.bf16.msra.mxu0 %v5905
      %6172 = vmatprep.subr.bf16.mxu0 %v5903
      %6173 = vmatpush2.bf16.msra.mxu0 %v5902
      %6174 = vmatprep.subr.bf16.mxu0 %v5900
      %6175 = vmatpush2.bf16.msra.mxu0 %v5899
      %6176 = vmatprep.subr.bf16.mxu0 %v5897
      %6177 = vmatpush2.bf16.msra.mxu0 %v5896
      %6178 = vmatprep.mubr.bf16.mxu0 %v5412
      %6179 = vmatmul.mubr.bf16.gmra.mxu0 %v5411
      %v6180 = vpop.f32.mrf.mxu0
      %v6181 = vadd.f32 %v5386, %v6180
      %v6182 = vpop.f32.mrf.mxu0
      %v6183 = vadd.f32 %v5386, %v6182
      %v6184 = vpop.f32.mrf.mxu0
      %v6185 = vadd.f32 %v5391, %v6184
      %v6186 = vpop.f32.mrf.mxu0
      %v6187 = vadd.f32 %v5391, %v6186
      %6188 = vdwg.mxu0
      %6189 = vmatprep.subr.bf16.mxu0 %v5942
      %6190 = vmatpush1.bf16.msra.mxu0 %v5941
      %6191 = vmatprep.subr.bf16.mxu0 %v5939
      %6192 = vmatpush1.bf16.msra.mxu0 %v5938
      %6193 = vmatprep.subr.bf16.mxu0 %v5936
      %6194 = vmatpush1.bf16.msra.mxu0 %v5935
      %6195 = vmatprep.subr.bf16.mxu0 %v5933
      %6196 = vmatpush1.bf16.msra.mxu0 %v5932
      %6197 = vmatprep.subr.bf16.mxu0 %v5930
      %6198 = vmatpush1.bf16.msra.mxu0 %v5929
      %6199 = vmatprep.subr.bf16.mxu0 %v5927
      %6200 = vmatpush1.bf16.msra.mxu0 %v5926
      %6201 = vmatprep.subr.bf16.mxu0 %v5924
      %6202 = vmatpush1.bf16.msra.mxu0 %v5923
      %6203 = vmatprep.subr.bf16.mxu0 %v5921
      %6204 = vmatpush1.bf16.msra.mxu0 %v5920
      %6205 = vmatprep.subr.bf16.mxu0 %v5966
      %6206 = vmatpush2.bf16.msra.mxu0 %v5965
      %6207 = vmatprep.subr.bf16.mxu0 %v5963
      %6208 = vmatpush2.bf16.msra.mxu0 %v5962
      %6209 = vmatprep.subr.bf16.mxu0 %v5960
      %6210 = vmatpush2.bf16.msra.mxu0 %v5959
      %6211 = vmatprep.subr.bf16.mxu0 %v5957
      %6212 = vmatpush2.bf16.msra.mxu0 %v5956
      %6213 = vmatprep.subr.bf16.mxu0 %v5954
      %6214 = vmatpush2.bf16.msra.mxu0 %v5953
      %6215 = vmatprep.subr.bf16.mxu0 %v5951
      %6216 = vmatpush2.bf16.msra.mxu0 %v5950
      %6217 = vmatprep.subr.bf16.mxu0 %v5948
      %6218 = vmatpush2.bf16.msra.mxu0 %v5947
      %6219 = vmatprep.subr.bf16.mxu0 %v5945
      %6220 = vmatpush2.bf16.msra.mxu0 %v5944
      %6221 = vmatprep.mubr.bf16.mxu0 %v5414
      %6222 = vmatmul.mubr.bf16.gmra.mxu0 %v5413
      %v6223 = vpop.f32.mrf.mxu0
      %v6224 = vadd.f32 %v6181, %v6223
      %v6225 = vpop.f32.mrf.mxu0
      %v6226 = vadd.f32 %v6183, %v6225
      %v6227 = vpop.f32.mrf.mxu0
      %v6228 = vadd.f32 %v6185, %v6227
      %v6229 = vpop.f32.mrf.mxu0
      %v6230 = vadd.f32 %v6187, %v6229
      %6231 = vdwg.mxu0
      %6232 = vmatprep.subr.bf16.mxu0 %v5990
      %6233 = vmatpush1.bf16.msra.mxu0 %v5989
      %6234 = vmatprep.subr.bf16.mxu0 %v5987
      %6235 = vmatpush1.bf16.msra.mxu0 %v5986
      %6236 = vmatprep.subr.bf16.mxu0 %v5984
      %6237 = vmatpush1.bf16.msra.mxu0 %v5983
      %6238 = vmatprep.subr.bf16.mxu0 %v5981
      %6239 = vmatpush1.bf16.msra.mxu0 %v5980
      %6240 = vmatprep.subr.bf16.mxu0 %v5978
      %6241 = vmatpush1.bf16.msra.mxu0 %v5977
      %6242 = vmatprep.subr.bf16.mxu0 %v5975
      %6243 = vmatpush1.bf16.msra.mxu0 %v5974
      %6244 = vmatprep.subr.bf16.mxu0 %v5972
      %6245 = vmatpush1.bf16.msra.mxu0 %v5971
      %6246 = vmatprep.subr.bf16.mxu0 %v5969
      %6247 = vmatpush1.bf16.msra.mxu0 %v5968
      %6248 = vmatprep.subr.bf16.mxu0 0
      %6249 = vmatpush2.bf16.msra.mxu0 0
      %6250 = vmatprep.subr.bf16.mxu0 0
      %6251 = vmatpush2.bf16.msra.mxu0 0
      %6252 = vmatprep.subr.bf16.mxu0 0
      %6253 = vmatpush2.bf16.msra.mxu0 0
      %6254 = vmatprep.subr.bf16.mxu0 %v6005
      %6255 = vmatpush2.bf16.msra.mxu0 %v6004
      %6256 = vmatprep.subr.bf16.mxu0 %v6002
      %6257 = vmatpush2.bf16.msra.mxu0 %v6001
      %6258 = vmatprep.subr.bf16.mxu0 %v5999
      %6259 = vmatpush2.bf16.msra.mxu0 %v5998
      %6260 = vmatprep.subr.bf16.mxu0 %v5996
      %6261 = vmatpush2.bf16.msra.mxu0 %v5995
      %6262 = vmatprep.subr.bf16.mxu0 %v5993
      %6263 = vmatpush2.bf16.msra.mxu0 %v5992
      %6264 = vmatprep.mubr.bf16.mxu0 %v6144
      %6265 = vmatmul.mubr.bf16.gmra.mxu0 %v5415
      %v6266 = vpop.f32.mrf.mxu0
      %v6267 = vadd.f32 %v6224, %v6266
      %v6268 = vpop.f32.mrf.mxu0
      %v6269 = vadd.f32 %v6226, %v6268
      %v6270 = vpop.f32.mrf.mxu0
      %v6271 = vadd.f32 %v6228, %v6270
      %v6272 = vpop.f32.mrf.mxu0
      %v6273 = vadd.f32 %v6230, %v6272
      %6274 = vdwg.mxu0
      %6275 = vmatprep.subr.bf16.mxu0 0
      %6276 = vmatpush1.bf16.msra.mxu0 %v5895
      %6277 = vmatprep.subr.bf16.mxu0 0
      %6278 = vmatpush1.bf16.msra.mxu0 %v5892
      %6279 = vmatprep.subr.bf16.mxu0 0
      %6280 = vmatpush1.bf16.msra.mxu0 %v5889
      %6281 = vmatprep.subr.bf16.mxu0 0
      %6282 = vmatpush1.bf16.msra.mxu0 %v5886
      %6283 = vmatprep.subr.bf16.mxu0 0
      %6284 = vmatpush1.bf16.msra.mxu0 %v5883
      %6285 = vmatprep.subr.bf16.mxu0 0
      %6286 = vmatpush1.bf16.msra.mxu0 %v5880
      %6287 = vmatprep.subr.bf16.mxu0 0
      %6288 = vmatpush1.bf16.msra.mxu0 %v5877
      %6289 = vmatprep.subr.bf16.mxu0 0
      %6290 = vmatpush1.bf16.msra.mxu0 %v5874
      %6291 = vmatprep.subr.bf16.mxu0 0
      %6292 = vmatpush2.bf16.msra.mxu0 %v5919
      %6293 = vmatprep.subr.bf16.mxu0 0
      %6294 = vmatpush2.bf16.msra.mxu0 %v5916
      %6295 = vmatprep.subr.bf16.mxu0 0
      %6296 = vmatpush2.bf16.msra.mxu0 %v5913
      %6297 = vmatprep.subr.bf16.mxu0 0
      %6298 = vmatpush2.bf16.msra.mxu0 %v5910
      %6299 = vmatprep.subr.bf16.mxu0 0
      %6300 = vmatpush2.bf16.msra.mxu0 %v5907
      %6301 = vmatprep.subr.bf16.mxu0 0
      %6302 = vmatpush2.bf16.msra.mxu0 %v5904
      %6303 = vmatprep.subr.bf16.mxu0 0
      %6304 = vmatpush2.bf16.msra.mxu0 %v5901
      %6305 = vmatprep.subr.bf16.mxu0 0
      %6306 = vmatpush2.bf16.msra.mxu0 %v5898
      %6307 = vmatprep.mubr.bf16.mxu0 %v5412
      %6308 = vmatmul.mubr.bf16.gmra.mxu0 %v5411
      %v6309 = vpop.f32.mrf.mxu0
      %v6310 = vadd.f32 %v5386, %v6309
      %v6311 = vpop.f32.mrf.mxu0
      %v6312 = vpop.f32.mrf.mxu0
      %v6313 = vadd.f32 %v5391, %v6312
      %v6314 = vpop.f32.mrf.mxu0
      %6315 = vdwg.mxu0
      %6316 = vmatprep.subr.bf16.mxu0 0
      %6317 = vmatpush1.bf16.msra.mxu0 %v5943
      %6318 = vmatprep.subr.bf16.mxu0 0
      %6319 = vmatpush1.bf16.msra.mxu0 %v5940
      %6320 = vmatprep.subr.bf16.mxu0 0
      %6321 = vmatpush1.bf16.msra.mxu0 %v5937
      %6322 = vmatprep.subr.bf16.mxu0 0
      %6323 = vmatpush1.bf16.msra.mxu0 %v5934
      %6324 = vmatprep.subr.bf16.mxu0 0
      %6325 = vmatpush1.bf16.msra.mxu0 %v5931
      %6326 = vmatprep.subr.bf16.mxu0 0
      %6327 = vmatpush1.bf16.msra.mxu0 %v5928
      %6328 = vmatprep.subr.bf16.mxu0 0
      %6329 = vmatpush1.bf16.msra.mxu0 %v5925
      %6330 = vmatprep.subr.bf16.mxu0 0
      %6331 = vmatpush1.bf16.msra.mxu0 %v5922
      %6332 = vmatprep.subr.bf16.mxu0 0
      %6333 = vmatpush2.bf16.msra.mxu0 %v5967
      %6334 = vmatprep.subr.bf16.mxu0 0
      %6335 = vmatpush2.bf16.msra.mxu0 %v5964
      %6336 = vmatprep.subr.bf16.mxu0 0
      %6337 = vmatpush2.bf16.msra.mxu0 %v5961
      %6338 = vmatprep.subr.bf16.mxu0 0
      %6339 = vmatpush2.bf16.msra.mxu0 %v5958
      %6340 = vmatprep.subr.bf16.mxu0 0
      %6341 = vmatpush2.bf16.msra.mxu0 %v5955
      %6342 = vmatprep.subr.bf16.mxu0 0
      %6343 = vmatpush2.bf16.msra.mxu0 %v5952
      %6344 = vmatprep.subr.bf16.mxu0 0
      %6345 = vmatpush2.bf16.msra.mxu0 %v5949
      %6346 = vmatprep.subr.bf16.mxu0 0
      %6347 = vmatpush2.bf16.msra.mxu0 %v5946
      %6348 = vmatprep.mubr.bf16.mxu0 %v5414
      %6349 = vmatmul.mubr.bf16.gmra.mxu0 %v5413
      %v6350 = vpop.f32.mrf.mxu0
      %v6351 = vadd.f32 %v6310, %v6350
      %v6352 = vpop.f32.mrf.mxu0
      %v6353 = vpop.f32.mrf.mxu0
      %v6354 = vadd.f32 %v6313, %v6353
      %v6355 = vpop.f32.mrf.mxu0
      %6356 = vdwg.mxu0
      %6357 = vmatprep.subr.bf16.mxu0 0
      %6358 = vmatpush1.bf16.msra.mxu0 %v5991
      %6359 = vmatprep.subr.bf16.mxu0 0
      %6360 = vmatpush1.bf16.msra.mxu0 %v5988
      %6361 = vmatprep.subr.bf16.mxu0 0
      %6362 = vmatpush1.bf16.msra.mxu0 %v5985
      %6363 = vmatprep.subr.bf16.mxu0 0
      %6364 = vmatpush1.bf16.msra.mxu0 %v5982
      %6365 = vmatprep.subr.bf16.mxu0 0
      %6366 = vmatpush1.bf16.msra.mxu0 %v5979
      %6367 = vmatprep.subr.bf16.mxu0 0
      %6368 = vmatpush1.bf16.msra.mxu0 %v5976
      %6369 = vmatprep.subr.bf16.mxu0 0
      %6370 = vmatpush1.bf16.msra.mxu0 %v5973
      %6371 = vmatprep.subr.bf16.mxu0 0
      %6372 = vmatpush1.bf16.msra.mxu0 %v5970
      %6373 = vmatprep.subr.bf16.mxu0 0
      %6374 = vmatpush2.bf16.msra.mxu0 0
      %6375 = vmatprep.subr.bf16.mxu0 0
      %6376 = vmatpush2.bf16.msra.mxu0 0
      %6377 = vmatprep.subr.bf16.mxu0 0
      %6378 = vmatpush2.bf16.msra.mxu0 0
      %6379 = vmatprep.subr.bf16.mxu0 0
      %6380 = vmatpush2.bf16.msra.mxu0 %v6006
      %6381 = vmatprep.subr.bf16.mxu0 0
      %6382 = vmatpush2.bf16.msra.mxu0 %v6003
      %6383 = vmatprep.subr.bf16.mxu0 0
      %6384 = vmatpush2.bf16.msra.mxu0 %v6000
      %6385 = vmatprep.subr.bf16.mxu0 0
      %6386 = vmatpush2.bf16.msra.mxu0 %v5997
      %6387 = vmatprep.subr.bf16.mxu0 0
      %6388 = vmatpush2.bf16.msra.mxu0 %v5994
      %6389 = vmatprep.mubr.bf16.mxu0 %v6144
      %6390 = vmatmul.mubr.bf16.gmra.mxu0 %v5415
      %v6391 = vpop.f32.mrf.mxu0
      %v6392 = vadd.f32 %v6351, %v6391
      %v6393 = vpop.f32.mrf.mxu0
      %v6394 = vpop.f32.mrf.mxu0
      %v6395 = vadd.f32 %v6354, %v6394
      %v6396 = vpop.f32.mrf.mxu0
      %6397 = vdwg.mxu0
      %v6398 = vmul.f32 %v6267, %v1102
      %v6399 = vmul.f32 %v6269, %v1106
      %v6400 = vmul.f32 %v6392, %v1110
      %v6401 = vmul.f32 %v6271, %v1102
      %v6402 = vmul.f32 %v6273, %v1106
      %v6403 = vmul.f32 %v6395, %v1110
      %v6404 = vld [vmem:[%s300 + $0x8] sm:$0xff]
      %v6405 = vld [vmem:[%s300 + $0x10] sm:$0xff]
      %v6406 = vld [vmem:[%s300 + $0x18] sm:$0xff]
      %v6407 = vld [vmem:[%s300 + $0x28] sm:$0xff]
      %v6408 = vld [vmem:[%s300 + $0x30] sm:$0xff]
      %v6409 = vld [vmem:[%s300 + $0x38] sm:$0xff]
      %v6410 = vmul.f32 %v6398, 0.2
      %v6411 = vmul.f32 %v6399, 0.2
      %v6412 = vmul.f32 %v6400, 0.2
      %v6413 = vmul.f32 %v6401, 0.2
      %v6414 = vmul.f32 %v6402, 0.2
      %v6415 = vmul.f32 %v6403, 0.2
      %v6416 = vadd.f32 %v6404, %v6410
      %v6417 = vadd.f32 %v6405, %v6411
      %v6418 = vadd.f32 %v6406, %v6412
      %v6419 = vadd.f32 %v6407, %v6413
      %v6420 = vadd.f32 %v6408, %v6414
      %v6421 = vadd.f32 %v6409, %v6415
      %6422 = vst [vmem:[%s305] sm:$0xff] 0.0
      %6423 = vst [vmem:[%s305 + $0x20] sm:$0xff] 0.0
      %6424 = vst [vmem:[%s305 + $0x8] sm:$0xff] %v6416
      %6425 = vst [vmem:[%s305 + $0x10] sm:$0xff] %v6417
      %vm6426 = vcmask 556032
      %6427 = vst.msk [vmem:[%s305 + $0x18] sm:$0xff] %vm6426, %v6418
      %6428 = vst [vmem:[%s305 + $0x28] sm:$0xff] %v6419
      %6429 = vst [vmem:[%s305 + $0x30] sm:$0xff] %v6420
      %6430 = vst.msk [vmem:[%s305 + $0x38] sm:$0xff] %vm6426, %v6421
      %vm6431 = vcmask 1048096
      %6432 = vst.msk [vmem:[%s305 + $0x18] sm:$0xff] %vm6431, 0.0
      %6433 = vst.msk [vmem:[%s305 + $0x38] sm:$0xff] %vm6431, 0.0
      %p6434 = scmp.lt.s32.totalorder %s19, 1
      %s6435 = scalar_select %p6434, %s19, 1
      %s6436 = smul.addr %s6435, 8
      %s6437 = smul.addr %s6436, 8
      %s6438 = scalar_lea.vmem %s8, %s6437
      // Predicated region
      $region53: #{rrdbnet_forward.6} parent=51 // pred_check
        %p6439 = pneg %p210
      $region54: #{rrdbnet_forward.6} parent=51 // pred_check_branch
        %6441 = sbr.rel (%p6439) target = $region56
      $region55: #{rrdbnet_forward.6} parent=51 // pred_region
        _
      $region56: #{rrdbnet_forward.6} parent=51 // pred_fallthru
        _
    $region52: #{rrdbnet_forward.6} parent=5 // pred_fallthru
      _
    %p6442 = scmp.le.s32.totalorder 2, %s14
    // Predicated region
    $region57: #{rrdbnet_forward.6} parent=5 // pred_check
      %p6443 = pneg %p6442
    $region58: #{rrdbnet_forward.6} parent=5 // pred_check_branch
      %6445 = sbr.rel (%p6443) target = $region60
    $region59: #{rrdbnet_forward.6} parent=5 // pred_region
      %s6446 = ssub.s32 %s14, 2
      // Predicated region
      $region61: #{rrdbnet_forward.6} parent=59 // pred_check
        %p6447 = pneg %p216
      $region62: #{rrdbnet_forward.6} parent=59 // pred_check_branch
        %6449 = sbr.rel (%p6447) target = $region64
      $region63: #{rrdbnet_forward.6} parent=59 // pred_region
        %p6450 = scmp.lt.s32.totalorder %s20, 1
        %s6451 = scalar_select %p6450, %s20, 1
        %s6452 = smul.addr %s6451, 8
        %s6453 = smul.addr %s6452, 8
        %s6454 = scalar_lea.vmem %s8, %s6453
      $region64: #{rrdbnet_forward.6} parent=59 // pred_fallthru
        _
    $region60: #{rrdbnet_forward.6} parent=5 // pred_fallthru
      _
  $region6: #{rrdbnet_forward.6} parent=0 // loop_footer
    %s18 = sadd.s32 1, %s14
  $region7: #{rrdbnet_forward.6} parent=0 // loop_footer_branch
    %13 = sbr.rel target = $region3
  $region8: #{rrdbnet_forward.6} parent=0 // loop_exit
    _

</llo_original>
